<compile_context>
chip_gen: v6e
topology: v6e:2x2x1
jax: 0.10.0
libtpu: 0.0.40
codegen_flags: <defaults>
</compile_context>

<pallas_src>
import functools
import math

import jax
import jax.numpy as jnp
from jax import lax
from jax.experimental import pallas as pl
from jax.experimental.pallas import tpu as pltpu


def _conv_block_kernel(x_ref, mask_ref, w1_ref, b1_ref, w2_ref, b2_ref,
                       w3_ref, b3_ref, gamma_ref, beta_ref, o_ref,
                       *, C, NB, H, W, eps):
    HW = H * W
    CNB = C * NB
    offsets = [(kh - 1, kw - 1) for kh in range(3) for kw in range(3)]

    # Current activation: all channels stacked into one lane-dense (C*NB, HW) slab.
    # Channel ci lives in sublane rows [ci*NB, (ci+1)*NB) -> every slice below is
    # an (8,128)-tile-aligned static slice (pure vreg selection, no relayout).
    cur = jnp.concatenate([x_ref[c] for c in range(C)], axis=0)

    # ---- three chained 3x3 / stride-1 / zero-padded convolutions --------------
    for w_ref, b_ref in ((w1_ref, b1_ref), (w2_ref, b2_ref), (w3_ref, b3_ref)):
        acc = [jnp.full((NB, HW), b_ref[co], dtype=jnp.float32) for co in range(C)]
        for t, (oh, ow) in enumerate(offsets):
            if oh == 0 and ow == 0:
                tap_all = cur
            else:
                # tap[p] = cur[p + oh*W + ow] where valid, 0 at the zero-pad border.
                shift = (-(oh * W + ow)) % HW
                tap_all = pltpu.roll(cur, shift, axis=1) * mask_ref[pl.ds(t, 1), :]
            for ci in range(C):
                tap = tap_all[ci * NB:(ci + 1) * NB]       # tile-aligned static slice
                for co in range(C):
                    wsc = w_ref[(co * C + ci) * 9 + t]     # SMEM scalar -> sreg splat
                    acc[co] = acc[co] + wsc * tap
        cur = jnp.concatenate(acc, axis=0)
        # TODO(synk): for large t_size (C >= ~32) this VPU channel-mixing loop should
        # become an im2col MXU matmul and the Python loops lax.fori_loop's.

    # ---- LayerNorm over n_step (= W) + ReLU + residual ------------------------
    last_lane = mask_ref[pl.ds(9, 1), :]                   # 1 at lane w==W-1 of each row

    def seg_sum(v):
        # Per-W-segment sum broadcast back over each segment (W is a power of two).
        # Doubling rolls: backward-looking sliding sum (exact at the last lane of
        # every segment), mask those lanes, then fan the value back over the segment.
        s = v
        k = 1
        while k < W:
            s = s + pltpu.roll(s, k, axis=1)
            k *= 2
        s = s * last_lane
        k = 1
        while k < W:
            s = s + pltpu.roll(s, (HW - k) % HW, axis=1)
            k *= 2
        return s

    stat = seg_sum(jnp.concatenate([cur, cur * cur], axis=0))   # one-pass sum & sumsq
    inv_n = 1.0 / float(W)
    mean = stat[:CNB] * inv_n
    var = stat[CNB:] * inv_n - mean * mean                      # biased, as nn.LayerNorm
    normed = (cur - mean) * lax.rsqrt(var + eps)                # rsqrt -> EUP slot
    act = jnp.maximum(normed * gamma_ref[...] + beta_ref[...], 0.0)

    for c in range(C):                                          # aligned lane-dense stores
        o_ref[c] = act[c * NB:(c + 1) * NB] + x_ref[c]


def conv_block_forward(x, w1, b1, w2, b2, w3, b3, gamma, beta):
    """Fused conv_block forward.  x: (N, C, H, W) float32, LayerNorm over W."""
    N, C, H, W = x.shape
    HW = H * W
    assert (W & (W - 1)) == 0, "n_step must be a power of two for the segmented reduce"
    # TODO(synk): non power-of-two n_step needs a different LayerNorm reduction.

    # Batch rows per grid step: multiple of 8 sublanes; keeps >=2 grid steps for
    # the test shapes so both v7x TensorCores get work.
    NB = 8 if N % 8 == 0 else N

    # Lane-dense layout: (C, N, H*W); each per-channel block slab is (NB, H*W).
    xt = jnp.transpose(x.reshape(N, C, HW), (1, 0, 2))

    # Rows 0..8: validity masks for the nine 3x3 taps in the flattened (H*W) layout
    # (rolls wrap; masks zero the wrapped-in elements == 'same' zero padding).
    # Row 9: selector of the last lane of every n_step segment (LayerNorm reduce).
    hh = jnp.arange(H)[:, None]
    ww = jnp.arange(W)[None, :]
    rows = []
    for kh in range(3):
        for kw in range(3):
            oh, ow = kh - 1, kw - 1
            m = ((hh + oh >= 0) & (hh + oh < H) & (ww + ow >= 0) & (ww + ow < W))
            rows.append(m.reshape(HW))
    rows.append((jnp.arange(HW) % W) == (W - 1))
    masks = jnp.stack(rows).astype(jnp.float32)                 # (10, HW)

    gamma_t = jnp.tile(gamma.reshape(-1), H).reshape(1, HW)
    beta_t = jnp.tile(beta.reshape(-1), H).reshape(1, HW)

    kernel = functools.partial(_conv_block_kernel, C=C, NB=NB, H=H, W=W, eps=1e-5)
    smem = pl.BlockSpec(memory_space=pltpu.MemorySpace.SMEM)

    def const_spec(shape):
        return pl.BlockSpec(shape, lambda i: (0,) * len(shape))

    out = pl.pallas_call(
        kernel,
        out_shape=jax.ShapeDtypeStruct((C, N, HW), jnp.float32),
        grid_spec=pltpu.PrefetchScalarGridSpec(
            num_scalar_prefetch=0,
            grid=(N // NB,),
            in_specs=[
                pl.BlockSpec((C, NB, HW), lambda i: (0, i, 0)),   # x
                const_spec((10, HW)),                             # masks (block-invariant)
                smem, smem,                                       # w1, b1
                smem, smem,                                       # w2, b2
                smem, smem,                                       # w3, b3
                const_spec((1, HW)), const_spec((1, HW)),         # gamma, beta
            ],
            out_specs=pl.BlockSpec((C, NB, HW), lambda i: (0, i, 0)),
        ),
        compiler_params=pltpu.CompilerParams(
            dimension_semantics=("parallel",)),
    )(xt, masks,
      w1.reshape(-1), b1, w2.reshape(-1), b2, w3.reshape(-1), b3,
      gamma_t, beta_t)

    return jnp.transpose(out, (1, 0, 2)).reshape(N, C, H, W)


def ref_forward(x, w1, b1, w2, b2, w3, b3, gamma, beta):
    """Plain-JAX reference (mirrors the PyTorch forward)."""
    def conv(h, w, b):
        out = lax.conv_general_dilated(
            h, w, window_strides=(1, 1), padding="SAME",
            dimension_numbers=("NCHW", "OIHW", "NCHW"))
        return out + b[None, :, None, None]

    h = conv(x, w1, b1)
    h = conv(h, w2, b2)
    h = conv(h, w3, b3)
    mean = jnp.mean(h, axis=-1, keepdims=True)
    var = jnp.mean((h - mean) ** 2, axis=-1, keepdims=True)
    h = (h - mean) / jnp.sqrt(var + 1e-5)
    h = h * gamma + beta
    return jnp.maximum(h, 0.0) + x


if __name__ == "__main__":
    # Module hyper-params: t_size = channels, n_step = last spatial dim (LayerNorm dim).
    N, C, H, W = 16, 4, 16, 16          # batch, t_size, height, n_step

    key = jax.random.PRNGKey(0)
    ks = jax.random.split(key, 10)

    # PyTorch Conv2d default init: uniform(-1/sqrt(fan_in), 1/sqrt(fan_in)).
    fan_in = C * 3 * 3
    bound = 1.0 / math.sqrt(fan_in)
    w1 = jax.random.uniform(ks[0], (C, C, 3, 3), jnp.float32, -bound, bound)
    b1 = jax.random.uniform(ks[1], (C,), jnp.float32, -bound, bound)
    w2 = jax.random.uniform(ks[2], (C, C, 3, 3), jnp.float32, -bound, bound)
    b2 = jax.random.uniform(ks[3], (C,), jnp.float32, -bound, bound)
    w3 = jax.random.uniform(ks[4], (C, C, 3, 3), jnp.float32, -bound, bound)
    b3 = jax.random.uniform(ks[5], (C,), jnp.float32, -bound, bound)
    # LayerNorm affine params (perturbed from ones/zeros default so they matter).
    gamma = 1.0 + 0.1 * jax.random.normal(ks[6], (W,), jnp.float32)
    beta = 0.1 * jax.random.normal(ks[7], (W,), jnp.float32)

    x = jax.random.normal(ks[8], (N, C, H, W), jnp.float32)

    out = conv_block_forward(x, w1, b1, w2, b2, w3, b3, gamma, beta)
    out = jax.block_until_ready(out)

    ref = ref_forward(x, w1, b1, w2, b2, w3, b3, gamma, beta)
    assert out.shape == (N, C, H, W)
    err = float(jnp.max(jnp.abs(out - ref)))
    assert jnp.allclose(out, ref, rtol=1e-3, atol=1e-3), err

    print("KERNEL_OK")
</pallas_src>

<mosaic_0001>
module attributes {stable_mosaic.version = 11 : i64} {
  func.func @_conv_block_kernel(%arg0: i32, %arg1: memref<4x8x256xf32, #tpu.memory_space<vmem>>, %arg2: memref<10x256xf32, #tpu.memory_space<vmem>>, %arg3: memref<144xf32, #tpu.memory_space<smem>>, %arg4: memref<4xf32, #tpu.memory_space<smem>>, %arg5: memref<144xf32, #tpu.memory_space<smem>>, %arg6: memref<4xf32, #tpu.memory_space<smem>>, %arg7: memref<144xf32, #tpu.memory_space<smem>>, %arg8: memref<4xf32, #tpu.memory_space<smem>>, %arg9: memref<1x256xf32, #tpu.memory_space<vmem>>, %arg10: memref<1x256xf32, #tpu.memory_space<vmem>>, %arg11: memref<4x8x256xf32, #tpu.memory_space<vmem>>) attributes {dimension_semantics = [#tpu.dimension_semantics<parallel>], iteration_bounds = array<i64: 2>, scalar_prefetch = 0 : i64, scratch_operands = 0 : i64, tpu.core_type = #tpu.core_type<tc>, window_params = [{transform_indices = @transform_0, window_bounds = array<i64: 4, 8, 256>}, {pipeline_mode = #tpu.pipeline_mode<synchronous>, transform_indices = @transform_1, window_bounds = array<i64: 10, 256>}, {transform_indices = @transform_2, window_bounds = array<i64: 144>}, {transform_indices = @transform_3, window_bounds = array<i64: 4>}, {transform_indices = @transform_4, window_bounds = array<i64: 144>}, {transform_indices = @transform_5, window_bounds = array<i64: 4>}, {transform_indices = @transform_6, window_bounds = array<i64: 144>}, {transform_indices = @transform_7, window_bounds = array<i64: 4>}, {pipeline_mode = #tpu.pipeline_mode<synchronous>, transform_indices = @transform_8, window_bounds = array<i64: 1, 256>}, {pipeline_mode = #tpu.pipeline_mode<synchronous>, transform_indices = @transform_9, window_bounds = array<i64: 1, 256>}, {transform_indices = @transform_10, window_bounds = array<i64: 4, 8, 256>}]} {
    %c0 = arith.constant 0 : index
    %c0_0 = arith.constant 0 : index
    %c0_1 = arith.constant 0 : index
    %0 = vector.load %arg1[%c0, %c0_0, %c0_1] : memref<4x8x256xf32, #tpu.memory_space<vmem>>, vector<1x8x256xf32>
    %1 = vector.shape_cast %0 : vector<1x8x256xf32> to vector<8x256xf32>
    %c1 = arith.constant 1 : index
    %c0_2 = arith.constant 0 : index
    %c0_3 = arith.constant 0 : index
    %2 = vector.load %arg1[%c1, %c0_2, %c0_3] : memref<4x8x256xf32, #tpu.memory_space<vmem>>, vector<1x8x256xf32>
    %3 = vector.shape_cast %2 : vector<1x8x256xf32> to vector<8x256xf32>
    %c2 = arith.constant 2 : index
    %c0_4 = arith.constant 0 : index
    %c0_5 = arith.constant 0 : index
    %4 = vector.load %arg1[%c2, %c0_4, %c0_5] : memref<4x8x256xf32, #tpu.memory_space<vmem>>, vector<1x8x256xf32>
    %5 = vector.shape_cast %4 : vector<1x8x256xf32> to vector<8x256xf32>
    %c3 = arith.constant 3 : index
    %c0_6 = arith.constant 0 : index
    %c0_7 = arith.constant 0 : index
    %6 = vector.load %arg1[%c3, %c0_6, %c0_7] : memref<4x8x256xf32, #tpu.memory_space<vmem>>, vector<1x8x256xf32>
    %7 = vector.shape_cast %6 : vector<1x8x256xf32> to vector<8x256xf32>
    %8 = tpu.concatenate %1, %3, %5, %7 in 0 : vector<8x256xf32>, vector<8x256xf32>, vector<8x256xf32>, vector<8x256xf32> -> vector<32x256xf32>
    %c0_8 = arith.constant 0 : index
    %9 = memref.load %arg4[%c0_8] : memref<4xf32, #tpu.memory_space<smem>>
    %10 = vector.broadcast %9 : f32 to vector<8x256xf32>
    %c1_9 = arith.constant 1 : index
    %11 = memref.load %arg4[%c1_9] : memref<4xf32, #tpu.memory_space<smem>>
    %12 = vector.broadcast %11 : f32 to vector<8x256xf32>
    %c2_10 = arith.constant 2 : index
    %13 = memref.load %arg4[%c2_10] : memref<4xf32, #tpu.memory_space<smem>>
    %14 = vector.broadcast %13 : f32 to vector<8x256xf32>
    %c3_11 = arith.constant 3 : index
    %15 = memref.load %arg4[%c3_11] : memref<4xf32, #tpu.memory_space<smem>>
    %16 = vector.broadcast %15 : f32 to vector<8x256xf32>
    %c17_i32 = arith.constant 17 : i32
    %17 = tpu.dynamic_rotate %8 by %c17_i32 dim 1 : vector<32x256xf32>, i32 -> vector<32x256xf32>
    %c0_12 = arith.constant 0 : index
    %c0_13 = arith.constant 0 : index
    %18 = vector.load %arg2[%c0_12, %c0_13] : memref<10x256xf32, #tpu.memory_space<vmem>>, vector<1x256xf32>
    %19 = vector.broadcast %18 : vector<1x256xf32> to vector<32x256xf32>
    %20 = arith.mulf %17, %19 : vector<32x256xf32>
    %21 = vector.extract_strided_slice %20 {offsets = [0, 0], sizes = [8, 256], strides = [1, 1]} : vector<32x256xf32> to vector<8x256xf32>
    %c0_14 = arith.constant 0 : index
    %22 = memref.load %arg3[%c0_14] : memref<144xf32, #tpu.memory_space<smem>>
    %23 = vector.broadcast %22 : f32 to vector<8x256xf32>
    %24 = arith.mulf %23, %21 : vector<8x256xf32>
    %25 = arith.addf %10, %24 : vector<8x256xf32>
    %c36 = arith.constant 36 : index
    %26 = memref.load %arg3[%c36] : memref<144xf32, #tpu.memory_space<smem>>
    %27 = vector.broadcast %26 : f32 to vector<8x256xf32>
    %28 = arith.mulf %27, %21 : vector<8x256xf32>
    %29 = arith.addf %12, %28 : vector<8x256xf32>
    %c72 = arith.constant 72 : index
    %30 = memref.load %arg3[%c72] : memref<144xf32, #tpu.memory_space<smem>>
    %31 = vector.broadcast %30 : f32 to vector<8x256xf32>
    %32 = arith.mulf %31, %21 : vector<8x256xf32>
    %33 = arith.addf %14, %32 : vector<8x256xf32>
    %c108 = arith.constant 108 : index
    %34 = memref.load %arg3[%c108] : memref<144xf32, #tpu.memory_space<smem>>
    %35 = vector.broadcast %34 : f32 to vector<8x256xf32>
    %36 = arith.mulf %35, %21 : vector<8x256xf32>
    %37 = arith.addf %16, %36 : vector<8x256xf32>
    %38 = vector.extract_strided_slice %20 {offsets = [8, 0], sizes = [8, 256], strides = [1, 1]} : vector<32x256xf32> to vector<8x256xf32>
    %c9 = arith.constant 9 : index
    %39 = memref.load %arg3[%c9] : memref<144xf32, #tpu.memory_space<smem>>
    %40 = vector.broadcast %39 : f32 to vector<8x256xf32>
    %41 = arith.mulf %40, %38 : vector<8x256xf32>
    %42 = arith.addf %25, %41 : vector<8x256xf32>
    %c45 = arith.constant 45 : index
    %43 = memref.load %arg3[%c45] : memref<144xf32, #tpu.memory_space<smem>>
    %44 = vector.broadcast %43 : f32 to vector<8x256xf32>
    %45 = arith.mulf %44, %38 : vector<8x256xf32>
    %46 = arith.addf %29, %45 : vector<8x256xf32>
    %c81 = arith.constant 81 : index
    %47 = memref.load %arg3[%c81] : memref<144xf32, #tpu.memory_space<smem>>
    %48 = vector.broadcast %47 : f32 to vector<8x256xf32>
    %49 = arith.mulf %48, %38 : vector<8x256xf32>
    %50 = arith.addf %33, %49 : vector<8x256xf32>
    %c117 = arith.constant 117 : index
    %51 = memref.load %arg3[%c117] : memref<144xf32, #tpu.memory_space<smem>>
    %52 = vector.broadcast %51 : f32 to vector<8x256xf32>
    %53 = arith.mulf %52, %38 : vector<8x256xf32>
    %54 = arith.addf %37, %53 : vector<8x256xf32>
    %55 = vector.extract_strided_slice %20 {offsets = [16, 0], sizes = [8, 256], strides = [1, 1]} : vector<32x256xf32> to vector<8x256xf32>
    %c18 = arith.constant 18 : index
    %56 = memref.load %arg3[%c18] : memref<144xf32, #tpu.memory_space<smem>>
    %57 = vector.broadcast %56 : f32 to vector<8x256xf32>
    %58 = arith.mulf %57, %55 : vector<8x256xf32>
    %59 = arith.addf %42, %58 : vector<8x256xf32>
    %c54 = arith.constant 54 : index
    %60 = memref.load %arg3[%c54] : memref<144xf32, #tpu.memory_space<smem>>
    %61 = vector.broadcast %60 : f32 to vector<8x256xf32>
    %62 = arith.mulf %61, %55 : vector<8x256xf32>
    %63 = arith.addf %46, %62 : vector<8x256xf32>
    %c90 = arith.constant 90 : index
    %64 = memref.load %arg3[%c90] : memref<144xf32, #tpu.memory_space<smem>>
    %65 = vector.broadcast %64 : f32 to vector<8x256xf32>
    %66 = arith.mulf %65, %55 : vector<8x256xf32>
    %67 = arith.addf %50, %66 : vector<8x256xf32>
    %c126 = arith.constant 126 : index
    %68 = memref.load %arg3[%c126] : memref<144xf32, #tpu.memory_space<smem>>
    %69 = vector.broadcast %68 : f32 to vector<8x256xf32>
    %70 = arith.mulf %69, %55 : vector<8x256xf32>
    %71 = arith.addf %54, %70 : vector<8x256xf32>
    %72 = vector.extract_strided_slice %20 {offsets = [24, 0], sizes = [8, 256], strides = [1, 1]} : vector<32x256xf32> to vector<8x256xf32>
    %c27 = arith.constant 27 : index
    %73 = memref.load %arg3[%c27] : memref<144xf32, #tpu.memory_space<smem>>
    %74 = vector.broadcast %73 : f32 to vector<8x256xf32>
    %75 = arith.mulf %74, %72 : vector<8x256xf32>
    %76 = arith.addf %59, %75 : vector<8x256xf32>
    %c63 = arith.constant 63 : index
    %77 = memref.load %arg3[%c63] : memref<144xf32, #tpu.memory_space<smem>>
    %78 = vector.broadcast %77 : f32 to vector<8x256xf32>
    %79 = arith.mulf %78, %72 : vector<8x256xf32>
    %80 = arith.addf %63, %79 : vector<8x256xf32>
    %c99 = arith.constant 99 : index
    %81 = memref.load %arg3[%c99] : memref<144xf32, #tpu.memory_space<smem>>
    %82 = vector.broadcast %81 : f32 to vector<8x256xf32>
    %83 = arith.mulf %82, %72 : vector<8x256xf32>
    %84 = arith.addf %67, %83 : vector<8x256xf32>
    %c135 = arith.constant 135 : index
    %85 = memref.load %arg3[%c135] : memref<144xf32, #tpu.memory_space<smem>>
    %86 = vector.broadcast %85 : f32 to vector<8x256xf32>
    %87 = arith.mulf %86, %72 : vector<8x256xf32>
    %88 = arith.addf %71, %87 : vector<8x256xf32>
    %c16_i32 = arith.constant 16 : i32
    %89 = tpu.dynamic_rotate %8 by %c16_i32 dim 1 : vector<32x256xf32>, i32 -> vector<32x256xf32>
    %c1_15 = arith.constant 1 : index
    %c0_16 = arith.constant 0 : index
    %90 = vector.load %arg2[%c1_15, %c0_16] : memref<10x256xf32, #tpu.memory_space<vmem>>, vector<1x256xf32>
    %91 = vector.broadcast %90 : vector<1x256xf32> to vector<32x256xf32>
    %92 = arith.mulf %89, %91 : vector<32x256xf32>
    %93 = vector.extract_strided_slice %92 {offsets = [0, 0], sizes = [8, 256], strides = [1, 1]} : vector<32x256xf32> to vector<8x256xf32>
    %c1_17 = arith.constant 1 : index
    %94 = memref.load %arg3[%c1_17] : memref<144xf32, #tpu.memory_space<smem>>
    %95 = vector.broadcast %94 : f32 to vector<8x256xf32>
    %96 = arith.mulf %95, %93 : vector<8x256xf32>
    %97 = arith.addf %76, %96 : vector<8x256xf32>
    %c37 = arith.constant 37 : index
    %98 = memref.load %arg3[%c37] : memref<144xf32, #tpu.memory_space<smem>>
    %99 = vector.broadcast %98 : f32 to vector<8x256xf32>
    %100 = arith.mulf %99, %93 : vector<8x256xf32>
    %101 = arith.addf %80, %100 : vector<8x256xf32>
    %c73 = arith.constant 73 : index
    %102 = memref.load %arg3[%c73] : memref<144xf32, #tpu.memory_space<smem>>
    %103 = vector.broadcast %102 : f32 to vector<8x256xf32>
    %104 = arith.mulf %103, %93 : vector<8x256xf32>
    %105 = arith.addf %84, %104 : vector<8x256xf32>
    %c109 = arith.constant 109 : index
    %106 = memref.load %arg3[%c109] : memref<144xf32, #tpu.memory_space<smem>>
    %107 = vector.broadcast %106 : f32 to vector<8x256xf32>
    %108 = arith.mulf %107, %93 : vector<8x256xf32>
    %109 = arith.addf %88, %108 : vector<8x256xf32>
    %110 = vector.extract_strided_slice %92 {offsets = [8, 0], sizes = [8, 256], strides = [1, 1]} : vector<32x256xf32> to vector<8x256xf32>
    %c10 = arith.constant 10 : index
    %111 = memref.load %arg3[%c10] : memref<144xf32, #tpu.memory_space<smem>>
    %112 = vector.broadcast %111 : f32 to vector<8x256xf32>
    %113 = arith.mulf %112, %110 : vector<8x256xf32>
    %114 = arith.addf %97, %113 : vector<8x256xf32>
    %c46 = arith.constant 46 : index
    %115 = memref.load %arg3[%c46] : memref<144xf32, #tpu.memory_space<smem>>
    %116 = vector.broadcast %115 : f32 to vector<8x256xf32>
    %117 = arith.mulf %116, %110 : vector<8x256xf32>
    %118 = arith.addf %101, %117 : vector<8x256xf32>
    %c82 = arith.constant 82 : index
    %119 = memref.load %arg3[%c82] : memref<144xf32, #tpu.memory_space<smem>>
    %120 = vector.broadcast %119 : f32 to vector<8x256xf32>
    %121 = arith.mulf %120, %110 : vector<8x256xf32>
    %122 = arith.addf %105, %121 : vector<8x256xf32>
    %c118 = arith.constant 118 : index
    %123 = memref.load %arg3[%c118] : memref<144xf32, #tpu.memory_space<smem>>
    %124 = vector.broadcast %123 : f32 to vector<8x256xf32>
    %125 = arith.mulf %124, %110 : vector<8x256xf32>
    %126 = arith.addf %109, %125 : vector<8x256xf32>
    %127 = vector.extract_strided_slice %92 {offsets = [16, 0], sizes = [8, 256], strides = [1, 1]} : vector<32x256xf32> to vector<8x256xf32>
    %c19 = arith.constant 19 : index
    %128 = memref.load %arg3[%c19] : memref<144xf32, #tpu.memory_space<smem>>
    %129 = vector.broadcast %128 : f32 to vector<8x256xf32>
    %130 = arith.mulf %129, %127 : vector<8x256xf32>
    %131 = arith.addf %114, %130 : vector<8x256xf32>
    %c55 = arith.constant 55 : index
    %132 = memref.load %arg3[%c55] : memref<144xf32, #tpu.memory_space<smem>>
    %133 = vector.broadcast %132 : f32 to vector<8x256xf32>
    %134 = arith.mulf %133, %127 : vector<8x256xf32>
    %135 = arith.addf %118, %134 : vector<8x256xf32>
    %c91 = arith.constant 91 : index
    %136 = memref.load %arg3[%c91] : memref<144xf32, #tpu.memory_space<smem>>
    %137 = vector.broadcast %136 : f32 to vector<8x256xf32>
    %138 = arith.mulf %137, %127 : vector<8x256xf32>
    %139 = arith.addf %122, %138 : vector<8x256xf32>
    %c127 = arith.constant 127 : index
    %140 = memref.load %arg3[%c127] : memref<144xf32, #tpu.memory_space<smem>>
    %141 = vector.broadcast %140 : f32 to vector<8x256xf32>
    %142 = arith.mulf %141, %127 : vector<8x256xf32>
    %143 = arith.addf %126, %142 : vector<8x256xf32>
    %144 = vector.extract_strided_slice %92 {offsets = [24, 0], sizes = [8, 256], strides = [1, 1]} : vector<32x256xf32> to vector<8x256xf32>
    %c28 = arith.constant 28 : index
    %145 = memref.load %arg3[%c28] : memref<144xf32, #tpu.memory_space<smem>>
    %146 = vector.broadcast %145 : f32 to vector<8x256xf32>
    %147 = arith.mulf %146, %144 : vector<8x256xf32>
    %148 = arith.addf %131, %147 : vector<8x256xf32>
    %c64 = arith.constant 64 : index
    %149 = memref.load %arg3[%c64] : memref<144xf32, #tpu.memory_space<smem>>
    %150 = vector.broadcast %149 : f32 to vector<8x256xf32>
    %151 = arith.mulf %150, %144 : vector<8x256xf32>
    %152 = arith.addf %135, %151 : vector<8x256xf32>
    %c100 = arith.constant 100 : index
    %153 = memref.load %arg3[%c100] : memref<144xf32, #tpu.memory_space<smem>>
    %154 = vector.broadcast %153 : f32 to vector<8x256xf32>
    %155 = arith.mulf %154, %144 : vector<8x256xf32>
    %156 = arith.addf %139, %155 : vector<8x256xf32>
    %c136 = arith.constant 136 : index
    %157 = memref.load %arg3[%c136] : memref<144xf32, #tpu.memory_space<smem>>
    %158 = vector.broadcast %157 : f32 to vector<8x256xf32>
    %159 = arith.mulf %158, %144 : vector<8x256xf32>
    %160 = arith.addf %143, %159 : vector<8x256xf32>
    %c15_i32 = arith.constant 15 : i32
    %161 = tpu.dynamic_rotate %8 by %c15_i32 dim 1 : vector<32x256xf32>, i32 -> vector<32x256xf32>
    %c2_18 = arith.constant 2 : index
    %c0_19 = arith.constant 0 : index
    %162 = vector.load %arg2[%c2_18, %c0_19] : memref<10x256xf32, #tpu.memory_space<vmem>>, vector<1x256xf32>
    %163 = vector.broadcast %162 : vector<1x256xf32> to vector<32x256xf32>
    %164 = arith.mulf %161, %163 : vector<32x256xf32>
    %165 = vector.extract_strided_slice %164 {offsets = [0, 0], sizes = [8, 256], strides = [1, 1]} : vector<32x256xf32> to vector<8x256xf32>
    %c2_20 = arith.constant 2 : index
    %166 = memref.load %arg3[%c2_20] : memref<144xf32, #tpu.memory_space<smem>>
    %167 = vector.broadcast %166 : f32 to vector<8x256xf32>
    %168 = arith.mulf %167, %165 : vector<8x256xf32>
    %169 = arith.addf %148, %168 : vector<8x256xf32>
    %c38 = arith.constant 38 : index
    %170 = memref.load %arg3[%c38] : memref<144xf32, #tpu.memory_space<smem>>
    %171 = vector.broadcast %170 : f32 to vector<8x256xf32>
    %172 = arith.mulf %171, %165 : vector<8x256xf32>
    %173 = arith.addf %152, %172 : vector<8x256xf32>
    %c74 = arith.constant 74 : index
    %174 = memref.load %arg3[%c74] : memref<144xf32, #tpu.memory_space<smem>>
    %175 = vector.broadcast %174 : f32 to vector<8x256xf32>
    %176 = arith.mulf %175, %165 : vector<8x256xf32>
    %177 = arith.addf %156, %176 : vector<8x256xf32>
    %c110 = arith.constant 110 : index
    %178 = memref.load %arg3[%c110] : memref<144xf32, #tpu.memory_space<smem>>
    %179 = vector.broadcast %178 : f32 to vector<8x256xf32>
    %180 = arith.mulf %179, %165 : vector<8x256xf32>
    %181 = arith.addf %160, %180 : vector<8x256xf32>
    %182 = vector.extract_strided_slice %164 {offsets = [8, 0], sizes = [8, 256], strides = [1, 1]} : vector<32x256xf32> to vector<8x256xf32>
    %c11 = arith.constant 11 : index
    %183 = memref.load %arg3[%c11] : memref<144xf32, #tpu.memory_space<smem>>
    %184 = vector.broadcast %183 : f32 to vector<8x256xf32>
    %185 = arith.mulf %184, %182 : vector<8x256xf32>
    %186 = arith.addf %169, %185 : vector<8x256xf32>
    %c47 = arith.constant 47 : index
    %187 = memref.load %arg3[%c47] : memref<144xf32, #tpu.memory_space<smem>>
    %188 = vector.broadcast %187 : f32 to vector<8x256xf32>
    %189 = arith.mulf %188, %182 : vector<8x256xf32>
    %190 = arith.addf %173, %189 : vector<8x256xf32>
    %c83 = arith.constant 83 : index
    %191 = memref.load %arg3[%c83] : memref<144xf32, #tpu.memory_space<smem>>
    %192 = vector.broadcast %191 : f32 to vector<8x256xf32>
    %193 = arith.mulf %192, %182 : vector<8x256xf32>
    %194 = arith.addf %177, %193 : vector<8x256xf32>
    %c119 = arith.constant 119 : index
    %195 = memref.load %arg3[%c119] : memref<144xf32, #tpu.memory_space<smem>>
    %196 = vector.broadcast %195 : f32 to vector<8x256xf32>
    %197 = arith.mulf %196, %182 : vector<8x256xf32>
    %198 = arith.addf %181, %197 : vector<8x256xf32>
    %199 = vector.extract_strided_slice %164 {offsets = [16, 0], sizes = [8, 256], strides = [1, 1]} : vector<32x256xf32> to vector<8x256xf32>
    %c20 = arith.constant 20 : index
    %200 = memref.load %arg3[%c20] : memref<144xf32, #tpu.memory_space<smem>>
    %201 = vector.broadcast %200 : f32 to vector<8x256xf32>
    %202 = arith.mulf %201, %199 : vector<8x256xf32>
    %203 = arith.addf %186, %202 : vector<8x256xf32>
    %c56 = arith.constant 56 : index
    %204 = memref.load %arg3[%c56] : memref<144xf32, #tpu.memory_space<smem>>
    %205 = vector.broadcast %204 : f32 to vector<8x256xf32>
    %206 = arith.mulf %205, %199 : vector<8x256xf32>
    %207 = arith.addf %190, %206 : vector<8x256xf32>
    %c92 = arith.constant 92 : index
    %208 = memref.load %arg3[%c92] : memref<144xf32, #tpu.memory_space<smem>>
    %209 = vector.broadcast %208 : f32 to vector<8x256xf32>
    %210 = arith.mulf %209, %199 : vector<8x256xf32>
    %211 = arith.addf %194, %210 : vector<8x256xf32>
    %c128 = arith.constant 128 : index
    %212 = memref.load %arg3[%c128] : memref<144xf32, #tpu.memory_space<smem>>
    %213 = vector.broadcast %212 : f32 to vector<8x256xf32>
    %214 = arith.mulf %213, %199 : vector<8x256xf32>
    %215 = arith.addf %198, %214 : vector<8x256xf32>
    %216 = vector.extract_strided_slice %164 {offsets = [24, 0], sizes = [8, 256], strides = [1, 1]} : vector<32x256xf32> to vector<8x256xf32>
    %c29 = arith.constant 29 : index
    %217 = memref.load %arg3[%c29] : memref<144xf32, #tpu.memory_space<smem>>
    %218 = vector.broadcast %217 : f32 to vector<8x256xf32>
    %219 = arith.mulf %218, %216 : vector<8x256xf32>
    %220 = arith.addf %203, %219 : vector<8x256xf32>
    %c65 = arith.constant 65 : index
    %221 = memref.load %arg3[%c65] : memref<144xf32, #tpu.memory_space<smem>>
    %222 = vector.broadcast %221 : f32 to vector<8x256xf32>
    %223 = arith.mulf %222, %216 : vector<8x256xf32>
    %224 = arith.addf %207, %223 : vector<8x256xf32>
    %c101 = arith.constant 101 : index
    %225 = memref.load %arg3[%c101] : memref<144xf32, #tpu.memory_space<smem>>
    %226 = vector.broadcast %225 : f32 to vector<8x256xf32>
    %227 = arith.mulf %226, %216 : vector<8x256xf32>
    %228 = arith.addf %211, %227 : vector<8x256xf32>
    %c137 = arith.constant 137 : index
    %229 = memref.load %arg3[%c137] : memref<144xf32, #tpu.memory_space<smem>>
    %230 = vector.broadcast %229 : f32 to vector<8x256xf32>
    %231 = arith.mulf %230, %216 : vector<8x256xf32>
    %232 = arith.addf %215, %231 : vector<8x256xf32>
    %c1_i32 = arith.constant 1 : i32
    %233 = tpu.dynamic_rotate %8 by %c1_i32 dim 1 : vector<32x256xf32>, i32 -> vector<32x256xf32>
    %c3_21 = arith.constant 3 : index
    %c0_22 = arith.constant 0 : index
    %234 = vector.load %arg2[%c3_21, %c0_22] : memref<10x256xf32, #tpu.memory_space<vmem>>, vector<1x256xf32>
    %235 = vector.broadcast %234 : vector<1x256xf32> to vector<32x256xf32>
    %236 = arith.mulf %233, %235 : vector<32x256xf32>
    %237 = vector.extract_strided_slice %236 {offsets = [0, 0], sizes = [8, 256], strides = [1, 1]} : vector<32x256xf32> to vector<8x256xf32>
    %c3_23 = arith.constant 3 : index
    %238 = memref.load %arg3[%c3_23] : memref<144xf32, #tpu.memory_space<smem>>
    %239 = vector.broadcast %238 : f32 to vector<8x256xf32>
    %240 = arith.mulf %239, %237 : vector<8x256xf32>
    %241 = arith.addf %220, %240 : vector<8x256xf32>
    %c39 = arith.constant 39 : index
    %242 = memref.load %arg3[%c39] : memref<144xf32, #tpu.memory_space<smem>>
    %243 = vector.broadcast %242 : f32 to vector<8x256xf32>
    %244 = arith.mulf %243, %237 : vector<8x256xf32>
    %245 = arith.addf %224, %244 : vector<8x256xf32>
    %c75 = arith.constant 75 : index
    %246 = memref.load %arg3[%c75] : memref<144xf32, #tpu.memory_space<smem>>
    %247 = vector.broadcast %246 : f32 to vector<8x256xf32>
    %248 = arith.mulf %247, %237 : vector<8x256xf32>
    %249 = arith.addf %228, %248 : vector<8x256xf32>
    %c111 = arith.constant 111 : index
    %250 = memref.load %arg3[%c111] : memref<144xf32, #tpu.memory_space<smem>>
    %251 = vector.broadcast %250 : f32 to vector<8x256xf32>
    %252 = arith.mulf %251, %237 : vector<8x256xf32>
    %253 = arith.addf %232, %252 : vector<8x256xf32>
    %254 = vector.extract_strided_slice %236 {offsets = [8, 0], sizes = [8, 256], strides = [1, 1]} : vector<32x256xf32> to vector<8x256xf32>
    %c12 = arith.constant 12 : index
    %255 = memref.load %arg3[%c12] : memref<144xf32, #tpu.memory_space<smem>>
    %256 = vector.broadcast %255 : f32 to vector<8x256xf32>
    %257 = arith.mulf %256, %254 : vector<8x256xf32>
    %258 = arith.addf %241, %257 : vector<8x256xf32>
    %c48 = arith.constant 48 : index
    %259 = memref.load %arg3[%c48] : memref<144xf32, #tpu.memory_space<smem>>
    %260 = vector.broadcast %259 : f32 to vector<8x256xf32>
    %261 = arith.mulf %260, %254 : vector<8x256xf32>
    %262 = arith.addf %245, %261 : vector<8x256xf32>
    %c84 = arith.constant 84 : index
    %263 = memref.load %arg3[%c84] : memref<144xf32, #tpu.memory_space<smem>>
    %264 = vector.broadcast %263 : f32 to vector<8x256xf32>
    %265 = arith.mulf %264, %254 : vector<8x256xf32>
    %266 = arith.addf %249, %265 : vector<8x256xf32>
    %c120 = arith.constant 120 : index
    %267 = memref.load %arg3[%c120] : memref<144xf32, #tpu.memory_space<smem>>
    %268 = vector.broadcast %267 : f32 to vector<8x256xf32>
    %269 = arith.mulf %268, %254 : vector<8x256xf32>
    %270 = arith.addf %253, %269 : vector<8x256xf32>
    %271 = vector.extract_strided_slice %236 {offsets = [16, 0], sizes = [8, 256], strides = [1, 1]} : vector<32x256xf32> to vector<8x256xf32>
    %c21 = arith.constant 21 : index
    %272 = memref.load %arg3[%c21] : memref<144xf32, #tpu.memory_space<smem>>
    %273 = vector.broadcast %272 : f32 to vector<8x256xf32>
    %274 = arith.mulf %273, %271 : vector<8x256xf32>
    %275 = arith.addf %258, %274 : vector<8x256xf32>
    %c57 = arith.constant 57 : index
    %276 = memref.load %arg3[%c57] : memref<144xf32, #tpu.memory_space<smem>>
    %277 = vector.broadcast %276 : f32 to vector<8x256xf32>
    %278 = arith.mulf %277, %271 : vector<8x256xf32>
    %279 = arith.addf %262, %278 : vector<8x256xf32>
    %c93 = arith.constant 93 : index
    %280 = memref.load %arg3[%c93] : memref<144xf32, #tpu.memory_space<smem>>
    %281 = vector.broadcast %280 : f32 to vector<8x256xf32>
    %282 = arith.mulf %281, %271 : vector<8x256xf32>
    %283 = arith.addf %266, %282 : vector<8x256xf32>
    %c129 = arith.constant 129 : index
    %284 = memref.load %arg3[%c129] : memref<144xf32, #tpu.memory_space<smem>>
    %285 = vector.broadcast %284 : f32 to vector<8x256xf32>
    %286 = arith.mulf %285, %271 : vector<8x256xf32>
    %287 = arith.addf %270, %286 : vector<8x256xf32>
    %288 = vector.extract_strided_slice %236 {offsets = [24, 0], sizes = [8, 256], strides = [1, 1]} : vector<32x256xf32> to vector<8x256xf32>
    %c30 = arith.constant 30 : index
    %289 = memref.load %arg3[%c30] : memref<144xf32, #tpu.memory_space<smem>>
    %290 = vector.broadcast %289 : f32 to vector<8x256xf32>
    %291 = arith.mulf %290, %288 : vector<8x256xf32>
    %292 = arith.addf %275, %291 : vector<8x256xf32>
    %c66 = arith.constant 66 : index
    %293 = memref.load %arg3[%c66] : memref<144xf32, #tpu.memory_space<smem>>
    %294 = vector.broadcast %293 : f32 to vector<8x256xf32>
    %295 = arith.mulf %294, %288 : vector<8x256xf32>
    %296 = arith.addf %279, %295 : vector<8x256xf32>
    %c102 = arith.constant 102 : index
    %297 = memref.load %arg3[%c102] : memref<144xf32, #tpu.memory_space<smem>>
    %298 = vector.broadcast %297 : f32 to vector<8x256xf32>
    %299 = arith.mulf %298, %288 : vector<8x256xf32>
    %300 = arith.addf %283, %299 : vector<8x256xf32>
    %c138 = arith.constant 138 : index
    %301 = memref.load %arg3[%c138] : memref<144xf32, #tpu.memory_space<smem>>
    %302 = vector.broadcast %301 : f32 to vector<8x256xf32>
    %303 = arith.mulf %302, %288 : vector<8x256xf32>
    %304 = arith.addf %287, %303 : vector<8x256xf32>
    %305 = vector.extract_strided_slice %8 {offsets = [0, 0], sizes = [8, 256], strides = [1, 1]} : vector<32x256xf32> to vector<8x256xf32>
    %c4 = arith.constant 4 : index
    %306 = memref.load %arg3[%c4] : memref<144xf32, #tpu.memory_space<smem>>
    %307 = vector.broadcast %306 : f32 to vector<8x256xf32>
    %308 = arith.mulf %307, %305 : vector<8x256xf32>
    %309 = arith.addf %292, %308 : vector<8x256xf32>
    %c40 = arith.constant 40 : index
    %310 = memref.load %arg3[%c40] : memref<144xf32, #tpu.memory_space<smem>>
    %311 = vector.broadcast %310 : f32 to vector<8x256xf32>
    %312 = arith.mulf %311, %305 : vector<8x256xf32>
    %313 = arith.addf %296, %312 : vector<8x256xf32>
    %c76 = arith.constant 76 : index
    %314 = memref.load %arg3[%c76] : memref<144xf32, #tpu.memory_space<smem>>
    %315 = vector.broadcast %314 : f32 to vector<8x256xf32>
    %316 = arith.mulf %315, %305 : vector<8x256xf32>
    %317 = arith.addf %300, %316 : vector<8x256xf32>
    %c112 = arith.constant 112 : index
    %318 = memref.load %arg3[%c112] : memref<144xf32, #tpu.memory_space<smem>>
    %319 = vector.broadcast %318 : f32 to vector<8x256xf32>
    %320 = arith.mulf %319, %305 : vector<8x256xf32>
    %321 = arith.addf %304, %320 : vector<8x256xf32>
    %322 = vector.extract_strided_slice %8 {offsets = [8, 0], sizes = [8, 256], strides = [1, 1]} : vector<32x256xf32> to vector<8x256xf32>
    %c13 = arith.constant 13 : index
    %323 = memref.load %arg3[%c13] : memref<144xf32, #tpu.memory_space<smem>>
    %324 = vector.broadcast %323 : f32 to vector<8x256xf32>
    %325 = arith.mulf %324, %322 : vector<8x256xf32>
    %326 = arith.addf %309, %325 : vector<8x256xf32>
    %c49 = arith.constant 49 : index
    %327 = memref.load %arg3[%c49] : memref<144xf32, #tpu.memory_space<smem>>
    %328 = vector.broadcast %327 : f32 to vector<8x256xf32>
    %329 = arith.mulf %328, %322 : vector<8x256xf32>
    %330 = arith.addf %313, %329 : vector<8x256xf32>
    %c85 = arith.constant 85 : index
    %331 = memref.load %arg3[%c85] : memref<144xf32, #tpu.memory_space<smem>>
    %332 = vector.broadcast %331 : f32 to vector<8x256xf32>
    %333 = arith.mulf %332, %322 : vector<8x256xf32>
    %334 = arith.addf %317, %333 : vector<8x256xf32>
    %c121 = arith.constant 121 : index
    %335 = memref.load %arg3[%c121] : memref<144xf32, #tpu.memory_space<smem>>
    %336 = vector.broadcast %335 : f32 to vector<8x256xf32>
    %337 = arith.mulf %336, %322 : vector<8x256xf32>
    %338 = arith.addf %321, %337 : vector<8x256xf32>
    %339 = vector.extract_strided_slice %8 {offsets = [16, 0], sizes = [8, 256], strides = [1, 1]} : vector<32x256xf32> to vector<8x256xf32>
    %c22 = arith.constant 22 : index
    %340 = memref.load %arg3[%c22] : memref<144xf32, #tpu.memory_space<smem>>
    %341 = vector.broadcast %340 : f32 to vector<8x256xf32>
    %342 = arith.mulf %341, %339 : vector<8x256xf32>
    %343 = arith.addf %326, %342 : vector<8x256xf32>
    %c58 = arith.constant 58 : index
    %344 = memref.load %arg3[%c58] : memref<144xf32, #tpu.memory_space<smem>>
    %345 = vector.broadcast %344 : f32 to vector<8x256xf32>
    %346 = arith.mulf %345, %339 : vector<8x256xf32>
    %347 = arith.addf %330, %346 : vector<8x256xf32>
    %c94 = arith.constant 94 : index
    %348 = memref.load %arg3[%c94] : memref<144xf32, #tpu.memory_space<smem>>
    %349 = vector.broadcast %348 : f32 to vector<8x256xf32>
    %350 = arith.mulf %349, %339 : vector<8x256xf32>
    %351 = arith.addf %334, %350 : vector<8x256xf32>
    %c130 = arith.constant 130 : index
    %352 = memref.load %arg3[%c130] : memref<144xf32, #tpu.memory_space<smem>>
    %353 = vector.broadcast %352 : f32 to vector<8x256xf32>
    %354 = arith.mulf %353, %339 : vector<8x256xf32>
    %355 = arith.addf %338, %354 : vector<8x256xf32>
    %356 = vector.extract_strided_slice %8 {offsets = [24, 0], sizes = [8, 256], strides = [1, 1]} : vector<32x256xf32> to vector<8x256xf32>
    %c31 = arith.constant 31 : index
    %357 = memref.load %arg3[%c31] : memref<144xf32, #tpu.memory_space<smem>>
    %358 = vector.broadcast %357 : f32 to vector<8x256xf32>
    %359 = arith.mulf %358, %356 : vector<8x256xf32>
    %360 = arith.addf %343, %359 : vector<8x256xf32>
    %c67 = arith.constant 67 : index
    %361 = memref.load %arg3[%c67] : memref<144xf32, #tpu.memory_space<smem>>
    %362 = vector.broadcast %361 : f32 to vector<8x256xf32>
    %363 = arith.mulf %362, %356 : vector<8x256xf32>
    %364 = arith.addf %347, %363 : vector<8x256xf32>
    %c103 = arith.constant 103 : index
    %365 = memref.load %arg3[%c103] : memref<144xf32, #tpu.memory_space<smem>>
    %366 = vector.broadcast %365 : f32 to vector<8x256xf32>
    %367 = arith.mulf %366, %356 : vector<8x256xf32>
    %368 = arith.addf %351, %367 : vector<8x256xf32>
    %c139 = arith.constant 139 : index
    %369 = memref.load %arg3[%c139] : memref<144xf32, #tpu.memory_space<smem>>
    %370 = vector.broadcast %369 : f32 to vector<8x256xf32>
    %371 = arith.mulf %370, %356 : vector<8x256xf32>
    %372 = arith.addf %355, %371 : vector<8x256xf32>
    %c255_i32 = arith.constant 255 : i32
    %373 = tpu.dynamic_rotate %8 by %c255_i32 dim 1 : vector<32x256xf32>, i32 -> vector<32x256xf32>
    %c5 = arith.constant 5 : index
    %c0_24 = arith.constant 0 : index
    %374 = vector.load %arg2[%c5, %c0_24] : memref<10x256xf32, #tpu.memory_space<vmem>>, vector<1x256xf32>
    %375 = vector.broadcast %374 : vector<1x256xf32> to vector<32x256xf32>
    %376 = arith.mulf %373, %375 : vector<32x256xf32>
    %377 = vector.extract_strided_slice %376 {offsets = [0, 0], sizes = [8, 256], strides = [1, 1]} : vector<32x256xf32> to vector<8x256xf32>
    %c5_25 = arith.constant 5 : index
    %378 = memref.load %arg3[%c5_25] : memref<144xf32, #tpu.memory_space<smem>>
    %379 = vector.broadcast %378 : f32 to vector<8x256xf32>
    %380 = arith.mulf %379, %377 : vector<8x256xf32>
    %381 = arith.addf %360, %380 : vector<8x256xf32>
    %c41 = arith.constant 41 : index
    %382 = memref.load %arg3[%c41] : memref<144xf32, #tpu.memory_space<smem>>
    %383 = vector.broadcast %382 : f32 to vector<8x256xf32>
    %384 = arith.mulf %383, %377 : vector<8x256xf32>
    %385 = arith.addf %364, %384 : vector<8x256xf32>
    %c77 = arith.constant 77 : index
    %386 = memref.load %arg3[%c77] : memref<144xf32, #tpu.memory_space<smem>>
    %387 = vector.broadcast %386 : f32 to vector<8x256xf32>
    %388 = arith.mulf %387, %377 : vector<8x256xf32>
    %389 = arith.addf %368, %388 : vector<8x256xf32>
    %c113 = arith.constant 113 : index
    %390 = memref.load %arg3[%c113] : memref<144xf32, #tpu.memory_space<smem>>
    %391 = vector.broadcast %390 : f32 to vector<8x256xf32>
    %392 = arith.mulf %391, %377 : vector<8x256xf32>
    %393 = arith.addf %372, %392 : vector<8x256xf32>
    %394 = vector.extract_strided_slice %376 {offsets = [8, 0], sizes = [8, 256], strides = [1, 1]} : vector<32x256xf32> to vector<8x256xf32>
    %c14 = arith.constant 14 : index
    %395 = memref.load %arg3[%c14] : memref<144xf32, #tpu.memory_space<smem>>
    %396 = vector.broadcast %395 : f32 to vector<8x256xf32>
    %397 = arith.mulf %396, %394 : vector<8x256xf32>
    %398 = arith.addf %381, %397 : vector<8x256xf32>
    %c50 = arith.constant 50 : index
    %399 = memref.load %arg3[%c50] : memref<144xf32, #tpu.memory_space<smem>>
    %400 = vector.broadcast %399 : f32 to vector<8x256xf32>
    %401 = arith.mulf %400, %394 : vector<8x256xf32>
    %402 = arith.addf %385, %401 : vector<8x256xf32>
    %c86 = arith.constant 86 : index
    %403 = memref.load %arg3[%c86] : memref<144xf32, #tpu.memory_space<smem>>
    %404 = vector.broadcast %403 : f32 to vector<8x256xf32>
    %405 = arith.mulf %404, %394 : vector<8x256xf32>
    %406 = arith.addf %389, %405 : vector<8x256xf32>
    %c122 = arith.constant 122 : index
    %407 = memref.load %arg3[%c122] : memref<144xf32, #tpu.memory_space<smem>>
    %408 = vector.broadcast %407 : f32 to vector<8x256xf32>
    %409 = arith.mulf %408, %394 : vector<8x256xf32>
    %410 = arith.addf %393, %409 : vector<8x256xf32>
    %411 = vector.extract_strided_slice %376 {offsets = [16, 0], sizes = [8, 256], strides = [1, 1]} : vector<32x256xf32> to vector<8x256xf32>
    %c23 = arith.constant 23 : index
    %412 = memref.load %arg3[%c23] : memref<144xf32, #tpu.memory_space<smem>>
    %413 = vector.broadcast %412 : f32 to vector<8x256xf32>
    %414 = arith.mulf %413, %411 : vector<8x256xf32>
    %415 = arith.addf %398, %414 : vector<8x256xf32>
    %c59 = arith.constant 59 : index
    %416 = memref.load %arg3[%c59] : memref<144xf32, #tpu.memory_space<smem>>
    %417 = vector.broadcast %416 : f32 to vector<8x256xf32>
    %418 = arith.mulf %417, %411 : vector<8x256xf32>
    %419 = arith.addf %402, %418 : vector<8x256xf32>
    %c95 = arith.constant 95 : index
    %420 = memref.load %arg3[%c95] : memref<144xf32, #tpu.memory_space<smem>>
    %421 = vector.broadcast %420 : f32 to vector<8x256xf32>
    %422 = arith.mulf %421, %411 : vector<8x256xf32>
    %423 = arith.addf %406, %422 : vector<8x256xf32>
    %c131 = arith.constant 131 : index
    %424 = memref.load %arg3[%c131] : memref<144xf32, #tpu.memory_space<smem>>
    %425 = vector.broadcast %424 : f32 to vector<8x256xf32>
    %426 = arith.mulf %425, %411 : vector<8x256xf32>
    %427 = arith.addf %410, %426 : vector<8x256xf32>
    %428 = vector.extract_strided_slice %376 {offsets = [24, 0], sizes = [8, 256], strides = [1, 1]} : vector<32x256xf32> to vector<8x256xf32>
    %c32 = arith.constant 32 : index
    %429 = memref.load %arg3[%c32] : memref<144xf32, #tpu.memory_space<smem>>
    %430 = vector.broadcast %429 : f32 to vector<8x256xf32>
    %431 = arith.mulf %430, %428 : vector<8x256xf32>
    %432 = arith.addf %415, %431 : vector<8x256xf32>
    %c68 = arith.constant 68 : index
    %433 = memref.load %arg3[%c68] : memref<144xf32, #tpu.memory_space<smem>>
    %434 = vector.broadcast %433 : f32 to vector<8x256xf32>
    %435 = arith.mulf %434, %428 : vector<8x256xf32>
    %436 = arith.addf %419, %435 : vector<8x256xf32>
    %c104 = arith.constant 104 : index
    %437 = memref.load %arg3[%c104] : memref<144xf32, #tpu.memory_space<smem>>
    %438 = vector.broadcast %437 : f32 to vector<8x256xf32>
    %439 = arith.mulf %438, %428 : vector<8x256xf32>
    %440 = arith.addf %423, %439 : vector<8x256xf32>
    %c140 = arith.constant 140 : index
    %441 = memref.load %arg3[%c140] : memref<144xf32, #tpu.memory_space<smem>>
    %442 = vector.broadcast %441 : f32 to vector<8x256xf32>
    %443 = arith.mulf %442, %428 : vector<8x256xf32>
    %444 = arith.addf %427, %443 : vector<8x256xf32>
    %c241_i32 = arith.constant 241 : i32
    %445 = tpu.dynamic_rotate %8 by %c241_i32 dim 1 : vector<32x256xf32>, i32 -> vector<32x256xf32>
    %c6 = arith.constant 6 : index
    %c0_26 = arith.constant 0 : index
    %446 = vector.load %arg2[%c6, %c0_26] : memref<10x256xf32, #tpu.memory_space<vmem>>, vector<1x256xf32>
    %447 = vector.broadcast %446 : vector<1x256xf32> to vector<32x256xf32>
    %448 = arith.mulf %445, %447 : vector<32x256xf32>
    %449 = vector.extract_strided_slice %448 {offsets = [0, 0], sizes = [8, 256], strides = [1, 1]} : vector<32x256xf32> to vector<8x256xf32>
    %c6_27 = arith.constant 6 : index
    %450 = memref.load %arg3[%c6_27] : memref<144xf32, #tpu.memory_space<smem>>
    %451 = vector.broadcast %450 : f32 to vector<8x256xf32>
    %452 = arith.mulf %451, %449 : vector<8x256xf32>
    %453 = arith.addf %432, %452 : vector<8x256xf32>
    %c42 = arith.constant 42 : index
    %454 = memref.load %arg3[%c42] : memref<144xf32, #tpu.memory_space<smem>>
    %455 = vector.broadcast %454 : f32 to vector<8x256xf32>
    %456 = arith.mulf %455, %449 : vector<8x256xf32>
    %457 = arith.addf %436, %456 : vector<8x256xf32>
    %c78 = arith.constant 78 : index
    %458 = memref.load %arg3[%c78] : memref<144xf32, #tpu.memory_space<smem>>
    %459 = vector.broadcast %458 : f32 to vector<8x256xf32>
    %460 = arith.mulf %459, %449 : vector<8x256xf32>
    %461 = arith.addf %440, %460 : vector<8x256xf32>
    %c114 = arith.constant 114 : index
    %462 = memref.load %arg3[%c114] : memref<144xf32, #tpu.memory_space<smem>>
    %463 = vector.broadcast %462 : f32 to vector<8x256xf32>
    %464 = arith.mulf %463, %449 : vector<8x256xf32>
    %465 = arith.addf %444, %464 : vector<8x256xf32>
    %466 = vector.extract_strided_slice %448 {offsets = [8, 0], sizes = [8, 256], strides = [1, 1]} : vector<32x256xf32> to vector<8x256xf32>
    %c15 = arith.constant 15 : index
    %467 = memref.load %arg3[%c15] : memref<144xf32, #tpu.memory_space<smem>>
    %468 = vector.broadcast %467 : f32 to vector<8x256xf32>
    %469 = arith.mulf %468, %466 : vector<8x256xf32>
    %470 = arith.addf %453, %469 : vector<8x256xf32>
    %c51 = arith.constant 51 : index
    %471 = memref.load %arg3[%c51] : memref<144xf32, #tpu.memory_space<smem>>
    %472 = vector.broadcast %471 : f32 to vector<8x256xf32>
    %473 = arith.mulf %472, %466 : vector<8x256xf32>
    %474 = arith.addf %457, %473 : vector<8x256xf32>
    %c87 = arith.constant 87 : index
    %475 = memref.load %arg3[%c87] : memref<144xf32, #tpu.memory_space<smem>>
    %476 = vector.broadcast %475 : f32 to vector<8x256xf32>
    %477 = arith.mulf %476, %466 : vector<8x256xf32>
    %478 = arith.addf %461, %477 : vector<8x256xf32>
    %c123 = arith.constant 123 : index
    %479 = memref.load %arg3[%c123] : memref<144xf32, #tpu.memory_space<smem>>
    %480 = vector.broadcast %479 : f32 to vector<8x256xf32>
    %481 = arith.mulf %480, %466 : vector<8x256xf32>
    %482 = arith.addf %465, %481 : vector<8x256xf32>
    %483 = vector.extract_strided_slice %448 {offsets = [16, 0], sizes = [8, 256], strides = [1, 1]} : vector<32x256xf32> to vector<8x256xf32>
    %c24 = arith.constant 24 : index
    %484 = memref.load %arg3[%c24] : memref<144xf32, #tpu.memory_space<smem>>
    %485 = vector.broadcast %484 : f32 to vector<8x256xf32>
    %486 = arith.mulf %485, %483 : vector<8x256xf32>
    %487 = arith.addf %470, %486 : vector<8x256xf32>
    %c60 = arith.constant 60 : index
    %488 = memref.load %arg3[%c60] : memref<144xf32, #tpu.memory_space<smem>>
    %489 = vector.broadcast %488 : f32 to vector<8x256xf32>
    %490 = arith.mulf %489, %483 : vector<8x256xf32>
    %491 = arith.addf %474, %490 : vector<8x256xf32>
    %c96 = arith.constant 96 : index
    %492 = memref.load %arg3[%c96] : memref<144xf32, #tpu.memory_space<smem>>
    %493 = vector.broadcast %492 : f32 to vector<8x256xf32>
    %494 = arith.mulf %493, %483 : vector<8x256xf32>
    %495 = arith.addf %478, %494 : vector<8x256xf32>
    %c132 = arith.constant 132 : index
    %496 = memref.load %arg3[%c132] : memref<144xf32, #tpu.memory_space<smem>>
    %497 = vector.broadcast %496 : f32 to vector<8x256xf32>
    %498 = arith.mulf %497, %483 : vector<8x256xf32>
    %499 = arith.addf %482, %498 : vector<8x256xf32>
    %500 = vector.extract_strided_slice %448 {offsets = [24, 0], sizes = [8, 256], strides = [1, 1]} : vector<32x256xf32> to vector<8x256xf32>
    %c33 = arith.constant 33 : index
    %501 = memref.load %arg3[%c33] : memref<144xf32, #tpu.memory_space<smem>>
    %502 = vector.broadcast %501 : f32 to vector<8x256xf32>
    %503 = arith.mulf %502, %500 : vector<8x256xf32>
    %504 = arith.addf %487, %503 : vector<8x256xf32>
    %c69 = arith.constant 69 : index
    %505 = memref.load %arg3[%c69] : memref<144xf32, #tpu.memory_space<smem>>
    %506 = vector.broadcast %505 : f32 to vector<8x256xf32>
    %507 = arith.mulf %506, %500 : vector<8x256xf32>
    %508 = arith.addf %491, %507 : vector<8x256xf32>
    %c105 = arith.constant 105 : index
    %509 = memref.load %arg3[%c105] : memref<144xf32, #tpu.memory_space<smem>>
    %510 = vector.broadcast %509 : f32 to vector<8x256xf32>
    %511 = arith.mulf %510, %500 : vector<8x256xf32>
    %512 = arith.addf %495, %511 : vector<8x256xf32>
    %c141 = arith.constant 141 : index
    %513 = memref.load %arg3[%c141] : memref<144xf32, #tpu.memory_space<smem>>
    %514 = vector.broadcast %513 : f32 to vector<8x256xf32>
    %515 = arith.mulf %514, %500 : vector<8x256xf32>
    %516 = arith.addf %499, %515 : vector<8x256xf32>
    %c240_i32 = arith.constant 240 : i32
    %517 = tpu.dynamic_rotate %8 by %c240_i32 dim 1 : vector<32x256xf32>, i32 -> vector<32x256xf32>
    %c7 = arith.constant 7 : index
    %c0_28 = arith.constant 0 : index
    %518 = vector.load %arg2[%c7, %c0_28] : memref<10x256xf32, #tpu.memory_space<vmem>>, vector<1x256xf32>
    %519 = vector.broadcast %518 : vector<1x256xf32> to vector<32x256xf32>
    %520 = arith.mulf %517, %519 : vector<32x256xf32>
    %521 = vector.extract_strided_slice %520 {offsets = [0, 0], sizes = [8, 256], strides = [1, 1]} : vector<32x256xf32> to vector<8x256xf32>
    %c7_29 = arith.constant 7 : index
    %522 = memref.load %arg3[%c7_29] : memref<144xf32, #tpu.memory_space<smem>>
    %523 = vector.broadcast %522 : f32 to vector<8x256xf32>
    %524 = arith.mulf %523, %521 : vector<8x256xf32>
    %525 = arith.addf %504, %524 : vector<8x256xf32>
    %c43 = arith.constant 43 : index
    %526 = memref.load %arg3[%c43] : memref<144xf32, #tpu.memory_space<smem>>
    %527 = vector.broadcast %526 : f32 to vector<8x256xf32>
    %528 = arith.mulf %527, %521 : vector<8x256xf32>
    %529 = arith.addf %508, %528 : vector<8x256xf32>
    %c79 = arith.constant 79 : index
    %530 = memref.load %arg3[%c79] : memref<144xf32, #tpu.memory_space<smem>>
    %531 = vector.broadcast %530 : f32 to vector<8x256xf32>
    %532 = arith.mulf %531, %521 : vector<8x256xf32>
    %533 = arith.addf %512, %532 : vector<8x256xf32>
    %c115 = arith.constant 115 : index
    %534 = memref.load %arg3[%c115] : memref<144xf32, #tpu.memory_space<smem>>
    %535 = vector.broadcast %534 : f32 to vector<8x256xf32>
    %536 = arith.mulf %535, %521 : vector<8x256xf32>
    %537 = arith.addf %516, %536 : vector<8x256xf32>
    %538 = vector.extract_strided_slice %520 {offsets = [8, 0], sizes = [8, 256], strides = [1, 1]} : vector<32x256xf32> to vector<8x256xf32>
    %c16 = arith.constant 16 : index
    %539 = memref.load %arg3[%c16] : memref<144xf32, #tpu.memory_space<smem>>
    %540 = vector.broadcast %539 : f32 to vector<8x256xf32>
    %541 = arith.mulf %540, %538 : vector<8x256xf32>
    %542 = arith.addf %525, %541 : vector<8x256xf32>
    %c52 = arith.constant 52 : index
    %543 = memref.load %arg3[%c52] : memref<144xf32, #tpu.memory_space<smem>>
    %544 = vector.broadcast %543 : f32 to vector<8x256xf32>
    %545 = arith.mulf %544, %538 : vector<8x256xf32>
    %546 = arith.addf %529, %545 : vector<8x256xf32>
    %c88 = arith.constant 88 : index
    %547 = memref.load %arg3[%c88] : memref<144xf32, #tpu.memory_space<smem>>
    %548 = vector.broadcast %547 : f32 to vector<8x256xf32>
    %549 = arith.mulf %548, %538 : vector<8x256xf32>
    %550 = arith.addf %533, %549 : vector<8x256xf32>
    %c124 = arith.constant 124 : index
    %551 = memref.load %arg3[%c124] : memref<144xf32, #tpu.memory_space<smem>>
    %552 = vector.broadcast %551 : f32 to vector<8x256xf32>
    %553 = arith.mulf %552, %538 : vector<8x256xf32>
    %554 = arith.addf %537, %553 : vector<8x256xf32>
    %555 = vector.extract_strided_slice %520 {offsets = [16, 0], sizes = [8, 256], strides = [1, 1]} : vector<32x256xf32> to vector<8x256xf32>
    %c25 = arith.constant 25 : index
    %556 = memref.load %arg3[%c25] : memref<144xf32, #tpu.memory_space<smem>>
    %557 = vector.broadcast %556 : f32 to vector<8x256xf32>
    %558 = arith.mulf %557, %555 : vector<8x256xf32>
    %559 = arith.addf %542, %558 : vector<8x256xf32>
    %c61 = arith.constant 61 : index
    %560 = memref.load %arg3[%c61] : memref<144xf32, #tpu.memory_space<smem>>
    %561 = vector.broadcast %560 : f32 to vector<8x256xf32>
    %562 = arith.mulf %561, %555 : vector<8x256xf32>
    %563 = arith.addf %546, %562 : vector<8x256xf32>
    %c97 = arith.constant 97 : index
    %564 = memref.load %arg3[%c97] : memref<144xf32, #tpu.memory_space<smem>>
    %565 = vector.broadcast %564 : f32 to vector<8x256xf32>
    %566 = arith.mulf %565, %555 : vector<8x256xf32>
    %567 = arith.addf %550, %566 : vector<8x256xf32>
    %c133 = arith.constant 133 : index
    %568 = memref.load %arg3[%c133] : memref<144xf32, #tpu.memory_space<smem>>
    %569 = vector.broadcast %568 : f32 to vector<8x256xf32>
    %570 = arith.mulf %569, %555 : vector<8x256xf32>
    %571 = arith.addf %554, %570 : vector<8x256xf32>
    %572 = vector.extract_strided_slice %520 {offsets = [24, 0], sizes = [8, 256], strides = [1, 1]} : vector<32x256xf32> to vector<8x256xf32>
    %c34 = arith.constant 34 : index
    %573 = memref.load %arg3[%c34] : memref<144xf32, #tpu.memory_space<smem>>
    %574 = vector.broadcast %573 : f32 to vector<8x256xf32>
    %575 = arith.mulf %574, %572 : vector<8x256xf32>
    %576 = arith.addf %559, %575 : vector<8x256xf32>
    %c70 = arith.constant 70 : index
    %577 = memref.load %arg3[%c70] : memref<144xf32, #tpu.memory_space<smem>>
    %578 = vector.broadcast %577 : f32 to vector<8x256xf32>
    %579 = arith.mulf %578, %572 : vector<8x256xf32>
    %580 = arith.addf %563, %579 : vector<8x256xf32>
    %c106 = arith.constant 106 : index
    %581 = memref.load %arg3[%c106] : memref<144xf32, #tpu.memory_space<smem>>
    %582 = vector.broadcast %581 : f32 to vector<8x256xf32>
    %583 = arith.mulf %582, %572 : vector<8x256xf32>
    %584 = arith.addf %567, %583 : vector<8x256xf32>
    %c142 = arith.constant 142 : index
    %585 = memref.load %arg3[%c142] : memref<144xf32, #tpu.memory_space<smem>>
    %586 = vector.broadcast %585 : f32 to vector<8x256xf32>
    %587 = arith.mulf %586, %572 : vector<8x256xf32>
    %588 = arith.addf %571, %587 : vector<8x256xf32>
    %c239_i32 = arith.constant 239 : i32
    %589 = tpu.dynamic_rotate %8 by %c239_i32 dim 1 : vector<32x256xf32>, i32 -> vector<32x256xf32>
    %c8 = arith.constant 8 : index
    %c0_30 = arith.constant 0 : index
    %590 = vector.load %arg2[%c8, %c0_30] : memref<10x256xf32, #tpu.memory_space<vmem>>, vector<1x256xf32>
    %591 = vector.broadcast %590 : vector<1x256xf32> to vector<32x256xf32>
    %592 = arith.mulf %589, %591 : vector<32x256xf32>
    %593 = vector.extract_strided_slice %592 {offsets = [0, 0], sizes = [8, 256], strides = [1, 1]} : vector<32x256xf32> to vector<8x256xf32>
    %c8_31 = arith.constant 8 : index
    %594 = memref.load %arg3[%c8_31] : memref<144xf32, #tpu.memory_space<smem>>
    %595 = vector.broadcast %594 : f32 to vector<8x256xf32>
    %596 = arith.mulf %595, %593 : vector<8x256xf32>
    %597 = arith.addf %576, %596 : vector<8x256xf32>
    %c44 = arith.constant 44 : index
    %598 = memref.load %arg3[%c44] : memref<144xf32, #tpu.memory_space<smem>>
    %599 = vector.broadcast %598 : f32 to vector<8x256xf32>
    %600 = arith.mulf %599, %593 : vector<8x256xf32>
    %601 = arith.addf %580, %600 : vector<8x256xf32>
    %c80 = arith.constant 80 : index
    %602 = memref.load %arg3[%c80] : memref<144xf32, #tpu.memory_space<smem>>
    %603 = vector.broadcast %602 : f32 to vector<8x256xf32>
    %604 = arith.mulf %603, %593 : vector<8x256xf32>
    %605 = arith.addf %584, %604 : vector<8x256xf32>
    %c116 = arith.constant 116 : index
    %606 = memref.load %arg3[%c116] : memref<144xf32, #tpu.memory_space<smem>>
    %607 = vector.broadcast %606 : f32 to vector<8x256xf32>
    %608 = arith.mulf %607, %593 : vector<8x256xf32>
    %609 = arith.addf %588, %608 : vector<8x256xf32>
    %610 = vector.extract_strided_slice %592 {offsets = [8, 0], sizes = [8, 256], strides = [1, 1]} : vector<32x256xf32> to vector<8x256xf32>
    %c17 = arith.constant 17 : index
    %611 = memref.load %arg3[%c17] : memref<144xf32, #tpu.memory_space<smem>>
    %612 = vector.broadcast %611 : f32 to vector<8x256xf32>
    %613 = arith.mulf %612, %610 : vector<8x256xf32>
    %614 = arith.addf %597, %613 : vector<8x256xf32>
    %c53 = arith.constant 53 : index
    %615 = memref.load %arg3[%c53] : memref<144xf32, #tpu.memory_space<smem>>
    %616 = vector.broadcast %615 : f32 to vector<8x256xf32>
    %617 = arith.mulf %616, %610 : vector<8x256xf32>
    %618 = arith.addf %601, %617 : vector<8x256xf32>
    %c89 = arith.constant 89 : index
    %619 = memref.load %arg3[%c89] : memref<144xf32, #tpu.memory_space<smem>>
    %620 = vector.broadcast %619 : f32 to vector<8x256xf32>
    %621 = arith.mulf %620, %610 : vector<8x256xf32>
    %622 = arith.addf %605, %621 : vector<8x256xf32>
    %c125 = arith.constant 125 : index
    %623 = memref.load %arg3[%c125] : memref<144xf32, #tpu.memory_space<smem>>
    %624 = vector.broadcast %623 : f32 to vector<8x256xf32>
    %625 = arith.mulf %624, %610 : vector<8x256xf32>
    %626 = arith.addf %609, %625 : vector<8x256xf32>
    %627 = vector.extract_strided_slice %592 {offsets = [16, 0], sizes = [8, 256], strides = [1, 1]} : vector<32x256xf32> to vector<8x256xf32>
    %c26 = arith.constant 26 : index
    %628 = memref.load %arg3[%c26] : memref<144xf32, #tpu.memory_space<smem>>
    %629 = vector.broadcast %628 : f32 to vector<8x256xf32>
    %630 = arith.mulf %629, %627 : vector<8x256xf32>
    %631 = arith.addf %614, %630 : vector<8x256xf32>
    %c62 = arith.constant 62 : index
    %632 = memref.load %arg3[%c62] : memref<144xf32, #tpu.memory_space<smem>>
    %633 = vector.broadcast %632 : f32 to vector<8x256xf32>
    %634 = arith.mulf %633, %627 : vector<8x256xf32>
    %635 = arith.addf %618, %634 : vector<8x256xf32>
    %c98 = arith.constant 98 : index
    %636 = memref.load %arg3[%c98] : memref<144xf32, #tpu.memory_space<smem>>
    %637 = vector.broadcast %636 : f32 to vector<8x256xf32>
    %638 = arith.mulf %637, %627 : vector<8x256xf32>
    %639 = arith.addf %622, %638 : vector<8x256xf32>
    %c134 = arith.constant 134 : index
    %640 = memref.load %arg3[%c134] : memref<144xf32, #tpu.memory_space<smem>>
    %641 = vector.broadcast %640 : f32 to vector<8x256xf32>
    %642 = arith.mulf %641, %627 : vector<8x256xf32>
    %643 = arith.addf %626, %642 : vector<8x256xf32>
    %644 = vector.extract_strided_slice %592 {offsets = [24, 0], sizes = [8, 256], strides = [1, 1]} : vector<32x256xf32> to vector<8x256xf32>
    %c35 = arith.constant 35 : index
    %645 = memref.load %arg3[%c35] : memref<144xf32, #tpu.memory_space<smem>>
    %646 = vector.broadcast %645 : f32 to vector<8x256xf32>
    %647 = arith.mulf %646, %644 : vector<8x256xf32>
    %648 = arith.addf %631, %647 : vector<8x256xf32>
    %c71 = arith.constant 71 : index
    %649 = memref.load %arg3[%c71] : memref<144xf32, #tpu.memory_space<smem>>
    %650 = vector.broadcast %649 : f32 to vector<8x256xf32>
    %651 = arith.mulf %650, %644 : vector<8x256xf32>
    %652 = arith.addf %635, %651 : vector<8x256xf32>
    %c107 = arith.constant 107 : index
    %653 = memref.load %arg3[%c107] : memref<144xf32, #tpu.memory_space<smem>>
    %654 = vector.broadcast %653 : f32 to vector<8x256xf32>
    %655 = arith.mulf %654, %644 : vector<8x256xf32>
    %656 = arith.addf %639, %655 : vector<8x256xf32>
    %c143 = arith.constant 143 : index
    %657 = memref.load %arg3[%c143] : memref<144xf32, #tpu.memory_space<smem>>
    %658 = vector.broadcast %657 : f32 to vector<8x256xf32>
    %659 = arith.mulf %658, %644 : vector<8x256xf32>
    %660 = arith.addf %643, %659 : vector<8x256xf32>
    %661 = tpu.concatenate %648, %652, %656, %660 in 0 : vector<8x256xf32>, vector<8x256xf32>, vector<8x256xf32>, vector<8x256xf32> -> vector<32x256xf32>
    %c0_32 = arith.constant 0 : index
    %662 = memref.load %arg6[%c0_32] : memref<4xf32, #tpu.memory_space<smem>>
    %663 = vector.broadcast %662 : f32 to vector<8x256xf32>
    %c1_33 = arith.constant 1 : index
    %664 = memref.load %arg6[%c1_33] : memref<4xf32, #tpu.memory_space<smem>>
    %665 = vector.broadcast %664 : f32 to vector<8x256xf32>
    %c2_34 = arith.constant 2 : index
    %666 = memref.load %arg6[%c2_34] : memref<4xf32, #tpu.memory_space<smem>>
    %667 = vector.broadcast %666 : f32 to vector<8x256xf32>
    %c3_35 = arith.constant 3 : index
    %668 = memref.load %arg6[%c3_35] : memref<4xf32, #tpu.memory_space<smem>>
    %669 = vector.broadcast %668 : f32 to vector<8x256xf32>
    %c17_i32_36 = arith.constant 17 : i32
    %670 = tpu.dynamic_rotate %661 by %c17_i32_36 dim 1 : vector<32x256xf32>, i32 -> vector<32x256xf32>
    %c0_37 = arith.constant 0 : index
    %c0_38 = arith.constant 0 : index
    %671 = vector.load %arg2[%c0_37, %c0_38] : memref<10x256xf32, #tpu.memory_space<vmem>>, vector<1x256xf32>
    %672 = vector.broadcast %671 : vector<1x256xf32> to vector<32x256xf32>
    %673 = arith.mulf %670, %672 : vector<32x256xf32>
    %674 = vector.extract_strided_slice %673 {offsets = [0, 0], sizes = [8, 256], strides = [1, 1]} : vector<32x256xf32> to vector<8x256xf32>
    %c0_39 = arith.constant 0 : index
    %675 = memref.load %arg5[%c0_39] : memref<144xf32, #tpu.memory_space<smem>>
    %676 = vector.broadcast %675 : f32 to vector<8x256xf32>
    %677 = arith.mulf %676, %674 : vector<8x256xf32>
    %678 = arith.addf %663, %677 : vector<8x256xf32>
    %c36_40 = arith.constant 36 : index
    %679 = memref.load %arg5[%c36_40] : memref<144xf32, #tpu.memory_space<smem>>
    %680 = vector.broadcast %679 : f32 to vector<8x256xf32>
    %681 = arith.mulf %680, %674 : vector<8x256xf32>
    %682 = arith.addf %665, %681 : vector<8x256xf32>
    %c72_41 = arith.constant 72 : index
    %683 = memref.load %arg5[%c72_41] : memref<144xf32, #tpu.memory_space<smem>>
    %684 = vector.broadcast %683 : f32 to vector<8x256xf32>
    %685 = arith.mulf %684, %674 : vector<8x256xf32>
    %686 = arith.addf %667, %685 : vector<8x256xf32>
    %c108_42 = arith.constant 108 : index
    %687 = memref.load %arg5[%c108_42] : memref<144xf32, #tpu.memory_space<smem>>
    %688 = vector.broadcast %687 : f32 to vector<8x256xf32>
    %689 = arith.mulf %688, %674 : vector<8x256xf32>
    %690 = arith.addf %669, %689 : vector<8x256xf32>
    %691 = vector.extract_strided_slice %673 {offsets = [8, 0], sizes = [8, 256], strides = [1, 1]} : vector<32x256xf32> to vector<8x256xf32>
    %c9_43 = arith.constant 9 : index
    %692 = memref.load %arg5[%c9_43] : memref<144xf32, #tpu.memory_space<smem>>
    %693 = vector.broadcast %692 : f32 to vector<8x256xf32>
    %694 = arith.mulf %693, %691 : vector<8x256xf32>
    %695 = arith.addf %678, %694 : vector<8x256xf32>
    %c45_44 = arith.constant 45 : index
    %696 = memref.load %arg5[%c45_44] : memref<144xf32, #tpu.memory_space<smem>>
    %697 = vector.broadcast %696 : f32 to vector<8x256xf32>
    %698 = arith.mulf %697, %691 : vector<8x256xf32>
    %699 = arith.addf %682, %698 : vector<8x256xf32>
    %c81_45 = arith.constant 81 : index
    %700 = memref.load %arg5[%c81_45] : memref<144xf32, #tpu.memory_space<smem>>
    %701 = vector.broadcast %700 : f32 to vector<8x256xf32>
    %702 = arith.mulf %701, %691 : vector<8x256xf32>
    %703 = arith.addf %686, %702 : vector<8x256xf32>
    %c117_46 = arith.constant 117 : index
    %704 = memref.load %arg5[%c117_46] : memref<144xf32, #tpu.memory_space<smem>>
    %705 = vector.broadcast %704 : f32 to vector<8x256xf32>
    %706 = arith.mulf %705, %691 : vector<8x256xf32>
    %707 = arith.addf %690, %706 : vector<8x256xf32>
    %708 = vector.extract_strided_slice %673 {offsets = [16, 0], sizes = [8, 256], strides = [1, 1]} : vector<32x256xf32> to vector<8x256xf32>
    %c18_47 = arith.constant 18 : index
    %709 = memref.load %arg5[%c18_47] : memref<144xf32, #tpu.memory_space<smem>>
    %710 = vector.broadcast %709 : f32 to vector<8x256xf32>
    %711 = arith.mulf %710, %708 : vector<8x256xf32>
    %712 = arith.addf %695, %711 : vector<8x256xf32>
    %c54_48 = arith.constant 54 : index
    %713 = memref.load %arg5[%c54_48] : memref<144xf32, #tpu.memory_space<smem>>
    %714 = vector.broadcast %713 : f32 to vector<8x256xf32>
    %715 = arith.mulf %714, %708 : vector<8x256xf32>
    %716 = arith.addf %699, %715 : vector<8x256xf32>
    %c90_49 = arith.constant 90 : index
    %717 = memref.load %arg5[%c90_49] : memref<144xf32, #tpu.memory_space<smem>>
    %718 = vector.broadcast %717 : f32 to vector<8x256xf32>
    %719 = arith.mulf %718, %708 : vector<8x256xf32>
    %720 = arith.addf %703, %719 : vector<8x256xf32>
    %c126_50 = arith.constant 126 : index
    %721 = memref.load %arg5[%c126_50] : memref<144xf32, #tpu.memory_space<smem>>
    %722 = vector.broadcast %721 : f32 to vector<8x256xf32>
    %723 = arith.mulf %722, %708 : vector<8x256xf32>
    %724 = arith.addf %707, %723 : vector<8x256xf32>
    %725 = vector.extract_strided_slice %673 {offsets = [24, 0], sizes = [8, 256], strides = [1, 1]} : vector<32x256xf32> to vector<8x256xf32>
    %c27_51 = arith.constant 27 : index
    %726 = memref.load %arg5[%c27_51] : memref<144xf32, #tpu.memory_space<smem>>
    %727 = vector.broadcast %726 : f32 to vector<8x256xf32>
    %728 = arith.mulf %727, %725 : vector<8x256xf32>
    %729 = arith.addf %712, %728 : vector<8x256xf32>
    %c63_52 = arith.constant 63 : index
    %730 = memref.load %arg5[%c63_52] : memref<144xf32, #tpu.memory_space<smem>>
    %731 = vector.broadcast %730 : f32 to vector<8x256xf32>
    %732 = arith.mulf %731, %725 : vector<8x256xf32>
    %733 = arith.addf %716, %732 : vector<8x256xf32>
    %c99_53 = arith.constant 99 : index
    %734 = memref.load %arg5[%c99_53] : memref<144xf32, #tpu.memory_space<smem>>
    %735 = vector.broadcast %734 : f32 to vector<8x256xf32>
    %736 = arith.mulf %735, %725 : vector<8x256xf32>
    %737 = arith.addf %720, %736 : vector<8x256xf32>
    %c135_54 = arith.constant 135 : index
    %738 = memref.load %arg5[%c135_54] : memref<144xf32, #tpu.memory_space<smem>>
    %739 = vector.broadcast %738 : f32 to vector<8x256xf32>
    %740 = arith.mulf %739, %725 : vector<8x256xf32>
    %741 = arith.addf %724, %740 : vector<8x256xf32>
    %c16_i32_55 = arith.constant 16 : i32
    %742 = tpu.dynamic_rotate %661 by %c16_i32_55 dim 1 : vector<32x256xf32>, i32 -> vector<32x256xf32>
    %c1_56 = arith.constant 1 : index
    %c0_57 = arith.constant 0 : index
    %743 = vector.load %arg2[%c1_56, %c0_57] : memref<10x256xf32, #tpu.memory_space<vmem>>, vector<1x256xf32>
    %744 = vector.broadcast %743 : vector<1x256xf32> to vector<32x256xf32>
    %745 = arith.mulf %742, %744 : vector<32x256xf32>
    %746 = vector.extract_strided_slice %745 {offsets = [0, 0], sizes = [8, 256], strides = [1, 1]} : vector<32x256xf32> to vector<8x256xf32>
    %c1_58 = arith.constant 1 : index
    %747 = memref.load %arg5[%c1_58] : memref<144xf32, #tpu.memory_space<smem>>
    %748 = vector.broadcast %747 : f32 to vector<8x256xf32>
    %749 = arith.mulf %748, %746 : vector<8x256xf32>
    %750 = arith.addf %729, %749 : vector<8x256xf32>
    %c37_59 = arith.constant 37 : index
    %751 = memref.load %arg5[%c37_59] : memref<144xf32, #tpu.memory_space<smem>>
    %752 = vector.broadcast %751 : f32 to vector<8x256xf32>
    %753 = arith.mulf %752, %746 : vector<8x256xf32>
    %754 = arith.addf %733, %753 : vector<8x256xf32>
    %c73_60 = arith.constant 73 : index
    %755 = memref.load %arg5[%c73_60] : memref<144xf32, #tpu.memory_space<smem>>
    %756 = vector.broadcast %755 : f32 to vector<8x256xf32>
    %757 = arith.mulf %756, %746 : vector<8x256xf32>
    %758 = arith.addf %737, %757 : vector<8x256xf32>
    %c109_61 = arith.constant 109 : index
    %759 = memref.load %arg5[%c109_61] : memref<144xf32, #tpu.memory_space<smem>>
    %760 = vector.broadcast %759 : f32 to vector<8x256xf32>
    %761 = arith.mulf %760, %746 : vector<8x256xf32>
    %762 = arith.addf %741, %761 : vector<8x256xf32>
    %763 = vector.extract_strided_slice %745 {offsets = [8, 0], sizes = [8, 256], strides = [1, 1]} : vector<32x256xf32> to vector<8x256xf32>
    %c10_62 = arith.constant 10 : index
    %764 = memref.load %arg5[%c10_62] : memref<144xf32, #tpu.memory_space<smem>>
    %765 = vector.broadcast %764 : f32 to vector<8x256xf32>
    %766 = arith.mulf %765, %763 : vector<8x256xf32>
    %767 = arith.addf %750, %766 : vector<8x256xf32>
    %c46_63 = arith.constant 46 : index
    %768 = memref.load %arg5[%c46_63] : memref<144xf32, #tpu.memory_space<smem>>
    %769 = vector.broadcast %768 : f32 to vector<8x256xf32>
    %770 = arith.mulf %769, %763 : vector<8x256xf32>
    %771 = arith.addf %754, %770 : vector<8x256xf32>
    %c82_64 = arith.constant 82 : index
    %772 = memref.load %arg5[%c82_64] : memref<144xf32, #tpu.memory_space<smem>>
    %773 = vector.broadcast %772 : f32 to vector<8x256xf32>
    %774 = arith.mulf %773, %763 : vector<8x256xf32>
    %775 = arith.addf %758, %774 : vector<8x256xf32>
    %c118_65 = arith.constant 118 : index
    %776 = memref.load %arg5[%c118_65] : memref<144xf32, #tpu.memory_space<smem>>
    %777 = vector.broadcast %776 : f32 to vector<8x256xf32>
    %778 = arith.mulf %777, %763 : vector<8x256xf32>
    %779 = arith.addf %762, %778 : vector<8x256xf32>
    %780 = vector.extract_strided_slice %745 {offsets = [16, 0], sizes = [8, 256], strides = [1, 1]} : vector<32x256xf32> to vector<8x256xf32>
    %c19_66 = arith.constant 19 : index
    %781 = memref.load %arg5[%c19_66] : memref<144xf32, #tpu.memory_space<smem>>
    %782 = vector.broadcast %781 : f32 to vector<8x256xf32>
    %783 = arith.mulf %782, %780 : vector<8x256xf32>
    %784 = arith.addf %767, %783 : vector<8x256xf32>
    %c55_67 = arith.constant 55 : index
    %785 = memref.load %arg5[%c55_67] : memref<144xf32, #tpu.memory_space<smem>>
    %786 = vector.broadcast %785 : f32 to vector<8x256xf32>
    %787 = arith.mulf %786, %780 : vector<8x256xf32>
    %788 = arith.addf %771, %787 : vector<8x256xf32>
    %c91_68 = arith.constant 91 : index
    %789 = memref.load %arg5[%c91_68] : memref<144xf32, #tpu.memory_space<smem>>
    %790 = vector.broadcast %789 : f32 to vector<8x256xf32>
    %791 = arith.mulf %790, %780 : vector<8x256xf32>
    %792 = arith.addf %775, %791 : vector<8x256xf32>
    %c127_69 = arith.constant 127 : index
    %793 = memref.load %arg5[%c127_69] : memref<144xf32, #tpu.memory_space<smem>>
    %794 = vector.broadcast %793 : f32 to vector<8x256xf32>
    %795 = arith.mulf %794, %780 : vector<8x256xf32>
    %796 = arith.addf %779, %795 : vector<8x256xf32>
    %797 = vector.extract_strided_slice %745 {offsets = [24, 0], sizes = [8, 256], strides = [1, 1]} : vector<32x256xf32> to vector<8x256xf32>
    %c28_70 = arith.constant 28 : index
    %798 = memref.load %arg5[%c28_70] : memref<144xf32, #tpu.memory_space<smem>>
    %799 = vector.broadcast %798 : f32 to vector<8x256xf32>
    %800 = arith.mulf %799, %797 : vector<8x256xf32>
    %801 = arith.addf %784, %800 : vector<8x256xf32>
    %c64_71 = arith.constant 64 : index
    %802 = memref.load %arg5[%c64_71] : memref<144xf32, #tpu.memory_space<smem>>
    %803 = vector.broadcast %802 : f32 to vector<8x256xf32>
    %804 = arith.mulf %803, %797 : vector<8x256xf32>
    %805 = arith.addf %788, %804 : vector<8x256xf32>
    %c100_72 = arith.constant 100 : index
    %806 = memref.load %arg5[%c100_72] : memref<144xf32, #tpu.memory_space<smem>>
    %807 = vector.broadcast %806 : f32 to vector<8x256xf32>
    %808 = arith.mulf %807, %797 : vector<8x256xf32>
    %809 = arith.addf %792, %808 : vector<8x256xf32>
    %c136_73 = arith.constant 136 : index
    %810 = memref.load %arg5[%c136_73] : memref<144xf32, #tpu.memory_space<smem>>
    %811 = vector.broadcast %810 : f32 to vector<8x256xf32>
    %812 = arith.mulf %811, %797 : vector<8x256xf32>
    %813 = arith.addf %796, %812 : vector<8x256xf32>
    %c15_i32_74 = arith.constant 15 : i32
    %814 = tpu.dynamic_rotate %661 by %c15_i32_74 dim 1 : vector<32x256xf32>, i32 -> vector<32x256xf32>
    %c2_75 = arith.constant 2 : index
    %c0_76 = arith.constant 0 : index
    %815 = vector.load %arg2[%c2_75, %c0_76] : memref<10x256xf32, #tpu.memory_space<vmem>>, vector<1x256xf32>
    %816 = vector.broadcast %815 : vector<1x256xf32> to vector<32x256xf32>
    %817 = arith.mulf %814, %816 : vector<32x256xf32>
    %818 = vector.extract_strided_slice %817 {offsets = [0, 0], sizes = [8, 256], strides = [1, 1]} : vector<32x256xf32> to vector<8x256xf32>
    %c2_77 = arith.constant 2 : index
    %819 = memref.load %arg5[%c2_77] : memref<144xf32, #tpu.memory_space<smem>>
    %820 = vector.broadcast %819 : f32 to vector<8x256xf32>
    %821 = arith.mulf %820, %818 : vector<8x256xf32>
    %822 = arith.addf %801, %821 : vector<8x256xf32>
    %c38_78 = arith.constant 38 : index
    %823 = memref.load %arg5[%c38_78] : memref<144xf32, #tpu.memory_space<smem>>
    %824 = vector.broadcast %823 : f32 to vector<8x256xf32>
    %825 = arith.mulf %824, %818 : vector<8x256xf32>
    %826 = arith.addf %805, %825 : vector<8x256xf32>
    %c74_79 = arith.constant 74 : index
    %827 = memref.load %arg5[%c74_79] : memref<144xf32, #tpu.memory_space<smem>>
    %828 = vector.broadcast %827 : f32 to vector<8x256xf32>
    %829 = arith.mulf %828, %818 : vector<8x256xf32>
    %830 = arith.addf %809, %829 : vector<8x256xf32>
    %c110_80 = arith.constant 110 : index
    %831 = memref.load %arg5[%c110_80] : memref<144xf32, #tpu.memory_space<smem>>
    %832 = vector.broadcast %831 : f32 to vector<8x256xf32>
    %833 = arith.mulf %832, %818 : vector<8x256xf32>
    %834 = arith.addf %813, %833 : vector<8x256xf32>
    %835 = vector.extract_strided_slice %817 {offsets = [8, 0], sizes = [8, 256], strides = [1, 1]} : vector<32x256xf32> to vector<8x256xf32>
    %c11_81 = arith.constant 11 : index
    %836 = memref.load %arg5[%c11_81] : memref<144xf32, #tpu.memory_space<smem>>
    %837 = vector.broadcast %836 : f32 to vector<8x256xf32>
    %838 = arith.mulf %837, %835 : vector<8x256xf32>
    %839 = arith.addf %822, %838 : vector<8x256xf32>
    %c47_82 = arith.constant 47 : index
    %840 = memref.load %arg5[%c47_82] : memref<144xf32, #tpu.memory_space<smem>>
    %841 = vector.broadcast %840 : f32 to vector<8x256xf32>
    %842 = arith.mulf %841, %835 : vector<8x256xf32>
    %843 = arith.addf %826, %842 : vector<8x256xf32>
    %c83_83 = arith.constant 83 : index
    %844 = memref.load %arg5[%c83_83] : memref<144xf32, #tpu.memory_space<smem>>
    %845 = vector.broadcast %844 : f32 to vector<8x256xf32>
    %846 = arith.mulf %845, %835 : vector<8x256xf32>
    %847 = arith.addf %830, %846 : vector<8x256xf32>
    %c119_84 = arith.constant 119 : index
    %848 = memref.load %arg5[%c119_84] : memref<144xf32, #tpu.memory_space<smem>>
    %849 = vector.broadcast %848 : f32 to vector<8x256xf32>
    %850 = arith.mulf %849, %835 : vector<8x256xf32>
    %851 = arith.addf %834, %850 : vector<8x256xf32>
    %852 = vector.extract_strided_slice %817 {offsets = [16, 0], sizes = [8, 256], strides = [1, 1]} : vector<32x256xf32> to vector<8x256xf32>
    %c20_85 = arith.constant 20 : index
    %853 = memref.load %arg5[%c20_85] : memref<144xf32, #tpu.memory_space<smem>>
    %854 = vector.broadcast %853 : f32 to vector<8x256xf32>
    %855 = arith.mulf %854, %852 : vector<8x256xf32>
    %856 = arith.addf %839, %855 : vector<8x256xf32>
    %c56_86 = arith.constant 56 : index
    %857 = memref.load %arg5[%c56_86] : memref<144xf32, #tpu.memory_space<smem>>
    %858 = vector.broadcast %857 : f32 to vector<8x256xf32>
    %859 = arith.mulf %858, %852 : vector<8x256xf32>
    %860 = arith.addf %843, %859 : vector<8x256xf32>
    %c92_87 = arith.constant 92 : index
    %861 = memref.load %arg5[%c92_87] : memref<144xf32, #tpu.memory_space<smem>>
    %862 = vector.broadcast %861 : f32 to vector<8x256xf32>
    %863 = arith.mulf %862, %852 : vector<8x256xf32>
    %864 = arith.addf %847, %863 : vector<8x256xf32>
    %c128_88 = arith.constant 128 : index
    %865 = memref.load %arg5[%c128_88] : memref<144xf32, #tpu.memory_space<smem>>
    %866 = vector.broadcast %865 : f32 to vector<8x256xf32>
    %867 = arith.mulf %866, %852 : vector<8x256xf32>
    %868 = arith.addf %851, %867 : vector<8x256xf32>
    %869 = vector.extract_strided_slice %817 {offsets = [24, 0], sizes = [8, 256], strides = [1, 1]} : vector<32x256xf32> to vector<8x256xf32>
    %c29_89 = arith.constant 29 : index
    %870 = memref.load %arg5[%c29_89] : memref<144xf32, #tpu.memory_space<smem>>
    %871 = vector.broadcast %870 : f32 to vector<8x256xf32>
    %872 = arith.mulf %871, %869 : vector<8x256xf32>
    %873 = arith.addf %856, %872 : vector<8x256xf32>
    %c65_90 = arith.constant 65 : index
    %874 = memref.load %arg5[%c65_90] : memref<144xf32, #tpu.memory_space<smem>>
    %875 = vector.broadcast %874 : f32 to vector<8x256xf32>
    %876 = arith.mulf %875, %869 : vector<8x256xf32>
    %877 = arith.addf %860, %876 : vector<8x256xf32>
    %c101_91 = arith.constant 101 : index
    %878 = memref.load %arg5[%c101_91] : memref<144xf32, #tpu.memory_space<smem>>
    %879 = vector.broadcast %878 : f32 to vector<8x256xf32>
    %880 = arith.mulf %879, %869 : vector<8x256xf32>
    %881 = arith.addf %864, %880 : vector<8x256xf32>
    %c137_92 = arith.constant 137 : index
    %882 = memref.load %arg5[%c137_92] : memref<144xf32, #tpu.memory_space<smem>>
    %883 = vector.broadcast %882 : f32 to vector<8x256xf32>
    %884 = arith.mulf %883, %869 : vector<8x256xf32>
    %885 = arith.addf %868, %884 : vector<8x256xf32>
    %c1_i32_93 = arith.constant 1 : i32
    %886 = tpu.dynamic_rotate %661 by %c1_i32_93 dim 1 : vector<32x256xf32>, i32 -> vector<32x256xf32>
    %c3_94 = arith.constant 3 : index
    %c0_95 = arith.constant 0 : index
    %887 = vector.load %arg2[%c3_94, %c0_95] : memref<10x256xf32, #tpu.memory_space<vmem>>, vector<1x256xf32>
    %888 = vector.broadcast %887 : vector<1x256xf32> to vector<32x256xf32>
    %889 = arith.mulf %886, %888 : vector<32x256xf32>
    %890 = vector.extract_strided_slice %889 {offsets = [0, 0], sizes = [8, 256], strides = [1, 1]} : vector<32x256xf32> to vector<8x256xf32>
    %c3_96 = arith.constant 3 : index
    %891 = memref.load %arg5[%c3_96] : memref<144xf32, #tpu.memory_space<smem>>
    %892 = vector.broadcast %891 : f32 to vector<8x256xf32>
    %893 = arith.mulf %892, %890 : vector<8x256xf32>
    %894 = arith.addf %873, %893 : vector<8x256xf32>
    %c39_97 = arith.constant 39 : index
    %895 = memref.load %arg5[%c39_97] : memref<144xf32, #tpu.memory_space<smem>>
    %896 = vector.broadcast %895 : f32 to vector<8x256xf32>
    %897 = arith.mulf %896, %890 : vector<8x256xf32>
    %898 = arith.addf %877, %897 : vector<8x256xf32>
    %c75_98 = arith.constant 75 : index
    %899 = memref.load %arg5[%c75_98] : memref<144xf32, #tpu.memory_space<smem>>
    %900 = vector.broadcast %899 : f32 to vector<8x256xf32>
    %901 = arith.mulf %900, %890 : vector<8x256xf32>
    %902 = arith.addf %881, %901 : vector<8x256xf32>
    %c111_99 = arith.constant 111 : index
    %903 = memref.load %arg5[%c111_99] : memref<144xf32, #tpu.memory_space<smem>>
    %904 = vector.broadcast %903 : f32 to vector<8x256xf32>
    %905 = arith.mulf %904, %890 : vector<8x256xf32>
    %906 = arith.addf %885, %905 : vector<8x256xf32>
    %907 = vector.extract_strided_slice %889 {offsets = [8, 0], sizes = [8, 256], strides = [1, 1]} : vector<32x256xf32> to vector<8x256xf32>
    %c12_100 = arith.constant 12 : index
    %908 = memref.load %arg5[%c12_100] : memref<144xf32, #tpu.memory_space<smem>>
    %909 = vector.broadcast %908 : f32 to vector<8x256xf32>
    %910 = arith.mulf %909, %907 : vector<8x256xf32>
    %911 = arith.addf %894, %910 : vector<8x256xf32>
    %c48_101 = arith.constant 48 : index
    %912 = memref.load %arg5[%c48_101] : memref<144xf32, #tpu.memory_space<smem>>
    %913 = vector.broadcast %912 : f32 to vector<8x256xf32>
    %914 = arith.mulf %913, %907 : vector<8x256xf32>
    %915 = arith.addf %898, %914 : vector<8x256xf32>
    %c84_102 = arith.constant 84 : index
    %916 = memref.load %arg5[%c84_102] : memref<144xf32, #tpu.memory_space<smem>>
    %917 = vector.broadcast %916 : f32 to vector<8x256xf32>
    %918 = arith.mulf %917, %907 : vector<8x256xf32>
    %919 = arith.addf %902, %918 : vector<8x256xf32>
    %c120_103 = arith.constant 120 : index
    %920 = memref.load %arg5[%c120_103] : memref<144xf32, #tpu.memory_space<smem>>
    %921 = vector.broadcast %920 : f32 to vector<8x256xf32>
    %922 = arith.mulf %921, %907 : vector<8x256xf32>
    %923 = arith.addf %906, %922 : vector<8x256xf32>
    %924 = vector.extract_strided_slice %889 {offsets = [16, 0], sizes = [8, 256], strides = [1, 1]} : vector<32x256xf32> to vector<8x256xf32>
    %c21_104 = arith.constant 21 : index
    %925 = memref.load %arg5[%c21_104] : memref<144xf32, #tpu.memory_space<smem>>
    %926 = vector.broadcast %925 : f32 to vector<8x256xf32>
    %927 = arith.mulf %926, %924 : vector<8x256xf32>
    %928 = arith.addf %911, %927 : vector<8x256xf32>
    %c57_105 = arith.constant 57 : index
    %929 = memref.load %arg5[%c57_105] : memref<144xf32, #tpu.memory_space<smem>>
    %930 = vector.broadcast %929 : f32 to vector<8x256xf32>
    %931 = arith.mulf %930, %924 : vector<8x256xf32>
    %932 = arith.addf %915, %931 : vector<8x256xf32>
    %c93_106 = arith.constant 93 : index
    %933 = memref.load %arg5[%c93_106] : memref<144xf32, #tpu.memory_space<smem>>
    %934 = vector.broadcast %933 : f32 to vector<8x256xf32>
    %935 = arith.mulf %934, %924 : vector<8x256xf32>
    %936 = arith.addf %919, %935 : vector<8x256xf32>
    %c129_107 = arith.constant 129 : index
    %937 = memref.load %arg5[%c129_107] : memref<144xf32, #tpu.memory_space<smem>>
    %938 = vector.broadcast %937 : f32 to vector<8x256xf32>
    %939 = arith.mulf %938, %924 : vector<8x256xf32>
    %940 = arith.addf %923, %939 : vector<8x256xf32>
    %941 = vector.extract_strided_slice %889 {offsets = [24, 0], sizes = [8, 256], strides = [1, 1]} : vector<32x256xf32> to vector<8x256xf32>
    %c30_108 = arith.constant 30 : index
    %942 = memref.load %arg5[%c30_108] : memref<144xf32, #tpu.memory_space<smem>>
    %943 = vector.broadcast %942 : f32 to vector<8x256xf32>
    %944 = arith.mulf %943, %941 : vector<8x256xf32>
    %945 = arith.addf %928, %944 : vector<8x256xf32>
    %c66_109 = arith.constant 66 : index
    %946 = memref.load %arg5[%c66_109] : memref<144xf32, #tpu.memory_space<smem>>
    %947 = vector.broadcast %946 : f32 to vector<8x256xf32>
    %948 = arith.mulf %947, %941 : vector<8x256xf32>
    %949 = arith.addf %932, %948 : vector<8x256xf32>
    %c102_110 = arith.constant 102 : index
    %950 = memref.load %arg5[%c102_110] : memref<144xf32, #tpu.memory_space<smem>>
    %951 = vector.broadcast %950 : f32 to vector<8x256xf32>
    %952 = arith.mulf %951, %941 : vector<8x256xf32>
    %953 = arith.addf %936, %952 : vector<8x256xf32>
    %c138_111 = arith.constant 138 : index
    %954 = memref.load %arg5[%c138_111] : memref<144xf32, #tpu.memory_space<smem>>
    %955 = vector.broadcast %954 : f32 to vector<8x256xf32>
    %956 = arith.mulf %955, %941 : vector<8x256xf32>
    %957 = arith.addf %940, %956 : vector<8x256xf32>
    %958 = vector.extract_strided_slice %661 {offsets = [0, 0], sizes = [8, 256], strides = [1, 1]} : vector<32x256xf32> to vector<8x256xf32>
    %c4_112 = arith.constant 4 : index
    %959 = memref.load %arg5[%c4_112] : memref<144xf32, #tpu.memory_space<smem>>
    %960 = vector.broadcast %959 : f32 to vector<8x256xf32>
    %961 = arith.mulf %960, %958 : vector<8x256xf32>
    %962 = arith.addf %945, %961 : vector<8x256xf32>
    %c40_113 = arith.constant 40 : index
    %963 = memref.load %arg5[%c40_113] : memref<144xf32, #tpu.memory_space<smem>>
    %964 = vector.broadcast %963 : f32 to vector<8x256xf32>
    %965 = arith.mulf %964, %958 : vector<8x256xf32>
    %966 = arith.addf %949, %965 : vector<8x256xf32>
    %c76_114 = arith.constant 76 : index
    %967 = memref.load %arg5[%c76_114] : memref<144xf32, #tpu.memory_space<smem>>
    %968 = vector.broadcast %967 : f32 to vector<8x256xf32>
    %969 = arith.mulf %968, %958 : vector<8x256xf32>
    %970 = arith.addf %953, %969 : vector<8x256xf32>
    %c112_115 = arith.constant 112 : index
    %971 = memref.load %arg5[%c112_115] : memref<144xf32, #tpu.memory_space<smem>>
    %972 = vector.broadcast %971 : f32 to vector<8x256xf32>
    %973 = arith.mulf %972, %958 : vector<8x256xf32>
    %974 = arith.addf %957, %973 : vector<8x256xf32>
    %975 = vector.extract_strided_slice %661 {offsets = [8, 0], sizes = [8, 256], strides = [1, 1]} : vector<32x256xf32> to vector<8x256xf32>
    %c13_116 = arith.constant 13 : index
    %976 = memref.load %arg5[%c13_116] : memref<144xf32, #tpu.memory_space<smem>>
    %977 = vector.broadcast %976 : f32 to vector<8x256xf32>
    %978 = arith.mulf %977, %975 : vector<8x256xf32>
    %979 = arith.addf %962, %978 : vector<8x256xf32>
    %c49_117 = arith.constant 49 : index
    %980 = memref.load %arg5[%c49_117] : memref<144xf32, #tpu.memory_space<smem>>
    %981 = vector.broadcast %980 : f32 to vector<8x256xf32>
    %982 = arith.mulf %981, %975 : vector<8x256xf32>
    %983 = arith.addf %966, %982 : vector<8x256xf32>
    %c85_118 = arith.constant 85 : index
    %984 = memref.load %arg5[%c85_118] : memref<144xf32, #tpu.memory_space<smem>>
    %985 = vector.broadcast %984 : f32 to vector<8x256xf32>
    %986 = arith.mulf %985, %975 : vector<8x256xf32>
    %987 = arith.addf %970, %986 : vector<8x256xf32>
    %c121_119 = arith.constant 121 : index
    %988 = memref.load %arg5[%c121_119] : memref<144xf32, #tpu.memory_space<smem>>
    %989 = vector.broadcast %988 : f32 to vector<8x256xf32>
    %990 = arith.mulf %989, %975 : vector<8x256xf32>
    %991 = arith.addf %974, %990 : vector<8x256xf32>
    %992 = vector.extract_strided_slice %661 {offsets = [16, 0], sizes = [8, 256], strides = [1, 1]} : vector<32x256xf32> to vector<8x256xf32>
    %c22_120 = arith.constant 22 : index
    %993 = memref.load %arg5[%c22_120] : memref<144xf32, #tpu.memory_space<smem>>
    %994 = vector.broadcast %993 : f32 to vector<8x256xf32>
    %995 = arith.mulf %994, %992 : vector<8x256xf32>
    %996 = arith.addf %979, %995 : vector<8x256xf32>
    %c58_121 = arith.constant 58 : index
    %997 = memref.load %arg5[%c58_121] : memref<144xf32, #tpu.memory_space<smem>>
    %998 = vector.broadcast %997 : f32 to vector<8x256xf32>
    %999 = arith.mulf %998, %992 : vector<8x256xf32>
    %1000 = arith.addf %983, %999 : vector<8x256xf32>
    %c94_122 = arith.constant 94 : index
    %1001 = memref.load %arg5[%c94_122] : memref<144xf32, #tpu.memory_space<smem>>
    %1002 = vector.broadcast %1001 : f32 to vector<8x256xf32>
    %1003 = arith.mulf %1002, %992 : vector<8x256xf32>
    %1004 = arith.addf %987, %1003 : vector<8x256xf32>
    %c130_123 = arith.constant 130 : index
    %1005 = memref.load %arg5[%c130_123] : memref<144xf32, #tpu.memory_space<smem>>
    %1006 = vector.broadcast %1005 : f32 to vector<8x256xf32>
    %1007 = arith.mulf %1006, %992 : vector<8x256xf32>
    %1008 = arith.addf %991, %1007 : vector<8x256xf32>
    %1009 = vector.extract_strided_slice %661 {offsets = [24, 0], sizes = [8, 256], strides = [1, 1]} : vector<32x256xf32> to vector<8x256xf32>
    %c31_124 = arith.constant 31 : index
    %1010 = memref.load %arg5[%c31_124] : memref<144xf32, #tpu.memory_space<smem>>
    %1011 = vector.broadcast %1010 : f32 to vector<8x256xf32>
    %1012 = arith.mulf %1011, %1009 : vector<8x256xf32>
    %1013 = arith.addf %996, %1012 : vector<8x256xf32>
    %c67_125 = arith.constant 67 : index
    %1014 = memref.load %arg5[%c67_125] : memref<144xf32, #tpu.memory_space<smem>>
    %1015 = vector.broadcast %1014 : f32 to vector<8x256xf32>
    %1016 = arith.mulf %1015, %1009 : vector<8x256xf32>
    %1017 = arith.addf %1000, %1016 : vector<8x256xf32>
    %c103_126 = arith.constant 103 : index
    %1018 = memref.load %arg5[%c103_126] : memref<144xf32, #tpu.memory_space<smem>>
    %1019 = vector.broadcast %1018 : f32 to vector<8x256xf32>
    %1020 = arith.mulf %1019, %1009 : vector<8x256xf32>
    %1021 = arith.addf %1004, %1020 : vector<8x256xf32>
    %c139_127 = arith.constant 139 : index
    %1022 = memref.load %arg5[%c139_127] : memref<144xf32, #tpu.memory_space<smem>>
    %1023 = vector.broadcast %1022 : f32 to vector<8x256xf32>
    %1024 = arith.mulf %1023, %1009 : vector<8x256xf32>
    %1025 = arith.addf %1008, %1024 : vector<8x256xf32>
    %c255_i32_128 = arith.constant 255 : i32
    %1026 = tpu.dynamic_rotate %661 by %c255_i32_128 dim 1 : vector<32x256xf32>, i32 -> vector<32x256xf32>
    %c5_129 = arith.constant 5 : index
    %c0_130 = arith.constant 0 : index
    %1027 = vector.load %arg2[%c5_129, %c0_130] : memref<10x256xf32, #tpu.memory_space<vmem>>, vector<1x256xf32>
    %1028 = vector.broadcast %1027 : vector<1x256xf32> to vector<32x256xf32>
    %1029 = arith.mulf %1026, %1028 : vector<32x256xf32>
    %1030 = vector.extract_strided_slice %1029 {offsets = [0, 0], sizes = [8, 256], strides = [1, 1]} : vector<32x256xf32> to vector<8x256xf32>
    %c5_131 = arith.constant 5 : index
    %1031 = memref.load %arg5[%c5_131] : memref<144xf32, #tpu.memory_space<smem>>
    %1032 = vector.broadcast %1031 : f32 to vector<8x256xf32>
    %1033 = arith.mulf %1032, %1030 : vector<8x256xf32>
    %1034 = arith.addf %1013, %1033 : vector<8x256xf32>
    %c41_132 = arith.constant 41 : index
    %1035 = memref.load %arg5[%c41_132] : memref<144xf32, #tpu.memory_space<smem>>
    %1036 = vector.broadcast %1035 : f32 to vector<8x256xf32>
    %1037 = arith.mulf %1036, %1030 : vector<8x256xf32>
    %1038 = arith.addf %1017, %1037 : vector<8x256xf32>
    %c77_133 = arith.constant 77 : index
    %1039 = memref.load %arg5[%c77_133] : memref<144xf32, #tpu.memory_space<smem>>
    %1040 = vector.broadcast %1039 : f32 to vector<8x256xf32>
    %1041 = arith.mulf %1040, %1030 : vector<8x256xf32>
    %1042 = arith.addf %1021, %1041 : vector<8x256xf32>
    %c113_134 = arith.constant 113 : index
    %1043 = memref.load %arg5[%c113_134] : memref<144xf32, #tpu.memory_space<smem>>
    %1044 = vector.broadcast %1043 : f32 to vector<8x256xf32>
    %1045 = arith.mulf %1044, %1030 : vector<8x256xf32>
    %1046 = arith.addf %1025, %1045 : vector<8x256xf32>
    %1047 = vector.extract_strided_slice %1029 {offsets = [8, 0], sizes = [8, 256], strides = [1, 1]} : vector<32x256xf32> to vector<8x256xf32>
    %c14_135 = arith.constant 14 : index
    %1048 = memref.load %arg5[%c14_135] : memref<144xf32, #tpu.memory_space<smem>>
    %1049 = vector.broadcast %1048 : f32 to vector<8x256xf32>
    %1050 = arith.mulf %1049, %1047 : vector<8x256xf32>
    %1051 = arith.addf %1034, %1050 : vector<8x256xf32>
    %c50_136 = arith.constant 50 : index
    %1052 = memref.load %arg5[%c50_136] : memref<144xf32, #tpu.memory_space<smem>>
    %1053 = vector.broadcast %1052 : f32 to vector<8x256xf32>
    %1054 = arith.mulf %1053, %1047 : vector<8x256xf32>
    %1055 = arith.addf %1038, %1054 : vector<8x256xf32>
    %c86_137 = arith.constant 86 : index
    %1056 = memref.load %arg5[%c86_137] : memref<144xf32, #tpu.memory_space<smem>>
    %1057 = vector.broadcast %1056 : f32 to vector<8x256xf32>
    %1058 = arith.mulf %1057, %1047 : vector<8x256xf32>
    %1059 = arith.addf %1042, %1058 : vector<8x256xf32>
    %c122_138 = arith.constant 122 : index
    %1060 = memref.load %arg5[%c122_138] : memref<144xf32, #tpu.memory_space<smem>>
    %1061 = vector.broadcast %1060 : f32 to vector<8x256xf32>
    %1062 = arith.mulf %1061, %1047 : vector<8x256xf32>
    %1063 = arith.addf %1046, %1062 : vector<8x256xf32>
    %1064 = vector.extract_strided_slice %1029 {offsets = [16, 0], sizes = [8, 256], strides = [1, 1]} : vector<32x256xf32> to vector<8x256xf32>
    %c23_139 = arith.constant 23 : index
    %1065 = memref.load %arg5[%c23_139] : memref<144xf32, #tpu.memory_space<smem>>
    %1066 = vector.broadcast %1065 : f32 to vector<8x256xf32>
    %1067 = arith.mulf %1066, %1064 : vector<8x256xf32>
    %1068 = arith.addf %1051, %1067 : vector<8x256xf32>
    %c59_140 = arith.constant 59 : index
    %1069 = memref.load %arg5[%c59_140] : memref<144xf32, #tpu.memory_space<smem>>
    %1070 = vector.broadcast %1069 : f32 to vector<8x256xf32>
    %1071 = arith.mulf %1070, %1064 : vector<8x256xf32>
    %1072 = arith.addf %1055, %1071 : vector<8x256xf32>
    %c95_141 = arith.constant 95 : index
    %1073 = memref.load %arg5[%c95_141] : memref<144xf32, #tpu.memory_space<smem>>
    %1074 = vector.broadcast %1073 : f32 to vector<8x256xf32>
    %1075 = arith.mulf %1074, %1064 : vector<8x256xf32>
    %1076 = arith.addf %1059, %1075 : vector<8x256xf32>
    %c131_142 = arith.constant 131 : index
    %1077 = memref.load %arg5[%c131_142] : memref<144xf32, #tpu.memory_space<smem>>
    %1078 = vector.broadcast %1077 : f32 to vector<8x256xf32>
    %1079 = arith.mulf %1078, %1064 : vector<8x256xf32>
    %1080 = arith.addf %1063, %1079 : vector<8x256xf32>
    %1081 = vector.extract_strided_slice %1029 {offsets = [24, 0], sizes = [8, 256], strides = [1, 1]} : vector<32x256xf32> to vector<8x256xf32>
    %c32_143 = arith.constant 32 : index
    %1082 = memref.load %arg5[%c32_143] : memref<144xf32, #tpu.memory_space<smem>>
    %1083 = vector.broadcast %1082 : f32 to vector<8x256xf32>
    %1084 = arith.mulf %1083, %1081 : vector<8x256xf32>
    %1085 = arith.addf %1068, %1084 : vector<8x256xf32>
    %c68_144 = arith.constant 68 : index
    %1086 = memref.load %arg5[%c68_144] : memref<144xf32, #tpu.memory_space<smem>>
    %1087 = vector.broadcast %1086 : f32 to vector<8x256xf32>
    %1088 = arith.mulf %1087, %1081 : vector<8x256xf32>
    %1089 = arith.addf %1072, %1088 : vector<8x256xf32>
    %c104_145 = arith.constant 104 : index
    %1090 = memref.load %arg5[%c104_145] : memref<144xf32, #tpu.memory_space<smem>>
    %1091 = vector.broadcast %1090 : f32 to vector<8x256xf32>
    %1092 = arith.mulf %1091, %1081 : vector<8x256xf32>
    %1093 = arith.addf %1076, %1092 : vector<8x256xf32>
    %c140_146 = arith.constant 140 : index
    %1094 = memref.load %arg5[%c140_146] : memref<144xf32, #tpu.memory_space<smem>>
    %1095 = vector.broadcast %1094 : f32 to vector<8x256xf32>
    %1096 = arith.mulf %1095, %1081 : vector<8x256xf32>
    %1097 = arith.addf %1080, %1096 : vector<8x256xf32>
    %c241_i32_147 = arith.constant 241 : i32
    %1098 = tpu.dynamic_rotate %661 by %c241_i32_147 dim 1 : vector<32x256xf32>, i32 -> vector<32x256xf32>
    %c6_148 = arith.constant 6 : index
    %c0_149 = arith.constant 0 : index
    %1099 = vector.load %arg2[%c6_148, %c0_149] : memref<10x256xf32, #tpu.memory_space<vmem>>, vector<1x256xf32>
    %1100 = vector.broadcast %1099 : vector<1x256xf32> to vector<32x256xf32>
    %1101 = arith.mulf %1098, %1100 : vector<32x256xf32>
    %1102 = vector.extract_strided_slice %1101 {offsets = [0, 0], sizes = [8, 256], strides = [1, 1]} : vector<32x256xf32> to vector<8x256xf32>
    %c6_150 = arith.constant 6 : index
    %1103 = memref.load %arg5[%c6_150] : memref<144xf32, #tpu.memory_space<smem>>
    %1104 = vector.broadcast %1103 : f32 to vector<8x256xf32>
    %1105 = arith.mulf %1104, %1102 : vector<8x256xf32>
    %1106 = arith.addf %1085, %1105 : vector<8x256xf32>
    %c42_151 = arith.constant 42 : index
    %1107 = memref.load %arg5[%c42_151] : memref<144xf32, #tpu.memory_space<smem>>
    %1108 = vector.broadcast %1107 : f32 to vector<8x256xf32>
    %1109 = arith.mulf %1108, %1102 : vector<8x256xf32>
    %1110 = arith.addf %1089, %1109 : vector<8x256xf32>
    %c78_152 = arith.constant 78 : index
    %1111 = memref.load %arg5[%c78_152] : memref<144xf32, #tpu.memory_space<smem>>
    %1112 = vector.broadcast %1111 : f32 to vector<8x256xf32>
    %1113 = arith.mulf %1112, %1102 : vector<8x256xf32>
    %1114 = arith.addf %1093, %1113 : vector<8x256xf32>
    %c114_153 = arith.constant 114 : index
    %1115 = memref.load %arg5[%c114_153] : memref<144xf32, #tpu.memory_space<smem>>
    %1116 = vector.broadcast %1115 : f32 to vector<8x256xf32>
    %1117 = arith.mulf %1116, %1102 : vector<8x256xf32>
    %1118 = arith.addf %1097, %1117 : vector<8x256xf32>
    %1119 = vector.extract_strided_slice %1101 {offsets = [8, 0], sizes = [8, 256], strides = [1, 1]} : vector<32x256xf32> to vector<8x256xf32>
    %c15_154 = arith.constant 15 : index
    %1120 = memref.load %arg5[%c15_154] : memref<144xf32, #tpu.memory_space<smem>>
    %1121 = vector.broadcast %1120 : f32 to vector<8x256xf32>
    %1122 = arith.mulf %1121, %1119 : vector<8x256xf32>
    %1123 = arith.addf %1106, %1122 : vector<8x256xf32>
    %c51_155 = arith.constant 51 : index
    %1124 = memref.load %arg5[%c51_155] : memref<144xf32, #tpu.memory_space<smem>>
    %1125 = vector.broadcast %1124 : f32 to vector<8x256xf32>
    %1126 = arith.mulf %1125, %1119 : vector<8x256xf32>
    %1127 = arith.addf %1110, %1126 : vector<8x256xf32>
    %c87_156 = arith.constant 87 : index
    %1128 = memref.load %arg5[%c87_156] : memref<144xf32, #tpu.memory_space<smem>>
    %1129 = vector.broadcast %1128 : f32 to vector<8x256xf32>
    %1130 = arith.mulf %1129, %1119 : vector<8x256xf32>
    %1131 = arith.addf %1114, %1130 : vector<8x256xf32>
    %c123_157 = arith.constant 123 : index
    %1132 = memref.load %arg5[%c123_157] : memref<144xf32, #tpu.memory_space<smem>>
    %1133 = vector.broadcast %1132 : f32 to vector<8x256xf32>
    %1134 = arith.mulf %1133, %1119 : vector<8x256xf32>
    %1135 = arith.addf %1118, %1134 : vector<8x256xf32>
    %1136 = vector.extract_strided_slice %1101 {offsets = [16, 0], sizes = [8, 256], strides = [1, 1]} : vector<32x256xf32> to vector<8x256xf32>
    %c24_158 = arith.constant 24 : index
    %1137 = memref.load %arg5[%c24_158] : memref<144xf32, #tpu.memory_space<smem>>
    %1138 = vector.broadcast %1137 : f32 to vector<8x256xf32>
    %1139 = arith.mulf %1138, %1136 : vector<8x256xf32>
    %1140 = arith.addf %1123, %1139 : vector<8x256xf32>
    %c60_159 = arith.constant 60 : index
    %1141 = memref.load %arg5[%c60_159] : memref<144xf32, #tpu.memory_space<smem>>
    %1142 = vector.broadcast %1141 : f32 to vector<8x256xf32>
    %1143 = arith.mulf %1142, %1136 : vector<8x256xf32>
    %1144 = arith.addf %1127, %1143 : vector<8x256xf32>
    %c96_160 = arith.constant 96 : index
    %1145 = memref.load %arg5[%c96_160] : memref<144xf32, #tpu.memory_space<smem>>
    %1146 = vector.broadcast %1145 : f32 to vector<8x256xf32>
    %1147 = arith.mulf %1146, %1136 : vector<8x256xf32>
    %1148 = arith.addf %1131, %1147 : vector<8x256xf32>
    %c132_161 = arith.constant 132 : index
    %1149 = memref.load %arg5[%c132_161] : memref<144xf32, #tpu.memory_space<smem>>
    %1150 = vector.broadcast %1149 : f32 to vector<8x256xf32>
    %1151 = arith.mulf %1150, %1136 : vector<8x256xf32>
    %1152 = arith.addf %1135, %1151 : vector<8x256xf32>
    %1153 = vector.extract_strided_slice %1101 {offsets = [24, 0], sizes = [8, 256], strides = [1, 1]} : vector<32x256xf32> to vector<8x256xf32>
    %c33_162 = arith.constant 33 : index
    %1154 = memref.load %arg5[%c33_162] : memref<144xf32, #tpu.memory_space<smem>>
    %1155 = vector.broadcast %1154 : f32 to vector<8x256xf32>
    %1156 = arith.mulf %1155, %1153 : vector<8x256xf32>
    %1157 = arith.addf %1140, %1156 : vector<8x256xf32>
    %c69_163 = arith.constant 69 : index
    %1158 = memref.load %arg5[%c69_163] : memref<144xf32, #tpu.memory_space<smem>>
    %1159 = vector.broadcast %1158 : f32 to vector<8x256xf32>
    %1160 = arith.mulf %1159, %1153 : vector<8x256xf32>
    %1161 = arith.addf %1144, %1160 : vector<8x256xf32>
    %c105_164 = arith.constant 105 : index
    %1162 = memref.load %arg5[%c105_164] : memref<144xf32, #tpu.memory_space<smem>>
    %1163 = vector.broadcast %1162 : f32 to vector<8x256xf32>
    %1164 = arith.mulf %1163, %1153 : vector<8x256xf32>
    %1165 = arith.addf %1148, %1164 : vector<8x256xf32>
    %c141_165 = arith.constant 141 : index
    %1166 = memref.load %arg5[%c141_165] : memref<144xf32, #tpu.memory_space<smem>>
    %1167 = vector.broadcast %1166 : f32 to vector<8x256xf32>
    %1168 = arith.mulf %1167, %1153 : vector<8x256xf32>
    %1169 = arith.addf %1152, %1168 : vector<8x256xf32>
    %c240_i32_166 = arith.constant 240 : i32
    %1170 = tpu.dynamic_rotate %661 by %c240_i32_166 dim 1 : vector<32x256xf32>, i32 -> vector<32x256xf32>
    %c7_167 = arith.constant 7 : index
    %c0_168 = arith.constant 0 : index
    %1171 = vector.load %arg2[%c7_167, %c0_168] : memref<10x256xf32, #tpu.memory_space<vmem>>, vector<1x256xf32>
    %1172 = vector.broadcast %1171 : vector<1x256xf32> to vector<32x256xf32>
    %1173 = arith.mulf %1170, %1172 : vector<32x256xf32>
    %1174 = vector.extract_strided_slice %1173 {offsets = [0, 0], sizes = [8, 256], strides = [1, 1]} : vector<32x256xf32> to vector<8x256xf32>
    %c7_169 = arith.constant 7 : index
    %1175 = memref.load %arg5[%c7_169] : memref<144xf32, #tpu.memory_space<smem>>
    %1176 = vector.broadcast %1175 : f32 to vector<8x256xf32>
    %1177 = arith.mulf %1176, %1174 : vector<8x256xf32>
    %1178 = arith.addf %1157, %1177 : vector<8x256xf32>
    %c43_170 = arith.constant 43 : index
    %1179 = memref.load %arg5[%c43_170] : memref<144xf32, #tpu.memory_space<smem>>
    %1180 = vector.broadcast %1179 : f32 to vector<8x256xf32>
    %1181 = arith.mulf %1180, %1174 : vector<8x256xf32>
    %1182 = arith.addf %1161, %1181 : vector<8x256xf32>
    %c79_171 = arith.constant 79 : index
    %1183 = memref.load %arg5[%c79_171] : memref<144xf32, #tpu.memory_space<smem>>
    %1184 = vector.broadcast %1183 : f32 to vector<8x256xf32>
    %1185 = arith.mulf %1184, %1174 : vector<8x256xf32>
    %1186 = arith.addf %1165, %1185 : vector<8x256xf32>
    %c115_172 = arith.constant 115 : index
    %1187 = memref.load %arg5[%c115_172] : memref<144xf32, #tpu.memory_space<smem>>
    %1188 = vector.broadcast %1187 : f32 to vector<8x256xf32>
    %1189 = arith.mulf %1188, %1174 : vector<8x256xf32>
    %1190 = arith.addf %1169, %1189 : vector<8x256xf32>
    %1191 = vector.extract_strided_slice %1173 {offsets = [8, 0], sizes = [8, 256], strides = [1, 1]} : vector<32x256xf32> to vector<8x256xf32>
    %c16_173 = arith.constant 16 : index
    %1192 = memref.load %arg5[%c16_173] : memref<144xf32, #tpu.memory_space<smem>>
    %1193 = vector.broadcast %1192 : f32 to vector<8x256xf32>
    %1194 = arith.mulf %1193, %1191 : vector<8x256xf32>
    %1195 = arith.addf %1178, %1194 : vector<8x256xf32>
    %c52_174 = arith.constant 52 : index
    %1196 = memref.load %arg5[%c52_174] : memref<144xf32, #tpu.memory_space<smem>>
    %1197 = vector.broadcast %1196 : f32 to vector<8x256xf32>
    %1198 = arith.mulf %1197, %1191 : vector<8x256xf32>
    %1199 = arith.addf %1182, %1198 : vector<8x256xf32>
    %c88_175 = arith.constant 88 : index
    %1200 = memref.load %arg5[%c88_175] : memref<144xf32, #tpu.memory_space<smem>>
    %1201 = vector.broadcast %1200 : f32 to vector<8x256xf32>
    %1202 = arith.mulf %1201, %1191 : vector<8x256xf32>
    %1203 = arith.addf %1186, %1202 : vector<8x256xf32>
    %c124_176 = arith.constant 124 : index
    %1204 = memref.load %arg5[%c124_176] : memref<144xf32, #tpu.memory_space<smem>>
    %1205 = vector.broadcast %1204 : f32 to vector<8x256xf32>
    %1206 = arith.mulf %1205, %1191 : vector<8x256xf32>
    %1207 = arith.addf %1190, %1206 : vector<8x256xf32>
    %1208 = vector.extract_strided_slice %1173 {offsets = [16, 0], sizes = [8, 256], strides = [1, 1]} : vector<32x256xf32> to vector<8x256xf32>
    %c25_177 = arith.constant 25 : index
    %1209 = memref.load %arg5[%c25_177] : memref<144xf32, #tpu.memory_space<smem>>
    %1210 = vector.broadcast %1209 : f32 to vector<8x256xf32>
    %1211 = arith.mulf %1210, %1208 : vector<8x256xf32>
    %1212 = arith.addf %1195, %1211 : vector<8x256xf32>
    %c61_178 = arith.constant 61 : index
    %1213 = memref.load %arg5[%c61_178] : memref<144xf32, #tpu.memory_space<smem>>
    %1214 = vector.broadcast %1213 : f32 to vector<8x256xf32>
    %1215 = arith.mulf %1214, %1208 : vector<8x256xf32>
    %1216 = arith.addf %1199, %1215 : vector<8x256xf32>
    %c97_179 = arith.constant 97 : index
    %1217 = memref.load %arg5[%c97_179] : memref<144xf32, #tpu.memory_space<smem>>
    %1218 = vector.broadcast %1217 : f32 to vector<8x256xf32>
    %1219 = arith.mulf %1218, %1208 : vector<8x256xf32>
    %1220 = arith.addf %1203, %1219 : vector<8x256xf32>
    %c133_180 = arith.constant 133 : index
    %1221 = memref.load %arg5[%c133_180] : memref<144xf32, #tpu.memory_space<smem>>
    %1222 = vector.broadcast %1221 : f32 to vector<8x256xf32>
    %1223 = arith.mulf %1222, %1208 : vector<8x256xf32>
    %1224 = arith.addf %1207, %1223 : vector<8x256xf32>
    %1225 = vector.extract_strided_slice %1173 {offsets = [24, 0], sizes = [8, 256], strides = [1, 1]} : vector<32x256xf32> to vector<8x256xf32>
    %c34_181 = arith.constant 34 : index
    %1226 = memref.load %arg5[%c34_181] : memref<144xf32, #tpu.memory_space<smem>>
    %1227 = vector.broadcast %1226 : f32 to vector<8x256xf32>
    %1228 = arith.mulf %1227, %1225 : vector<8x256xf32>
    %1229 = arith.addf %1212, %1228 : vector<8x256xf32>
    %c70_182 = arith.constant 70 : index
    %1230 = memref.load %arg5[%c70_182] : memref<144xf32, #tpu.memory_space<smem>>
    %1231 = vector.broadcast %1230 : f32 to vector<8x256xf32>
    %1232 = arith.mulf %1231, %1225 : vector<8x256xf32>
    %1233 = arith.addf %1216, %1232 : vector<8x256xf32>
    %c106_183 = arith.constant 106 : index
    %1234 = memref.load %arg5[%c106_183] : memref<144xf32, #tpu.memory_space<smem>>
    %1235 = vector.broadcast %1234 : f32 to vector<8x256xf32>
    %1236 = arith.mulf %1235, %1225 : vector<8x256xf32>
    %1237 = arith.addf %1220, %1236 : vector<8x256xf32>
    %c142_184 = arith.constant 142 : index
    %1238 = memref.load %arg5[%c142_184] : memref<144xf32, #tpu.memory_space<smem>>
    %1239 = vector.broadcast %1238 : f32 to vector<8x256xf32>
    %1240 = arith.mulf %1239, %1225 : vector<8x256xf32>
    %1241 = arith.addf %1224, %1240 : vector<8x256xf32>
    %c239_i32_185 = arith.constant 239 : i32
    %1242 = tpu.dynamic_rotate %661 by %c239_i32_185 dim 1 : vector<32x256xf32>, i32 -> vector<32x256xf32>
    %c8_186 = arith.constant 8 : index
    %c0_187 = arith.constant 0 : index
    %1243 = vector.load %arg2[%c8_186, %c0_187] : memref<10x256xf32, #tpu.memory_space<vmem>>, vector<1x256xf32>
    %1244 = vector.broadcast %1243 : vector<1x256xf32> to vector<32x256xf32>
    %1245 = arith.mulf %1242, %1244 : vector<32x256xf32>
    %1246 = vector.extract_strided_slice %1245 {offsets = [0, 0], sizes = [8, 256], strides = [1, 1]} : vector<32x256xf32> to vector<8x256xf32>
    %c8_188 = arith.constant 8 : index
    %1247 = memref.load %arg5[%c8_188] : memref<144xf32, #tpu.memory_space<smem>>
    %1248 = vector.broadcast %1247 : f32 to vector<8x256xf32>
    %1249 = arith.mulf %1248, %1246 : vector<8x256xf32>
    %1250 = arith.addf %1229, %1249 : vector<8x256xf32>
    %c44_189 = arith.constant 44 : index
    %1251 = memref.load %arg5[%c44_189] : memref<144xf32, #tpu.memory_space<smem>>
    %1252 = vector.broadcast %1251 : f32 to vector<8x256xf32>
    %1253 = arith.mulf %1252, %1246 : vector<8x256xf32>
    %1254 = arith.addf %1233, %1253 : vector<8x256xf32>
    %c80_190 = arith.constant 80 : index
    %1255 = memref.load %arg5[%c80_190] : memref<144xf32, #tpu.memory_space<smem>>
    %1256 = vector.broadcast %1255 : f32 to vector<8x256xf32>
    %1257 = arith.mulf %1256, %1246 : vector<8x256xf32>
    %1258 = arith.addf %1237, %1257 : vector<8x256xf32>
    %c116_191 = arith.constant 116 : index
    %1259 = memref.load %arg5[%c116_191] : memref<144xf32, #tpu.memory_space<smem>>
    %1260 = vector.broadcast %1259 : f32 to vector<8x256xf32>
    %1261 = arith.mulf %1260, %1246 : vector<8x256xf32>
    %1262 = arith.addf %1241, %1261 : vector<8x256xf32>
    %1263 = vector.extract_strided_slice %1245 {offsets = [8, 0], sizes = [8, 256], strides = [1, 1]} : vector<32x256xf32> to vector<8x256xf32>
    %c17_192 = arith.constant 17 : index
    %1264 = memref.load %arg5[%c17_192] : memref<144xf32, #tpu.memory_space<smem>>
    %1265 = vector.broadcast %1264 : f32 to vector<8x256xf32>
    %1266 = arith.mulf %1265, %1263 : vector<8x256xf32>
    %1267 = arith.addf %1250, %1266 : vector<8x256xf32>
    %c53_193 = arith.constant 53 : index
    %1268 = memref.load %arg5[%c53_193] : memref<144xf32, #tpu.memory_space<smem>>
    %1269 = vector.broadcast %1268 : f32 to vector<8x256xf32>
    %1270 = arith.mulf %1269, %1263 : vector<8x256xf32>
    %1271 = arith.addf %1254, %1270 : vector<8x256xf32>
    %c89_194 = arith.constant 89 : index
    %1272 = memref.load %arg5[%c89_194] : memref<144xf32, #tpu.memory_space<smem>>
    %1273 = vector.broadcast %1272 : f32 to vector<8x256xf32>
    %1274 = arith.mulf %1273, %1263 : vector<8x256xf32>
    %1275 = arith.addf %1258, %1274 : vector<8x256xf32>
    %c125_195 = arith.constant 125 : index
    %1276 = memref.load %arg5[%c125_195] : memref<144xf32, #tpu.memory_space<smem>>
    %1277 = vector.broadcast %1276 : f32 to vector<8x256xf32>
    %1278 = arith.mulf %1277, %1263 : vector<8x256xf32>
    %1279 = arith.addf %1262, %1278 : vector<8x256xf32>
    %1280 = vector.extract_strided_slice %1245 {offsets = [16, 0], sizes = [8, 256], strides = [1, 1]} : vector<32x256xf32> to vector<8x256xf32>
    %c26_196 = arith.constant 26 : index
    %1281 = memref.load %arg5[%c26_196] : memref<144xf32, #tpu.memory_space<smem>>
    %1282 = vector.broadcast %1281 : f32 to vector<8x256xf32>
    %1283 = arith.mulf %1282, %1280 : vector<8x256xf32>
    %1284 = arith.addf %1267, %1283 : vector<8x256xf32>
    %c62_197 = arith.constant 62 : index
    %1285 = memref.load %arg5[%c62_197] : memref<144xf32, #tpu.memory_space<smem>>
    %1286 = vector.broadcast %1285 : f32 to vector<8x256xf32>
    %1287 = arith.mulf %1286, %1280 : vector<8x256xf32>
    %1288 = arith.addf %1271, %1287 : vector<8x256xf32>
    %c98_198 = arith.constant 98 : index
    %1289 = memref.load %arg5[%c98_198] : memref<144xf32, #tpu.memory_space<smem>>
    %1290 = vector.broadcast %1289 : f32 to vector<8x256xf32>
    %1291 = arith.mulf %1290, %1280 : vector<8x256xf32>
    %1292 = arith.addf %1275, %1291 : vector<8x256xf32>
    %c134_199 = arith.constant 134 : index
    %1293 = memref.load %arg5[%c134_199] : memref<144xf32, #tpu.memory_space<smem>>
    %1294 = vector.broadcast %1293 : f32 to vector<8x256xf32>
    %1295 = arith.mulf %1294, %1280 : vector<8x256xf32>
    %1296 = arith.addf %1279, %1295 : vector<8x256xf32>
    %1297 = vector.extract_strided_slice %1245 {offsets = [24, 0], sizes = [8, 256], strides = [1, 1]} : vector<32x256xf32> to vector<8x256xf32>
    %c35_200 = arith.constant 35 : index
    %1298 = memref.load %arg5[%c35_200] : memref<144xf32, #tpu.memory_space<smem>>
    %1299 = vector.broadcast %1298 : f32 to vector<8x256xf32>
    %1300 = arith.mulf %1299, %1297 : vector<8x256xf32>
    %1301 = arith.addf %1284, %1300 : vector<8x256xf32>
    %c71_201 = arith.constant 71 : index
    %1302 = memref.load %arg5[%c71_201] : memref<144xf32, #tpu.memory_space<smem>>
    %1303 = vector.broadcast %1302 : f32 to vector<8x256xf32>
    %1304 = arith.mulf %1303, %1297 : vector<8x256xf32>
    %1305 = arith.addf %1288, %1304 : vector<8x256xf32>
    %c107_202 = arith.constant 107 : index
    %1306 = memref.load %arg5[%c107_202] : memref<144xf32, #tpu.memory_space<smem>>
    %1307 = vector.broadcast %1306 : f32 to vector<8x256xf32>
    %1308 = arith.mulf %1307, %1297 : vector<8x256xf32>
    %1309 = arith.addf %1292, %1308 : vector<8x256xf32>
    %c143_203 = arith.constant 143 : index
    %1310 = memref.load %arg5[%c143_203] : memref<144xf32, #tpu.memory_space<smem>>
    %1311 = vector.broadcast %1310 : f32 to vector<8x256xf32>
    %1312 = arith.mulf %1311, %1297 : vector<8x256xf32>
    %1313 = arith.addf %1296, %1312 : vector<8x256xf32>
    %1314 = tpu.concatenate %1301, %1305, %1309, %1313 in 0 : vector<8x256xf32>, vector<8x256xf32>, vector<8x256xf32>, vector<8x256xf32> -> vector<32x256xf32>
    %c0_204 = arith.constant 0 : index
    %1315 = memref.load %arg8[%c0_204] : memref<4xf32, #tpu.memory_space<smem>>
    %1316 = vector.broadcast %1315 : f32 to vector<8x256xf32>
    %c1_205 = arith.constant 1 : index
    %1317 = memref.load %arg8[%c1_205] : memref<4xf32, #tpu.memory_space<smem>>
    %1318 = vector.broadcast %1317 : f32 to vector<8x256xf32>
    %c2_206 = arith.constant 2 : index
    %1319 = memref.load %arg8[%c2_206] : memref<4xf32, #tpu.memory_space<smem>>
    %1320 = vector.broadcast %1319 : f32 to vector<8x256xf32>
    %c3_207 = arith.constant 3 : index
    %1321 = memref.load %arg8[%c3_207] : memref<4xf32, #tpu.memory_space<smem>>
    %1322 = vector.broadcast %1321 : f32 to vector<8x256xf32>
    %c17_i32_208 = arith.constant 17 : i32
    %1323 = tpu.dynamic_rotate %1314 by %c17_i32_208 dim 1 : vector<32x256xf32>, i32 -> vector<32x256xf32>
    %c0_209 = arith.constant 0 : index
    %c0_210 = arith.constant 0 : index
    %1324 = vector.load %arg2[%c0_209, %c0_210] : memref<10x256xf32, #tpu.memory_space<vmem>>, vector<1x256xf32>
    %1325 = vector.broadcast %1324 : vector<1x256xf32> to vector<32x256xf32>
    %1326 = arith.mulf %1323, %1325 : vector<32x256xf32>
    %1327 = vector.extract_strided_slice %1326 {offsets = [0, 0], sizes = [8, 256], strides = [1, 1]} : vector<32x256xf32> to vector<8x256xf32>
    %c0_211 = arith.constant 0 : index
    %1328 = memref.load %arg7[%c0_211] : memref<144xf32, #tpu.memory_space<smem>>
    %1329 = vector.broadcast %1328 : f32 to vector<8x256xf32>
    %1330 = arith.mulf %1329, %1327 : vector<8x256xf32>
    %1331 = arith.addf %1316, %1330 : vector<8x256xf32>
    %c36_212 = arith.constant 36 : index
    %1332 = memref.load %arg7[%c36_212] : memref<144xf32, #tpu.memory_space<smem>>
    %1333 = vector.broadcast %1332 : f32 to vector<8x256xf32>
    %1334 = arith.mulf %1333, %1327 : vector<8x256xf32>
    %1335 = arith.addf %1318, %1334 : vector<8x256xf32>
    %c72_213 = arith.constant 72 : index
    %1336 = memref.load %arg7[%c72_213] : memref<144xf32, #tpu.memory_space<smem>>
    %1337 = vector.broadcast %1336 : f32 to vector<8x256xf32>
    %1338 = arith.mulf %1337, %1327 : vector<8x256xf32>
    %1339 = arith.addf %1320, %1338 : vector<8x256xf32>
    %c108_214 = arith.constant 108 : index
    %1340 = memref.load %arg7[%c108_214] : memref<144xf32, #tpu.memory_space<smem>>
    %1341 = vector.broadcast %1340 : f32 to vector<8x256xf32>
    %1342 = arith.mulf %1341, %1327 : vector<8x256xf32>
    %1343 = arith.addf %1322, %1342 : vector<8x256xf32>
    %1344 = vector.extract_strided_slice %1326 {offsets = [8, 0], sizes = [8, 256], strides = [1, 1]} : vector<32x256xf32> to vector<8x256xf32>
    %c9_215 = arith.constant 9 : index
    %1345 = memref.load %arg7[%c9_215] : memref<144xf32, #tpu.memory_space<smem>>
    %1346 = vector.broadcast %1345 : f32 to vector<8x256xf32>
    %1347 = arith.mulf %1346, %1344 : vector<8x256xf32>
    %1348 = arith.addf %1331, %1347 : vector<8x256xf32>
    %c45_216 = arith.constant 45 : index
    %1349 = memref.load %arg7[%c45_216] : memref<144xf32, #tpu.memory_space<smem>>
    %1350 = vector.broadcast %1349 : f32 to vector<8x256xf32>
    %1351 = arith.mulf %1350, %1344 : vector<8x256xf32>
    %1352 = arith.addf %1335, %1351 : vector<8x256xf32>
    %c81_217 = arith.constant 81 : index
    %1353 = memref.load %arg7[%c81_217] : memref<144xf32, #tpu.memory_space<smem>>
    %1354 = vector.broadcast %1353 : f32 to vector<8x256xf32>
    %1355 = arith.mulf %1354, %1344 : vector<8x256xf32>
    %1356 = arith.addf %1339, %1355 : vector<8x256xf32>
    %c117_218 = arith.constant 117 : index
    %1357 = memref.load %arg7[%c117_218] : memref<144xf32, #tpu.memory_space<smem>>
    %1358 = vector.broadcast %1357 : f32 to vector<8x256xf32>
    %1359 = arith.mulf %1358, %1344 : vector<8x256xf32>
    %1360 = arith.addf %1343, %1359 : vector<8x256xf32>
    %1361 = vector.extract_strided_slice %1326 {offsets = [16, 0], sizes = [8, 256], strides = [1, 1]} : vector<32x256xf32> to vector<8x256xf32>
    %c18_219 = arith.constant 18 : index
    %1362 = memref.load %arg7[%c18_219] : memref<144xf32, #tpu.memory_space<smem>>
    %1363 = vector.broadcast %1362 : f32 to vector<8x256xf32>
    %1364 = arith.mulf %1363, %1361 : vector<8x256xf32>
    %1365 = arith.addf %1348, %1364 : vector<8x256xf32>
    %c54_220 = arith.constant 54 : index
    %1366 = memref.load %arg7[%c54_220] : memref<144xf32, #tpu.memory_space<smem>>
    %1367 = vector.broadcast %1366 : f32 to vector<8x256xf32>
    %1368 = arith.mulf %1367, %1361 : vector<8x256xf32>
    %1369 = arith.addf %1352, %1368 : vector<8x256xf32>
    %c90_221 = arith.constant 90 : index
    %1370 = memref.load %arg7[%c90_221] : memref<144xf32, #tpu.memory_space<smem>>
    %1371 = vector.broadcast %1370 : f32 to vector<8x256xf32>
    %1372 = arith.mulf %1371, %1361 : vector<8x256xf32>
    %1373 = arith.addf %1356, %1372 : vector<8x256xf32>
    %c126_222 = arith.constant 126 : index
    %1374 = memref.load %arg7[%c126_222] : memref<144xf32, #tpu.memory_space<smem>>
    %1375 = vector.broadcast %1374 : f32 to vector<8x256xf32>
    %1376 = arith.mulf %1375, %1361 : vector<8x256xf32>
    %1377 = arith.addf %1360, %1376 : vector<8x256xf32>
    %1378 = vector.extract_strided_slice %1326 {offsets = [24, 0], sizes = [8, 256], strides = [1, 1]} : vector<32x256xf32> to vector<8x256xf32>
    %c27_223 = arith.constant 27 : index
    %1379 = memref.load %arg7[%c27_223] : memref<144xf32, #tpu.memory_space<smem>>
    %1380 = vector.broadcast %1379 : f32 to vector<8x256xf32>
    %1381 = arith.mulf %1380, %1378 : vector<8x256xf32>
    %1382 = arith.addf %1365, %1381 : vector<8x256xf32>
    %c63_224 = arith.constant 63 : index
    %1383 = memref.load %arg7[%c63_224] : memref<144xf32, #tpu.memory_space<smem>>
    %1384 = vector.broadcast %1383 : f32 to vector<8x256xf32>
    %1385 = arith.mulf %1384, %1378 : vector<8x256xf32>
    %1386 = arith.addf %1369, %1385 : vector<8x256xf32>
    %c99_225 = arith.constant 99 : index
    %1387 = memref.load %arg7[%c99_225] : memref<144xf32, #tpu.memory_space<smem>>
    %1388 = vector.broadcast %1387 : f32 to vector<8x256xf32>
    %1389 = arith.mulf %1388, %1378 : vector<8x256xf32>
    %1390 = arith.addf %1373, %1389 : vector<8x256xf32>
    %c135_226 = arith.constant 135 : index
    %1391 = memref.load %arg7[%c135_226] : memref<144xf32, #tpu.memory_space<smem>>
    %1392 = vector.broadcast %1391 : f32 to vector<8x256xf32>
    %1393 = arith.mulf %1392, %1378 : vector<8x256xf32>
    %1394 = arith.addf %1377, %1393 : vector<8x256xf32>
    %c16_i32_227 = arith.constant 16 : i32
    %1395 = tpu.dynamic_rotate %1314 by %c16_i32_227 dim 1 : vector<32x256xf32>, i32 -> vector<32x256xf32>
    %c1_228 = arith.constant 1 : index
    %c0_229 = arith.constant 0 : index
    %1396 = vector.load %arg2[%c1_228, %c0_229] : memref<10x256xf32, #tpu.memory_space<vmem>>, vector<1x256xf32>
    %1397 = vector.broadcast %1396 : vector<1x256xf32> to vector<32x256xf32>
    %1398 = arith.mulf %1395, %1397 : vector<32x256xf32>
    %1399 = vector.extract_strided_slice %1398 {offsets = [0, 0], sizes = [8, 256], strides = [1, 1]} : vector<32x256xf32> to vector<8x256xf32>
    %c1_230 = arith.constant 1 : index
    %1400 = memref.load %arg7[%c1_230] : memref<144xf32, #tpu.memory_space<smem>>
    %1401 = vector.broadcast %1400 : f32 to vector<8x256xf32>
    %1402 = arith.mulf %1401, %1399 : vector<8x256xf32>
    %1403 = arith.addf %1382, %1402 : vector<8x256xf32>
    %c37_231 = arith.constant 37 : index
    %1404 = memref.load %arg7[%c37_231] : memref<144xf32, #tpu.memory_space<smem>>
    %1405 = vector.broadcast %1404 : f32 to vector<8x256xf32>
    %1406 = arith.mulf %1405, %1399 : vector<8x256xf32>
    %1407 = arith.addf %1386, %1406 : vector<8x256xf32>
    %c73_232 = arith.constant 73 : index
    %1408 = memref.load %arg7[%c73_232] : memref<144xf32, #tpu.memory_space<smem>>
    %1409 = vector.broadcast %1408 : f32 to vector<8x256xf32>
    %1410 = arith.mulf %1409, %1399 : vector<8x256xf32>
    %1411 = arith.addf %1390, %1410 : vector<8x256xf32>
    %c109_233 = arith.constant 109 : index
    %1412 = memref.load %arg7[%c109_233] : memref<144xf32, #tpu.memory_space<smem>>
    %1413 = vector.broadcast %1412 : f32 to vector<8x256xf32>
    %1414 = arith.mulf %1413, %1399 : vector<8x256xf32>
    %1415 = arith.addf %1394, %1414 : vector<8x256xf32>
    %1416 = vector.extract_strided_slice %1398 {offsets = [8, 0], sizes = [8, 256], strides = [1, 1]} : vector<32x256xf32> to vector<8x256xf32>
    %c10_234 = arith.constant 10 : index
    %1417 = memref.load %arg7[%c10_234] : memref<144xf32, #tpu.memory_space<smem>>
    %1418 = vector.broadcast %1417 : f32 to vector<8x256xf32>
    %1419 = arith.mulf %1418, %1416 : vector<8x256xf32>
    %1420 = arith.addf %1403, %1419 : vector<8x256xf32>
    %c46_235 = arith.constant 46 : index
    %1421 = memref.load %arg7[%c46_235] : memref<144xf32, #tpu.memory_space<smem>>
    %1422 = vector.broadcast %1421 : f32 to vector<8x256xf32>
    %1423 = arith.mulf %1422, %1416 : vector<8x256xf32>
    %1424 = arith.addf %1407, %1423 : vector<8x256xf32>
    %c82_236 = arith.constant 82 : index
    %1425 = memref.load %arg7[%c82_236] : memref<144xf32, #tpu.memory_space<smem>>
    %1426 = vector.broadcast %1425 : f32 to vector<8x256xf32>
    %1427 = arith.mulf %1426, %1416 : vector<8x256xf32>
    %1428 = arith.addf %1411, %1427 : vector<8x256xf32>
    %c118_237 = arith.constant 118 : index
    %1429 = memref.load %arg7[%c118_237] : memref<144xf32, #tpu.memory_space<smem>>
    %1430 = vector.broadcast %1429 : f32 to vector<8x256xf32>
    %1431 = arith.mulf %1430, %1416 : vector<8x256xf32>
    %1432 = arith.addf %1415, %1431 : vector<8x256xf32>
    %1433 = vector.extract_strided_slice %1398 {offsets = [16, 0], sizes = [8, 256], strides = [1, 1]} : vector<32x256xf32> to vector<8x256xf32>
    %c19_238 = arith.constant 19 : index
    %1434 = memref.load %arg7[%c19_238] : memref<144xf32, #tpu.memory_space<smem>>
    %1435 = vector.broadcast %1434 : f32 to vector<8x256xf32>
    %1436 = arith.mulf %1435, %1433 : vector<8x256xf32>
    %1437 = arith.addf %1420, %1436 : vector<8x256xf32>
    %c55_239 = arith.constant 55 : index
    %1438 = memref.load %arg7[%c55_239] : memref<144xf32, #tpu.memory_space<smem>>
    %1439 = vector.broadcast %1438 : f32 to vector<8x256xf32>
    %1440 = arith.mulf %1439, %1433 : vector<8x256xf32>
    %1441 = arith.addf %1424, %1440 : vector<8x256xf32>
    %c91_240 = arith.constant 91 : index
    %1442 = memref.load %arg7[%c91_240] : memref<144xf32, #tpu.memory_space<smem>>
    %1443 = vector.broadcast %1442 : f32 to vector<8x256xf32>
    %1444 = arith.mulf %1443, %1433 : vector<8x256xf32>
    %1445 = arith.addf %1428, %1444 : vector<8x256xf32>
    %c127_241 = arith.constant 127 : index
    %1446 = memref.load %arg7[%c127_241] : memref<144xf32, #tpu.memory_space<smem>>
    %1447 = vector.broadcast %1446 : f32 to vector<8x256xf32>
    %1448 = arith.mulf %1447, %1433 : vector<8x256xf32>
    %1449 = arith.addf %1432, %1448 : vector<8x256xf32>
    %1450 = vector.extract_strided_slice %1398 {offsets = [24, 0], sizes = [8, 256], strides = [1, 1]} : vector<32x256xf32> to vector<8x256xf32>
    %c28_242 = arith.constant 28 : index
    %1451 = memref.load %arg7[%c28_242] : memref<144xf32, #tpu.memory_space<smem>>
    %1452 = vector.broadcast %1451 : f32 to vector<8x256xf32>
    %1453 = arith.mulf %1452, %1450 : vector<8x256xf32>
    %1454 = arith.addf %1437, %1453 : vector<8x256xf32>
    %c64_243 = arith.constant 64 : index
    %1455 = memref.load %arg7[%c64_243] : memref<144xf32, #tpu.memory_space<smem>>
    %1456 = vector.broadcast %1455 : f32 to vector<8x256xf32>
    %1457 = arith.mulf %1456, %1450 : vector<8x256xf32>
    %1458 = arith.addf %1441, %1457 : vector<8x256xf32>
    %c100_244 = arith.constant 100 : index
    %1459 = memref.load %arg7[%c100_244] : memref<144xf32, #tpu.memory_space<smem>>
    %1460 = vector.broadcast %1459 : f32 to vector<8x256xf32>
    %1461 = arith.mulf %1460, %1450 : vector<8x256xf32>
    %1462 = arith.addf %1445, %1461 : vector<8x256xf32>
    %c136_245 = arith.constant 136 : index
    %1463 = memref.load %arg7[%c136_245] : memref<144xf32, #tpu.memory_space<smem>>
    %1464 = vector.broadcast %1463 : f32 to vector<8x256xf32>
    %1465 = arith.mulf %1464, %1450 : vector<8x256xf32>
    %1466 = arith.addf %1449, %1465 : vector<8x256xf32>
    %c15_i32_246 = arith.constant 15 : i32
    %1467 = tpu.dynamic_rotate %1314 by %c15_i32_246 dim 1 : vector<32x256xf32>, i32 -> vector<32x256xf32>
    %c2_247 = arith.constant 2 : index
    %c0_248 = arith.constant 0 : index
    %1468 = vector.load %arg2[%c2_247, %c0_248] : memref<10x256xf32, #tpu.memory_space<vmem>>, vector<1x256xf32>
    %1469 = vector.broadcast %1468 : vector<1x256xf32> to vector<32x256xf32>
    %1470 = arith.mulf %1467, %1469 : vector<32x256xf32>
    %1471 = vector.extract_strided_slice %1470 {offsets = [0, 0], sizes = [8, 256], strides = [1, 1]} : vector<32x256xf32> to vector<8x256xf32>
    %c2_249 = arith.constant 2 : index
    %1472 = memref.load %arg7[%c2_249] : memref<144xf32, #tpu.memory_space<smem>>
    %1473 = vector.broadcast %1472 : f32 to vector<8x256xf32>
    %1474 = arith.mulf %1473, %1471 : vector<8x256xf32>
    %1475 = arith.addf %1454, %1474 : vector<8x256xf32>
    %c38_250 = arith.constant 38 : index
    %1476 = memref.load %arg7[%c38_250] : memref<144xf32, #tpu.memory_space<smem>>
    %1477 = vector.broadcast %1476 : f32 to vector<8x256xf32>
    %1478 = arith.mulf %1477, %1471 : vector<8x256xf32>
    %1479 = arith.addf %1458, %1478 : vector<8x256xf32>
    %c74_251 = arith.constant 74 : index
    %1480 = memref.load %arg7[%c74_251] : memref<144xf32, #tpu.memory_space<smem>>
    %1481 = vector.broadcast %1480 : f32 to vector<8x256xf32>
    %1482 = arith.mulf %1481, %1471 : vector<8x256xf32>
    %1483 = arith.addf %1462, %1482 : vector<8x256xf32>
    %c110_252 = arith.constant 110 : index
    %1484 = memref.load %arg7[%c110_252] : memref<144xf32, #tpu.memory_space<smem>>
    %1485 = vector.broadcast %1484 : f32 to vector<8x256xf32>
    %1486 = arith.mulf %1485, %1471 : vector<8x256xf32>
    %1487 = arith.addf %1466, %1486 : vector<8x256xf32>
    %1488 = vector.extract_strided_slice %1470 {offsets = [8, 0], sizes = [8, 256], strides = [1, 1]} : vector<32x256xf32> to vector<8x256xf32>
    %c11_253 = arith.constant 11 : index
    %1489 = memref.load %arg7[%c11_253] : memref<144xf32, #tpu.memory_space<smem>>
    %1490 = vector.broadcast %1489 : f32 to vector<8x256xf32>
    %1491 = arith.mulf %1490, %1488 : vector<8x256xf32>
    %1492 = arith.addf %1475, %1491 : vector<8x256xf32>
    %c47_254 = arith.constant 47 : index
    %1493 = memref.load %arg7[%c47_254] : memref<144xf32, #tpu.memory_space<smem>>
    %1494 = vector.broadcast %1493 : f32 to vector<8x256xf32>
    %1495 = arith.mulf %1494, %1488 : vector<8x256xf32>
    %1496 = arith.addf %1479, %1495 : vector<8x256xf32>
    %c83_255 = arith.constant 83 : index
    %1497 = memref.load %arg7[%c83_255] : memref<144xf32, #tpu.memory_space<smem>>
    %1498 = vector.broadcast %1497 : f32 to vector<8x256xf32>
    %1499 = arith.mulf %1498, %1488 : vector<8x256xf32>
    %1500 = arith.addf %1483, %1499 : vector<8x256xf32>
    %c119_256 = arith.constant 119 : index
    %1501 = memref.load %arg7[%c119_256] : memref<144xf32, #tpu.memory_space<smem>>
    %1502 = vector.broadcast %1501 : f32 to vector<8x256xf32>
    %1503 = arith.mulf %1502, %1488 : vector<8x256xf32>
    %1504 = arith.addf %1487, %1503 : vector<8x256xf32>
    %1505 = vector.extract_strided_slice %1470 {offsets = [16, 0], sizes = [8, 256], strides = [1, 1]} : vector<32x256xf32> to vector<8x256xf32>
    %c20_257 = arith.constant 20 : index
    %1506 = memref.load %arg7[%c20_257] : memref<144xf32, #tpu.memory_space<smem>>
    %1507 = vector.broadcast %1506 : f32 to vector<8x256xf32>
    %1508 = arith.mulf %1507, %1505 : vector<8x256xf32>
    %1509 = arith.addf %1492, %1508 : vector<8x256xf32>
    %c56_258 = arith.constant 56 : index
    %1510 = memref.load %arg7[%c56_258] : memref<144xf32, #tpu.memory_space<smem>>
    %1511 = vector.broadcast %1510 : f32 to vector<8x256xf32>
    %1512 = arith.mulf %1511, %1505 : vector<8x256xf32>
    %1513 = arith.addf %1496, %1512 : vector<8x256xf32>
    %c92_259 = arith.constant 92 : index
    %1514 = memref.load %arg7[%c92_259] : memref<144xf32, #tpu.memory_space<smem>>
    %1515 = vector.broadcast %1514 : f32 to vector<8x256xf32>
    %1516 = arith.mulf %1515, %1505 : vector<8x256xf32>
    %1517 = arith.addf %1500, %1516 : vector<8x256xf32>
    %c128_260 = arith.constant 128 : index
    %1518 = memref.load %arg7[%c128_260] : memref<144xf32, #tpu.memory_space<smem>>
    %1519 = vector.broadcast %1518 : f32 to vector<8x256xf32>
    %1520 = arith.mulf %1519, %1505 : vector<8x256xf32>
    %1521 = arith.addf %1504, %1520 : vector<8x256xf32>
    %1522 = vector.extract_strided_slice %1470 {offsets = [24, 0], sizes = [8, 256], strides = [1, 1]} : vector<32x256xf32> to vector<8x256xf32>
    %c29_261 = arith.constant 29 : index
    %1523 = memref.load %arg7[%c29_261] : memref<144xf32, #tpu.memory_space<smem>>
    %1524 = vector.broadcast %1523 : f32 to vector<8x256xf32>
    %1525 = arith.mulf %1524, %1522 : vector<8x256xf32>
    %1526 = arith.addf %1509, %1525 : vector<8x256xf32>
    %c65_262 = arith.constant 65 : index
    %1527 = memref.load %arg7[%c65_262] : memref<144xf32, #tpu.memory_space<smem>>
    %1528 = vector.broadcast %1527 : f32 to vector<8x256xf32>
    %1529 = arith.mulf %1528, %1522 : vector<8x256xf32>
    %1530 = arith.addf %1513, %1529 : vector<8x256xf32>
    %c101_263 = arith.constant 101 : index
    %1531 = memref.load %arg7[%c101_263] : memref<144xf32, #tpu.memory_space<smem>>
    %1532 = vector.broadcast %1531 : f32 to vector<8x256xf32>
    %1533 = arith.mulf %1532, %1522 : vector<8x256xf32>
    %1534 = arith.addf %1517, %1533 : vector<8x256xf32>
    %c137_264 = arith.constant 137 : index
    %1535 = memref.load %arg7[%c137_264] : memref<144xf32, #tpu.memory_space<smem>>
    %1536 = vector.broadcast %1535 : f32 to vector<8x256xf32>
    %1537 = arith.mulf %1536, %1522 : vector<8x256xf32>
    %1538 = arith.addf %1521, %1537 : vector<8x256xf32>
    %c1_i32_265 = arith.constant 1 : i32
    %1539 = tpu.dynamic_rotate %1314 by %c1_i32_265 dim 1 : vector<32x256xf32>, i32 -> vector<32x256xf32>
    %c3_266 = arith.constant 3 : index
    %c0_267 = arith.constant 0 : index
    %1540 = vector.load %arg2[%c3_266, %c0_267] : memref<10x256xf32, #tpu.memory_space<vmem>>, vector<1x256xf32>
    %1541 = vector.broadcast %1540 : vector<1x256xf32> to vector<32x256xf32>
    %1542 = arith.mulf %1539, %1541 : vector<32x256xf32>
    %1543 = vector.extract_strided_slice %1542 {offsets = [0, 0], sizes = [8, 256], strides = [1, 1]} : vector<32x256xf32> to vector<8x256xf32>
    %c3_268 = arith.constant 3 : index
    %1544 = memref.load %arg7[%c3_268] : memref<144xf32, #tpu.memory_space<smem>>
    %1545 = vector.broadcast %1544 : f32 to vector<8x256xf32>
    %1546 = arith.mulf %1545, %1543 : vector<8x256xf32>
    %1547 = arith.addf %1526, %1546 : vector<8x256xf32>
    %c39_269 = arith.constant 39 : index
    %1548 = memref.load %arg7[%c39_269] : memref<144xf32, #tpu.memory_space<smem>>
    %1549 = vector.broadcast %1548 : f32 to vector<8x256xf32>
    %1550 = arith.mulf %1549, %1543 : vector<8x256xf32>
    %1551 = arith.addf %1530, %1550 : vector<8x256xf32>
    %c75_270 = arith.constant 75 : index
    %1552 = memref.load %arg7[%c75_270] : memref<144xf32, #tpu.memory_space<smem>>
    %1553 = vector.broadcast %1552 : f32 to vector<8x256xf32>
    %1554 = arith.mulf %1553, %1543 : vector<8x256xf32>
    %1555 = arith.addf %1534, %1554 : vector<8x256xf32>
    %c111_271 = arith.constant 111 : index
    %1556 = memref.load %arg7[%c111_271] : memref<144xf32, #tpu.memory_space<smem>>
    %1557 = vector.broadcast %1556 : f32 to vector<8x256xf32>
    %1558 = arith.mulf %1557, %1543 : vector<8x256xf32>
    %1559 = arith.addf %1538, %1558 : vector<8x256xf32>
    %1560 = vector.extract_strided_slice %1542 {offsets = [8, 0], sizes = [8, 256], strides = [1, 1]} : vector<32x256xf32> to vector<8x256xf32>
    %c12_272 = arith.constant 12 : index
    %1561 = memref.load %arg7[%c12_272] : memref<144xf32, #tpu.memory_space<smem>>
    %1562 = vector.broadcast %1561 : f32 to vector<8x256xf32>
    %1563 = arith.mulf %1562, %1560 : vector<8x256xf32>
    %1564 = arith.addf %1547, %1563 : vector<8x256xf32>
    %c48_273 = arith.constant 48 : index
    %1565 = memref.load %arg7[%c48_273] : memref<144xf32, #tpu.memory_space<smem>>
    %1566 = vector.broadcast %1565 : f32 to vector<8x256xf32>
    %1567 = arith.mulf %1566, %1560 : vector<8x256xf32>
    %1568 = arith.addf %1551, %1567 : vector<8x256xf32>
    %c84_274 = arith.constant 84 : index
    %1569 = memref.load %arg7[%c84_274] : memref<144xf32, #tpu.memory_space<smem>>
    %1570 = vector.broadcast %1569 : f32 to vector<8x256xf32>
    %1571 = arith.mulf %1570, %1560 : vector<8x256xf32>
    %1572 = arith.addf %1555, %1571 : vector<8x256xf32>
    %c120_275 = arith.constant 120 : index
    %1573 = memref.load %arg7[%c120_275] : memref<144xf32, #tpu.memory_space<smem>>
    %1574 = vector.broadcast %1573 : f32 to vector<8x256xf32>
    %1575 = arith.mulf %1574, %1560 : vector<8x256xf32>
    %1576 = arith.addf %1559, %1575 : vector<8x256xf32>
    %1577 = vector.extract_strided_slice %1542 {offsets = [16, 0], sizes = [8, 256], strides = [1, 1]} : vector<32x256xf32> to vector<8x256xf32>
    %c21_276 = arith.constant 21 : index
    %1578 = memref.load %arg7[%c21_276] : memref<144xf32, #tpu.memory_space<smem>>
    %1579 = vector.broadcast %1578 : f32 to vector<8x256xf32>
    %1580 = arith.mulf %1579, %1577 : vector<8x256xf32>
    %1581 = arith.addf %1564, %1580 : vector<8x256xf32>
    %c57_277 = arith.constant 57 : index
    %1582 = memref.load %arg7[%c57_277] : memref<144xf32, #tpu.memory_space<smem>>
    %1583 = vector.broadcast %1582 : f32 to vector<8x256xf32>
    %1584 = arith.mulf %1583, %1577 : vector<8x256xf32>
    %1585 = arith.addf %1568, %1584 : vector<8x256xf32>
    %c93_278 = arith.constant 93 : index
    %1586 = memref.load %arg7[%c93_278] : memref<144xf32, #tpu.memory_space<smem>>
    %1587 = vector.broadcast %1586 : f32 to vector<8x256xf32>
    %1588 = arith.mulf %1587, %1577 : vector<8x256xf32>
    %1589 = arith.addf %1572, %1588 : vector<8x256xf32>
    %c129_279 = arith.constant 129 : index
    %1590 = memref.load %arg7[%c129_279] : memref<144xf32, #tpu.memory_space<smem>>
    %1591 = vector.broadcast %1590 : f32 to vector<8x256xf32>
    %1592 = arith.mulf %1591, %1577 : vector<8x256xf32>
    %1593 = arith.addf %1576, %1592 : vector<8x256xf32>
    %1594 = vector.extract_strided_slice %1542 {offsets = [24, 0], sizes = [8, 256], strides = [1, 1]} : vector<32x256xf32> to vector<8x256xf32>
    %c30_280 = arith.constant 30 : index
    %1595 = memref.load %arg7[%c30_280] : memref<144xf32, #tpu.memory_space<smem>>
    %1596 = vector.broadcast %1595 : f32 to vector<8x256xf32>
    %1597 = arith.mulf %1596, %1594 : vector<8x256xf32>
    %1598 = arith.addf %1581, %1597 : vector<8x256xf32>
    %c66_281 = arith.constant 66 : index
    %1599 = memref.load %arg7[%c66_281] : memref<144xf32, #tpu.memory_space<smem>>
    %1600 = vector.broadcast %1599 : f32 to vector<8x256xf32>
    %1601 = arith.mulf %1600, %1594 : vector<8x256xf32>
    %1602 = arith.addf %1585, %1601 : vector<8x256xf32>
    %c102_282 = arith.constant 102 : index
    %1603 = memref.load %arg7[%c102_282] : memref<144xf32, #tpu.memory_space<smem>>
    %1604 = vector.broadcast %1603 : f32 to vector<8x256xf32>
    %1605 = arith.mulf %1604, %1594 : vector<8x256xf32>
    %1606 = arith.addf %1589, %1605 : vector<8x256xf32>
    %c138_283 = arith.constant 138 : index
    %1607 = memref.load %arg7[%c138_283] : memref<144xf32, #tpu.memory_space<smem>>
    %1608 = vector.broadcast %1607 : f32 to vector<8x256xf32>
    %1609 = arith.mulf %1608, %1594 : vector<8x256xf32>
    %1610 = arith.addf %1593, %1609 : vector<8x256xf32>
    %1611 = vector.extract_strided_slice %1314 {offsets = [0, 0], sizes = [8, 256], strides = [1, 1]} : vector<32x256xf32> to vector<8x256xf32>
    %c4_284 = arith.constant 4 : index
    %1612 = memref.load %arg7[%c4_284] : memref<144xf32, #tpu.memory_space<smem>>
    %1613 = vector.broadcast %1612 : f32 to vector<8x256xf32>
    %1614 = arith.mulf %1613, %1611 : vector<8x256xf32>
    %1615 = arith.addf %1598, %1614 : vector<8x256xf32>
    %c40_285 = arith.constant 40 : index
    %1616 = memref.load %arg7[%c40_285] : memref<144xf32, #tpu.memory_space<smem>>
    %1617 = vector.broadcast %1616 : f32 to vector<8x256xf32>
    %1618 = arith.mulf %1617, %1611 : vector<8x256xf32>
    %1619 = arith.addf %1602, %1618 : vector<8x256xf32>
    %c76_286 = arith.constant 76 : index
    %1620 = memref.load %arg7[%c76_286] : memref<144xf32, #tpu.memory_space<smem>>
    %1621 = vector.broadcast %1620 : f32 to vector<8x256xf32>
    %1622 = arith.mulf %1621, %1611 : vector<8x256xf32>
    %1623 = arith.addf %1606, %1622 : vector<8x256xf32>
    %c112_287 = arith.constant 112 : index
    %1624 = memref.load %arg7[%c112_287] : memref<144xf32, #tpu.memory_space<smem>>
    %1625 = vector.broadcast %1624 : f32 to vector<8x256xf32>
    %1626 = arith.mulf %1625, %1611 : vector<8x256xf32>
    %1627 = arith.addf %1610, %1626 : vector<8x256xf32>
    %1628 = vector.extract_strided_slice %1314 {offsets = [8, 0], sizes = [8, 256], strides = [1, 1]} : vector<32x256xf32> to vector<8x256xf32>
    %c13_288 = arith.constant 13 : index
    %1629 = memref.load %arg7[%c13_288] : memref<144xf32, #tpu.memory_space<smem>>
    %1630 = vector.broadcast %1629 : f32 to vector<8x256xf32>
    %1631 = arith.mulf %1630, %1628 : vector<8x256xf32>
    %1632 = arith.addf %1615, %1631 : vector<8x256xf32>
    %c49_289 = arith.constant 49 : index
    %1633 = memref.load %arg7[%c49_289] : memref<144xf32, #tpu.memory_space<smem>>
    %1634 = vector.broadcast %1633 : f32 to vector<8x256xf32>
    %1635 = arith.mulf %1634, %1628 : vector<8x256xf32>
    %1636 = arith.addf %1619, %1635 : vector<8x256xf32>
    %c85_290 = arith.constant 85 : index
    %1637 = memref.load %arg7[%c85_290] : memref<144xf32, #tpu.memory_space<smem>>
    %1638 = vector.broadcast %1637 : f32 to vector<8x256xf32>
    %1639 = arith.mulf %1638, %1628 : vector<8x256xf32>
    %1640 = arith.addf %1623, %1639 : vector<8x256xf32>
    %c121_291 = arith.constant 121 : index
    %1641 = memref.load %arg7[%c121_291] : memref<144xf32, #tpu.memory_space<smem>>
    %1642 = vector.broadcast %1641 : f32 to vector<8x256xf32>
    %1643 = arith.mulf %1642, %1628 : vector<8x256xf32>
    %1644 = arith.addf %1627, %1643 : vector<8x256xf32>
    %1645 = vector.extract_strided_slice %1314 {offsets = [16, 0], sizes = [8, 256], strides = [1, 1]} : vector<32x256xf32> to vector<8x256xf32>
    %c22_292 = arith.constant 22 : index
    %1646 = memref.load %arg7[%c22_292] : memref<144xf32, #tpu.memory_space<smem>>
    %1647 = vector.broadcast %1646 : f32 to vector<8x256xf32>
    %1648 = arith.mulf %1647, %1645 : vector<8x256xf32>
    %1649 = arith.addf %1632, %1648 : vector<8x256xf32>
    %c58_293 = arith.constant 58 : index
    %1650 = memref.load %arg7[%c58_293] : memref<144xf32, #tpu.memory_space<smem>>
    %1651 = vector.broadcast %1650 : f32 to vector<8x256xf32>
    %1652 = arith.mulf %1651, %1645 : vector<8x256xf32>
    %1653 = arith.addf %1636, %1652 : vector<8x256xf32>
    %c94_294 = arith.constant 94 : index
    %1654 = memref.load %arg7[%c94_294] : memref<144xf32, #tpu.memory_space<smem>>
    %1655 = vector.broadcast %1654 : f32 to vector<8x256xf32>
    %1656 = arith.mulf %1655, %1645 : vector<8x256xf32>
    %1657 = arith.addf %1640, %1656 : vector<8x256xf32>
    %c130_295 = arith.constant 130 : index
    %1658 = memref.load %arg7[%c130_295] : memref<144xf32, #tpu.memory_space<smem>>
    %1659 = vector.broadcast %1658 : f32 to vector<8x256xf32>
    %1660 = arith.mulf %1659, %1645 : vector<8x256xf32>
    %1661 = arith.addf %1644, %1660 : vector<8x256xf32>
    %1662 = vector.extract_strided_slice %1314 {offsets = [24, 0], sizes = [8, 256], strides = [1, 1]} : vector<32x256xf32> to vector<8x256xf32>
    %c31_296 = arith.constant 31 : index
    %1663 = memref.load %arg7[%c31_296] : memref<144xf32, #tpu.memory_space<smem>>
    %1664 = vector.broadcast %1663 : f32 to vector<8x256xf32>
    %1665 = arith.mulf %1664, %1662 : vector<8x256xf32>
    %1666 = arith.addf %1649, %1665 : vector<8x256xf32>
    %c67_297 = arith.constant 67 : index
    %1667 = memref.load %arg7[%c67_297] : memref<144xf32, #tpu.memory_space<smem>>
    %1668 = vector.broadcast %1667 : f32 to vector<8x256xf32>
    %1669 = arith.mulf %1668, %1662 : vector<8x256xf32>
    %1670 = arith.addf %1653, %1669 : vector<8x256xf32>
    %c103_298 = arith.constant 103 : index
    %1671 = memref.load %arg7[%c103_298] : memref<144xf32, #tpu.memory_space<smem>>
    %1672 = vector.broadcast %1671 : f32 to vector<8x256xf32>
    %1673 = arith.mulf %1672, %1662 : vector<8x256xf32>
    %1674 = arith.addf %1657, %1673 : vector<8x256xf32>
    %c139_299 = arith.constant 139 : index
    %1675 = memref.load %arg7[%c139_299] : memref<144xf32, #tpu.memory_space<smem>>
    %1676 = vector.broadcast %1675 : f32 to vector<8x256xf32>
    %1677 = arith.mulf %1676, %1662 : vector<8x256xf32>
    %1678 = arith.addf %1661, %1677 : vector<8x256xf32>
    %c255_i32_300 = arith.constant 255 : i32
    %1679 = tpu.dynamic_rotate %1314 by %c255_i32_300 dim 1 : vector<32x256xf32>, i32 -> vector<32x256xf32>
    %c5_301 = arith.constant 5 : index
    %c0_302 = arith.constant 0 : index
    %1680 = vector.load %arg2[%c5_301, %c0_302] : memref<10x256xf32, #tpu.memory_space<vmem>>, vector<1x256xf32>
    %1681 = vector.broadcast %1680 : vector<1x256xf32> to vector<32x256xf32>
    %1682 = arith.mulf %1679, %1681 : vector<32x256xf32>
    %1683 = vector.extract_strided_slice %1682 {offsets = [0, 0], sizes = [8, 256], strides = [1, 1]} : vector<32x256xf32> to vector<8x256xf32>
    %c5_303 = arith.constant 5 : index
    %1684 = memref.load %arg7[%c5_303] : memref<144xf32, #tpu.memory_space<smem>>
    %1685 = vector.broadcast %1684 : f32 to vector<8x256xf32>
    %1686 = arith.mulf %1685, %1683 : vector<8x256xf32>
    %1687 = arith.addf %1666, %1686 : vector<8x256xf32>
    %c41_304 = arith.constant 41 : index
    %1688 = memref.load %arg7[%c41_304] : memref<144xf32, #tpu.memory_space<smem>>
    %1689 = vector.broadcast %1688 : f32 to vector<8x256xf32>
    %1690 = arith.mulf %1689, %1683 : vector<8x256xf32>
    %1691 = arith.addf %1670, %1690 : vector<8x256xf32>
    %c77_305 = arith.constant 77 : index
    %1692 = memref.load %arg7[%c77_305] : memref<144xf32, #tpu.memory_space<smem>>
    %1693 = vector.broadcast %1692 : f32 to vector<8x256xf32>
    %1694 = arith.mulf %1693, %1683 : vector<8x256xf32>
    %1695 = arith.addf %1674, %1694 : vector<8x256xf32>
    %c113_306 = arith.constant 113 : index
    %1696 = memref.load %arg7[%c113_306] : memref<144xf32, #tpu.memory_space<smem>>
    %1697 = vector.broadcast %1696 : f32 to vector<8x256xf32>
    %1698 = arith.mulf %1697, %1683 : vector<8x256xf32>
    %1699 = arith.addf %1678, %1698 : vector<8x256xf32>
    %1700 = vector.extract_strided_slice %1682 {offsets = [8, 0], sizes = [8, 256], strides = [1, 1]} : vector<32x256xf32> to vector<8x256xf32>
    %c14_307 = arith.constant 14 : index
    %1701 = memref.load %arg7[%c14_307] : memref<144xf32, #tpu.memory_space<smem>>
    %1702 = vector.broadcast %1701 : f32 to vector<8x256xf32>
    %1703 = arith.mulf %1702, %1700 : vector<8x256xf32>
    %1704 = arith.addf %1687, %1703 : vector<8x256xf32>
    %c50_308 = arith.constant 50 : index
    %1705 = memref.load %arg7[%c50_308] : memref<144xf32, #tpu.memory_space<smem>>
    %1706 = vector.broadcast %1705 : f32 to vector<8x256xf32>
    %1707 = arith.mulf %1706, %1700 : vector<8x256xf32>
    %1708 = arith.addf %1691, %1707 : vector<8x256xf32>
    %c86_309 = arith.constant 86 : index
    %1709 = memref.load %arg7[%c86_309] : memref<144xf32, #tpu.memory_space<smem>>
    %1710 = vector.broadcast %1709 : f32 to vector<8x256xf32>
    %1711 = arith.mulf %1710, %1700 : vector<8x256xf32>
    %1712 = arith.addf %1695, %1711 : vector<8x256xf32>
    %c122_310 = arith.constant 122 : index
    %1713 = memref.load %arg7[%c122_310] : memref<144xf32, #tpu.memory_space<smem>>
    %1714 = vector.broadcast %1713 : f32 to vector<8x256xf32>
    %1715 = arith.mulf %1714, %1700 : vector<8x256xf32>
    %1716 = arith.addf %1699, %1715 : vector<8x256xf32>
    %1717 = vector.extract_strided_slice %1682 {offsets = [16, 0], sizes = [8, 256], strides = [1, 1]} : vector<32x256xf32> to vector<8x256xf32>
    %c23_311 = arith.constant 23 : index
    %1718 = memref.load %arg7[%c23_311] : memref<144xf32, #tpu.memory_space<smem>>
    %1719 = vector.broadcast %1718 : f32 to vector<8x256xf32>
    %1720 = arith.mulf %1719, %1717 : vector<8x256xf32>
    %1721 = arith.addf %1704, %1720 : vector<8x256xf32>
    %c59_312 = arith.constant 59 : index
    %1722 = memref.load %arg7[%c59_312] : memref<144xf32, #tpu.memory_space<smem>>
    %1723 = vector.broadcast %1722 : f32 to vector<8x256xf32>
    %1724 = arith.mulf %1723, %1717 : vector<8x256xf32>
    %1725 = arith.addf %1708, %1724 : vector<8x256xf32>
    %c95_313 = arith.constant 95 : index
    %1726 = memref.load %arg7[%c95_313] : memref<144xf32, #tpu.memory_space<smem>>
    %1727 = vector.broadcast %1726 : f32 to vector<8x256xf32>
    %1728 = arith.mulf %1727, %1717 : vector<8x256xf32>
    %1729 = arith.addf %1712, %1728 : vector<8x256xf32>
    %c131_314 = arith.constant 131 : index
    %1730 = memref.load %arg7[%c131_314] : memref<144xf32, #tpu.memory_space<smem>>
    %1731 = vector.broadcast %1730 : f32 to vector<8x256xf32>
    %1732 = arith.mulf %1731, %1717 : vector<8x256xf32>
    %1733 = arith.addf %1716, %1732 : vector<8x256xf32>
    %1734 = vector.extract_strided_slice %1682 {offsets = [24, 0], sizes = [8, 256], strides = [1, 1]} : vector<32x256xf32> to vector<8x256xf32>
    %c32_315 = arith.constant 32 : index
    %1735 = memref.load %arg7[%c32_315] : memref<144xf32, #tpu.memory_space<smem>>
    %1736 = vector.broadcast %1735 : f32 to vector<8x256xf32>
    %1737 = arith.mulf %1736, %1734 : vector<8x256xf32>
    %1738 = arith.addf %1721, %1737 : vector<8x256xf32>
    %c68_316 = arith.constant 68 : index
    %1739 = memref.load %arg7[%c68_316] : memref<144xf32, #tpu.memory_space<smem>>
    %1740 = vector.broadcast %1739 : f32 to vector<8x256xf32>
    %1741 = arith.mulf %1740, %1734 : vector<8x256xf32>
    %1742 = arith.addf %1725, %1741 : vector<8x256xf32>
    %c104_317 = arith.constant 104 : index
    %1743 = memref.load %arg7[%c104_317] : memref<144xf32, #tpu.memory_space<smem>>
    %1744 = vector.broadcast %1743 : f32 to vector<8x256xf32>
    %1745 = arith.mulf %1744, %1734 : vector<8x256xf32>
    %1746 = arith.addf %1729, %1745 : vector<8x256xf32>
    %c140_318 = arith.constant 140 : index
    %1747 = memref.load %arg7[%c140_318] : memref<144xf32, #tpu.memory_space<smem>>
    %1748 = vector.broadcast %1747 : f32 to vector<8x256xf32>
    %1749 = arith.mulf %1748, %1734 : vector<8x256xf32>
    %1750 = arith.addf %1733, %1749 : vector<8x256xf32>
    %c241_i32_319 = arith.constant 241 : i32
    %1751 = tpu.dynamic_rotate %1314 by %c241_i32_319 dim 1 : vector<32x256xf32>, i32 -> vector<32x256xf32>
    %c6_320 = arith.constant 6 : index
    %c0_321 = arith.constant 0 : index
    %1752 = vector.load %arg2[%c6_320, %c0_321] : memref<10x256xf32, #tpu.memory_space<vmem>>, vector<1x256xf32>
    %1753 = vector.broadcast %1752 : vector<1x256xf32> to vector<32x256xf32>
    %1754 = arith.mulf %1751, %1753 : vector<32x256xf32>
    %1755 = vector.extract_strided_slice %1754 {offsets = [0, 0], sizes = [8, 256], strides = [1, 1]} : vector<32x256xf32> to vector<8x256xf32>
    %c6_322 = arith.constant 6 : index
    %1756 = memref.load %arg7[%c6_322] : memref<144xf32, #tpu.memory_space<smem>>
    %1757 = vector.broadcast %1756 : f32 to vector<8x256xf32>
    %1758 = arith.mulf %1757, %1755 : vector<8x256xf32>
    %1759 = arith.addf %1738, %1758 : vector<8x256xf32>
    %c42_323 = arith.constant 42 : index
    %1760 = memref.load %arg7[%c42_323] : memref<144xf32, #tpu.memory_space<smem>>
    %1761 = vector.broadcast %1760 : f32 to vector<8x256xf32>
    %1762 = arith.mulf %1761, %1755 : vector<8x256xf32>
    %1763 = arith.addf %1742, %1762 : vector<8x256xf32>
    %c78_324 = arith.constant 78 : index
    %1764 = memref.load %arg7[%c78_324] : memref<144xf32, #tpu.memory_space<smem>>
    %1765 = vector.broadcast %1764 : f32 to vector<8x256xf32>
    %1766 = arith.mulf %1765, %1755 : vector<8x256xf32>
    %1767 = arith.addf %1746, %1766 : vector<8x256xf32>
    %c114_325 = arith.constant 114 : index
    %1768 = memref.load %arg7[%c114_325] : memref<144xf32, #tpu.memory_space<smem>>
    %1769 = vector.broadcast %1768 : f32 to vector<8x256xf32>
    %1770 = arith.mulf %1769, %1755 : vector<8x256xf32>
    %1771 = arith.addf %1750, %1770 : vector<8x256xf32>
    %1772 = vector.extract_strided_slice %1754 {offsets = [8, 0], sizes = [8, 256], strides = [1, 1]} : vector<32x256xf32> to vector<8x256xf32>
    %c15_326 = arith.constant 15 : index
    %1773 = memref.load %arg7[%c15_326] : memref<144xf32, #tpu.memory_space<smem>>
    %1774 = vector.broadcast %1773 : f32 to vector<8x256xf32>
    %1775 = arith.mulf %1774, %1772 : vector<8x256xf32>
    %1776 = arith.addf %1759, %1775 : vector<8x256xf32>
    %c51_327 = arith.constant 51 : index
    %1777 = memref.load %arg7[%c51_327] : memref<144xf32, #tpu.memory_space<smem>>
    %1778 = vector.broadcast %1777 : f32 to vector<8x256xf32>
    %1779 = arith.mulf %1778, %1772 : vector<8x256xf32>
    %1780 = arith.addf %1763, %1779 : vector<8x256xf32>
    %c87_328 = arith.constant 87 : index
    %1781 = memref.load %arg7[%c87_328] : memref<144xf32, #tpu.memory_space<smem>>
    %1782 = vector.broadcast %1781 : f32 to vector<8x256xf32>
    %1783 = arith.mulf %1782, %1772 : vector<8x256xf32>
    %1784 = arith.addf %1767, %1783 : vector<8x256xf32>
    %c123_329 = arith.constant 123 : index
    %1785 = memref.load %arg7[%c123_329] : memref<144xf32, #tpu.memory_space<smem>>
    %1786 = vector.broadcast %1785 : f32 to vector<8x256xf32>
    %1787 = arith.mulf %1786, %1772 : vector<8x256xf32>
    %1788 = arith.addf %1771, %1787 : vector<8x256xf32>
    %1789 = vector.extract_strided_slice %1754 {offsets = [16, 0], sizes = [8, 256], strides = [1, 1]} : vector<32x256xf32> to vector<8x256xf32>
    %c24_330 = arith.constant 24 : index
    %1790 = memref.load %arg7[%c24_330] : memref<144xf32, #tpu.memory_space<smem>>
    %1791 = vector.broadcast %1790 : f32 to vector<8x256xf32>
    %1792 = arith.mulf %1791, %1789 : vector<8x256xf32>
    %1793 = arith.addf %1776, %1792 : vector<8x256xf32>
    %c60_331 = arith.constant 60 : index
    %1794 = memref.load %arg7[%c60_331] : memref<144xf32, #tpu.memory_space<smem>>
    %1795 = vector.broadcast %1794 : f32 to vector<8x256xf32>
    %1796 = arith.mulf %1795, %1789 : vector<8x256xf32>
    %1797 = arith.addf %1780, %1796 : vector<8x256xf32>
    %c96_332 = arith.constant 96 : index
    %1798 = memref.load %arg7[%c96_332] : memref<144xf32, #tpu.memory_space<smem>>
    %1799 = vector.broadcast %1798 : f32 to vector<8x256xf32>
    %1800 = arith.mulf %1799, %1789 : vector<8x256xf32>
    %1801 = arith.addf %1784, %1800 : vector<8x256xf32>
    %c132_333 = arith.constant 132 : index
    %1802 = memref.load %arg7[%c132_333] : memref<144xf32, #tpu.memory_space<smem>>
    %1803 = vector.broadcast %1802 : f32 to vector<8x256xf32>
    %1804 = arith.mulf %1803, %1789 : vector<8x256xf32>
    %1805 = arith.addf %1788, %1804 : vector<8x256xf32>
    %1806 = vector.extract_strided_slice %1754 {offsets = [24, 0], sizes = [8, 256], strides = [1, 1]} : vector<32x256xf32> to vector<8x256xf32>
    %c33_334 = arith.constant 33 : index
    %1807 = memref.load %arg7[%c33_334] : memref<144xf32, #tpu.memory_space<smem>>
    %1808 = vector.broadcast %1807 : f32 to vector<8x256xf32>
    %1809 = arith.mulf %1808, %1806 : vector<8x256xf32>
    %1810 = arith.addf %1793, %1809 : vector<8x256xf32>
    %c69_335 = arith.constant 69 : index
    %1811 = memref.load %arg7[%c69_335] : memref<144xf32, #tpu.memory_space<smem>>
    %1812 = vector.broadcast %1811 : f32 to vector<8x256xf32>
    %1813 = arith.mulf %1812, %1806 : vector<8x256xf32>
    %1814 = arith.addf %1797, %1813 : vector<8x256xf32>
    %c105_336 = arith.constant 105 : index
    %1815 = memref.load %arg7[%c105_336] : memref<144xf32, #tpu.memory_space<smem>>
    %1816 = vector.broadcast %1815 : f32 to vector<8x256xf32>
    %1817 = arith.mulf %1816, %1806 : vector<8x256xf32>
    %1818 = arith.addf %1801, %1817 : vector<8x256xf32>
    %c141_337 = arith.constant 141 : index
    %1819 = memref.load %arg7[%c141_337] : memref<144xf32, #tpu.memory_space<smem>>
    %1820 = vector.broadcast %1819 : f32 to vector<8x256xf32>
    %1821 = arith.mulf %1820, %1806 : vector<8x256xf32>
    %1822 = arith.addf %1805, %1821 : vector<8x256xf32>
    %c240_i32_338 = arith.constant 240 : i32
    %1823 = tpu.dynamic_rotate %1314 by %c240_i32_338 dim 1 : vector<32x256xf32>, i32 -> vector<32x256xf32>
    %c7_339 = arith.constant 7 : index
    %c0_340 = arith.constant 0 : index
    %1824 = vector.load %arg2[%c7_339, %c0_340] : memref<10x256xf32, #tpu.memory_space<vmem>>, vector<1x256xf32>
    %1825 = vector.broadcast %1824 : vector<1x256xf32> to vector<32x256xf32>
    %1826 = arith.mulf %1823, %1825 : vector<32x256xf32>
    %1827 = vector.extract_strided_slice %1826 {offsets = [0, 0], sizes = [8, 256], strides = [1, 1]} : vector<32x256xf32> to vector<8x256xf32>
    %c7_341 = arith.constant 7 : index
    %1828 = memref.load %arg7[%c7_341] : memref<144xf32, #tpu.memory_space<smem>>
    %1829 = vector.broadcast %1828 : f32 to vector<8x256xf32>
    %1830 = arith.mulf %1829, %1827 : vector<8x256xf32>
    %1831 = arith.addf %1810, %1830 : vector<8x256xf32>
    %c43_342 = arith.constant 43 : index
    %1832 = memref.load %arg7[%c43_342] : memref<144xf32, #tpu.memory_space<smem>>
    %1833 = vector.broadcast %1832 : f32 to vector<8x256xf32>
    %1834 = arith.mulf %1833, %1827 : vector<8x256xf32>
    %1835 = arith.addf %1814, %1834 : vector<8x256xf32>
    %c79_343 = arith.constant 79 : index
    %1836 = memref.load %arg7[%c79_343] : memref<144xf32, #tpu.memory_space<smem>>
    %1837 = vector.broadcast %1836 : f32 to vector<8x256xf32>
    %1838 = arith.mulf %1837, %1827 : vector<8x256xf32>
    %1839 = arith.addf %1818, %1838 : vector<8x256xf32>
    %c115_344 = arith.constant 115 : index
    %1840 = memref.load %arg7[%c115_344] : memref<144xf32, #tpu.memory_space<smem>>
    %1841 = vector.broadcast %1840 : f32 to vector<8x256xf32>
    %1842 = arith.mulf %1841, %1827 : vector<8x256xf32>
    %1843 = arith.addf %1822, %1842 : vector<8x256xf32>
    %1844 = vector.extract_strided_slice %1826 {offsets = [8, 0], sizes = [8, 256], strides = [1, 1]} : vector<32x256xf32> to vector<8x256xf32>
    %c16_345 = arith.constant 16 : index
    %1845 = memref.load %arg7[%c16_345] : memref<144xf32, #tpu.memory_space<smem>>
    %1846 = vector.broadcast %1845 : f32 to vector<8x256xf32>
    %1847 = arith.mulf %1846, %1844 : vector<8x256xf32>
    %1848 = arith.addf %1831, %1847 : vector<8x256xf32>
    %c52_346 = arith.constant 52 : index
    %1849 = memref.load %arg7[%c52_346] : memref<144xf32, #tpu.memory_space<smem>>
    %1850 = vector.broadcast %1849 : f32 to vector<8x256xf32>
    %1851 = arith.mulf %1850, %1844 : vector<8x256xf32>
    %1852 = arith.addf %1835, %1851 : vector<8x256xf32>
    %c88_347 = arith.constant 88 : index
    %1853 = memref.load %arg7[%c88_347] : memref<144xf32, #tpu.memory_space<smem>>
    %1854 = vector.broadcast %1853 : f32 to vector<8x256xf32>
    %1855 = arith.mulf %1854, %1844 : vector<8x256xf32>
    %1856 = arith.addf %1839, %1855 : vector<8x256xf32>
    %c124_348 = arith.constant 124 : index
    %1857 = memref.load %arg7[%c124_348] : memref<144xf32, #tpu.memory_space<smem>>
    %1858 = vector.broadcast %1857 : f32 to vector<8x256xf32>
    %1859 = arith.mulf %1858, %1844 : vector<8x256xf32>
    %1860 = arith.addf %1843, %1859 : vector<8x256xf32>
    %1861 = vector.extract_strided_slice %1826 {offsets = [16, 0], sizes = [8, 256], strides = [1, 1]} : vector<32x256xf32> to vector<8x256xf32>
    %c25_349 = arith.constant 25 : index
    %1862 = memref.load %arg7[%c25_349] : memref<144xf32, #tpu.memory_space<smem>>
    %1863 = vector.broadcast %1862 : f32 to vector<8x256xf32>
    %1864 = arith.mulf %1863, %1861 : vector<8x256xf32>
    %1865 = arith.addf %1848, %1864 : vector<8x256xf32>
    %c61_350 = arith.constant 61 : index
    %1866 = memref.load %arg7[%c61_350] : memref<144xf32, #tpu.memory_space<smem>>
    %1867 = vector.broadcast %1866 : f32 to vector<8x256xf32>
    %1868 = arith.mulf %1867, %1861 : vector<8x256xf32>
    %1869 = arith.addf %1852, %1868 : vector<8x256xf32>
    %c97_351 = arith.constant 97 : index
    %1870 = memref.load %arg7[%c97_351] : memref<144xf32, #tpu.memory_space<smem>>
    %1871 = vector.broadcast %1870 : f32 to vector<8x256xf32>
    %1872 = arith.mulf %1871, %1861 : vector<8x256xf32>
    %1873 = arith.addf %1856, %1872 : vector<8x256xf32>
    %c133_352 = arith.constant 133 : index
    %1874 = memref.load %arg7[%c133_352] : memref<144xf32, #tpu.memory_space<smem>>
    %1875 = vector.broadcast %1874 : f32 to vector<8x256xf32>
    %1876 = arith.mulf %1875, %1861 : vector<8x256xf32>
    %1877 = arith.addf %1860, %1876 : vector<8x256xf32>
    %1878 = vector.extract_strided_slice %1826 {offsets = [24, 0], sizes = [8, 256], strides = [1, 1]} : vector<32x256xf32> to vector<8x256xf32>
    %c34_353 = arith.constant 34 : index
    %1879 = memref.load %arg7[%c34_353] : memref<144xf32, #tpu.memory_space<smem>>
    %1880 = vector.broadcast %1879 : f32 to vector<8x256xf32>
    %1881 = arith.mulf %1880, %1878 : vector<8x256xf32>
    %1882 = arith.addf %1865, %1881 : vector<8x256xf32>
    %c70_354 = arith.constant 70 : index
    %1883 = memref.load %arg7[%c70_354] : memref<144xf32, #tpu.memory_space<smem>>
    %1884 = vector.broadcast %1883 : f32 to vector<8x256xf32>
    %1885 = arith.mulf %1884, %1878 : vector<8x256xf32>
    %1886 = arith.addf %1869, %1885 : vector<8x256xf32>
    %c106_355 = arith.constant 106 : index
    %1887 = memref.load %arg7[%c106_355] : memref<144xf32, #tpu.memory_space<smem>>
    %1888 = vector.broadcast %1887 : f32 to vector<8x256xf32>
    %1889 = arith.mulf %1888, %1878 : vector<8x256xf32>
    %1890 = arith.addf %1873, %1889 : vector<8x256xf32>
    %c142_356 = arith.constant 142 : index
    %1891 = memref.load %arg7[%c142_356] : memref<144xf32, #tpu.memory_space<smem>>
    %1892 = vector.broadcast %1891 : f32 to vector<8x256xf32>
    %1893 = arith.mulf %1892, %1878 : vector<8x256xf32>
    %1894 = arith.addf %1877, %1893 : vector<8x256xf32>
    %c239_i32_357 = arith.constant 239 : i32
    %1895 = tpu.dynamic_rotate %1314 by %c239_i32_357 dim 1 : vector<32x256xf32>, i32 -> vector<32x256xf32>
    %c8_358 = arith.constant 8 : index
    %c0_359 = arith.constant 0 : index
    %1896 = vector.load %arg2[%c8_358, %c0_359] : memref<10x256xf32, #tpu.memory_space<vmem>>, vector<1x256xf32>
    %1897 = vector.broadcast %1896 : vector<1x256xf32> to vector<32x256xf32>
    %1898 = arith.mulf %1895, %1897 : vector<32x256xf32>
    %1899 = vector.extract_strided_slice %1898 {offsets = [0, 0], sizes = [8, 256], strides = [1, 1]} : vector<32x256xf32> to vector<8x256xf32>
    %c8_360 = arith.constant 8 : index
    %1900 = memref.load %arg7[%c8_360] : memref<144xf32, #tpu.memory_space<smem>>
    %1901 = vector.broadcast %1900 : f32 to vector<8x256xf32>
    %1902 = arith.mulf %1901, %1899 : vector<8x256xf32>
    %1903 = arith.addf %1882, %1902 : vector<8x256xf32>
    %c44_361 = arith.constant 44 : index
    %1904 = memref.load %arg7[%c44_361] : memref<144xf32, #tpu.memory_space<smem>>
    %1905 = vector.broadcast %1904 : f32 to vector<8x256xf32>
    %1906 = arith.mulf %1905, %1899 : vector<8x256xf32>
    %1907 = arith.addf %1886, %1906 : vector<8x256xf32>
    %c80_362 = arith.constant 80 : index
    %1908 = memref.load %arg7[%c80_362] : memref<144xf32, #tpu.memory_space<smem>>
    %1909 = vector.broadcast %1908 : f32 to vector<8x256xf32>
    %1910 = arith.mulf %1909, %1899 : vector<8x256xf32>
    %1911 = arith.addf %1890, %1910 : vector<8x256xf32>
    %c116_363 = arith.constant 116 : index
    %1912 = memref.load %arg7[%c116_363] : memref<144xf32, #tpu.memory_space<smem>>
    %1913 = vector.broadcast %1912 : f32 to vector<8x256xf32>
    %1914 = arith.mulf %1913, %1899 : vector<8x256xf32>
    %1915 = arith.addf %1894, %1914 : vector<8x256xf32>
    %1916 = vector.extract_strided_slice %1898 {offsets = [8, 0], sizes = [8, 256], strides = [1, 1]} : vector<32x256xf32> to vector<8x256xf32>
    %c17_364 = arith.constant 17 : index
    %1917 = memref.load %arg7[%c17_364] : memref<144xf32, #tpu.memory_space<smem>>
    %1918 = vector.broadcast %1917 : f32 to vector<8x256xf32>
    %1919 = arith.mulf %1918, %1916 : vector<8x256xf32>
    %1920 = arith.addf %1903, %1919 : vector<8x256xf32>
    %c53_365 = arith.constant 53 : index
    %1921 = memref.load %arg7[%c53_365] : memref<144xf32, #tpu.memory_space<smem>>
    %1922 = vector.broadcast %1921 : f32 to vector<8x256xf32>
    %1923 = arith.mulf %1922, %1916 : vector<8x256xf32>
    %1924 = arith.addf %1907, %1923 : vector<8x256xf32>
    %c89_366 = arith.constant 89 : index
    %1925 = memref.load %arg7[%c89_366] : memref<144xf32, #tpu.memory_space<smem>>
    %1926 = vector.broadcast %1925 : f32 to vector<8x256xf32>
    %1927 = arith.mulf %1926, %1916 : vector<8x256xf32>
    %1928 = arith.addf %1911, %1927 : vector<8x256xf32>
    %c125_367 = arith.constant 125 : index
    %1929 = memref.load %arg7[%c125_367] : memref<144xf32, #tpu.memory_space<smem>>
    %1930 = vector.broadcast %1929 : f32 to vector<8x256xf32>
    %1931 = arith.mulf %1930, %1916 : vector<8x256xf32>
    %1932 = arith.addf %1915, %1931 : vector<8x256xf32>
    %1933 = vector.extract_strided_slice %1898 {offsets = [16, 0], sizes = [8, 256], strides = [1, 1]} : vector<32x256xf32> to vector<8x256xf32>
    %c26_368 = arith.constant 26 : index
    %1934 = memref.load %arg7[%c26_368] : memref<144xf32, #tpu.memory_space<smem>>
    %1935 = vector.broadcast %1934 : f32 to vector<8x256xf32>
    %1936 = arith.mulf %1935, %1933 : vector<8x256xf32>
    %1937 = arith.addf %1920, %1936 : vector<8x256xf32>
    %c62_369 = arith.constant 62 : index
    %1938 = memref.load %arg7[%c62_369] : memref<144xf32, #tpu.memory_space<smem>>
    %1939 = vector.broadcast %1938 : f32 to vector<8x256xf32>
    %1940 = arith.mulf %1939, %1933 : vector<8x256xf32>
    %1941 = arith.addf %1924, %1940 : vector<8x256xf32>
    %c98_370 = arith.constant 98 : index
    %1942 = memref.load %arg7[%c98_370] : memref<144xf32, #tpu.memory_space<smem>>
    %1943 = vector.broadcast %1942 : f32 to vector<8x256xf32>
    %1944 = arith.mulf %1943, %1933 : vector<8x256xf32>
    %1945 = arith.addf %1928, %1944 : vector<8x256xf32>
    %c134_371 = arith.constant 134 : index
    %1946 = memref.load %arg7[%c134_371] : memref<144xf32, #tpu.memory_space<smem>>
    %1947 = vector.broadcast %1946 : f32 to vector<8x256xf32>
    %1948 = arith.mulf %1947, %1933 : vector<8x256xf32>
    %1949 = arith.addf %1932, %1948 : vector<8x256xf32>
    %1950 = vector.extract_strided_slice %1898 {offsets = [24, 0], sizes = [8, 256], strides = [1, 1]} : vector<32x256xf32> to vector<8x256xf32>
    %c35_372 = arith.constant 35 : index
    %1951 = memref.load %arg7[%c35_372] : memref<144xf32, #tpu.memory_space<smem>>
    %1952 = vector.broadcast %1951 : f32 to vector<8x256xf32>
    %1953 = arith.mulf %1952, %1950 : vector<8x256xf32>
    %1954 = arith.addf %1937, %1953 : vector<8x256xf32>
    %c71_373 = arith.constant 71 : index
    %1955 = memref.load %arg7[%c71_373] : memref<144xf32, #tpu.memory_space<smem>>
    %1956 = vector.broadcast %1955 : f32 to vector<8x256xf32>
    %1957 = arith.mulf %1956, %1950 : vector<8x256xf32>
    %1958 = arith.addf %1941, %1957 : vector<8x256xf32>
    %c107_374 = arith.constant 107 : index
    %1959 = memref.load %arg7[%c107_374] : memref<144xf32, #tpu.memory_space<smem>>
    %1960 = vector.broadcast %1959 : f32 to vector<8x256xf32>
    %1961 = arith.mulf %1960, %1950 : vector<8x256xf32>
    %1962 = arith.addf %1945, %1961 : vector<8x256xf32>
    %c143_375 = arith.constant 143 : index
    %1963 = memref.load %arg7[%c143_375] : memref<144xf32, #tpu.memory_space<smem>>
    %1964 = vector.broadcast %1963 : f32 to vector<8x256xf32>
    %1965 = arith.mulf %1964, %1950 : vector<8x256xf32>
    %1966 = arith.addf %1949, %1965 : vector<8x256xf32>
    %1967 = tpu.concatenate %1954, %1958, %1962, %1966 in 0 : vector<8x256xf32>, vector<8x256xf32>, vector<8x256xf32>, vector<8x256xf32> -> vector<32x256xf32>
    %c9_376 = arith.constant 9 : index
    %c0_377 = arith.constant 0 : index
    %1968 = vector.load %arg2[%c9_376, %c0_377] : memref<10x256xf32, #tpu.memory_space<vmem>>, vector<1x256xf32>
    %1969 = arith.mulf %1967, %1967 : vector<32x256xf32>
    %1970 = tpu.concatenate %1967, %1969 in 0 : vector<32x256xf32>, vector<32x256xf32> -> vector<64x256xf32>
    %c1_i32_378 = arith.constant 1 : i32
    %1971 = tpu.dynamic_rotate %1970 by %c1_i32_378 dim 1 : vector<64x256xf32>, i32 -> vector<64x256xf32>
    %1972 = arith.addf %1970, %1971 : vector<64x256xf32>
    %c2_i32 = arith.constant 2 : i32
    %1973 = tpu.dynamic_rotate %1972 by %c2_i32 dim 1 : vector<64x256xf32>, i32 -> vector<64x256xf32>
    %1974 = arith.addf %1972, %1973 : vector<64x256xf32>
    %c4_i32 = arith.constant 4 : i32
    %1975 = tpu.dynamic_rotate %1974 by %c4_i32 dim 1 : vector<64x256xf32>, i32 -> vector<64x256xf32>
    %1976 = arith.addf %1974, %1975 : vector<64x256xf32>
    %c8_i32 = arith.constant 8 : i32
    %1977 = tpu.dynamic_rotate %1976 by %c8_i32 dim 1 : vector<64x256xf32>, i32 -> vector<64x256xf32>
    %1978 = arith.addf %1976, %1977 : vector<64x256xf32>
    %1979 = vector.broadcast %1968 : vector<1x256xf32> to vector<64x256xf32>
    %1980 = arith.mulf %1978, %1979 : vector<64x256xf32>
    %c255_i32_379 = arith.constant 255 : i32
    %1981 = tpu.dynamic_rotate %1980 by %c255_i32_379 dim 1 : vector<64x256xf32>, i32 -> vector<64x256xf32>
    %1982 = arith.addf %1980, %1981 : vector<64x256xf32>
    %c254_i32 = arith.constant 254 : i32
    %1983 = tpu.dynamic_rotate %1982 by %c254_i32 dim 1 : vector<64x256xf32>, i32 -> vector<64x256xf32>
    %1984 = arith.addf %1982, %1983 : vector<64x256xf32>
    %c252_i32 = arith.constant 252 : i32
    %1985 = tpu.dynamic_rotate %1984 by %c252_i32 dim 1 : vector<64x256xf32>, i32 -> vector<64x256xf32>
    %1986 = arith.addf %1984, %1985 : vector<64x256xf32>
    %c248_i32 = arith.constant 248 : i32
    %1987 = tpu.dynamic_rotate %1986 by %c248_i32 dim 1 : vector<64x256xf32>, i32 -> vector<64x256xf32>
    %1988 = arith.addf %1986, %1987 : vector<64x256xf32>
    %1989 = vector.extract_strided_slice %1988 {offsets = [0, 0], sizes = [32, 256], strides = [1, 1]} : vector<64x256xf32> to vector<32x256xf32>
    %cst = arith.constant 6.250000e-02 : f32
    %1990 = vector.broadcast %cst : f32 to vector<32x256xf32>
    %1991 = arith.mulf %1989, %1990 : vector<32x256xf32>
    %1992 = vector.extract_strided_slice %1988 {offsets = [32, 0], sizes = [32, 256], strides = [1, 1]} : vector<64x256xf32> to vector<32x256xf32>
    %cst_380 = arith.constant 6.250000e-02 : f32
    %1993 = vector.broadcast %cst_380 : f32 to vector<32x256xf32>
    %1994 = arith.mulf %1992, %1993 : vector<32x256xf32>
    %1995 = arith.mulf %1991, %1991 : vector<32x256xf32>
    %1996 = arith.subf %1994, %1995 : vector<32x256xf32>
    %1997 = arith.subf %1967, %1991 : vector<32x256xf32>
    %cst_381 = arith.constant 9.99999974E-6 : f32
    %1998 = vector.broadcast %cst_381 : f32 to vector<32x256xf32>
    %1999 = arith.addf %1996, %1998 : vector<32x256xf32>
    %2000 = math.rsqrt %1999 : vector<32x256xf32>
    %2001 = arith.mulf %1997, %2000 : vector<32x256xf32>
    %c0_382 = arith.constant 0 : index
    %c0_383 = arith.constant 0 : index
    %2002 = vector.load %arg9[%c0_382, %c0_383] : memref<1x256xf32, #tpu.memory_space<vmem>>, vector<1x256xf32>
    %2003 = vector.broadcast %2002 : vector<1x256xf32> to vector<32x256xf32>
    %2004 = arith.mulf %2001, %2003 : vector<32x256xf32>
    %c0_384 = arith.constant 0 : index
    %c0_385 = arith.constant 0 : index
    %2005 = vector.load %arg10[%c0_384, %c0_385] : memref<1x256xf32, #tpu.memory_space<vmem>>, vector<1x256xf32>
    %2006 = vector.broadcast %2005 : vector<1x256xf32> to vector<32x256xf32>
    %2007 = arith.addf %2004, %2006 : vector<32x256xf32>
    %cst_386 = arith.constant 0.000000e+00 : f32
    %2008 = vector.broadcast %cst_386 : f32 to vector<32x256xf32>
    %2009 = arith.maximumf %2007, %2008 : vector<32x256xf32>
    %2010 = vector.extract_strided_slice %2009 {offsets = [0, 0], sizes = [8, 256], strides = [1, 1]} : vector<32x256xf32> to vector<8x256xf32>
    %c0_387 = arith.constant 0 : index
    %c0_388 = arith.constant 0 : index
    %c0_389 = arith.constant 0 : index
    %2011 = vector.load %arg1[%c0_387, %c0_388, %c0_389] : memref<4x8x256xf32, #tpu.memory_space<vmem>>, vector<1x8x256xf32>
    %2012 = vector.shape_cast %2011 : vector<1x8x256xf32> to vector<8x256xf32>
    %2013 = arith.addf %2010, %2012 : vector<8x256xf32>
    %c0_390 = arith.constant 0 : index
    %c0_391 = arith.constant 0 : index
    %c0_392 = arith.constant 0 : index
    %2014 = vector.load %arg11[%c0_390, %c0_391, %c0_392] : memref<4x8x256xf32, #tpu.memory_space<vmem>>, vector<1x8x256xf32>
    %2015 = vector.shape_cast %2014 : vector<1x8x256xf32> to vector<8x256xf32>
    %2016 = vector.shape_cast %2013 : vector<8x256xf32> to vector<1x8x256xf32>
    tpu.vector_store %arg11[%c0_390, %c0_391, %c0_392], %2016 {strides = array<i32>} : memref<4x8x256xf32, #tpu.memory_space<vmem>>, vector<1x8x256xf32>,
    %2017 = vector.extract_strided_slice %2009 {offsets = [8, 0], sizes = [8, 256], strides = [1, 1]} : vector<32x256xf32> to vector<8x256xf32>
    %c1_393 = arith.constant 1 : index
    %c0_394 = arith.constant 0 : index
    %c0_395 = arith.constant 0 : index
    %2018 = vector.load %arg1[%c1_393, %c0_394, %c0_395] : memref<4x8x256xf32, #tpu.memory_space<vmem>>, vector<1x8x256xf32>
    %2019 = vector.shape_cast %2018 : vector<1x8x256xf32> to vector<8x256xf32>
    %2020 = arith.addf %2017, %2019 : vector<8x256xf32>
    %c1_396 = arith.constant 1 : index
    %c0_397 = arith.constant 0 : index
    %c0_398 = arith.constant 0 : index
    %2021 = vector.load %arg11[%c1_396, %c0_397, %c0_398] : memref<4x8x256xf32, #tpu.memory_space<vmem>>, vector<1x8x256xf32>
    %2022 = vector.shape_cast %2021 : vector<1x8x256xf32> to vector<8x256xf32>
    %2023 = vector.shape_cast %2020 : vector<8x256xf32> to vector<1x8x256xf32>
    tpu.vector_store %arg11[%c1_396, %c0_397, %c0_398], %2023 {strides = array<i32>} : memref<4x8x256xf32, #tpu.memory_space<vmem>>, vector<1x8x256xf32>,
    %2024 = vector.extract_strided_slice %2009 {offsets = [16, 0], sizes = [8, 256], strides = [1, 1]} : vector<32x256xf32> to vector<8x256xf32>
    %c2_399 = arith.constant 2 : index
    %c0_400 = arith.constant 0 : index
    %c0_401 = arith.constant 0 : index
    %2025 = vector.load %arg1[%c2_399, %c0_400, %c0_401] : memref<4x8x256xf32, #tpu.memory_space<vmem>>, vector<1x8x256xf32>
    %2026 = vector.shape_cast %2025 : vector<1x8x256xf32> to vector<8x256xf32>
    %2027 = arith.addf %2024, %2026 : vector<8x256xf32>
    %c2_402 = arith.constant 2 : index
    %c0_403 = arith.constant 0 : index
    %c0_404 = arith.constant 0 : index
    %2028 = vector.load %arg11[%c2_402, %c0_403, %c0_404] : memref<4x8x256xf32, #tpu.memory_space<vmem>>, vector<1x8x256xf32>
    %2029 = vector.shape_cast %2028 : vector<1x8x256xf32> to vector<8x256xf32>
    %2030 = vector.shape_cast %2027 : vector<8x256xf32> to vector<1x8x256xf32>
    tpu.vector_store %arg11[%c2_402, %c0_403, %c0_404], %2030 {strides = array<i32>} : memref<4x8x256xf32, #tpu.memory_space<vmem>>, vector<1x8x256xf32>,
    %2031 = vector.extract_strided_slice %2009 {offsets = [24, 0], sizes = [8, 256], strides = [1, 1]} : vector<32x256xf32> to vector<8x256xf32>
    %c3_405 = arith.constant 3 : index
    %c0_406 = arith.constant 0 : index
    %c0_407 = arith.constant 0 : index
    %2032 = vector.load %arg1[%c3_405, %c0_406, %c0_407] : memref<4x8x256xf32, #tpu.memory_space<vmem>>, vector<1x8x256xf32>
    %2033 = vector.shape_cast %2032 : vector<1x8x256xf32> to vector<8x256xf32>
    %2034 = arith.addf %2031, %2033 : vector<8x256xf32>
    %c3_408 = arith.constant 3 : index
    %c0_409 = arith.constant 0 : index
    %c0_410 = arith.constant 0 : index
    %2035 = vector.load %arg11[%c3_408, %c0_409, %c0_410] : memref<4x8x256xf32, #tpu.memory_space<vmem>>, vector<1x8x256xf32>
    %2036 = vector.shape_cast %2035 : vector<1x8x256xf32> to vector<8x256xf32>
    %2037 = vector.shape_cast %2034 : vector<8x256xf32> to vector<1x8x256xf32>
    tpu.vector_store %arg11[%c3_408, %c0_409, %c0_410], %2037 {strides = array<i32>} : memref<4x8x256xf32, #tpu.memory_space<vmem>>, vector<1x8x256xf32>,
    return
  }
  func.func @transform_0(%arg0: i32) -> (i32, i32, i32) {
    %c0_i32 = arith.constant 0 : i32
    %c0_i32_0 = arith.constant 0 : i32
    %c0_i32_1 = arith.constant 0 : i32
    return %c0_i32, %arg0, %c0_i32_0 : i32, i32, i32
  }
  func.func @transform_1(%arg0: i32) -> (i32, i32) {
    %c0_i32 = arith.constant 0 : i32
    %c0_i32_0 = arith.constant 0 : i32
    %c0_i32_1 = arith.constant 0 : i32
    return %c0_i32, %c0_i32_0 : i32, i32
  }
  func.func @transform_2(%arg0: i32) -> i32 {
    %c0_i32 = arith.constant 0 : i32
    %c0_i32_0 = arith.constant 0 : i32
    return %c0_i32 : i32
  }
  func.func @transform_3(%arg0: i32) -> i32 {
    %c0_i32 = arith.constant 0 : i32
    %c0_i32_0 = arith.constant 0 : i32
    return %c0_i32 : i32
  }
  func.func @transform_4(%arg0: i32) -> i32 {
    %c0_i32 = arith.constant 0 : i32
    %c0_i32_0 = arith.constant 0 : i32
    return %c0_i32 : i32
  }
  func.func @transform_5(%arg0: i32) -> i32 {
    %c0_i32 = arith.constant 0 : i32
    %c0_i32_0 = arith.constant 0 : i32
    return %c0_i32 : i32
  }
  func.func @transform_6(%arg0: i32) -> i32 {
    %c0_i32 = arith.constant 0 : i32
    %c0_i32_0 = arith.constant 0 : i32
    return %c0_i32 : i32
  }
  func.func @transform_7(%arg0: i32) -> i32 {
    %c0_i32 = arith.constant 0 : i32
    %c0_i32_0 = arith.constant 0 : i32
    return %c0_i32 : i32
  }
  func.func @transform_8(%arg0: i32) -> (i32, i32) {
    %c0_i32 = arith.constant 0 : i32
    %c0_i32_0 = arith.constant 0 : i32
    %c0_i32_1 = arith.constant 0 : i32
    return %c0_i32, %c0_i32_0 : i32, i32
  }
  func.func @transform_9(%arg0: i32) -> (i32, i32) {
    %c0_i32 = arith.constant 0 : i32
    %c0_i32_0 = arith.constant 0 : i32
    %c0_i32_1 = arith.constant 0 : i32
    return %c0_i32, %c0_i32_0 : i32, i32
  }
  func.func @transform_10(%arg0: i32) -> (i32, i32, i32) {
    %c0_i32 = arith.constant 0 : i32
    %c0_i32_0 = arith.constant 0 : i32
    %c0_i32_1 = arith.constant 0 : i32
    return %c0_i32, %arg0, %c0_i32_0 : i32, i32, i32
  }
}

</mosaic_0001>

<llo_original>
// kernel: tpu_custom_call.1
$region0: #{tpu_custom_call.1}
  #allocation0 [shape = 'u32[]', space=smem, size = 0x4, offset = 0x4, fixed_abs, tag = 'smem constant byte address 0x4 - core index']
  #allocation1 [shape = 'u32[144,128]{1,0:T(1,128)}', space=vmem, size = 0x12000, scoped, tag = 'internal scratch']
  %s0 = inlined_call_operand.hbm [shape: f32[4,16,256], index: 0, kind: input, shape index: {}]
  %s1 = inlined_call_operand.hbm [shape: f32[10,256], index: 1, kind: input, shape index: {}]
  %s2 = inlined_call_operand.vmem [shape: f32[144], index: 2, kind: input, shape index: {}]
  %s3 = inlined_call_operand.hbm [shape: f32[4], index: 3, kind: input, shape index: {}]
  %s4 = inlined_call_operand.vmem [shape: f32[144], index: 4, kind: input, shape index: {}]
  %s5 = inlined_call_operand.hbm [shape: f32[4], index: 5, kind: input, shape index: {}]
  %s6 = inlined_call_operand.vmem [shape: f32[144], index: 6, kind: input, shape index: {}]
  %s7 = inlined_call_operand.vmem [shape: f32[4], index: 7, kind: input, shape index: {}]
  %s8 = inlined_call_operand.vmem [shape: f32[1,256], index: 8, kind: input, shape index: {}]
  %s9 = inlined_call_operand.vmem [shape: f32[1,256], index: 9, kind: input, shape index: {}]
  %s10 = inlined_call_operand.hbm [shape: f32[4,16,256], index: 10, kind: output, shape index: {}]
  %s11 = sld [smem:[#allocation0]]
  $region105: #{tpu_custom_call.1} parent=0
    _
  %s13 = ssub.s32 1, %s11
  %s14 = scalar_select 0, %s13, %s11
  $region1: #{tpu_custom_call.1} parent=0
    #allocation2 [shape = 'u8[65536]{0}', space=vmem, size = 0x10000, scoped, tag = 'input window, operand 0']
    #allocation3 [shape = 's32[2]{0}', space=sflag, size = 0x8, scoped, tag = 'scoped memory for tpu_custom_call.1']
    #allocation4 [shape = 's32[2]{0}', space=sflag, size = 0x8, scoped, tag = 'scoped memory for tpu_custom_call.1']
    #allocation5 [shape = 's32[2]{0}', space=sflag, size = 0x8, scoped, tag = 'scoped memory for tpu_custom_call.1']
    #allocation6 [shape = 's32[2]{0}', space=sflag, size = 0x8, scoped, tag = 'scoped memory for tpu_custom_call.1']
    #allocation7 [shape = 'u8[16384]{0}', space=vmem, size = 0x4000, scoped, tag = 'input window, operand 1, single buffered']
    #allocation8 [shape = 's32[1]{0}', space=sflag, size = 0x4, scoped, tag = 'scoped memory for tpu_custom_call.1']
    #allocation9 [shape = 'u8[1024]{0}', space=smem, size = 0x400, scoped, tag = 'input window, operand 2, single buffered']
    #allocation10 [shape = 'u8[512]{0}', space=smem, size = 0x200, scoped, tag = 'input window, operand 3, single buffered']
    #allocation11 [shape = 'u8[1024]{0}', space=smem, size = 0x400, scoped, tag = 'input window, operand 4, single buffered']
    #allocation12 [shape = 's32[1]{0}', space=sflag, size = 0x4, scoped, tag = 'scoped memory for tpu_custom_call.1']
    #allocation13 [shape = 'u8[512]{0}', space=smem, size = 0x200, scoped, tag = 'input window, operand 5, single buffered']
    #allocation14 [shape = 's32[1]{0}', space=sflag, size = 0x4, scoped, tag = 'scoped memory for tpu_custom_call.1']
    #allocation15 [shape = 'u8[1024]{0}', space=smem, size = 0x400, scoped, tag = 'input window, operand 6, single buffered']
    #allocation16 [shape = 'u8[512]{0}', space=smem, size = 0x200, scoped, tag = 'input window, operand 7, single buffered']
    #allocation17 [shape = 's32[1]{0}', space=sflag, size = 0x4, scoped, tag = 'scoped memory for tpu_custom_call.1']
    #allocation18 [shape = 'u8[65536]{0}', space=vmem, size = 0x10000, scoped, tag = 'output window, operand 0']
    %15 = vsyncpa [#allocation3], 0
    %s16 = scalar_lea.sflag [#allocation3], 1
    %17 = vsyncpa %s16, 0
    %18 = vsyncpa [#allocation8], 0
    %19 = vsyncpa [#allocation6], 0
    %20 = vsyncpa [#allocation5], 0
    %21 = vsyncpa [#allocation12], 0
    %22 = vsyncpa [#allocation14], 0
    %23 = vsyncpa [#allocation17], 0
    %24 = vsyncpa [#allocation4], 0
    %s25 = scalar_lea.sflag [#allocation4], 1
    %26 = vsyncpa %s25, 0
    loop: start=0, step=1, limit=4
    $region2: #{tpu_custom_call.1} parent=1 // loop_pre_header
      _
    $region3: #{tpu_custom_call.1} parent=1 // loop_header
      %s28 = sphi 0, %s32
      %p29 = scmp.ge.s32.totalorder %s28, 4
      %s38 = sphi 0, %s40
      %s41 = sphi 0, %s38
      %s42 = sphi 0, %s41
      %s58 = sphi 0, %s42
      %s62 = sphi 0, %s62
      %s64 = sphi 0, %s62
      %s65 = sphi 0, %s64
      %s79 = sphi 0, %s65
      %s83 = sphi 0, %s83
      %s85 = sphi 0, %s83
      %s86 = sphi 0, %s85
      %s100 = sphi 0, %s86
      %s104 = sphi 0, %s104
      %s106 = sphi 0, %s104
      %s107 = sphi 0, %s106
      %s121 = sphi 0, %s107
      %s125 = sphi 0, %s125
      %s127 = sphi 0, %s125
      %s128 = sphi 0, %s127
      %s142 = sphi 0, %s128
      %s146 = sphi 0, %s146
      %s148 = sphi 0, %s146
      %s149 = sphi 0, %s148
      %s163 = sphi 0, %s149
      %s167 = sphi 0, %s167
      %s169 = sphi 0, %s167
      %s170 = sphi 0, %s169
      %s184 = sphi 0, %s170
      %s188 = sphi 0, %s188
      %s190 = sphi 0, %s188
      %s191 = sphi 0, %s190
      %s205 = sphi 0, %s191
      %s209 = sphi 0, %s209
      %s211 = sphi 0, %s209
      %s212 = sphi 0, %s211
      %s226 = sphi 0, %s212
      %s230 = sphi 0, %s230
      %s232 = sphi 0, %s230
      %s233 = sphi 0, %s232
      %s247 = sphi 0, %s233
      %s253 = sphi 0, %s255
      %s256 = sphi 0, %s253
      %s257 = sphi 0, %s256
      %s273 = sphi 0, %s257
    $region4: #{tpu_custom_call.1} parent=1 // loop_header_branch
      %31 = sbr.rel (%p29) target = $region8
    $region5: #{tpu_custom_call.1} parent=1 // loop_body
      %s33 = ssub.s32 %s28, 1
      %s34 = ssub.s32 %s28, 2
      %s35 = sadd.s32 %s28, 1
      %s36 = ssub.s32 %s28, %s35
      %p37 = scmp.eq.s32.totalorder %s36, 0
      %s39 = sadd.s32 %s38, 1
      %s40 = scalar_select %p37, %s38, %s39
      %p43 = pneg %p37
      %p44 = scmp.eq.s32.totalorder %s28, 1
      %p45 = por %p43, %p44
      %p46 = scmp.ne.s32.totalorder %s38, %s41
      %p47 = scmp.eq.s32.totalorder %s28, 0
      %p48 = por %p46, %p47
      %p49 = scmp.ne.s32.totalorder %s38, %s41
      %p50 = scmp.eq.s32.totalorder %s33, 1
      %p51 = por %p49, %p50
      %p52 = scmp.ne.s32.totalorder %s41, %s42
      %p53 = scmp.eq.s32.totalorder %s33, 0
      %p54 = por %p52, %p53
      %p55 = scmp.ne.s32.totalorder %s41, %s42
      %p56 = scmp.eq.s32.totalorder %s34, 1
      %p57 = por %p55, %p56
      %p59 = scmp.ne.s32.totalorder %s42, %s58
      %p60 = scmp.eq.s32.totalorder %s34, 0
      %p61 = por %p59, %p60
      %s63 = sadd.s32 %s62, 1
      %p66 = scmp.eq.s32.totalorder %s28, 1
      %p67 = scmp.ne.s32.totalorder %s62, %s64
      %p68 = scmp.eq.s32.totalorder %s28, 0
      %p69 = por %p67, %p68
      %p70 = scmp.ne.s32.totalorder %s62, %s64
      %p71 = scmp.eq.s32.totalorder %s33, 1
      %p72 = por %p70, %p71
      %p73 = scmp.ne.s32.totalorder %s64, %s65
      %p74 = scmp.eq.s32.totalorder %s33, 0
      %p75 = por %p73, %p74
      %p76 = scmp.ne.s32.totalorder %s64, %s65
      %p77 = scmp.eq.s32.totalorder %s34, 1
      %p78 = por %p76, %p77
      %p80 = scmp.ne.s32.totalorder %s65, %s79
      %p81 = scmp.eq.s32.totalorder %s34, 0
      %p82 = por %p80, %p81
      %s84 = sadd.s32 %s83, 1
      %p87 = scmp.eq.s32.totalorder %s28, 1
      %p88 = scmp.ne.s32.totalorder %s83, %s85
      %p89 = scmp.eq.s32.totalorder %s28, 0
      %p90 = por %p88, %p89
      %p91 = scmp.ne.s32.totalorder %s83, %s85
      %p92 = scmp.eq.s32.totalorder %s33, 1
      %p93 = por %p91, %p92
      %p94 = scmp.ne.s32.totalorder %s85, %s86
      %p95 = scmp.eq.s32.totalorder %s33, 0
      %p96 = por %p94, %p95
      %p97 = scmp.ne.s32.totalorder %s85, %s86
      %p98 = scmp.eq.s32.totalorder %s34, 1
      %p99 = por %p97, %p98
      %p101 = scmp.ne.s32.totalorder %s86, %s100
      %p102 = scmp.eq.s32.totalorder %s34, 0
      %p103 = por %p101, %p102
      %s105 = sadd.s32 %s104, 1
      %p108 = scmp.eq.s32.totalorder %s28, 1
      %p109 = scmp.ne.s32.totalorder %s104, %s106
      %p110 = scmp.eq.s32.totalorder %s28, 0
      %p111 = por %p109, %p110
      %p112 = scmp.ne.s32.totalorder %s104, %s106
      %p113 = scmp.eq.s32.totalorder %s33, 1
      %p114 = por %p112, %p113
      %p115 = scmp.ne.s32.totalorder %s106, %s107
      %p116 = scmp.eq.s32.totalorder %s33, 0
      %p117 = por %p115, %p116
      %p118 = scmp.ne.s32.totalorder %s106, %s107
      %p119 = scmp.eq.s32.totalorder %s34, 1
      %p120 = por %p118, %p119
      %p122 = scmp.ne.s32.totalorder %s107, %s121
      %p123 = scmp.eq.s32.totalorder %s34, 0
      %p124 = por %p122, %p123
      %s126 = sadd.s32 %s125, 1
      %p129 = scmp.eq.s32.totalorder %s28, 1
      %p130 = scmp.ne.s32.totalorder %s125, %s127
      %p131 = scmp.eq.s32.totalorder %s28, 0
      %p132 = por %p130, %p131
      %p133 = scmp.ne.s32.totalorder %s125, %s127
      %p134 = scmp.eq.s32.totalorder %s33, 1
      %p135 = por %p133, %p134
      %p136 = scmp.ne.s32.totalorder %s127, %s128
      %p137 = scmp.eq.s32.totalorder %s33, 0
      %p138 = por %p136, %p137
      %p139 = scmp.ne.s32.totalorder %s127, %s128
      %p140 = scmp.eq.s32.totalorder %s34, 1
      %p141 = por %p139, %p140
      %p143 = scmp.ne.s32.totalorder %s128, %s142
      %p144 = scmp.eq.s32.totalorder %s34, 0
      %p145 = por %p143, %p144
      %s147 = sadd.s32 %s146, 1
      %p150 = scmp.eq.s32.totalorder %s28, 1
      %p151 = scmp.ne.s32.totalorder %s146, %s148
      %p152 = scmp.eq.s32.totalorder %s28, 0
      %p153 = por %p151, %p152
      %p154 = scmp.ne.s32.totalorder %s146, %s148
      %p155 = scmp.eq.s32.totalorder %s33, 1
      %p156 = por %p154, %p155
      %p157 = scmp.ne.s32.totalorder %s148, %s149
      %p158 = scmp.eq.s32.totalorder %s33, 0
      %p159 = por %p157, %p158
      %p160 = scmp.ne.s32.totalorder %s148, %s149
      %p161 = scmp.eq.s32.totalorder %s34, 1
      %p162 = por %p160, %p161
      %p164 = scmp.ne.s32.totalorder %s149, %s163
      %p165 = scmp.eq.s32.totalorder %s34, 0
      %p166 = por %p164, %p165
      %s168 = sadd.s32 %s167, 1
      %p171 = scmp.eq.s32.totalorder %s28, 1
      %p172 = scmp.ne.s32.totalorder %s167, %s169
      %p173 = scmp.eq.s32.totalorder %s28, 0
      %p174 = por %p172, %p173
      %p175 = scmp.ne.s32.totalorder %s167, %s169
      %p176 = scmp.eq.s32.totalorder %s33, 1
      %p177 = por %p175, %p176
      %p178 = scmp.ne.s32.totalorder %s169, %s170
      %p179 = scmp.eq.s32.totalorder %s33, 0
      %p180 = por %p178, %p179
      %p181 = scmp.ne.s32.totalorder %s169, %s170
      %p182 = scmp.eq.s32.totalorder %s34, 1
      %p183 = por %p181, %p182
      %p185 = scmp.ne.s32.totalorder %s170, %s184
      %p186 = scmp.eq.s32.totalorder %s34, 0
      %p187 = por %p185, %p186
      %s189 = sadd.s32 %s188, 1
      %p192 = scmp.eq.s32.totalorder %s28, 1
      %p193 = scmp.ne.s32.totalorder %s188, %s190
      %p194 = scmp.eq.s32.totalorder %s28, 0
      %p195 = por %p193, %p194
      %p196 = scmp.ne.s32.totalorder %s188, %s190
      %p197 = scmp.eq.s32.totalorder %s33, 1
      %p198 = por %p196, %p197
      %p199 = scmp.ne.s32.totalorder %s190, %s191
      %p200 = scmp.eq.s32.totalorder %s33, 0
      %p201 = por %p199, %p200
      %p202 = scmp.ne.s32.totalorder %s190, %s191
      %p203 = scmp.eq.s32.totalorder %s34, 1
      %p204 = por %p202, %p203
      %p206 = scmp.ne.s32.totalorder %s191, %s205
      %p207 = scmp.eq.s32.totalorder %s34, 0
      %p208 = por %p206, %p207
      %s210 = sadd.s32 %s209, 1
      %p213 = scmp.eq.s32.totalorder %s28, 1
      %p214 = scmp.ne.s32.totalorder %s209, %s211
      %p215 = scmp.eq.s32.totalorder %s28, 0
      %p216 = por %p214, %p215
      %p217 = scmp.ne.s32.totalorder %s209, %s211
      %p218 = scmp.eq.s32.totalorder %s33, 1
      %p219 = por %p217, %p218
      %p220 = scmp.ne.s32.totalorder %s211, %s212
      %p221 = scmp.eq.s32.totalorder %s33, 0
      %p222 = por %p220, %p221
      %p223 = scmp.ne.s32.totalorder %s211, %s212
      %p224 = scmp.eq.s32.totalorder %s34, 1
      %p225 = por %p223, %p224
      %p227 = scmp.ne.s32.totalorder %s212, %s226
      %p228 = scmp.eq.s32.totalorder %s34, 0
      %p229 = por %p227, %p228
      %s231 = sadd.s32 %s230, 1
      %p234 = scmp.eq.s32.totalorder %s28, 1
      %p235 = scmp.ne.s32.totalorder %s230, %s232
      %p236 = scmp.eq.s32.totalorder %s28, 0
      %p237 = por %p235, %p236
      %p238 = scmp.ne.s32.totalorder %s230, %s232
      %p239 = scmp.eq.s32.totalorder %s33, 1
      %p240 = por %p238, %p239
      %p241 = scmp.ne.s32.totalorder %s232, %s233
      %p242 = scmp.eq.s32.totalorder %s33, 0
      %p243 = por %p241, %p242
      %p244 = scmp.ne.s32.totalorder %s232, %s233
      %p245 = scmp.eq.s32.totalorder %s34, 1
      %p246 = por %p244, %p245
      %p248 = scmp.ne.s32.totalorder %s233, %s247
      %p249 = scmp.eq.s32.totalorder %s34, 0
      %p250 = por %p248, %p249
      %s251 = ssub.s32 %s28, %s35
      %p252 = scmp.eq.s32.totalorder %s251, 0
      %s254 = sadd.s32 %s253, 1
      %s255 = scalar_select %p252, %s253, %s254
      %p258 = pneg %p252
      %p259 = scmp.eq.s32.totalorder %s28, 1
      %p260 = por %p258, %p259
      %p261 = scmp.ne.s32.totalorder %s253, %s256
      %p262 = scmp.eq.s32.totalorder %s28, 0
      %p263 = por %p261, %p262
      %p264 = scmp.ne.s32.totalorder %s253, %s256
      %p265 = scmp.eq.s32.totalorder %s33, 1
      %p266 = por %p264, %p265
      %p267 = scmp.ne.s32.totalorder %s256, %s257
      %p268 = scmp.eq.s32.totalorder %s33, 0
      %p269 = por %p267, %p268
      %p270 = scmp.ne.s32.totalorder %s256, %s257
      %p271 = scmp.eq.s32.totalorder %s34, 1
      %p272 = por %p270, %p271
      %p274 = scmp.ne.s32.totalorder %s257, %s273
      %p275 = scmp.eq.s32.totalorder %s34, 0
      %p276 = por %p274, %p275
      %p277 = scmp.le.s32.totalorder 1, %s28
      %p278 = scmp.lt.s32.totalorder %s28, 3
      %p279 = pnand %p277, %p278
      %p280 = pneg %p279
      // Predicated region
      $region9: #{tpu_custom_call.1} parent=5 // pred_check
        _
      $region10: #{tpu_custom_call.1} parent=5 // pred_check_branch
        %282 = sbr.rel (%p279) target = $region12
      $region11: #{tpu_custom_call.1} parent=5 // pred_region
        %s283 = ssub.s32 %s28, 1
        // Predicated region
        $region13: #{tpu_custom_call.1} parent=11 // pred_check
          %p284 = pneg %p75
        $region14: #{tpu_custom_call.1} parent=11 // pred_check_branch
          %286 = sbr.rel (%p284) target = $region16
        $region15: #{tpu_custom_call.1} parent=11 // pred_region
          %s288 = ssub.s32 512, 512
          %289 = vsyncadd [#allocation8], %s288
          %s290 = sshll.u32 [#allocation7], 4
          %s291 = int_to_ptr.vmem [resolvable:$true] %s290
          %296 = dma.hbm_to_vmem [thread:$0]  %s1, 512, %s291, [#allocation8], 256, 256, 16
        $region16: #{tpu_custom_call.1} parent=11 // pred_fallthru
          _
        // Predicated region
        $region17: #{tpu_custom_call.1} parent=11 // pred_check
          %p297 = pneg %p96
        $region18: #{tpu_custom_call.1} parent=11 // pred_check_branch
          %299 = sbr.rel (%p297) target = $region20
        $region19: #{tpu_custom_call.1} parent=11 // pred_region
          %s301 = ssub.s32 32, 32
          %302 = vsyncadd [#allocation6], %s301
          %s304 = sshll.u32 %s2, 4
          %s305 = int_to_ptr.vmem [resolvable:$true] %s304
          %307 = dma.vmem_to_smem %s305, 32, [#allocation9], [#allocation6]
        $region20: #{tpu_custom_call.1} parent=11 // pred_fallthru
          _
        // Predicated region
        $region21: #{tpu_custom_call.1} parent=11 // pred_check
          %p308 = pneg %p117
        $region22: #{tpu_custom_call.1} parent=11 // pred_check_branch
          %310 = sbr.rel (%p308) target = $region24
        $region23: #{tpu_custom_call.1} parent=11 // pred_region
          %s312 = ssub.s32 16, 16
          %313 = vsyncadd [#allocation5], %s312
          %316 = dma.hbm_to_smem %s3, 16, [#allocation10], [#allocation5]
        $region24: #{tpu_custom_call.1} parent=11 // pred_fallthru
          _
        // Predicated region
        $region25: #{tpu_custom_call.1} parent=11 // pred_check
          %p317 = pneg %p138
        $region26: #{tpu_custom_call.1} parent=11 // pred_check_branch
          %319 = sbr.rel (%p317) target = $region28
        $region27: #{tpu_custom_call.1} parent=11 // pred_region
          %s321 = ssub.s32 32, 32
          %322 = vsyncadd [#allocation12], %s321
          %s324 = sshll.u32 %s4, 4
          %s325 = int_to_ptr.vmem [resolvable:$true] %s324
          %327 = dma.vmem_to_smem %s325, 32, [#allocation11], [#allocation12]
        $region28: #{tpu_custom_call.1} parent=11 // pred_fallthru
          _
        // Predicated region
        $region29: #{tpu_custom_call.1} parent=11 // pred_check
          %p328 = pneg %p159
        $region30: #{tpu_custom_call.1} parent=11 // pred_check_branch
          %330 = sbr.rel (%p328) target = $region32
        $region31: #{tpu_custom_call.1} parent=11 // pred_region
          %s332 = ssub.s32 16, 16
          %333 = vsyncadd [#allocation14], %s332
          %336 = dma.hbm_to_smem %s5, 16, [#allocation13], [#allocation14]
        $region32: #{tpu_custom_call.1} parent=11 // pred_fallthru
          _
        // Predicated region
        $region33: #{tpu_custom_call.1} parent=11 // pred_check
          %p337 = pneg %p180
        $region34: #{tpu_custom_call.1} parent=11 // pred_check_branch
          %339 = sbr.rel (%p337) target = $region36
        $region35: #{tpu_custom_call.1} parent=11 // pred_region
          %s341 = ssub.s32 32, 32
          %342 = vsyncadd [#allocation12], %s341
          %s344 = sshll.u32 %s6, 4
          %s345 = int_to_ptr.vmem [resolvable:$true] %s344
          %347 = dma.vmem_to_smem %s345, 32, [#allocation15], [#allocation12]
        $region36: #{tpu_custom_call.1} parent=11 // pred_fallthru
          _
        // Predicated region
        $region37: #{tpu_custom_call.1} parent=11 // pred_check
          %p348 = pneg %p201
        $region38: #{tpu_custom_call.1} parent=11 // pred_check_branch
          %350 = sbr.rel (%p348) target = $region40
        $region39: #{tpu_custom_call.1} parent=11 // pred_region
          %s352 = ssub.s32 16, 16
          %353 = vsyncadd [#allocation17], %s352
          %s355 = sshll.u32 %s7, 4
          %s356 = int_to_ptr.vmem [resolvable:$true] %s355
          %358 = dma.vmem_to_smem %s356, 16, [#allocation16], [#allocation17]
        $region40: #{tpu_custom_call.1} parent=11 // pred_fallthru
          _
        // Predicated region
        $region41: #{tpu_custom_call.1} parent=11 // pred_check
          %p359 = pneg %p222
        $region42: #{tpu_custom_call.1} parent=11 // pred_check_branch
          %361 = sbr.rel (%p359) target = $region44
        $region43: #{tpu_custom_call.1} parent=11 // pred_region
          _
        $region44: #{tpu_custom_call.1} parent=11 // pred_fallthru
          _
        // Predicated region
        $region45: #{tpu_custom_call.1} parent=11 // pred_check
          %p362 = pneg %p243
        $region46: #{tpu_custom_call.1} parent=11 // pred_check_branch
          %364 = sbr.rel (%p362) target = $region48
        $region47: #{tpu_custom_call.1} parent=11 // pred_region
          _
        $region48: #{tpu_custom_call.1} parent=11 // pred_fallthru
          _
      $region12: #{tpu_custom_call.1} parent=5 // pred_fallthru
        _
      %p365 = scmp.lt.s32.totalorder %s28, 2
      // Predicated region
      $region49: #{tpu_custom_call.1} parent=5 // pred_check
        %p366 = pneg %p365
      $region50: #{tpu_custom_call.1} parent=5 // pred_check_branch
        %368 = sbr.rel (%p366) target = $region52
      $region51: #{tpu_custom_call.1} parent=5 // pred_region
        // Predicated region
        $region53: #{tpu_custom_call.1} parent=51 // pred_check
          %p369 = pneg %p48
        $region54: #{tpu_custom_call.1} parent=51 // pred_check_branch
          %371 = sbr.rel (%p369) target = $region56
        $region55: #{tpu_custom_call.1} parent=51 // pred_region
          %s372 = sand.u32 %s38, 1
          %s373 = scalar_lea.sflag [#allocation3], %s372
          %s374 = sand.u32 %s38, 1
          %s375 = smul.addr %s374, 64
          %s376 = scalar_lea.vmem [#allocation2], %s375
          %s378 = ssub.s32 1024, 1024
          %379 = vsyncadd %s373, %s378
          %s380 = smul.addr %s28, 2
          %s381 = smul.addr %s380, 128
          %s382 = scalar_lea.hbm %s0, %s381
          %s383 = sshll.u32 %s376, 4
          %s384 = int_to_ptr.vmem [resolvable:$true] %s383
          %389 = dma.hbm_to_vmem [thread:$0]  %s382, 1024, %s384, %s373, 512, 256, 16
        $region56: #{tpu_custom_call.1} parent=51 // pred_fallthru
          _
      $region52: #{tpu_custom_call.1} parent=5 // pred_fallthru
        _
      %p390 = scmp.le.s32.totalorder 1, %s28
      %p391 = scmp.lt.s32.totalorder %s28, 3
      %p392 = pnand %p390, %p391
      %p393 = pneg %p392
      // Predicated region
      $region57: #{tpu_custom_call.1} parent=5 // pred_check
        _
      $region58: #{tpu_custom_call.1} parent=5 // pred_check_branch
        %395 = sbr.rel (%p392) target = $region60
      $region59: #{tpu_custom_call.1} parent=5 // pred_region
        %s396 = ssub.s32 %s28, 1
        %s397 = sand.u32 %s41, 1
        %s398 = scalar_lea.sflag [#allocation3], %s397
        %s399 = sand.u32 %s41, 1
        %s400 = smul.addr %s399, 64
        %s401 = scalar_lea.vmem [#allocation2], %s400
        // Predicated region
        $region61: #{tpu_custom_call.1} parent=59 // pred_check
          %p402 = pneg %p54
        $region62: #{tpu_custom_call.1} parent=59 // pred_check_branch
          %404 = sbr.rel (%p402) target = $region64
        $region63: #{tpu_custom_call.1} parent=59 // pred_region
          %405 = dma.done %s398, 1024
        $region64: #{tpu_custom_call.1} parent=59 // pred_fallthru
          _
        // Predicated region
        $region65: #{tpu_custom_call.1} parent=59 // pred_check
          %p406 = pneg %p75
        $region66: #{tpu_custom_call.1} parent=59 // pred_check_branch
          %408 = sbr.rel (%p406) target = $region68
        $region67: #{tpu_custom_call.1} parent=59 // pred_region
          %409 = dma.done [#allocation8], 512
        $region68: #{tpu_custom_call.1} parent=59 // pred_fallthru
          _
        // Predicated region
        $region69: #{tpu_custom_call.1} parent=59 // pred_check
          %p410 = pneg %p96
        $region70: #{tpu_custom_call.1} parent=59 // pred_check_branch
          %412 = sbr.rel (%p410) target = $region72
        $region71: #{tpu_custom_call.1} parent=59 // pred_region
          %413 = dma.done [#allocation6], 32
        $region72: #{tpu_custom_call.1} parent=59 // pred_fallthru
          _
        // Predicated region
        $region73: #{tpu_custom_call.1} parent=59 // pred_check
          %p414 = pneg %p117
        $region74: #{tpu_custom_call.1} parent=59 // pred_check_branch
          %416 = sbr.rel (%p414) target = $region76
        $region75: #{tpu_custom_call.1} parent=59 // pred_region
          %417 = dma.done [#allocation5], 16
        $region76: #{tpu_custom_call.1} parent=59 // pred_fallthru
          _
        // Predicated region
        $region77: #{tpu_custom_call.1} parent=59 // pred_check
          %p418 = pneg %p138
        $region78: #{tpu_custom_call.1} parent=59 // pred_check_branch
          %420 = sbr.rel (%p418) target = $region80
        $region79: #{tpu_custom_call.1} parent=59 // pred_region
          %421 = dma.done [#allocation12], 32
        $region80: #{tpu_custom_call.1} parent=59 // pred_fallthru
          _
        // Predicated region
        $region81: #{tpu_custom_call.1} parent=59 // pred_check
          %p422 = pneg %p159
        $region82: #{tpu_custom_call.1} parent=59 // pred_check_branch
          %424 = sbr.rel (%p422) target = $region84
        $region83: #{tpu_custom_call.1} parent=59 // pred_region
          %425 = dma.done [#allocation14], 16
        $region84: #{tpu_custom_call.1} parent=59 // pred_fallthru
          _
        // Predicated region
        $region85: #{tpu_custom_call.1} parent=59 // pred_check
          %p426 = pneg %p180
        $region86: #{tpu_custom_call.1} parent=59 // pred_check_branch
          %428 = sbr.rel (%p426) target = $region88
        $region87: #{tpu_custom_call.1} parent=59 // pred_region
          %429 = dma.done [#allocation12], 32
        $region88: #{tpu_custom_call.1} parent=59 // pred_fallthru
          _
        // Predicated region
        $region89: #{tpu_custom_call.1} parent=59 // pred_check
          %p430 = pneg %p201
        $region90: #{tpu_custom_call.1} parent=59 // pred_check_branch
          %432 = sbr.rel (%p430) target = $region92
        $region91: #{tpu_custom_call.1} parent=59 // pred_region
          %433 = dma.done [#allocation17], 16
        $region92: #{tpu_custom_call.1} parent=59 // pred_fallthru
          _
        %434 = sfence
        %s435 = sand.u32 %s41, 1
        %s436 = scalar_lea.sflag [#allocation3], %s435
        %s437 = sand.u32 %s41, 1
        %s438 = smul.addr %s437, 64
        %s439 = scalar_lea.vmem [#allocation2], %s438
        %p440 = pneg %p54
        %p441 = pneg %p51
        %p442 = pneg %p75
        %p443 = pneg %p72
        %p444 = pneg %p96
        %p445 = pneg %p93
        %p446 = pneg %p117
        %p447 = pneg %p114
        %p448 = pneg %p138
        %p449 = pneg %p135
        %p450 = pneg %p159
        %p451 = pneg %p156
        %p452 = pneg %p180
        %p453 = pneg %p177
        %p454 = pneg %p201
        %p455 = pneg %p198
        %p456 = pneg %p222
        %p457 = pneg %p219
        %p458 = pneg %p243
        %p459 = pneg %p240
        %p460 = pneg %p269
        %p461 = pneg %p266
        %s462 = sand.u32 %s256, 1
        %s463 = scalar_lea.sflag [#allocation4], %s462
        %s464 = sand.u32 %s256, 1
        %s465 = smul.addr %s464, 64
        %s466 = scalar_lea.vmem [#allocation18], %s465
        %v467 = vld [vmem:[%s401] sm:$0xff]
        %v468 = vld [vmem:[%s401 + $0x8] sm:$0xff]
        %s469 = scalar_lea.vmem %s401, 16 [#allocation2]
        %v470 = vld [vmem:[%s469] sm:$0xff]
        %v471 = vld [vmem:[%s469 + $0x8] sm:$0xff]
        %s472 = scalar_lea.vmem %s401, 32 [#allocation2]
        %v473 = vld [vmem:[%s472] sm:$0xff]
        %v474 = vld [vmem:[%s472 + $0x8] sm:$0xff]
        %s475 = scalar_lea.vmem %s401, 48 [#allocation2]
        %v476 = vld [vmem:[%s475] sm:$0xff]
        %v477 = vld [vmem:[%s475 + $0x8] sm:$0xff]
        %s478 = sld [smem:[#allocation10]]
        %v479 = vstv %s478
        %s480 = sld [smem:[#allocation10 + $0x1]]
        %v481 = vstv %s480
        %s482 = sld [smem:[#allocation10 + $0x2]]
        %v483 = vstv %s482
        %s484 = sld [smem:[#allocation10 + $0x3]]
        %v485 = vstv %s484
        %486 = vrot.lane.b32.xlu0 %v467, 17
        %v487 = vpop.permute.xlu0 %486
        %488 = vrot.lane.b32.xlu0 %v470, 17
        %v489 = vpop.permute.xlu0 %488
        %490 = vrot.lane.b32.xlu0 %v473, 17
        %v491 = vpop.permute.xlu0 %490
        %492 = vrot.lane.b32.xlu0 %v476, 17
        %v493 = vpop.permute.xlu0 %492
        %494 = vrot.lane.b32.xlu0 %v468, 17
        %v495 = vpop.permute.xlu0 %494
        %496 = vrot.lane.b32.xlu0 %v471, 17
        %v497 = vpop.permute.xlu0 %496
        %498 = vrot.lane.b32.xlu0 %v474, 17
        %v499 = vpop.permute.xlu0 %498
        %500 = vrot.lane.b32.xlu0 %v477, 17
        %v501 = vpop.permute.xlu0 %500
        %v502 = vlaneseq
        %v503 = vand.u32 %v502, 127
        %vm504 = vcmp.lt.s32.totalorder %v503, 17
        %v505 = vsel %vm504, %v487, %v495
        %v506 = vsel %vm504, %v489, %v497
        %v507 = vsel %vm504, %v491, %v499
        %v508 = vsel %vm504, %v493, %v501
        %v509 = vsel %vm504, %v495, %v487
        %v510 = vsel %vm504, %v497, %v489
        %v511 = vsel %vm504, %v499, %v491
        %v512 = vsel %vm504, %v501, %v493
        %v513 = vld [vmem:[#allocation7] ss:$8 sm:$0x3]
        %v515 = vlaneseq
        %v516 = vshrl.u32 %v515, 7
        %v517 = vsub.s32 0, %v516
        %v518 = vrot.slane %v513, %v517
        %v519 = vlaneseq
        %v520 = vshrl.u32 %v519, 7
        %v521 = vsub.s32 1, %v520
        %v522 = vrot.slane %v513, %v521
        %v525 = vmul.f32 %v509, %v518
        %v526 = vmul.f32 %v505, %v522
        %v527 = vmul.f32 %v510, %v518
        %v528 = vmul.f32 %v506, %v522
        %v529 = vmul.f32 %v511, %v518
        %v530 = vmul.f32 %v507, %v522
        %v531 = vmul.f32 %v512, %v518
        %v532 = vmul.f32 %v508, %v522
        %s533 = sld [smem:[#allocation9]]
        %v534 = vstv %s533
        %v535 = vmul.f32 %v534, %v525
        %v536 = vmul.f32 %v534, %v526
        %v537 = vadd.f32 %v479, %v535
        %v538 = vadd.f32 %v479, %v536
        %s539 = sld [smem:[#allocation9 + $0x24]]
        %v540 = vstv %s539
        %v541 = vmul.f32 %v540, %v525
        %v542 = vmul.f32 %v540, %v526
        %v543 = vadd.f32 %v481, %v541
        %v544 = vadd.f32 %v481, %v542
        %s545 = sld [smem:[#allocation9 + $0x48]]
        %v546 = vstv %s545
        %v547 = vmul.f32 %v546, %v525
        %v548 = vmul.f32 %v546, %v526
        %v549 = vadd.f32 %v483, %v547
        %v550 = vadd.f32 %v483, %v548
        %s551 = sld [smem:[#allocation9 + $0x6c]]
        %v552 = vstv %s551
        %v553 = vmul.f32 %v552, %v525
        %v554 = vmul.f32 %v552, %v526
        %v555 = vadd.f32 %v485, %v553
        %v556 = vadd.f32 %v485, %v554
        %s557 = sld [smem:[#allocation9 + $0x9]]
        %v558 = vstv %s557
        %v559 = vmul.f32 %v558, %v527
        %v560 = vmul.f32 %v558, %v528
        %v561 = vadd.f32 %v537, %v559
        %v562 = vadd.f32 %v538, %v560
        %s563 = sld [smem:[#allocation9 + $0x2d]]
        %v564 = vstv %s563
        %v565 = vmul.f32 %v564, %v527
        %v566 = vmul.f32 %v564, %v528
        %v567 = vadd.f32 %v543, %v565
        %v568 = vadd.f32 %v544, %v566
        %s569 = sld [smem:[#allocation9 + $0x51]]
        %v570 = vstv %s569
        %v571 = vmul.f32 %v570, %v527
        %v572 = vmul.f32 %v570, %v528
        %v573 = vadd.f32 %v549, %v571
        %v574 = vadd.f32 %v550, %v572
        %s575 = sld [smem:[#allocation9 + $0x75]]
        %v576 = vstv %s575
        %v577 = vmul.f32 %v576, %v527
        %v578 = vmul.f32 %v576, %v528
        %v579 = vadd.f32 %v555, %v577
        %v580 = vadd.f32 %v556, %v578
        %s581 = sld [smem:[#allocation9 + $0x12]]
        %v582 = vstv %s581
        %v583 = vmul.f32 %v582, %v529
        %v584 = vmul.f32 %v582, %v530
        %v585 = vadd.f32 %v561, %v583
        %v586 = vadd.f32 %v562, %v584
        %s587 = sld [smem:[#allocation9 + $0x36]]
        %v588 = vstv %s587
        %v589 = vmul.f32 %v588, %v529
        %v590 = vmul.f32 %v588, %v530
        %v591 = vadd.f32 %v567, %v589
        %v592 = vadd.f32 %v568, %v590
        %s593 = sld [smem:[#allocation9 + $0x5a]]
        %v594 = vstv %s593
        %v595 = vmul.f32 %v594, %v529
        %v596 = vmul.f32 %v594, %v530
        %v597 = vadd.f32 %v573, %v595
        %v598 = vadd.f32 %v574, %v596
        %s599 = sld [smem:[#allocation9 + $0x7e]]
        %v600 = vstv %s599
        %v601 = vmul.f32 %v600, %v529
        %v602 = vmul.f32 %v600, %v530
        %v603 = vadd.f32 %v579, %v601
        %v604 = vadd.f32 %v580, %v602
        %s605 = sld [smem:[#allocation9 + $0x1b]]
        %v606 = vstv %s605
        %v607 = vmul.f32 %v606, %v531
        %v608 = vmul.f32 %v606, %v532
        %v609 = vadd.f32 %v585, %v607
        %v610 = vadd.f32 %v586, %v608
        %s611 = sld [smem:[#allocation9 + $0x3f]]
        %v612 = vstv %s611
        %v613 = vmul.f32 %v612, %v531
        %v614 = vmul.f32 %v612, %v532
        %v615 = vadd.f32 %v591, %v613
        %v616 = vadd.f32 %v592, %v614
        %s617 = sld [smem:[#allocation9 + $0x63]]
        %v618 = vstv %s617
        %v619 = vmul.f32 %v618, %v531
        %v620 = vmul.f32 %v618, %v532
        %v621 = vadd.f32 %v597, %v619
        %v622 = vadd.f32 %v598, %v620
        %s623 = sld [smem:[#allocation9 + $0x87]]
        %v624 = vstv %s623
        %v625 = vmul.f32 %v624, %v531
        %v626 = vmul.f32 %v624, %v532
        %v627 = vadd.f32 %v603, %v625
        %v628 = vadd.f32 %v604, %v626
        %629 = vrot.lane.b32.xlu0 %v467, 16
        %v630 = vpop.permute.xlu0 %629
        %631 = vrot.lane.b32.xlu0 %v470, 16
        %v632 = vpop.permute.xlu0 %631
        %633 = vrot.lane.b32.xlu0 %v473, 16
        %v634 = vpop.permute.xlu0 %633
        %635 = vrot.lane.b32.xlu0 %v476, 16
        %v636 = vpop.permute.xlu0 %635
        %637 = vrot.lane.b32.xlu0 %v468, 16
        %v638 = vpop.permute.xlu0 %637
        %639 = vrot.lane.b32.xlu0 %v471, 16
        %v640 = vpop.permute.xlu0 %639
        %641 = vrot.lane.b32.xlu0 %v474, 16
        %v642 = vpop.permute.xlu0 %641
        %643 = vrot.lane.b32.xlu0 %v477, 16
        %v644 = vpop.permute.xlu0 %643
        %vm645 = vcmp.lt.s32.totalorder %v503, 16
        %v646 = vsel %vm645, %v630, %v638
        %v647 = vsel %vm645, %v632, %v640
        %v648 = vsel %vm645, %v634, %v642
        %v649 = vsel %vm645, %v636, %v644
        %v650 = vsel %vm645, %v638, %v630
        %v651 = vsel %vm645, %v640, %v632
        %v652 = vsel %vm645, %v642, %v634
        %v653 = vsel %vm645, %v644, %v636
        %s654 = scalar_lea.vmem [#allocation7], 1
        %v655 = vld [vmem:[%s654] ss:$8 sm:$0x3]
        %v657 = vlaneseq
        %v658 = vshrl.u32 %v657, 7
        %v659 = vsub.s32 0, %v658
        %v660 = vrot.slane %v655, %v659
        %v661 = vlaneseq
        %v662 = vshrl.u32 %v661, 7
        %v663 = vsub.s32 1, %v662
        %v664 = vrot.slane %v655, %v663
        %v667 = vmul.f32 %v650, %v660
        %v668 = vmul.f32 %v646, %v664
        %v669 = vmul.f32 %v651, %v660
        %v670 = vmul.f32 %v647, %v664
        %v671 = vmul.f32 %v652, %v660
        %v672 = vmul.f32 %v648, %v664
        %v673 = vmul.f32 %v653, %v660
        %v674 = vmul.f32 %v649, %v664
        %s675 = sld [smem:[#allocation9 + $0x1]]
        %v676 = vstv %s675
        %v677 = vmul.f32 %v676, %v667
        %v678 = vmul.f32 %v676, %v668
        %v679 = vadd.f32 %v609, %v677
        %v680 = vadd.f32 %v610, %v678
        %s681 = sld [smem:[#allocation9 + $0x25]]
        %v682 = vstv %s681
        %v683 = vmul.f32 %v682, %v667
        %v684 = vmul.f32 %v682, %v668
        %v685 = vadd.f32 %v615, %v683
        %v686 = vadd.f32 %v616, %v684
        %s687 = sld [smem:[#allocation9 + $0x49]]
        %v688 = vstv %s687
        %v689 = vmul.f32 %v688, %v667
        %v690 = vmul.f32 %v688, %v668
        %v691 = vadd.f32 %v621, %v689
        %v692 = vadd.f32 %v622, %v690
        %s693 = sld [smem:[#allocation9 + $0x6d]]
        %v694 = vstv %s693
        %v695 = vmul.f32 %v694, %v667
        %v696 = vmul.f32 %v694, %v668
        %v697 = vadd.f32 %v627, %v695
        %v698 = vadd.f32 %v628, %v696
        %s699 = sld [smem:[#allocation9 + $0xa]]
        %v700 = vstv %s699
        %v701 = vmul.f32 %v700, %v669
        %v702 = vmul.f32 %v700, %v670
        %v703 = vadd.f32 %v679, %v701
        %v704 = vadd.f32 %v680, %v702
        %s705 = sld [smem:[#allocation9 + $0x2e]]
        %v706 = vstv %s705
        %v707 = vmul.f32 %v706, %v669
        %v708 = vmul.f32 %v706, %v670
        %v709 = vadd.f32 %v685, %v707
        %v710 = vadd.f32 %v686, %v708
        %s711 = sld [smem:[#allocation9 + $0x52]]
        %v712 = vstv %s711
        %v713 = vmul.f32 %v712, %v669
        %v714 = vmul.f32 %v712, %v670
        %v715 = vadd.f32 %v691, %v713
        %v716 = vadd.f32 %v692, %v714
        %s717 = sld [smem:[#allocation9 + $0x76]]
        %v718 = vstv %s717
        %v719 = vmul.f32 %v718, %v669
        %v720 = vmul.f32 %v718, %v670
        %v721 = vadd.f32 %v697, %v719
        %v722 = vadd.f32 %v698, %v720
        %s723 = sld [smem:[#allocation9 + $0x13]]
        %v724 = vstv %s723
        %v725 = vmul.f32 %v724, %v671
        %v726 = vmul.f32 %v724, %v672
        %v727 = vadd.f32 %v703, %v725
        %v728 = vadd.f32 %v704, %v726
        %s729 = sld [smem:[#allocation9 + $0x37]]
        %v730 = vstv %s729
        %v731 = vmul.f32 %v730, %v671
        %v732 = vmul.f32 %v730, %v672
        %v733 = vadd.f32 %v709, %v731
        %v734 = vadd.f32 %v710, %v732
        %s735 = sld [smem:[#allocation9 + $0x5b]]
        %v736 = vstv %s735
        %v737 = vmul.f32 %v736, %v671
        %v738 = vmul.f32 %v736, %v672
        %v739 = vadd.f32 %v715, %v737
        %v740 = vadd.f32 %v716, %v738
        %s741 = sld [smem:[#allocation9 + $0x7f]]
        %v742 = vstv %s741
        %v743 = vmul.f32 %v742, %v671
        %v744 = vmul.f32 %v742, %v672
        %v745 = vadd.f32 %v721, %v743
        %v746 = vadd.f32 %v722, %v744
        %s747 = sld [smem:[#allocation9 + $0x1c]]
        %v748 = vstv %s747
        %v749 = vmul.f32 %v748, %v673
        %v750 = vmul.f32 %v748, %v674
        %v751 = vadd.f32 %v727, %v749
        %v752 = vadd.f32 %v728, %v750
        %s753 = sld [smem:[#allocation9 + $0x40]]
        %v754 = vstv %s753
        %v755 = vmul.f32 %v754, %v673
        %v756 = vmul.f32 %v754, %v674
        %v757 = vadd.f32 %v733, %v755
        %v758 = vadd.f32 %v734, %v756
        %s759 = sld [smem:[#allocation9 + $0x64]]
        %v760 = vstv %s759
        %v761 = vmul.f32 %v760, %v673
        %v762 = vmul.f32 %v760, %v674
        %v763 = vadd.f32 %v739, %v761
        %v764 = vadd.f32 %v740, %v762
        %s765 = sld [smem:[#allocation9 + $0x88]]
        %v766 = vstv %s765
        %v767 = vmul.f32 %v766, %v673
        %v768 = vmul.f32 %v766, %v674
        %v769 = vadd.f32 %v745, %v767
        %v770 = vadd.f32 %v746, %v768
        %771 = vrot.lane.b32.xlu0 %v467, 15
        %v772 = vpop.permute.xlu0 %771
        %773 = vrot.lane.b32.xlu0 %v470, 15
        %v774 = vpop.permute.xlu0 %773
        %775 = vrot.lane.b32.xlu0 %v473, 15
        %v776 = vpop.permute.xlu0 %775
        %777 = vrot.lane.b32.xlu0 %v476, 15
        %v778 = vpop.permute.xlu0 %777
        %779 = vrot.lane.b32.xlu0 %v468, 15
        %v780 = vpop.permute.xlu0 %779
        %781 = vrot.lane.b32.xlu0 %v471, 15
        %v782 = vpop.permute.xlu0 %781
        %783 = vrot.lane.b32.xlu0 %v474, 15
        %v784 = vpop.permute.xlu0 %783
        %785 = vrot.lane.b32.xlu0 %v477, 15
        %v786 = vpop.permute.xlu0 %785
        %vm787 = vcmp.lt.s32.totalorder %v503, 15
        %v788 = vsel %vm787, %v772, %v780
        %v789 = vsel %vm787, %v774, %v782
        %v790 = vsel %vm787, %v776, %v784
        %v791 = vsel %vm787, %v778, %v786
        %v792 = vsel %vm787, %v780, %v772
        %v793 = vsel %vm787, %v782, %v774
        %v794 = vsel %vm787, %v784, %v776
        %v795 = vsel %vm787, %v786, %v778
        %s796 = scalar_lea.vmem [#allocation7], 2
        %v797 = vld [vmem:[%s796] ss:$8 sm:$0x3]
        %v799 = vlaneseq
        %v800 = vshrl.u32 %v799, 7
        %v801 = vsub.s32 0, %v800
        %v802 = vrot.slane %v797, %v801
        %v803 = vlaneseq
        %v804 = vshrl.u32 %v803, 7
        %v805 = vsub.s32 1, %v804
        %v806 = vrot.slane %v797, %v805
        %v809 = vmul.f32 %v792, %v802
        %v810 = vmul.f32 %v788, %v806
        %v811 = vmul.f32 %v793, %v802
        %v812 = vmul.f32 %v789, %v806
        %v813 = vmul.f32 %v794, %v802
        %v814 = vmul.f32 %v790, %v806
        %v815 = vmul.f32 %v795, %v802
        %v816 = vmul.f32 %v791, %v806
        %s817 = sld [smem:[#allocation9 + $0x2]]
        %v818 = vstv %s817
        %v819 = vmul.f32 %v818, %v809
        %v820 = vmul.f32 %v818, %v810
        %v821 = vadd.f32 %v751, %v819
        %v822 = vadd.f32 %v752, %v820
        %s823 = sld [smem:[#allocation9 + $0x26]]
        %v824 = vstv %s823
        %v825 = vmul.f32 %v824, %v809
        %v826 = vmul.f32 %v824, %v810
        %v827 = vadd.f32 %v757, %v825
        %v828 = vadd.f32 %v758, %v826
        %s829 = sld [smem:[#allocation9 + $0x4a]]
        %v830 = vstv %s829
        %v831 = vmul.f32 %v830, %v809
        %v832 = vmul.f32 %v830, %v810
        %v833 = vadd.f32 %v763, %v831
        %v834 = vadd.f32 %v764, %v832
        %s835 = sld [smem:[#allocation9 + $0x6e]]
        %v836 = vstv %s835
        %v837 = vmul.f32 %v836, %v809
        %v838 = vmul.f32 %v836, %v810
        %v839 = vadd.f32 %v769, %v837
        %v840 = vadd.f32 %v770, %v838
        %s841 = sld [smem:[#allocation9 + $0xb]]
        %v842 = vstv %s841
        %v843 = vmul.f32 %v842, %v811
        %v844 = vmul.f32 %v842, %v812
        %v845 = vadd.f32 %v821, %v843
        %v846 = vadd.f32 %v822, %v844
        %s847 = sld [smem:[#allocation9 + $0x2f]]
        %v848 = vstv %s847
        %v849 = vmul.f32 %v848, %v811
        %v850 = vmul.f32 %v848, %v812
        %v851 = vadd.f32 %v827, %v849
        %v852 = vadd.f32 %v828, %v850
        %s853 = sld [smem:[#allocation9 + $0x53]]
        %v854 = vstv %s853
        %v855 = vmul.f32 %v854, %v811
        %v856 = vmul.f32 %v854, %v812
        %v857 = vadd.f32 %v833, %v855
        %v858 = vadd.f32 %v834, %v856
        %s859 = sld [smem:[#allocation9 + $0x77]]
        %v860 = vstv %s859
        %v861 = vmul.f32 %v860, %v811
        %v862 = vmul.f32 %v860, %v812
        %v863 = vadd.f32 %v839, %v861
        %v864 = vadd.f32 %v840, %v862
        %s865 = sld [smem:[#allocation9 + $0x14]]
        %v866 = vstv %s865
        %v867 = vmul.f32 %v866, %v813
        %v868 = vmul.f32 %v866, %v814
        %v869 = vadd.f32 %v845, %v867
        %v870 = vadd.f32 %v846, %v868
        %s871 = sld [smem:[#allocation9 + $0x38]]
        %v872 = vstv %s871
        %v873 = vmul.f32 %v872, %v813
        %v874 = vmul.f32 %v872, %v814
        %v875 = vadd.f32 %v851, %v873
        %v876 = vadd.f32 %v852, %v874
        %s877 = sld [smem:[#allocation9 + $0x5c]]
        %v878 = vstv %s877
        %v879 = vmul.f32 %v878, %v813
        %v880 = vmul.f32 %v878, %v814
        %v881 = vadd.f32 %v857, %v879
        %v882 = vadd.f32 %v858, %v880
        %s883 = sld [smem:[#allocation9 + $0x80]]
        %v884 = vstv %s883
        %v885 = vmul.f32 %v884, %v813
        %v886 = vmul.f32 %v884, %v814
        %v887 = vadd.f32 %v863, %v885
        %v888 = vadd.f32 %v864, %v886
        %s889 = sld [smem:[#allocation9 + $0x1d]]
        %v890 = vstv %s889
        %v891 = vmul.f32 %v890, %v815
        %v892 = vmul.f32 %v890, %v816
        %v893 = vadd.f32 %v869, %v891
        %v894 = vadd.f32 %v870, %v892
        %s895 = sld [smem:[#allocation9 + $0x41]]
        %v896 = vstv %s895
        %v897 = vmul.f32 %v896, %v815
        %v898 = vmul.f32 %v896, %v816
        %v899 = vadd.f32 %v875, %v897
        %v900 = vadd.f32 %v876, %v898
        %s901 = sld [smem:[#allocation9 + $0x65]]
        %v902 = vstv %s901
        %v903 = vmul.f32 %v902, %v815
        %v904 = vmul.f32 %v902, %v816
        %v905 = vadd.f32 %v881, %v903
        %v906 = vadd.f32 %v882, %v904
        %s907 = sld [smem:[#allocation9 + $0x89]]
        %v908 = vstv %s907
        %v909 = vmul.f32 %v908, %v815
        %v910 = vmul.f32 %v908, %v816
        %v911 = vadd.f32 %v887, %v909
        %v912 = vadd.f32 %v888, %v910
        %913 = vrot.lane.b32.xlu0 %v467, 1
        %v914 = vpop.permute.xlu0 %913
        %915 = vrot.lane.b32.xlu0 %v470, 1
        %v916 = vpop.permute.xlu0 %915
        %917 = vrot.lane.b32.xlu0 %v473, 1
        %v918 = vpop.permute.xlu0 %917
        %919 = vrot.lane.b32.xlu0 %v476, 1
        %v920 = vpop.permute.xlu0 %919
        %921 = vrot.lane.b32.xlu0 %v468, 1
        %v922 = vpop.permute.xlu0 %921
        %923 = vrot.lane.b32.xlu0 %v471, 1
        %v924 = vpop.permute.xlu0 %923
        %925 = vrot.lane.b32.xlu0 %v474, 1
        %v926 = vpop.permute.xlu0 %925
        %927 = vrot.lane.b32.xlu0 %v477, 1
        %v928 = vpop.permute.xlu0 %927
        %vm929 = vcmp.lt.s32.totalorder %v503, 1
        %v930 = vsel %vm929, %v914, %v922
        %v931 = vsel %vm929, %v916, %v924
        %v932 = vsel %vm929, %v918, %v926
        %v933 = vsel %vm929, %v920, %v928
        %v934 = vsel %vm929, %v922, %v914
        %v935 = vsel %vm929, %v924, %v916
        %v936 = vsel %vm929, %v926, %v918
        %v937 = vsel %vm929, %v928, %v920
        %s938 = scalar_lea.vmem [#allocation7], 3
        %v939 = vld [vmem:[%s938] ss:$8 sm:$0x3]
        %v941 = vlaneseq
        %v942 = vshrl.u32 %v941, 7
        %v943 = vsub.s32 0, %v942
        %v944 = vrot.slane %v939, %v943
        %v945 = vlaneseq
        %v946 = vshrl.u32 %v945, 7
        %v947 = vsub.s32 1, %v946
        %v948 = vrot.slane %v939, %v947
        %v951 = vmul.f32 %v934, %v944
        %v952 = vmul.f32 %v930, %v948
        %v953 = vmul.f32 %v935, %v944
        %v954 = vmul.f32 %v931, %v948
        %v955 = vmul.f32 %v936, %v944
        %v956 = vmul.f32 %v932, %v948
        %v957 = vmul.f32 %v937, %v944
        %v958 = vmul.f32 %v933, %v948
        %s959 = sld [smem:[#allocation9 + $0x3]]
        %v960 = vstv %s959
        %v961 = vmul.f32 %v960, %v951
        %v962 = vmul.f32 %v960, %v952
        %v963 = vadd.f32 %v893, %v961
        %v964 = vadd.f32 %v894, %v962
        %s965 = sld [smem:[#allocation9 + $0x27]]
        %v966 = vstv %s965
        %v967 = vmul.f32 %v966, %v951
        %v968 = vmul.f32 %v966, %v952
        %v969 = vadd.f32 %v899, %v967
        %v970 = vadd.f32 %v900, %v968
        %s971 = sld [smem:[#allocation9 + $0x4b]]
        %v972 = vstv %s971
        %v973 = vmul.f32 %v972, %v951
        %v974 = vmul.f32 %v972, %v952
        %v975 = vadd.f32 %v905, %v973
        %v976 = vadd.f32 %v906, %v974
        %s977 = sld [smem:[#allocation9 + $0x6f]]
        %v978 = vstv %s977
        %v979 = vmul.f32 %v978, %v951
        %v980 = vmul.f32 %v978, %v952
        %v981 = vadd.f32 %v911, %v979
        %v982 = vadd.f32 %v912, %v980
        %s983 = sld [smem:[#allocation9 + $0xc]]
        %v984 = vstv %s983
        %v985 = vmul.f32 %v984, %v953
        %v986 = vmul.f32 %v984, %v954
        %v987 = vadd.f32 %v963, %v985
        %v988 = vadd.f32 %v964, %v986
        %s989 = sld [smem:[#allocation9 + $0x30]]
        %v990 = vstv %s989
        %v991 = vmul.f32 %v990, %v953
        %v992 = vmul.f32 %v990, %v954
        %v993 = vadd.f32 %v969, %v991
        %v994 = vadd.f32 %v970, %v992
        %s995 = sld [smem:[#allocation9 + $0x54]]
        %v996 = vstv %s995
        %v997 = vmul.f32 %v996, %v953
        %v998 = vmul.f32 %v996, %v954
        %v999 = vadd.f32 %v975, %v997
        %v1000 = vadd.f32 %v976, %v998
        %s1001 = sld [smem:[#allocation9 + $0x78]]
        %v1002 = vstv %s1001
        %v1003 = vmul.f32 %v1002, %v953
        %v1004 = vmul.f32 %v1002, %v954
        %v1005 = vadd.f32 %v981, %v1003
        %v1006 = vadd.f32 %v982, %v1004
        %s1007 = sld [smem:[#allocation9 + $0x15]]
        %v1008 = vstv %s1007
        %v1009 = vmul.f32 %v1008, %v955
        %v1010 = vmul.f32 %v1008, %v956
        %v1011 = vadd.f32 %v987, %v1009
        %v1012 = vadd.f32 %v988, %v1010
        %s1013 = sld [smem:[#allocation9 + $0x39]]
        %v1014 = vstv %s1013
        %v1015 = vmul.f32 %v1014, %v955
        %v1016 = vmul.f32 %v1014, %v956
        %v1017 = vadd.f32 %v993, %v1015
        %v1018 = vadd.f32 %v994, %v1016
        %s1019 = sld [smem:[#allocation9 + $0x5d]]
        %v1020 = vstv %s1019
        %v1021 = vmul.f32 %v1020, %v955
        %v1022 = vmul.f32 %v1020, %v956
        %v1023 = vadd.f32 %v999, %v1021
        %v1024 = vadd.f32 %v1000, %v1022
        %s1025 = sld [smem:[#allocation9 + $0x81]]
        %v1026 = vstv %s1025
        %v1027 = vmul.f32 %v1026, %v955
        %v1028 = vmul.f32 %v1026, %v956
        %v1029 = vadd.f32 %v1005, %v1027
        %v1030 = vadd.f32 %v1006, %v1028
        %s1031 = sld [smem:[#allocation9 + $0x1e]]
        %v1032 = vstv %s1031
        %v1033 = vmul.f32 %v1032, %v957
        %v1034 = vmul.f32 %v1032, %v958
        %v1035 = vadd.f32 %v1011, %v1033
        %v1036 = vadd.f32 %v1012, %v1034
        %s1037 = sld [smem:[#allocation9 + $0x42]]
        %v1038 = vstv %s1037
        %v1039 = vmul.f32 %v1038, %v957
        %v1040 = vmul.f32 %v1038, %v958
        %v1041 = vadd.f32 %v1017, %v1039
        %v1042 = vadd.f32 %v1018, %v1040
        %s1043 = sld [smem:[#allocation9 + $0x66]]
        %v1044 = vstv %s1043
        %v1045 = vmul.f32 %v1044, %v957
        %v1046 = vmul.f32 %v1044, %v958
        %v1047 = vadd.f32 %v1023, %v1045
        %v1048 = vadd.f32 %v1024, %v1046
        %s1049 = sld [smem:[#allocation9 + $0x8a]]
        %v1050 = vstv %s1049
        %v1051 = vmul.f32 %v1050, %v957
        %v1052 = vmul.f32 %v1050, %v958
        %v1053 = vadd.f32 %v1029, %v1051
        %v1054 = vadd.f32 %v1030, %v1052
        %s1055 = sld [smem:[#allocation9 + $0x4]]
        %v1056 = vstv %s1055
        %v1057 = vmul.f32 %v1056, %v467
        %v1058 = vmul.f32 %v1056, %v468
        %v1059 = vadd.f32 %v1035, %v1057
        %v1060 = vadd.f32 %v1036, %v1058
        %s1061 = sld [smem:[#allocation9 + $0x28]]
        %v1062 = vstv %s1061
        %v1063 = vmul.f32 %v1062, %v467
        %v1064 = vmul.f32 %v1062, %v468
        %v1065 = vadd.f32 %v1041, %v1063
        %v1066 = vadd.f32 %v1042, %v1064
        %s1067 = sld [smem:[#allocation9 + $0x4c]]
        %v1068 = vstv %s1067
        %v1069 = vmul.f32 %v1068, %v467
        %v1070 = vmul.f32 %v1068, %v468
        %v1071 = vadd.f32 %v1047, %v1069
        %v1072 = vadd.f32 %v1048, %v1070
        %s1073 = sld [smem:[#allocation9 + $0x70]]
        %v1074 = vstv %s1073
        %v1075 = vmul.f32 %v1074, %v467
        %v1076 = vmul.f32 %v1074, %v468
        %v1077 = vadd.f32 %v1053, %v1075
        %v1078 = vadd.f32 %v1054, %v1076
        %s1079 = sld [smem:[#allocation9 + $0xd]]
        %v1080 = vstv %s1079
        %v1081 = vmul.f32 %v1080, %v470
        %v1082 = vmul.f32 %v1080, %v471
        %v1083 = vadd.f32 %v1059, %v1081
        %v1084 = vadd.f32 %v1060, %v1082
        %s1085 = sld [smem:[#allocation9 + $0x31]]
        %v1086 = vstv %s1085
        %v1087 = vmul.f32 %v1086, %v470
        %v1088 = vmul.f32 %v1086, %v471
        %v1089 = vadd.f32 %v1065, %v1087
        %v1090 = vadd.f32 %v1066, %v1088
        %s1091 = sld [smem:[#allocation9 + $0x55]]
        %v1092 = vstv %s1091
        %v1093 = vmul.f32 %v1092, %v470
        %v1094 = vmul.f32 %v1092, %v471
        %v1095 = vadd.f32 %v1071, %v1093
        %v1096 = vadd.f32 %v1072, %v1094
        %s1097 = sld [smem:[#allocation9 + $0x79]]
        %v1098 = vstv %s1097
        %v1099 = vmul.f32 %v1098, %v470
        %v1100 = vmul.f32 %v1098, %v471
        %v1101 = vadd.f32 %v1077, %v1099
        %v1102 = vadd.f32 %v1078, %v1100
        %s1103 = sld [smem:[#allocation9 + $0x16]]
        %v1104 = vstv %s1103
        %v1105 = vmul.f32 %v1104, %v473
        %v1106 = vmul.f32 %v1104, %v474
        %v1107 = vadd.f32 %v1083, %v1105
        %v1108 = vadd.f32 %v1084, %v1106
        %s1109 = sld [smem:[#allocation9 + $0x3a]]
        %v1110 = vstv %s1109
        %v1111 = vmul.f32 %v1110, %v473
        %v1112 = vmul.f32 %v1110, %v474
        %v1113 = vadd.f32 %v1089, %v1111
        %v1114 = vadd.f32 %v1090, %v1112
        %s1115 = sld [smem:[#allocation9 + $0x5e]]
        %v1116 = vstv %s1115
        %v1117 = vmul.f32 %v1116, %v473
        %v1118 = vmul.f32 %v1116, %v474
        %v1119 = vadd.f32 %v1095, %v1117
        %v1120 = vadd.f32 %v1096, %v1118
        %s1121 = sld [smem:[#allocation9 + $0x82]]
        %v1122 = vstv %s1121
        %v1123 = vmul.f32 %v1122, %v473
        %v1124 = vmul.f32 %v1122, %v474
        %v1125 = vadd.f32 %v1101, %v1123
        %v1126 = vadd.f32 %v1102, %v1124
        %s1127 = sld [smem:[#allocation9 + $0x1f]]
        %v1128 = vstv %s1127
        %v1129 = vmul.f32 %v1128, %v476
        %v1130 = vmul.f32 %v1128, %v477
        %v1131 = vadd.f32 %v1107, %v1129
        %v1132 = vadd.f32 %v1108, %v1130
        %s1133 = sld [smem:[#allocation9 + $0x43]]
        %v1134 = vstv %s1133
        %v1135 = vmul.f32 %v1134, %v476
        %v1136 = vmul.f32 %v1134, %v477
        %v1137 = vadd.f32 %v1113, %v1135
        %v1138 = vadd.f32 %v1114, %v1136
        %s1139 = sld [smem:[#allocation9 + $0x67]]
        %v1140 = vstv %s1139
        %v1141 = vmul.f32 %v1140, %v476
        %v1142 = vmul.f32 %v1140, %v477
        %v1143 = vadd.f32 %v1119, %v1141
        %v1144 = vadd.f32 %v1120, %v1142
        %s1145 = sld [smem:[#allocation9 + $0x8b]]
        %v1146 = vstv %s1145
        %v1147 = vmul.f32 %v1146, %v476
        %v1148 = vmul.f32 %v1146, %v477
        %v1149 = vadd.f32 %v1125, %v1147
        %v1150 = vadd.f32 %v1126, %v1148
        %1151 = vrot.lane.b32.xlu0 %v467, 127
        %v1152 = vpop.permute.xlu0 %1151
        %1153 = vrot.lane.b32.xlu0 %v470, 127
        %v1154 = vpop.permute.xlu0 %1153
        %1155 = vrot.lane.b32.xlu0 %v473, 127
        %v1156 = vpop.permute.xlu0 %1155
        %1157 = vrot.lane.b32.xlu0 %v476, 127
        %v1158 = vpop.permute.xlu0 %1157
        %1159 = vrot.lane.b32.xlu0 %v468, 127
        %v1160 = vpop.permute.xlu0 %1159
        %1161 = vrot.lane.b32.xlu0 %v471, 127
        %v1162 = vpop.permute.xlu0 %1161
        %1163 = vrot.lane.b32.xlu0 %v474, 127
        %v1164 = vpop.permute.xlu0 %1163
        %1165 = vrot.lane.b32.xlu0 %v477, 127
        %v1166 = vpop.permute.xlu0 %1165
        %vm1167 = vcmp.lt.s32.totalorder %v503, 127
        %v1168 = vsel %vm1167, %v1152, %v1160
        %v1169 = vsel %vm1167, %v1154, %v1162
        %v1170 = vsel %vm1167, %v1156, %v1164
        %v1171 = vsel %vm1167, %v1158, %v1166
        %v1172 = vsel %vm1167, %v1160, %v1152
        %v1173 = vsel %vm1167, %v1162, %v1154
        %v1174 = vsel %vm1167, %v1164, %v1156
        %v1175 = vsel %vm1167, %v1166, %v1158
        %s1176 = scalar_lea.vmem [#allocation7], 5
        %v1177 = vld [vmem:[%s1176] ss:$8 sm:$0x3]
        %v1179 = vlaneseq
        %v1180 = vshrl.u32 %v1179, 7
        %v1181 = vsub.s32 0, %v1180
        %v1182 = vrot.slane %v1177, %v1181
        %v1183 = vlaneseq
        %v1184 = vshrl.u32 %v1183, 7
        %v1185 = vsub.s32 1, %v1184
        %v1186 = vrot.slane %v1177, %v1185
        %v1189 = vmul.f32 %v1168, %v1182
        %v1190 = vmul.f32 %v1172, %v1186
        %v1191 = vmul.f32 %v1169, %v1182
        %v1192 = vmul.f32 %v1173, %v1186
        %v1193 = vmul.f32 %v1170, %v1182
        %v1194 = vmul.f32 %v1174, %v1186
        %v1195 = vmul.f32 %v1171, %v1182
        %v1196 = vmul.f32 %v1175, %v1186
        %s1197 = sld [smem:[#allocation9 + $0x5]]
        %v1198 = vstv %s1197
        %v1199 = vmul.f32 %v1198, %v1189
        %v1200 = vmul.f32 %v1198, %v1190
        %v1201 = vadd.f32 %v1131, %v1199
        %v1202 = vadd.f32 %v1132, %v1200
        %s1203 = sld [smem:[#allocation9 + $0x29]]
        %v1204 = vstv %s1203
        %v1205 = vmul.f32 %v1204, %v1189
        %v1206 = vmul.f32 %v1204, %v1190
        %v1207 = vadd.f32 %v1137, %v1205
        %v1208 = vadd.f32 %v1138, %v1206
        %s1209 = sld [smem:[#allocation9 + $0x4d]]
        %v1210 = vstv %s1209
        %v1211 = vmul.f32 %v1210, %v1189
        %v1212 = vmul.f32 %v1210, %v1190
        %v1213 = vadd.f32 %v1143, %v1211
        %v1214 = vadd.f32 %v1144, %v1212
        %s1215 = sld [smem:[#allocation9 + $0x71]]
        %v1216 = vstv %s1215
        %v1217 = vmul.f32 %v1216, %v1189
        %v1218 = vmul.f32 %v1216, %v1190
        %v1219 = vadd.f32 %v1149, %v1217
        %v1220 = vadd.f32 %v1150, %v1218
        %s1221 = sld [smem:[#allocation9 + $0xe]]
        %v1222 = vstv %s1221
        %v1223 = vmul.f32 %v1222, %v1191
        %v1224 = vmul.f32 %v1222, %v1192
        %v1225 = vadd.f32 %v1201, %v1223
        %v1226 = vadd.f32 %v1202, %v1224
        %s1227 = sld [smem:[#allocation9 + $0x32]]
        %v1228 = vstv %s1227
        %v1229 = vmul.f32 %v1228, %v1191
        %v1230 = vmul.f32 %v1228, %v1192
        %v1231 = vadd.f32 %v1207, %v1229
        %v1232 = vadd.f32 %v1208, %v1230
        %s1233 = sld [smem:[#allocation9 + $0x56]]
        %v1234 = vstv %s1233
        %v1235 = vmul.f32 %v1234, %v1191
        %v1236 = vmul.f32 %v1234, %v1192
        %v1237 = vadd.f32 %v1213, %v1235
        %v1238 = vadd.f32 %v1214, %v1236
        %s1239 = sld [smem:[#allocation9 + $0x7a]]
        %v1240 = vstv %s1239
        %v1241 = vmul.f32 %v1240, %v1191
        %v1242 = vmul.f32 %v1240, %v1192
        %v1243 = vadd.f32 %v1219, %v1241
        %v1244 = vadd.f32 %v1220, %v1242
        %s1245 = sld [smem:[#allocation9 + $0x17]]
        %v1246 = vstv %s1245
        %v1247 = vmul.f32 %v1246, %v1193
        %v1248 = vmul.f32 %v1246, %v1194
        %v1249 = vadd.f32 %v1225, %v1247
        %v1250 = vadd.f32 %v1226, %v1248
        %s1251 = sld [smem:[#allocation9 + $0x3b]]
        %v1252 = vstv %s1251
        %v1253 = vmul.f32 %v1252, %v1193
        %v1254 = vmul.f32 %v1252, %v1194
        %v1255 = vadd.f32 %v1231, %v1253
        %v1256 = vadd.f32 %v1232, %v1254
        %s1257 = sld [smem:[#allocation9 + $0x5f]]
        %v1258 = vstv %s1257
        %v1259 = vmul.f32 %v1258, %v1193
        %v1260 = vmul.f32 %v1258, %v1194
        %v1261 = vadd.f32 %v1237, %v1259
        %v1262 = vadd.f32 %v1238, %v1260
        %s1263 = sld [smem:[#allocation9 + $0x83]]
        %v1264 = vstv %s1263
        %v1265 = vmul.f32 %v1264, %v1193
        %v1266 = vmul.f32 %v1264, %v1194
        %v1267 = vadd.f32 %v1243, %v1265
        %v1268 = vadd.f32 %v1244, %v1266
        %s1269 = sld [smem:[#allocation9 + $0x20]]
        %v1270 = vstv %s1269
        %v1271 = vmul.f32 %v1270, %v1195
        %v1272 = vmul.f32 %v1270, %v1196
        %v1273 = vadd.f32 %v1249, %v1271
        %v1274 = vadd.f32 %v1250, %v1272
        %s1275 = sld [smem:[#allocation9 + $0x44]]
        %v1276 = vstv %s1275
        %v1277 = vmul.f32 %v1276, %v1195
        %v1278 = vmul.f32 %v1276, %v1196
        %v1279 = vadd.f32 %v1255, %v1277
        %v1280 = vadd.f32 %v1256, %v1278
        %s1281 = sld [smem:[#allocation9 + $0x68]]
        %v1282 = vstv %s1281
        %v1283 = vmul.f32 %v1282, %v1195
        %v1284 = vmul.f32 %v1282, %v1196
        %v1285 = vadd.f32 %v1261, %v1283
        %v1286 = vadd.f32 %v1262, %v1284
        %s1287 = sld [smem:[#allocation9 + $0x8c]]
        %v1288 = vstv %s1287
        %v1289 = vmul.f32 %v1288, %v1195
        %v1290 = vmul.f32 %v1288, %v1196
        %v1291 = vadd.f32 %v1267, %v1289
        %v1292 = vadd.f32 %v1268, %v1290
        %1293 = vrot.lane.b32.xlu0 %v467, 113
        %v1294 = vpop.permute.xlu0 %1293
        %1295 = vrot.lane.b32.xlu0 %v470, 113
        %v1296 = vpop.permute.xlu0 %1295
        %1297 = vrot.lane.b32.xlu0 %v473, 113
        %v1298 = vpop.permute.xlu0 %1297
        %1299 = vrot.lane.b32.xlu0 %v476, 113
        %v1300 = vpop.permute.xlu0 %1299
        %1301 = vrot.lane.b32.xlu0 %v468, 113
        %v1302 = vpop.permute.xlu0 %1301
        %1303 = vrot.lane.b32.xlu0 %v471, 113
        %v1304 = vpop.permute.xlu0 %1303
        %1305 = vrot.lane.b32.xlu0 %v474, 113
        %v1306 = vpop.permute.xlu0 %1305
        %1307 = vrot.lane.b32.xlu0 %v477, 113
        %v1308 = vpop.permute.xlu0 %1307
        %vm1309 = vcmp.lt.s32.totalorder %v503, 113
        %v1310 = vsel %vm1309, %v1294, %v1302
        %v1311 = vsel %vm1309, %v1296, %v1304
        %v1312 = vsel %vm1309, %v1298, %v1306
        %v1313 = vsel %vm1309, %v1300, %v1308
        %v1314 = vsel %vm1309, %v1302, %v1294
        %v1315 = vsel %vm1309, %v1304, %v1296
        %v1316 = vsel %vm1309, %v1306, %v1298
        %v1317 = vsel %vm1309, %v1308, %v1300
        %s1318 = scalar_lea.vmem [#allocation7], 6
        %v1319 = vld [vmem:[%s1318] ss:$8 sm:$0x3]
        %v1321 = vlaneseq
        %v1322 = vshrl.u32 %v1321, 7
        %v1323 = vsub.s32 0, %v1322
        %v1324 = vrot.slane %v1319, %v1323
        %v1325 = vlaneseq
        %v1326 = vshrl.u32 %v1325, 7
        %v1327 = vsub.s32 1, %v1326
        %v1328 = vrot.slane %v1319, %v1327
        %v1331 = vmul.f32 %v1310, %v1324
        %v1332 = vmul.f32 %v1314, %v1328
        %v1333 = vmul.f32 %v1311, %v1324
        %v1334 = vmul.f32 %v1315, %v1328
        %v1335 = vmul.f32 %v1312, %v1324
        %v1336 = vmul.f32 %v1316, %v1328
        %v1337 = vmul.f32 %v1313, %v1324
        %v1338 = vmul.f32 %v1317, %v1328
        %s1339 = sld [smem:[#allocation9 + $0x6]]
        %v1340 = vstv %s1339
        %v1341 = vmul.f32 %v1340, %v1331
        %v1342 = vmul.f32 %v1340, %v1332
        %v1343 = vadd.f32 %v1273, %v1341
        %v1344 = vadd.f32 %v1274, %v1342
        %s1345 = sld [smem:[#allocation9 + $0x2a]]
        %v1346 = vstv %s1345
        %v1347 = vmul.f32 %v1346, %v1331
        %v1348 = vmul.f32 %v1346, %v1332
        %v1349 = vadd.f32 %v1279, %v1347
        %v1350 = vadd.f32 %v1280, %v1348
        %s1351 = sld [smem:[#allocation9 + $0x4e]]
        %v1352 = vstv %s1351
        %v1353 = vmul.f32 %v1352, %v1331
        %v1354 = vmul.f32 %v1352, %v1332
        %v1355 = vadd.f32 %v1285, %v1353
        %v1356 = vadd.f32 %v1286, %v1354
        %s1357 = sld [smem:[#allocation9 + $0x72]]
        %v1358 = vstv %s1357
        %v1359 = vmul.f32 %v1358, %v1331
        %v1360 = vmul.f32 %v1358, %v1332
        %v1361 = vadd.f32 %v1291, %v1359
        %v1362 = vadd.f32 %v1292, %v1360
        %s1363 = sld [smem:[#allocation9 + $0xf]]
        %v1364 = vstv %s1363
        %v1365 = vmul.f32 %v1364, %v1333
        %v1366 = vmul.f32 %v1364, %v1334
        %v1367 = vadd.f32 %v1343, %v1365
        %v1368 = vadd.f32 %v1344, %v1366
        %s1369 = sld [smem:[#allocation9 + $0x33]]
        %v1370 = vstv %s1369
        %v1371 = vmul.f32 %v1370, %v1333
        %v1372 = vmul.f32 %v1370, %v1334
        %v1373 = vadd.f32 %v1349, %v1371
        %v1374 = vadd.f32 %v1350, %v1372
        %s1375 = sld [smem:[#allocation9 + $0x57]]
        %v1376 = vstv %s1375
        %v1377 = vmul.f32 %v1376, %v1333
        %v1378 = vmul.f32 %v1376, %v1334
        %v1379 = vadd.f32 %v1355, %v1377
        %v1380 = vadd.f32 %v1356, %v1378
        %s1381 = sld [smem:[#allocation9 + $0x7b]]
        %v1382 = vstv %s1381
        %v1383 = vmul.f32 %v1382, %v1333
        %v1384 = vmul.f32 %v1382, %v1334
        %v1385 = vadd.f32 %v1361, %v1383
        %v1386 = vadd.f32 %v1362, %v1384
        %s1387 = sld [smem:[#allocation9 + $0x18]]
        %v1388 = vstv %s1387
        %v1389 = vmul.f32 %v1388, %v1335
        %v1390 = vmul.f32 %v1388, %v1336
        %v1391 = vadd.f32 %v1367, %v1389
        %v1392 = vadd.f32 %v1368, %v1390
        %s1393 = sld [smem:[#allocation9 + $0x3c]]
        %v1394 = vstv %s1393
        %v1395 = vmul.f32 %v1394, %v1335
        %v1396 = vmul.f32 %v1394, %v1336
        %v1397 = vadd.f32 %v1373, %v1395
        %v1398 = vadd.f32 %v1374, %v1396
        %s1399 = sld [smem:[#allocation9 + $0x60]]
        %v1400 = vstv %s1399
        %v1401 = vmul.f32 %v1400, %v1335
        %v1402 = vmul.f32 %v1400, %v1336
        %v1403 = vadd.f32 %v1379, %v1401
        %v1404 = vadd.f32 %v1380, %v1402
        %s1405 = sld [smem:[#allocation9 + $0x84]]
        %v1406 = vstv %s1405
        %v1407 = vmul.f32 %v1406, %v1335
        %v1408 = vmul.f32 %v1406, %v1336
        %v1409 = vadd.f32 %v1385, %v1407
        %v1410 = vadd.f32 %v1386, %v1408
        %s1411 = sld [smem:[#allocation9 + $0x21]]
        %v1412 = vstv %s1411
        %v1413 = vmul.f32 %v1412, %v1337
        %v1414 = vmul.f32 %v1412, %v1338
        %v1415 = vadd.f32 %v1391, %v1413
        %v1416 = vadd.f32 %v1392, %v1414
        %s1417 = sld [smem:[#allocation9 + $0x45]]
        %v1418 = vstv %s1417
        %v1419 = vmul.f32 %v1418, %v1337
        %v1420 = vmul.f32 %v1418, %v1338
        %v1421 = vadd.f32 %v1397, %v1419
        %v1422 = vadd.f32 %v1398, %v1420
        %s1423 = sld [smem:[#allocation9 + $0x69]]
        %v1424 = vstv %s1423
        %v1425 = vmul.f32 %v1424, %v1337
        %v1426 = vmul.f32 %v1424, %v1338
        %v1427 = vadd.f32 %v1403, %v1425
        %v1428 = vadd.f32 %v1404, %v1426
        %s1429 = sld [smem:[#allocation9 + $0x8d]]
        %v1430 = vstv %s1429
        %v1431 = vmul.f32 %v1430, %v1337
        %v1432 = vmul.f32 %v1430, %v1338
        %v1433 = vadd.f32 %v1409, %v1431
        %v1434 = vadd.f32 %v1410, %v1432
        %1435 = vrot.lane.b32.xlu0 %v467, 112
        %v1436 = vpop.permute.xlu0 %1435
        %1437 = vrot.lane.b32.xlu0 %v470, 112
        %v1438 = vpop.permute.xlu0 %1437
        %1439 = vrot.lane.b32.xlu0 %v473, 112
        %v1440 = vpop.permute.xlu0 %1439
        %1441 = vrot.lane.b32.xlu0 %v476, 112
        %v1442 = vpop.permute.xlu0 %1441
        %1443 = vrot.lane.b32.xlu0 %v468, 112
        %v1444 = vpop.permute.xlu0 %1443
        %1445 = vrot.lane.b32.xlu0 %v471, 112
        %v1446 = vpop.permute.xlu0 %1445
        %1447 = vrot.lane.b32.xlu0 %v474, 112
        %v1448 = vpop.permute.xlu0 %1447
        %1449 = vrot.lane.b32.xlu0 %v477, 112
        %v1450 = vpop.permute.xlu0 %1449
        %vm1451 = vcmp.lt.s32.totalorder %v503, 112
        %v1452 = vsel %vm1451, %v1436, %v1444
        %v1453 = vsel %vm1451, %v1438, %v1446
        %v1454 = vsel %vm1451, %v1440, %v1448
        %v1455 = vsel %vm1451, %v1442, %v1450
        %v1456 = vsel %vm1451, %v1444, %v1436
        %v1457 = vsel %vm1451, %v1446, %v1438
        %v1458 = vsel %vm1451, %v1448, %v1440
        %v1459 = vsel %vm1451, %v1450, %v1442
        %s1460 = scalar_lea.vmem [#allocation7], 7
        %v1461 = vld [vmem:[%s1460] ss:$8 sm:$0x3]
        %v1463 = vlaneseq
        %v1464 = vshrl.u32 %v1463, 7
        %v1465 = vsub.s32 0, %v1464
        %v1466 = vrot.slane %v1461, %v1465
        %v1467 = vlaneseq
        %v1468 = vshrl.u32 %v1467, 7
        %v1469 = vsub.s32 1, %v1468
        %v1470 = vrot.slane %v1461, %v1469
        %v1473 = vmul.f32 %v1452, %v1466
        %v1474 = vmul.f32 %v1456, %v1470
        %v1475 = vmul.f32 %v1453, %v1466
        %v1476 = vmul.f32 %v1457, %v1470
        %v1477 = vmul.f32 %v1454, %v1466
        %v1478 = vmul.f32 %v1458, %v1470
        %v1479 = vmul.f32 %v1455, %v1466
        %v1480 = vmul.f32 %v1459, %v1470
        %s1481 = sld [smem:[#allocation9 + $0x7]]
        %v1482 = vstv %s1481
        %v1483 = vmul.f32 %v1482, %v1473
        %v1484 = vmul.f32 %v1482, %v1474
        %v1485 = vadd.f32 %v1415, %v1483
        %v1486 = vadd.f32 %v1416, %v1484
        %s1487 = sld [smem:[#allocation9 + $0x2b]]
        %v1488 = vstv %s1487
        %v1489 = vmul.f32 %v1488, %v1473
        %v1490 = vmul.f32 %v1488, %v1474
        %v1491 = vadd.f32 %v1421, %v1489
        %v1492 = vadd.f32 %v1422, %v1490
        %s1493 = sld [smem:[#allocation9 + $0x4f]]
        %v1494 = vstv %s1493
        %v1495 = vmul.f32 %v1494, %v1473
        %v1496 = vmul.f32 %v1494, %v1474
        %v1497 = vadd.f32 %v1427, %v1495
        %v1498 = vadd.f32 %v1428, %v1496
        %s1499 = sld [smem:[#allocation9 + $0x73]]
        %v1500 = vstv %s1499
        %v1501 = vmul.f32 %v1500, %v1473
        %v1502 = vmul.f32 %v1500, %v1474
        %v1503 = vadd.f32 %v1433, %v1501
        %v1504 = vadd.f32 %v1434, %v1502
        %s1505 = sld [smem:[#allocation9 + $0x10]]
        %v1506 = vstv %s1505
        %v1507 = vmul.f32 %v1506, %v1475
        %v1508 = vmul.f32 %v1506, %v1476
        %v1509 = vadd.f32 %v1485, %v1507
        %v1510 = vadd.f32 %v1486, %v1508
        %s1511 = sld [smem:[#allocation9 + $0x34]]
        %v1512 = vstv %s1511
        %v1513 = vmul.f32 %v1512, %v1475
        %v1514 = vmul.f32 %v1512, %v1476
        %v1515 = vadd.f32 %v1491, %v1513
        %v1516 = vadd.f32 %v1492, %v1514
        %s1517 = sld [smem:[#allocation9 + $0x58]]
        %v1518 = vstv %s1517
        %v1519 = vmul.f32 %v1518, %v1475
        %v1520 = vmul.f32 %v1518, %v1476
        %v1521 = vadd.f32 %v1497, %v1519
        %v1522 = vadd.f32 %v1498, %v1520
        %s1523 = sld [smem:[#allocation9 + $0x7c]]
        %v1524 = vstv %s1523
        %v1525 = vmul.f32 %v1524, %v1475
        %v1526 = vmul.f32 %v1524, %v1476
        %v1527 = vadd.f32 %v1503, %v1525
        %v1528 = vadd.f32 %v1504, %v1526
        %s1529 = sld [smem:[#allocation9 + $0x19]]
        %v1530 = vstv %s1529
        %v1531 = vmul.f32 %v1530, %v1477
        %v1532 = vmul.f32 %v1530, %v1478
        %v1533 = vadd.f32 %v1509, %v1531
        %v1534 = vadd.f32 %v1510, %v1532
        %s1535 = sld [smem:[#allocation9 + $0x3d]]
        %v1536 = vstv %s1535
        %v1537 = vmul.f32 %v1536, %v1477
        %v1538 = vmul.f32 %v1536, %v1478
        %v1539 = vadd.f32 %v1515, %v1537
        %v1540 = vadd.f32 %v1516, %v1538
        %s1541 = sld [smem:[#allocation9 + $0x61]]
        %v1542 = vstv %s1541
        %v1543 = vmul.f32 %v1542, %v1477
        %v1544 = vmul.f32 %v1542, %v1478
        %v1545 = vadd.f32 %v1521, %v1543
        %v1546 = vadd.f32 %v1522, %v1544
        %s1547 = sld [smem:[#allocation9 + $0x85]]
        %v1548 = vstv %s1547
        %v1549 = vmul.f32 %v1548, %v1477
        %v1550 = vmul.f32 %v1548, %v1478
        %v1551 = vadd.f32 %v1527, %v1549
        %v1552 = vadd.f32 %v1528, %v1550
        %s1553 = sld [smem:[#allocation9 + $0x22]]
        %v1554 = vstv %s1553
        %v1555 = vmul.f32 %v1554, %v1479
        %v1556 = vmul.f32 %v1554, %v1480
        %v1557 = vadd.f32 %v1533, %v1555
        %v1558 = vadd.f32 %v1534, %v1556
        %s1559 = sld [smem:[#allocation9 + $0x46]]
        %v1560 = vstv %s1559
        %v1561 = vmul.f32 %v1560, %v1479
        %v1562 = vmul.f32 %v1560, %v1480
        %v1563 = vadd.f32 %v1539, %v1561
        %v1564 = vadd.f32 %v1540, %v1562
        %s1565 = sld [smem:[#allocation9 + $0x6a]]
        %v1566 = vstv %s1565
        %v1567 = vmul.f32 %v1566, %v1479
        %v1568 = vmul.f32 %v1566, %v1480
        %v1569 = vadd.f32 %v1545, %v1567
        %v1570 = vadd.f32 %v1546, %v1568
        %s1571 = sld [smem:[#allocation9 + $0x8e]]
        %v1572 = vstv %s1571
        %v1573 = vmul.f32 %v1572, %v1479
        %v1574 = vmul.f32 %v1572, %v1480
        %v1575 = vadd.f32 %v1551, %v1573
        %v1576 = vadd.f32 %v1552, %v1574
        %1577 = vrot.lane.b32.xlu0 %v467, 111
        %v1578 = vpop.permute.xlu0 %1577
        %1579 = vrot.lane.b32.xlu0 %v470, 111
        %v1580 = vpop.permute.xlu0 %1579
        %1581 = vrot.lane.b32.xlu0 %v473, 111
        %v1582 = vpop.permute.xlu0 %1581
        %1583 = vrot.lane.b32.xlu0 %v476, 111
        %v1584 = vpop.permute.xlu0 %1583
        %1585 = vrot.lane.b32.xlu0 %v468, 111
        %v1586 = vpop.permute.xlu0 %1585
        %1587 = vrot.lane.b32.xlu0 %v471, 111
        %v1588 = vpop.permute.xlu0 %1587
        %1589 = vrot.lane.b32.xlu0 %v474, 111
        %v1590 = vpop.permute.xlu0 %1589
        %1591 = vrot.lane.b32.xlu0 %v477, 111
        %v1592 = vpop.permute.xlu0 %1591
        %vm1593 = vcmp.lt.s32.totalorder %v503, 111
        %v1594 = vsel %vm1593, %v1578, %v1586
        %v1595 = vsel %vm1593, %v1580, %v1588
        %v1596 = vsel %vm1593, %v1582, %v1590
        %v1597 = vsel %vm1593, %v1584, %v1592
        %v1598 = vsel %vm1593, %v1586, %v1578
        %v1599 = vsel %vm1593, %v1588, %v1580
        %v1600 = vsel %vm1593, %v1590, %v1582
        %v1601 = vsel %vm1593, %v1592, %v1584
        %s1602 = scalar_lea.vmem [#allocation7], 16
        %v1603 = vld [vmem:[%s1602] ss:$8 sm:$0x3]
        %v1605 = vlaneseq
        %v1606 = vshrl.u32 %v1605, 7
        %v1607 = vsub.s32 0, %v1606
        %v1608 = vrot.slane %v1603, %v1607
        %v1609 = vlaneseq
        %v1610 = vshrl.u32 %v1609, 7
        %v1611 = vsub.s32 1, %v1610
        %v1612 = vrot.slane %v1603, %v1611
        %v1615 = vmul.f32 %v1594, %v1608
        %v1616 = vmul.f32 %v1598, %v1612
        %v1617 = vmul.f32 %v1595, %v1608
        %v1618 = vmul.f32 %v1599, %v1612
        %v1619 = vmul.f32 %v1596, %v1608
        %v1620 = vmul.f32 %v1600, %v1612
        %v1621 = vmul.f32 %v1597, %v1608
        %v1622 = vmul.f32 %v1601, %v1612
        %s1623 = sld [smem:[#allocation9 + $0x8]]
        %v1624 = vstv %s1623
        %v1625 = vmul.f32 %v1624, %v1615
        %v1626 = vmul.f32 %v1624, %v1616
        %v1627 = vadd.f32 %v1557, %v1625
        %v1628 = vadd.f32 %v1558, %v1626
        %s1629 = sld [smem:[#allocation9 + $0x2c]]
        %v1630 = vstv %s1629
        %v1631 = vmul.f32 %v1630, %v1615
        %v1632 = vmul.f32 %v1630, %v1616
        %v1633 = vadd.f32 %v1563, %v1631
        %v1634 = vadd.f32 %v1564, %v1632
        %s1635 = sld [smem:[#allocation9 + $0x50]]
        %v1636 = vstv %s1635
        %v1637 = vmul.f32 %v1636, %v1615
        %v1638 = vmul.f32 %v1636, %v1616
        %v1639 = vadd.f32 %v1569, %v1637
        %v1640 = vadd.f32 %v1570, %v1638
        %s1641 = sld [smem:[#allocation9 + $0x74]]
        %v1642 = vstv %s1641
        %v1643 = vmul.f32 %v1642, %v1615
        %v1644 = vmul.f32 %v1642, %v1616
        %v1645 = vadd.f32 %v1575, %v1643
        %v1646 = vadd.f32 %v1576, %v1644
        %s1647 = sld [smem:[#allocation9 + $0x11]]
        %v1648 = vstv %s1647
        %v1649 = vmul.f32 %v1648, %v1617
        %v1650 = vmul.f32 %v1648, %v1618
        %v1651 = vadd.f32 %v1627, %v1649
        %v1652 = vadd.f32 %v1628, %v1650
        %s1653 = sld [smem:[#allocation9 + $0x35]]
        %v1654 = vstv %s1653
        %v1655 = vmul.f32 %v1654, %v1617
        %v1656 = vmul.f32 %v1654, %v1618
        %v1657 = vadd.f32 %v1633, %v1655
        %v1658 = vadd.f32 %v1634, %v1656
        %s1659 = sld [smem:[#allocation9 + $0x59]]
        %v1660 = vstv %s1659
        %v1661 = vmul.f32 %v1660, %v1617
        %v1662 = vmul.f32 %v1660, %v1618
        %v1663 = vadd.f32 %v1639, %v1661
        %v1664 = vadd.f32 %v1640, %v1662
        %s1665 = sld [smem:[#allocation9 + $0x7d]]
        %v1666 = vstv %s1665
        %v1667 = vmul.f32 %v1666, %v1617
        %v1668 = vmul.f32 %v1666, %v1618
        %v1669 = vadd.f32 %v1645, %v1667
        %v1670 = vadd.f32 %v1646, %v1668
        %s1671 = sld [smem:[#allocation9 + $0x1a]]
        %v1672 = vstv %s1671
        %v1673 = vmul.f32 %v1672, %v1619
        %v1674 = vmul.f32 %v1672, %v1620
        %v1675 = vadd.f32 %v1651, %v1673
        %v1676 = vadd.f32 %v1652, %v1674
        %s1677 = sld [smem:[#allocation9 + $0x3e]]
        %v1678 = vstv %s1677
        %v1679 = vmul.f32 %v1678, %v1619
        %v1680 = vmul.f32 %v1678, %v1620
        %v1681 = vadd.f32 %v1657, %v1679
        %v1682 = vadd.f32 %v1658, %v1680
        %s1683 = sld [smem:[#allocation9 + $0x62]]
        %v1684 = vstv %s1683
        %v1685 = vmul.f32 %v1684, %v1619
        %v1686 = vmul.f32 %v1684, %v1620
        %v1687 = vadd.f32 %v1663, %v1685
        %v1688 = vadd.f32 %v1664, %v1686
        %s1689 = sld [smem:[#allocation9 + $0x86]]
        %v1690 = vstv %s1689
        %v1691 = vmul.f32 %v1690, %v1619
        %v1692 = vmul.f32 %v1690, %v1620
        %v1693 = vadd.f32 %v1669, %v1691
        %v1694 = vadd.f32 %v1670, %v1692
        %s1695 = sld [smem:[#allocation9 + $0x23]]
        %v1696 = vstv %s1695
        %v1697 = vmul.f32 %v1696, %v1621
        %v1698 = vmul.f32 %v1696, %v1622
        %v1699 = vadd.f32 %v1675, %v1697
        %v1700 = vadd.f32 %v1676, %v1698
        %s1701 = sld [smem:[#allocation9 + $0x47]]
        %v1702 = vstv %s1701
        %v1703 = vmul.f32 %v1702, %v1621
        %v1704 = vmul.f32 %v1702, %v1622
        %v1705 = vadd.f32 %v1681, %v1703
        %v1706 = vadd.f32 %v1682, %v1704
        %s1707 = sld [smem:[#allocation9 + $0x6b]]
        %v1708 = vstv %s1707
        %v1709 = vmul.f32 %v1708, %v1621
        %v1710 = vmul.f32 %v1708, %v1622
        %v1711 = vadd.f32 %v1687, %v1709
        %v1712 = vadd.f32 %v1688, %v1710
        %s1713 = sld [smem:[#allocation9 + $0x8f]]
        %v1714 = vstv %s1713
        %v1715 = vmul.f32 %v1714, %v1621
        %v1716 = vmul.f32 %v1714, %v1622
        %v1717 = vadd.f32 %v1693, %v1715
        %v1718 = vadd.f32 %v1694, %v1716
        %s1719 = sld [smem:[#allocation13]]
        %v1720 = vstv %s1719
        %s1721 = sld [smem:[#allocation13 + $0x1]]
        %v1722 = vstv %s1721
        %s1723 = sld [smem:[#allocation13 + $0x2]]
        %v1724 = vstv %s1723
        %s1725 = sld [smem:[#allocation13 + $0x3]]
        %v1726 = vstv %s1725
        %1727 = vrot.lane.b32.xlu0 %v1699, 17
        %v1728 = vpop.permute.xlu0 %1727
        %1729 = vrot.lane.b32.xlu0 %v1705, 17
        %v1730 = vpop.permute.xlu0 %1729
        %1731 = vrot.lane.b32.xlu0 %v1711, 17
        %v1732 = vpop.permute.xlu0 %1731
        %1733 = vrot.lane.b32.xlu0 %v1717, 17
        %v1734 = vpop.permute.xlu0 %1733
        %1735 = vrot.lane.b32.xlu0 %v1700, 17
        %v1736 = vpop.permute.xlu0 %1735
        %1737 = vrot.lane.b32.xlu0 %v1706, 17
        %v1738 = vpop.permute.xlu0 %1737
        %1739 = vrot.lane.b32.xlu0 %v1712, 17
        %v1740 = vpop.permute.xlu0 %1739
        %1741 = vrot.lane.b32.xlu0 %v1718, 17
        %v1742 = vpop.permute.xlu0 %1741
        %v1743 = vsel %vm504, %v1728, %v1736
        %v1744 = vsel %vm504, %v1730, %v1738
        %v1745 = vsel %vm504, %v1732, %v1740
        %v1746 = vsel %vm504, %v1734, %v1742
        %v1747 = vsel %vm504, %v1736, %v1728
        %v1748 = vsel %vm504, %v1738, %v1730
        %v1749 = vsel %vm504, %v1740, %v1732
        %v1750 = vsel %vm504, %v1742, %v1734
        %v1751 = vmul.f32 %v1747, %v518
        %v1752 = vmul.f32 %v1743, %v522
        %v1753 = vmul.f32 %v1748, %v518
        %v1754 = vmul.f32 %v1744, %v522
        %v1755 = vmul.f32 %v1749, %v518
        %v1756 = vmul.f32 %v1745, %v522
        %v1757 = vmul.f32 %v1750, %v518
        %v1758 = vmul.f32 %v1746, %v522
        %s1759 = sld [smem:[#allocation11]]
        %v1760 = vstv %s1759
        %v1761 = vmul.f32 %v1760, %v1751
        %v1762 = vmul.f32 %v1760, %v1752
        %v1763 = vadd.f32 %v1720, %v1761
        %v1764 = vadd.f32 %v1720, %v1762
        %s1765 = sld [smem:[#allocation11 + $0x24]]
        %v1766 = vstv %s1765
        %v1767 = vmul.f32 %v1766, %v1751
        %v1768 = vmul.f32 %v1766, %v1752
        %v1769 = vadd.f32 %v1722, %v1767
        %v1770 = vadd.f32 %v1722, %v1768
        %s1771 = sld [smem:[#allocation11 + $0x48]]
        %v1772 = vstv %s1771
        %v1773 = vmul.f32 %v1772, %v1751
        %v1774 = vmul.f32 %v1772, %v1752
        %v1775 = vadd.f32 %v1724, %v1773
        %v1776 = vadd.f32 %v1724, %v1774
        %s1777 = sld [smem:[#allocation11 + $0x6c]]
        %v1778 = vstv %s1777
        %v1779 = vmul.f32 %v1778, %v1751
        %v1780 = vmul.f32 %v1778, %v1752
        %v1781 = vadd.f32 %v1726, %v1779
        %v1782 = vadd.f32 %v1726, %v1780
        %s1783 = sld [smem:[#allocation11 + $0x9]]
        %v1784 = vstv %s1783
        %v1785 = vmul.f32 %v1784, %v1753
        %v1786 = vmul.f32 %v1784, %v1754
        %v1787 = vadd.f32 %v1763, %v1785
        %v1788 = vadd.f32 %v1764, %v1786
        %s1789 = sld [smem:[#allocation11 + $0x2d]]
        %v1790 = vstv %s1789
        %v1791 = vmul.f32 %v1790, %v1753
        %v1792 = vmul.f32 %v1790, %v1754
        %v1793 = vadd.f32 %v1769, %v1791
        %v1794 = vadd.f32 %v1770, %v1792
        %s1795 = sld [smem:[#allocation11 + $0x51]]
        %v1796 = vstv %s1795
        %v1797 = vmul.f32 %v1796, %v1753
        %v1798 = vmul.f32 %v1796, %v1754
        %v1799 = vadd.f32 %v1775, %v1797
        %v1800 = vadd.f32 %v1776, %v1798
        %s1801 = sld [smem:[#allocation11 + $0x75]]
        %v1802 = vstv %s1801
        %v1803 = vmul.f32 %v1802, %v1753
        %v1804 = vmul.f32 %v1802, %v1754
        %v1805 = vadd.f32 %v1781, %v1803
        %v1806 = vadd.f32 %v1782, %v1804
        %s1807 = sld [smem:[#allocation11 + $0x12]]
        %v1808 = vstv %s1807
        %v1809 = vmul.f32 %v1808, %v1755
        %v1810 = vmul.f32 %v1808, %v1756
        %v1811 = vadd.f32 %v1787, %v1809
        %v1812 = vadd.f32 %v1788, %v1810
        %s1813 = sld [smem:[#allocation11 + $0x36]]
        %v1814 = vstv %s1813
        %v1815 = vmul.f32 %v1814, %v1755
        %v1816 = vmul.f32 %v1814, %v1756
        %v1817 = vadd.f32 %v1793, %v1815
        %v1818 = vadd.f32 %v1794, %v1816
        %s1819 = sld [smem:[#allocation11 + $0x5a]]
        %v1820 = vstv %s1819
        %v1821 = vmul.f32 %v1820, %v1755
        %v1822 = vmul.f32 %v1820, %v1756
        %v1823 = vadd.f32 %v1799, %v1821
        %v1824 = vadd.f32 %v1800, %v1822
        %s1825 = sld [smem:[#allocation11 + $0x7e]]
        %v1826 = vstv %s1825
        %v1827 = vmul.f32 %v1826, %v1755
        %v1828 = vmul.f32 %v1826, %v1756
        %v1829 = vadd.f32 %v1805, %v1827
        %v1830 = vadd.f32 %v1806, %v1828
        %s1831 = sld [smem:[#allocation11 + $0x1b]]
        %v1832 = vstv %s1831
        %v1833 = vmul.f32 %v1832, %v1757
        %v1834 = vmul.f32 %v1832, %v1758
        %v1835 = vadd.f32 %v1811, %v1833
        %v1836 = vadd.f32 %v1812, %v1834
        %s1837 = sld [smem:[#allocation11 + $0x3f]]
        %v1838 = vstv %s1837
        %v1839 = vmul.f32 %v1838, %v1757
        %v1840 = vmul.f32 %v1838, %v1758
        %v1841 = vadd.f32 %v1817, %v1839
        %v1842 = vadd.f32 %v1818, %v1840
        %s1843 = sld [smem:[#allocation11 + $0x63]]
        %v1844 = vstv %s1843
        %v1845 = vmul.f32 %v1844, %v1757
        %v1846 = vmul.f32 %v1844, %v1758
        %v1847 = vadd.f32 %v1823, %v1845
        %v1848 = vadd.f32 %v1824, %v1846
        %s1849 = sld [smem:[#allocation11 + $0x87]]
        %v1850 = vstv %s1849
        %v1851 = vmul.f32 %v1850, %v1757
        %v1852 = vmul.f32 %v1850, %v1758
        %v1853 = vadd.f32 %v1829, %v1851
        %v1854 = vadd.f32 %v1830, %v1852
        %1855 = vrot.lane.b32.xlu0 %v1699, 16
        %v1856 = vpop.permute.xlu0 %1855
        %1857 = vrot.lane.b32.xlu0 %v1705, 16
        %v1858 = vpop.permute.xlu0 %1857
        %1859 = vrot.lane.b32.xlu0 %v1711, 16
        %v1860 = vpop.permute.xlu0 %1859
        %1861 = vrot.lane.b32.xlu0 %v1717, 16
        %v1862 = vpop.permute.xlu0 %1861
        %1863 = vrot.lane.b32.xlu0 %v1700, 16
        %v1864 = vpop.permute.xlu0 %1863
        %1865 = vrot.lane.b32.xlu0 %v1706, 16
        %v1866 = vpop.permute.xlu0 %1865
        %1867 = vrot.lane.b32.xlu0 %v1712, 16
        %v1868 = vpop.permute.xlu0 %1867
        %1869 = vrot.lane.b32.xlu0 %v1718, 16
        %v1870 = vpop.permute.xlu0 %1869
        %v1871 = vsel %vm645, %v1856, %v1864
        %v1872 = vsel %vm645, %v1858, %v1866
        %v1873 = vsel %vm645, %v1860, %v1868
        %v1874 = vsel %vm645, %v1862, %v1870
        %v1875 = vsel %vm645, %v1864, %v1856
        %v1876 = vsel %vm645, %v1866, %v1858
        %v1877 = vsel %vm645, %v1868, %v1860
        %v1878 = vsel %vm645, %v1870, %v1862
        %v1879 = vmul.f32 %v1875, %v660
        %v1880 = vmul.f32 %v1871, %v664
        %v1881 = vmul.f32 %v1876, %v660
        %v1882 = vmul.f32 %v1872, %v664
        %v1883 = vmul.f32 %v1877, %v660
        %v1884 = vmul.f32 %v1873, %v664
        %v1885 = vmul.f32 %v1878, %v660
        %v1886 = vmul.f32 %v1874, %v664
        %s1887 = sld [smem:[#allocation11 + $0x1]]
        %v1888 = vstv %s1887
        %v1889 = vmul.f32 %v1888, %v1879
        %v1890 = vmul.f32 %v1888, %v1880
        %v1891 = vadd.f32 %v1835, %v1889
        %v1892 = vadd.f32 %v1836, %v1890
        %s1893 = sld [smem:[#allocation11 + $0x25]]
        %v1894 = vstv %s1893
        %v1895 = vmul.f32 %v1894, %v1879
        %v1896 = vmul.f32 %v1894, %v1880
        %v1897 = vadd.f32 %v1841, %v1895
        %v1898 = vadd.f32 %v1842, %v1896
        %s1899 = sld [smem:[#allocation11 + $0x49]]
        %v1900 = vstv %s1899
        %v1901 = vmul.f32 %v1900, %v1879
        %v1902 = vmul.f32 %v1900, %v1880
        %v1903 = vadd.f32 %v1847, %v1901
        %v1904 = vadd.f32 %v1848, %v1902
        %s1905 = sld [smem:[#allocation11 + $0x6d]]
        %v1906 = vstv %s1905
        %v1907 = vmul.f32 %v1906, %v1879
        %v1908 = vmul.f32 %v1906, %v1880
        %v1909 = vadd.f32 %v1853, %v1907
        %v1910 = vadd.f32 %v1854, %v1908
        %s1911 = sld [smem:[#allocation11 + $0xa]]
        %v1912 = vstv %s1911
        %v1913 = vmul.f32 %v1912, %v1881
        %v1914 = vmul.f32 %v1912, %v1882
        %v1915 = vadd.f32 %v1891, %v1913
        %v1916 = vadd.f32 %v1892, %v1914
        %s1917 = sld [smem:[#allocation11 + $0x2e]]
        %v1918 = vstv %s1917
        %v1919 = vmul.f32 %v1918, %v1881
        %v1920 = vmul.f32 %v1918, %v1882
        %v1921 = vadd.f32 %v1897, %v1919
        %v1922 = vadd.f32 %v1898, %v1920
        %s1923 = sld [smem:[#allocation11 + $0x52]]
        %v1924 = vstv %s1923
        %v1925 = vmul.f32 %v1924, %v1881
        %v1926 = vmul.f32 %v1924, %v1882
        %v1927 = vadd.f32 %v1903, %v1925
        %v1928 = vadd.f32 %v1904, %v1926
        %s1929 = sld [smem:[#allocation11 + $0x76]]
        %v1930 = vstv %s1929
        %v1931 = vmul.f32 %v1930, %v1881
        %v1932 = vmul.f32 %v1930, %v1882
        %v1933 = vadd.f32 %v1909, %v1931
        %v1934 = vadd.f32 %v1910, %v1932
        %s1935 = sld [smem:[#allocation11 + $0x13]]
        %v1936 = vstv %s1935
        %v1937 = vmul.f32 %v1936, %v1883
        %v1938 = vmul.f32 %v1936, %v1884
        %v1939 = vadd.f32 %v1915, %v1937
        %v1940 = vadd.f32 %v1916, %v1938
        %s1941 = sld [smem:[#allocation11 + $0x37]]
        %v1942 = vstv %s1941
        %v1943 = vmul.f32 %v1942, %v1883
        %v1944 = vmul.f32 %v1942, %v1884
        %v1945 = vadd.f32 %v1921, %v1943
        %v1946 = vadd.f32 %v1922, %v1944
        %s1947 = sld [smem:[#allocation11 + $0x5b]]
        %v1948 = vstv %s1947
        %v1949 = vmul.f32 %v1948, %v1883
        %v1950 = vmul.f32 %v1948, %v1884
        %v1951 = vadd.f32 %v1927, %v1949
        %v1952 = vadd.f32 %v1928, %v1950
        %s1953 = sld [smem:[#allocation11 + $0x7f]]
        %v1954 = vstv %s1953
        %v1955 = vmul.f32 %v1954, %v1883
        %v1956 = vmul.f32 %v1954, %v1884
        %v1957 = vadd.f32 %v1933, %v1955
        %v1958 = vadd.f32 %v1934, %v1956
        %s1959 = sld [smem:[#allocation11 + $0x1c]]
        %v1960 = vstv %s1959
        %v1961 = vmul.f32 %v1960, %v1885
        %v1962 = vmul.f32 %v1960, %v1886
        %v1963 = vadd.f32 %v1939, %v1961
        %v1964 = vadd.f32 %v1940, %v1962
        %s1965 = sld [smem:[#allocation11 + $0x40]]
        %v1966 = vstv %s1965
        %v1967 = vmul.f32 %v1966, %v1885
        %v1968 = vmul.f32 %v1966, %v1886
        %v1969 = vadd.f32 %v1945, %v1967
        %v1970 = vadd.f32 %v1946, %v1968
        %s1971 = sld [smem:[#allocation11 + $0x64]]
        %v1972 = vstv %s1971
        %v1973 = vmul.f32 %v1972, %v1885
        %v1974 = vmul.f32 %v1972, %v1886
        %v1975 = vadd.f32 %v1951, %v1973
        %v1976 = vadd.f32 %v1952, %v1974
        %s1977 = sld [smem:[#allocation11 + $0x88]]
        %v1978 = vstv %s1977
        %v1979 = vmul.f32 %v1978, %v1885
        %v1980 = vmul.f32 %v1978, %v1886
        %v1981 = vadd.f32 %v1957, %v1979
        %v1982 = vadd.f32 %v1958, %v1980
        %1983 = vrot.lane.b32.xlu0 %v1699, 15
        %v1984 = vpop.permute.xlu0 %1983
        %1985 = vrot.lane.b32.xlu0 %v1705, 15
        %v1986 = vpop.permute.xlu0 %1985
        %1987 = vrot.lane.b32.xlu0 %v1711, 15
        %v1988 = vpop.permute.xlu0 %1987
        %1989 = vrot.lane.b32.xlu0 %v1717, 15
        %v1990 = vpop.permute.xlu0 %1989
        %1991 = vrot.lane.b32.xlu0 %v1700, 15
        %v1992 = vpop.permute.xlu0 %1991
        %1993 = vrot.lane.b32.xlu0 %v1706, 15
        %v1994 = vpop.permute.xlu0 %1993
        %1995 = vrot.lane.b32.xlu0 %v1712, 15
        %v1996 = vpop.permute.xlu0 %1995
        %1997 = vrot.lane.b32.xlu0 %v1718, 15
        %v1998 = vpop.permute.xlu0 %1997
        %v1999 = vsel %vm787, %v1984, %v1992
        %v2000 = vsel %vm787, %v1986, %v1994
        %v2001 = vsel %vm787, %v1988, %v1996
        %v2002 = vsel %vm787, %v1990, %v1998
        %v2003 = vsel %vm787, %v1992, %v1984
        %v2004 = vsel %vm787, %v1994, %v1986
        %v2005 = vsel %vm787, %v1996, %v1988
        %v2006 = vsel %vm787, %v1998, %v1990
        %v2007 = vmul.f32 %v2003, %v802
        %v2008 = vmul.f32 %v1999, %v806
        %v2009 = vmul.f32 %v2004, %v802
        %v2010 = vmul.f32 %v2000, %v806
        %v2011 = vmul.f32 %v2005, %v802
        %v2012 = vmul.f32 %v2001, %v806
        %v2013 = vmul.f32 %v2006, %v802
        %v2014 = vmul.f32 %v2002, %v806
        %s2015 = sld [smem:[#allocation11 + $0x2]]
        %v2016 = vstv %s2015
        %v2017 = vmul.f32 %v2016, %v2007
        %v2018 = vmul.f32 %v2016, %v2008
        %v2019 = vadd.f32 %v1963, %v2017
        %v2020 = vadd.f32 %v1964, %v2018
        %s2021 = sld [smem:[#allocation11 + $0x26]]
        %v2022 = vstv %s2021
        %v2023 = vmul.f32 %v2022, %v2007
        %v2024 = vmul.f32 %v2022, %v2008
        %v2025 = vadd.f32 %v1969, %v2023
        %v2026 = vadd.f32 %v1970, %v2024
        %s2027 = sld [smem:[#allocation11 + $0x4a]]
        %v2028 = vstv %s2027
        %v2029 = vmul.f32 %v2028, %v2007
        %v2030 = vmul.f32 %v2028, %v2008
        %v2031 = vadd.f32 %v1975, %v2029
        %v2032 = vadd.f32 %v1976, %v2030
        %s2033 = sld [smem:[#allocation11 + $0x6e]]
        %v2034 = vstv %s2033
        %v2035 = vmul.f32 %v2034, %v2007
        %v2036 = vmul.f32 %v2034, %v2008
        %v2037 = vadd.f32 %v1981, %v2035
        %v2038 = vadd.f32 %v1982, %v2036
        %s2039 = sld [smem:[#allocation11 + $0xb]]
        %v2040 = vstv %s2039
        %v2041 = vmul.f32 %v2040, %v2009
        %v2042 = vmul.f32 %v2040, %v2010
        %v2043 = vadd.f32 %v2019, %v2041
        %v2044 = vadd.f32 %v2020, %v2042
        %s2045 = sld [smem:[#allocation11 + $0x2f]]
        %v2046 = vstv %s2045
        %v2047 = vmul.f32 %v2046, %v2009
        %v2048 = vmul.f32 %v2046, %v2010
        %v2049 = vadd.f32 %v2025, %v2047
        %v2050 = vadd.f32 %v2026, %v2048
        %s2051 = sld [smem:[#allocation11 + $0x53]]
        %v2052 = vstv %s2051
        %v2053 = vmul.f32 %v2052, %v2009
        %v2054 = vmul.f32 %v2052, %v2010
        %v2055 = vadd.f32 %v2031, %v2053
        %v2056 = vadd.f32 %v2032, %v2054
        %s2057 = sld [smem:[#allocation11 + $0x77]]
        %v2058 = vstv %s2057
        %v2059 = vmul.f32 %v2058, %v2009
        %v2060 = vmul.f32 %v2058, %v2010
        %v2061 = vadd.f32 %v2037, %v2059
        %v2062 = vadd.f32 %v2038, %v2060
        %s2063 = sld [smem:[#allocation11 + $0x14]]
        %v2064 = vstv %s2063
        %v2065 = vmul.f32 %v2064, %v2011
        %v2066 = vmul.f32 %v2064, %v2012
        %v2067 = vadd.f32 %v2043, %v2065
        %v2068 = vadd.f32 %v2044, %v2066
        %s2069 = sld [smem:[#allocation11 + $0x38]]
        %v2070 = vstv %s2069
        %v2071 = vmul.f32 %v2070, %v2011
        %v2072 = vmul.f32 %v2070, %v2012
        %v2073 = vadd.f32 %v2049, %v2071
        %v2074 = vadd.f32 %v2050, %v2072
        %s2075 = sld [smem:[#allocation11 + $0x5c]]
        %v2076 = vstv %s2075
        %v2077 = vmul.f32 %v2076, %v2011
        %v2078 = vmul.f32 %v2076, %v2012
        %v2079 = vadd.f32 %v2055, %v2077
        %v2080 = vadd.f32 %v2056, %v2078
        %s2081 = sld [smem:[#allocation11 + $0x80]]
        %v2082 = vstv %s2081
        %v2083 = vmul.f32 %v2082, %v2011
        %v2084 = vmul.f32 %v2082, %v2012
        %v2085 = vadd.f32 %v2061, %v2083
        %v2086 = vadd.f32 %v2062, %v2084
        %s2087 = sld [smem:[#allocation11 + $0x1d]]
        %v2088 = vstv %s2087
        %v2089 = vmul.f32 %v2088, %v2013
        %v2090 = vmul.f32 %v2088, %v2014
        %v2091 = vadd.f32 %v2067, %v2089
        %v2092 = vadd.f32 %v2068, %v2090
        %s2093 = sld [smem:[#allocation11 + $0x41]]
        %v2094 = vstv %s2093
        %v2095 = vmul.f32 %v2094, %v2013
        %v2096 = vmul.f32 %v2094, %v2014
        %v2097 = vadd.f32 %v2073, %v2095
        %v2098 = vadd.f32 %v2074, %v2096
        %s2099 = sld [smem:[#allocation11 + $0x65]]
        %v2100 = vstv %s2099
        %v2101 = vmul.f32 %v2100, %v2013
        %v2102 = vmul.f32 %v2100, %v2014
        %v2103 = vadd.f32 %v2079, %v2101
        %v2104 = vadd.f32 %v2080, %v2102
        %s2105 = sld [smem:[#allocation11 + $0x89]]
        %v2106 = vstv %s2105
        %v2107 = vmul.f32 %v2106, %v2013
        %v2108 = vmul.f32 %v2106, %v2014
        %v2109 = vadd.f32 %v2085, %v2107
        %v2110 = vadd.f32 %v2086, %v2108
        %2111 = vrot.lane.b32.xlu0 %v1699, 1
        %v2112 = vpop.permute.xlu0 %2111
        %2113 = vrot.lane.b32.xlu0 %v1705, 1
        %v2114 = vpop.permute.xlu0 %2113
        %2115 = vrot.lane.b32.xlu0 %v1711, 1
        %v2116 = vpop.permute.xlu0 %2115
        %2117 = vrot.lane.b32.xlu0 %v1717, 1
        %v2118 = vpop.permute.xlu0 %2117
        %2119 = vrot.lane.b32.xlu0 %v1700, 1
        %v2120 = vpop.permute.xlu0 %2119
        %2121 = vrot.lane.b32.xlu0 %v1706, 1
        %v2122 = vpop.permute.xlu0 %2121
        %2123 = vrot.lane.b32.xlu0 %v1712, 1
        %v2124 = vpop.permute.xlu0 %2123
        %2125 = vrot.lane.b32.xlu0 %v1718, 1
        %v2126 = vpop.permute.xlu0 %2125
        %v2127 = vsel %vm929, %v2112, %v2120
        %v2128 = vsel %vm929, %v2114, %v2122
        %v2129 = vsel %vm929, %v2116, %v2124
        %v2130 = vsel %vm929, %v2118, %v2126
        %v2131 = vsel %vm929, %v2120, %v2112
        %v2132 = vsel %vm929, %v2122, %v2114
        %v2133 = vsel %vm929, %v2124, %v2116
        %v2134 = vsel %vm929, %v2126, %v2118
        %v2135 = vmul.f32 %v2131, %v944
        %v2136 = vmul.f32 %v2127, %v948
        %v2137 = vmul.f32 %v2132, %v944
        %v2138 = vmul.f32 %v2128, %v948
        %v2139 = vmul.f32 %v2133, %v944
        %v2140 = vmul.f32 %v2129, %v948
        %v2141 = vmul.f32 %v2134, %v944
        %v2142 = vmul.f32 %v2130, %v948
        %s2143 = sld [smem:[#allocation11 + $0x3]]
        %v2144 = vstv %s2143
        %v2145 = vmul.f32 %v2144, %v2135
        %v2146 = vmul.f32 %v2144, %v2136
        %v2147 = vadd.f32 %v2091, %v2145
        %v2148 = vadd.f32 %v2092, %v2146
        %s2149 = sld [smem:[#allocation11 + $0x27]]
        %v2150 = vstv %s2149
        %v2151 = vmul.f32 %v2150, %v2135
        %v2152 = vmul.f32 %v2150, %v2136
        %v2153 = vadd.f32 %v2097, %v2151
        %v2154 = vadd.f32 %v2098, %v2152
        %s2155 = sld [smem:[#allocation11 + $0x4b]]
        %v2156 = vstv %s2155
        %v2157 = vmul.f32 %v2156, %v2135
        %v2158 = vmul.f32 %v2156, %v2136
        %v2159 = vadd.f32 %v2103, %v2157
        %v2160 = vadd.f32 %v2104, %v2158
        %s2161 = sld [smem:[#allocation11 + $0x6f]]
        %v2162 = vstv %s2161
        %v2163 = vmul.f32 %v2162, %v2135
        %v2164 = vmul.f32 %v2162, %v2136
        %v2165 = vadd.f32 %v2109, %v2163
        %v2166 = vadd.f32 %v2110, %v2164
        %s2167 = sld [smem:[#allocation11 + $0xc]]
        %v2168 = vstv %s2167
        %v2169 = vmul.f32 %v2168, %v2137
        %v2170 = vmul.f32 %v2168, %v2138
        %v2171 = vadd.f32 %v2147, %v2169
        %v2172 = vadd.f32 %v2148, %v2170
        %s2173 = sld [smem:[#allocation11 + $0x30]]
        %v2174 = vstv %s2173
        %v2175 = vmul.f32 %v2174, %v2137
        %v2176 = vmul.f32 %v2174, %v2138
        %v2177 = vadd.f32 %v2153, %v2175
        %v2178 = vadd.f32 %v2154, %v2176
        %s2179 = sld [smem:[#allocation11 + $0x54]]
        %v2180 = vstv %s2179
        %v2181 = vmul.f32 %v2180, %v2137
        %v2182 = vmul.f32 %v2180, %v2138
        %v2183 = vadd.f32 %v2159, %v2181
        %v2184 = vadd.f32 %v2160, %v2182
        %s2185 = sld [smem:[#allocation11 + $0x78]]
        %v2186 = vstv %s2185
        %v2187 = vmul.f32 %v2186, %v2137
        %v2188 = vmul.f32 %v2186, %v2138
        %v2189 = vadd.f32 %v2165, %v2187
        %v2190 = vadd.f32 %v2166, %v2188
        %s2191 = sld [smem:[#allocation11 + $0x15]]
        %v2192 = vstv %s2191
        %v2193 = vmul.f32 %v2192, %v2139
        %v2194 = vmul.f32 %v2192, %v2140
        %v2195 = vadd.f32 %v2171, %v2193
        %v2196 = vadd.f32 %v2172, %v2194
        %s2197 = sld [smem:[#allocation11 + $0x39]]
        %v2198 = vstv %s2197
        %v2199 = vmul.f32 %v2198, %v2139
        %v2200 = vmul.f32 %v2198, %v2140
        %v2201 = vadd.f32 %v2177, %v2199
        %v2202 = vadd.f32 %v2178, %v2200
        %s2203 = sld [smem:[#allocation11 + $0x5d]]
        %v2204 = vstv %s2203
        %v2205 = vmul.f32 %v2204, %v2139
        %v2206 = vmul.f32 %v2204, %v2140
        %v2207 = vadd.f32 %v2183, %v2205
        %v2208 = vadd.f32 %v2184, %v2206
        %s2209 = sld [smem:[#allocation11 + $0x81]]
        %v2210 = vstv %s2209
        %v2211 = vmul.f32 %v2210, %v2139
        %v2212 = vmul.f32 %v2210, %v2140
        %v2213 = vadd.f32 %v2189, %v2211
        %v2214 = vadd.f32 %v2190, %v2212
        %s2215 = sld [smem:[#allocation11 + $0x1e]]
        %v2216 = vstv %s2215
        %v2217 = vmul.f32 %v2216, %v2141
        %v2218 = vmul.f32 %v2216, %v2142
        %v2219 = vadd.f32 %v2195, %v2217
        %v2220 = vadd.f32 %v2196, %v2218
        %s2221 = sld [smem:[#allocation11 + $0x42]]
        %v2222 = vstv %s2221
        %v2223 = vmul.f32 %v2222, %v2141
        %v2224 = vmul.f32 %v2222, %v2142
        %v2225 = vadd.f32 %v2201, %v2223
        %v2226 = vadd.f32 %v2202, %v2224
        %s2227 = sld [smem:[#allocation11 + $0x66]]
        %v2228 = vstv %s2227
        %v2229 = vmul.f32 %v2228, %v2141
        %v2230 = vmul.f32 %v2228, %v2142
        %v2231 = vadd.f32 %v2207, %v2229
        %v2232 = vadd.f32 %v2208, %v2230
        %s2233 = sld [smem:[#allocation11 + $0x8a]]
        %v2234 = vstv %s2233
        %v2235 = vmul.f32 %v2234, %v2141
        %v2236 = vmul.f32 %v2234, %v2142
        %v2237 = vadd.f32 %v2213, %v2235
        %v2238 = vadd.f32 %v2214, %v2236
        %s2239 = sld [smem:[#allocation11 + $0x4]]
        %v2240 = vstv %s2239
        %v2241 = vmul.f32 %v2240, %v1699
        %v2242 = vmul.f32 %v2240, %v1700
        %v2243 = vadd.f32 %v2219, %v2241
        %v2244 = vadd.f32 %v2220, %v2242
        %s2245 = sld [smem:[#allocation11 + $0x28]]
        %v2246 = vstv %s2245
        %v2247 = vmul.f32 %v2246, %v1699
        %v2248 = vmul.f32 %v2246, %v1700
        %v2249 = vadd.f32 %v2225, %v2247
        %v2250 = vadd.f32 %v2226, %v2248
        %s2251 = sld [smem:[#allocation11 + $0x4c]]
        %v2252 = vstv %s2251
        %v2253 = vmul.f32 %v2252, %v1699
        %v2254 = vmul.f32 %v2252, %v1700
        %v2255 = vadd.f32 %v2231, %v2253
        %v2256 = vadd.f32 %v2232, %v2254
        %s2257 = sld [smem:[#allocation11 + $0x70]]
        %v2258 = vstv %s2257
        %v2259 = vmul.f32 %v2258, %v1699
        %v2260 = vmul.f32 %v2258, %v1700
        %v2261 = vadd.f32 %v2237, %v2259
        %v2262 = vadd.f32 %v2238, %v2260
        %s2263 = sld [smem:[#allocation11 + $0xd]]
        %v2264 = vstv %s2263
        %v2265 = vmul.f32 %v2264, %v1705
        %v2266 = vmul.f32 %v2264, %v1706
        %v2267 = vadd.f32 %v2243, %v2265
        %v2268 = vadd.f32 %v2244, %v2266
        %s2269 = sld [smem:[#allocation11 + $0x31]]
        %v2270 = vstv %s2269
        %v2271 = vmul.f32 %v2270, %v1705
        %v2272 = vmul.f32 %v2270, %v1706
        %v2273 = vadd.f32 %v2249, %v2271
        %v2274 = vadd.f32 %v2250, %v2272
        %s2275 = sld [smem:[#allocation11 + $0x55]]
        %v2276 = vstv %s2275
        %v2277 = vmul.f32 %v2276, %v1705
        %v2278 = vmul.f32 %v2276, %v1706
        %v2279 = vadd.f32 %v2255, %v2277
        %v2280 = vadd.f32 %v2256, %v2278
        %s2281 = sld [smem:[#allocation11 + $0x79]]
        %v2282 = vstv %s2281
        %v2283 = vmul.f32 %v2282, %v1705
        %v2284 = vmul.f32 %v2282, %v1706
        %v2285 = vadd.f32 %v2261, %v2283
        %v2286 = vadd.f32 %v2262, %v2284
        %s2287 = sld [smem:[#allocation11 + $0x16]]
        %v2288 = vstv %s2287
        %v2289 = vmul.f32 %v2288, %v1711
        %v2290 = vmul.f32 %v2288, %v1712
        %v2291 = vadd.f32 %v2267, %v2289
        %v2292 = vadd.f32 %v2268, %v2290
        %s2293 = sld [smem:[#allocation11 + $0x3a]]
        %v2294 = vstv %s2293
        %v2295 = vmul.f32 %v2294, %v1711
        %v2296 = vmul.f32 %v2294, %v1712
        %v2297 = vadd.f32 %v2273, %v2295
        %v2298 = vadd.f32 %v2274, %v2296
        %s2299 = sld [smem:[#allocation11 + $0x5e]]
        %v2300 = vstv %s2299
        %v2301 = vmul.f32 %v2300, %v1711
        %v2302 = vmul.f32 %v2300, %v1712
        %v2303 = vadd.f32 %v2279, %v2301
        %v2304 = vadd.f32 %v2280, %v2302
        %s2305 = sld [smem:[#allocation11 + $0x82]]
        %v2306 = vstv %s2305
        %v2307 = vmul.f32 %v2306, %v1711
        %v2308 = vmul.f32 %v2306, %v1712
        %v2309 = vadd.f32 %v2285, %v2307
        %v2310 = vadd.f32 %v2286, %v2308
        %s2311 = sld [smem:[#allocation11 + $0x1f]]
        %v2312 = vstv %s2311
        %v2313 = vmul.f32 %v2312, %v1717
        %v2314 = vmul.f32 %v2312, %v1718
        %v2315 = vadd.f32 %v2291, %v2313
        %v2316 = vadd.f32 %v2292, %v2314
        %s2317 = sld [smem:[#allocation11 + $0x43]]
        %v2318 = vstv %s2317
        %v2319 = vmul.f32 %v2318, %v1717
        %v2320 = vmul.f32 %v2318, %v1718
        %v2321 = vadd.f32 %v2297, %v2319
        %v2322 = vadd.f32 %v2298, %v2320
        %s2323 = sld [smem:[#allocation11 + $0x67]]
        %v2324 = vstv %s2323
        %v2325 = vmul.f32 %v2324, %v1717
        %v2326 = vmul.f32 %v2324, %v1718
        %v2327 = vadd.f32 %v2303, %v2325
        %v2328 = vadd.f32 %v2304, %v2326
        %s2329 = sld [smem:[#allocation11 + $0x8b]]
        %v2330 = vstv %s2329
        %v2331 = vmul.f32 %v2330, %v1717
        %v2332 = vmul.f32 %v2330, %v1718
        %v2333 = vadd.f32 %v2309, %v2331
        %v2334 = vadd.f32 %v2310, %v2332
        %2335 = vrot.lane.b32.xlu0 %v1699, 127
        %v2336 = vpop.permute.xlu0 %2335
        %2337 = vrot.lane.b32.xlu0 %v1705, 127
        %v2338 = vpop.permute.xlu0 %2337
        %2339 = vrot.lane.b32.xlu0 %v1711, 127
        %v2340 = vpop.permute.xlu0 %2339
        %2341 = vrot.lane.b32.xlu0 %v1717, 127
        %v2342 = vpop.permute.xlu0 %2341
        %2343 = vrot.lane.b32.xlu0 %v1700, 127
        %v2344 = vpop.permute.xlu0 %2343
        %2345 = vrot.lane.b32.xlu0 %v1706, 127
        %v2346 = vpop.permute.xlu0 %2345
        %2347 = vrot.lane.b32.xlu0 %v1712, 127
        %v2348 = vpop.permute.xlu0 %2347
        %2349 = vrot.lane.b32.xlu0 %v1718, 127
        %v2350 = vpop.permute.xlu0 %2349
        %v2351 = vsel %vm1167, %v2336, %v2344
        %v2352 = vsel %vm1167, %v2338, %v2346
        %v2353 = vsel %vm1167, %v2340, %v2348
        %v2354 = vsel %vm1167, %v2342, %v2350
        %v2355 = vsel %vm1167, %v2344, %v2336
        %v2356 = vsel %vm1167, %v2346, %v2338
        %v2357 = vsel %vm1167, %v2348, %v2340
        %v2358 = vsel %vm1167, %v2350, %v2342
        %v2359 = vmul.f32 %v2351, %v1182
        %v2360 = vmul.f32 %v2355, %v1186
        %v2361 = vmul.f32 %v2352, %v1182
        %v2362 = vmul.f32 %v2356, %v1186
        %v2363 = vmul.f32 %v2353, %v1182
        %v2364 = vmul.f32 %v2357, %v1186
        %v2365 = vmul.f32 %v2354, %v1182
        %v2366 = vmul.f32 %v2358, %v1186
        %s2367 = sld [smem:[#allocation11 + $0x5]]
        %v2368 = vstv %s2367
        %v2369 = vmul.f32 %v2368, %v2359
        %v2370 = vmul.f32 %v2368, %v2360
        %v2371 = vadd.f32 %v2315, %v2369
        %v2372 = vadd.f32 %v2316, %v2370
        %s2373 = sld [smem:[#allocation11 + $0x29]]
        %v2374 = vstv %s2373
        %v2375 = vmul.f32 %v2374, %v2359
        %v2376 = vmul.f32 %v2374, %v2360
        %v2377 = vadd.f32 %v2321, %v2375
        %v2378 = vadd.f32 %v2322, %v2376
        %s2379 = sld [smem:[#allocation11 + $0x4d]]
        %v2380 = vstv %s2379
        %v2381 = vmul.f32 %v2380, %v2359
        %v2382 = vmul.f32 %v2380, %v2360
        %v2383 = vadd.f32 %v2327, %v2381
        %v2384 = vadd.f32 %v2328, %v2382
        %s2385 = sld [smem:[#allocation11 + $0x71]]
        %v2386 = vstv %s2385
        %v2387 = vmul.f32 %v2386, %v2359
        %v2388 = vmul.f32 %v2386, %v2360
        %v2389 = vadd.f32 %v2333, %v2387
        %v2390 = vadd.f32 %v2334, %v2388
        %s2391 = sld [smem:[#allocation11 + $0xe]]
        %v2392 = vstv %s2391
        %v2393 = vmul.f32 %v2392, %v2361
        %v2394 = vmul.f32 %v2392, %v2362
        %v2395 = vadd.f32 %v2371, %v2393
        %v2396 = vadd.f32 %v2372, %v2394
        %s2397 = sld [smem:[#allocation11 + $0x32]]
        %v2398 = vstv %s2397
        %v2399 = vmul.f32 %v2398, %v2361
        %v2400 = vmul.f32 %v2398, %v2362
        %v2401 = vadd.f32 %v2377, %v2399
        %v2402 = vadd.f32 %v2378, %v2400
        %s2403 = sld [smem:[#allocation11 + $0x56]]
        %v2404 = vstv %s2403
        %v2405 = vmul.f32 %v2404, %v2361
        %v2406 = vmul.f32 %v2404, %v2362
        %v2407 = vadd.f32 %v2383, %v2405
        %v2408 = vadd.f32 %v2384, %v2406
        %s2409 = sld [smem:[#allocation11 + $0x7a]]
        %v2410 = vstv %s2409
        %v2411 = vmul.f32 %v2410, %v2361
        %v2412 = vmul.f32 %v2410, %v2362
        %v2413 = vadd.f32 %v2389, %v2411
        %v2414 = vadd.f32 %v2390, %v2412
        %s2415 = sld [smem:[#allocation11 + $0x17]]
        %v2416 = vstv %s2415
        %v2417 = vmul.f32 %v2416, %v2363
        %v2418 = vmul.f32 %v2416, %v2364
        %v2419 = vadd.f32 %v2395, %v2417
        %v2420 = vadd.f32 %v2396, %v2418
        %s2421 = sld [smem:[#allocation11 + $0x3b]]
        %v2422 = vstv %s2421
        %v2423 = vmul.f32 %v2422, %v2363
        %v2424 = vmul.f32 %v2422, %v2364
        %v2425 = vadd.f32 %v2401, %v2423
        %v2426 = vadd.f32 %v2402, %v2424
        %s2427 = sld [smem:[#allocation11 + $0x5f]]
        %v2428 = vstv %s2427
        %v2429 = vmul.f32 %v2428, %v2363
        %v2430 = vmul.f32 %v2428, %v2364
        %v2431 = vadd.f32 %v2407, %v2429
        %v2432 = vadd.f32 %v2408, %v2430
        %s2433 = sld [smem:[#allocation11 + $0x83]]
        %v2434 = vstv %s2433
        %v2435 = vmul.f32 %v2434, %v2363
        %v2436 = vmul.f32 %v2434, %v2364
        %v2437 = vadd.f32 %v2413, %v2435
        %v2438 = vadd.f32 %v2414, %v2436
        %s2439 = sld [smem:[#allocation11 + $0x20]]
        %v2440 = vstv %s2439
        %v2441 = vmul.f32 %v2440, %v2365
        %v2442 = vmul.f32 %v2440, %v2366
        %v2443 = vadd.f32 %v2419, %v2441
        %v2444 = vadd.f32 %v2420, %v2442
        %s2445 = sld [smem:[#allocation11 + $0x44]]
        %v2446 = vstv %s2445
        %v2447 = vmul.f32 %v2446, %v2365
        %v2448 = vmul.f32 %v2446, %v2366
        %v2449 = vadd.f32 %v2425, %v2447
        %v2450 = vadd.f32 %v2426, %v2448
        %s2451 = sld [smem:[#allocation11 + $0x68]]
        %v2452 = vstv %s2451
        %v2453 = vmul.f32 %v2452, %v2365
        %v2454 = vmul.f32 %v2452, %v2366
        %v2455 = vadd.f32 %v2431, %v2453
        %v2456 = vadd.f32 %v2432, %v2454
        %s2457 = sld [smem:[#allocation11 + $0x8c]]
        %v2458 = vstv %s2457
        %v2459 = vmul.f32 %v2458, %v2365
        %v2460 = vmul.f32 %v2458, %v2366
        %v2461 = vadd.f32 %v2437, %v2459
        %v2462 = vadd.f32 %v2438, %v2460
        %2463 = vrot.lane.b32.xlu0 %v1699, 113
        %v2464 = vpop.permute.xlu0 %2463
        %2465 = vrot.lane.b32.xlu0 %v1705, 113
        %v2466 = vpop.permute.xlu0 %2465
        %2467 = vrot.lane.b32.xlu0 %v1711, 113
        %v2468 = vpop.permute.xlu0 %2467
        %2469 = vrot.lane.b32.xlu0 %v1717, 113
        %v2470 = vpop.permute.xlu0 %2469
        %2471 = vrot.lane.b32.xlu0 %v1700, 113
        %v2472 = vpop.permute.xlu0 %2471
        %2473 = vrot.lane.b32.xlu0 %v1706, 113
        %v2474 = vpop.permute.xlu0 %2473
        %2475 = vrot.lane.b32.xlu0 %v1712, 113
        %v2476 = vpop.permute.xlu0 %2475
        %2477 = vrot.lane.b32.xlu0 %v1718, 113
        %v2478 = vpop.permute.xlu0 %2477
        %v2479 = vsel %vm1309, %v2464, %v2472
        %v2480 = vsel %vm1309, %v2466, %v2474
        %v2481 = vsel %vm1309, %v2468, %v2476
        %v2482 = vsel %vm1309, %v2470, %v2478
        %v2483 = vsel %vm1309, %v2472, %v2464
        %v2484 = vsel %vm1309, %v2474, %v2466
        %v2485 = vsel %vm1309, %v2476, %v2468
        %v2486 = vsel %vm1309, %v2478, %v2470
        %v2487 = vmul.f32 %v2479, %v1324
        %v2488 = vmul.f32 %v2483, %v1328
        %v2489 = vmul.f32 %v2480, %v1324
        %v2490 = vmul.f32 %v2484, %v1328
        %v2491 = vmul.f32 %v2481, %v1324
        %v2492 = vmul.f32 %v2485, %v1328
        %v2493 = vmul.f32 %v2482, %v1324
        %v2494 = vmul.f32 %v2486, %v1328
        %s2495 = sld [smem:[#allocation11 + $0x6]]
        %v2496 = vstv %s2495
        %v2497 = vmul.f32 %v2496, %v2487
        %v2498 = vmul.f32 %v2496, %v2488
        %v2499 = vadd.f32 %v2443, %v2497
        %v2500 = vadd.f32 %v2444, %v2498
        %s2501 = sld [smem:[#allocation11 + $0x2a]]
        %v2502 = vstv %s2501
        %v2503 = vmul.f32 %v2502, %v2487
        %v2504 = vmul.f32 %v2502, %v2488
        %v2505 = vadd.f32 %v2449, %v2503
        %v2506 = vadd.f32 %v2450, %v2504
        %s2507 = sld [smem:[#allocation11 + $0x4e]]
        %v2508 = vstv %s2507
        %v2509 = vmul.f32 %v2508, %v2487
        %v2510 = vmul.f32 %v2508, %v2488
        %v2511 = vadd.f32 %v2455, %v2509
        %v2512 = vadd.f32 %v2456, %v2510
        %s2513 = sld [smem:[#allocation11 + $0x72]]
        %v2514 = vstv %s2513
        %v2515 = vmul.f32 %v2514, %v2487
        %v2516 = vmul.f32 %v2514, %v2488
        %v2517 = vadd.f32 %v2461, %v2515
        %v2518 = vadd.f32 %v2462, %v2516
        %s2519 = sld [smem:[#allocation11 + $0xf]]
        %v2520 = vstv %s2519
        %v2521 = vmul.f32 %v2520, %v2489
        %v2522 = vmul.f32 %v2520, %v2490
        %v2523 = vadd.f32 %v2499, %v2521
        %v2524 = vadd.f32 %v2500, %v2522
        %s2525 = sld [smem:[#allocation11 + $0x33]]
        %v2526 = vstv %s2525
        %v2527 = vmul.f32 %v2526, %v2489
        %v2528 = vmul.f32 %v2526, %v2490
        %v2529 = vadd.f32 %v2505, %v2527
        %v2530 = vadd.f32 %v2506, %v2528
        %s2531 = sld [smem:[#allocation11 + $0x57]]
        %v2532 = vstv %s2531
        %v2533 = vmul.f32 %v2532, %v2489
        %v2534 = vmul.f32 %v2532, %v2490
        %v2535 = vadd.f32 %v2511, %v2533
        %v2536 = vadd.f32 %v2512, %v2534
        %s2537 = sld [smem:[#allocation11 + $0x7b]]
        %v2538 = vstv %s2537
        %v2539 = vmul.f32 %v2538, %v2489
        %v2540 = vmul.f32 %v2538, %v2490
        %v2541 = vadd.f32 %v2517, %v2539
        %v2542 = vadd.f32 %v2518, %v2540
        %s2543 = sld [smem:[#allocation11 + $0x18]]
        %v2544 = vstv %s2543
        %v2545 = vmul.f32 %v2544, %v2491
        %v2546 = vmul.f32 %v2544, %v2492
        %v2547 = vadd.f32 %v2523, %v2545
        %v2548 = vadd.f32 %v2524, %v2546
        %s2549 = sld [smem:[#allocation11 + $0x3c]]
        %v2550 = vstv %s2549
        %v2551 = vmul.f32 %v2550, %v2491
        %v2552 = vmul.f32 %v2550, %v2492
        %v2553 = vadd.f32 %v2529, %v2551
        %v2554 = vadd.f32 %v2530, %v2552
        %s2555 = sld [smem:[#allocation11 + $0x60]]
        %v2556 = vstv %s2555
        %v2557 = vmul.f32 %v2556, %v2491
        %v2558 = vmul.f32 %v2556, %v2492
        %v2559 = vadd.f32 %v2535, %v2557
        %v2560 = vadd.f32 %v2536, %v2558
        %s2561 = sld [smem:[#allocation11 + $0x84]]
        %v2562 = vstv %s2561
        %v2563 = vmul.f32 %v2562, %v2491
        %v2564 = vmul.f32 %v2562, %v2492
        %v2565 = vadd.f32 %v2541, %v2563
        %v2566 = vadd.f32 %v2542, %v2564
        %s2567 = sld [smem:[#allocation11 + $0x21]]
        %v2568 = vstv %s2567
        %v2569 = vmul.f32 %v2568, %v2493
        %v2570 = vmul.f32 %v2568, %v2494
        %v2571 = vadd.f32 %v2547, %v2569
        %v2572 = vadd.f32 %v2548, %v2570
        %s2573 = sld [smem:[#allocation11 + $0x45]]
        %v2574 = vstv %s2573
        %v2575 = vmul.f32 %v2574, %v2493
        %v2576 = vmul.f32 %v2574, %v2494
        %v2577 = vadd.f32 %v2553, %v2575
        %v2578 = vadd.f32 %v2554, %v2576
        %s2579 = sld [smem:[#allocation11 + $0x69]]
        %v2580 = vstv %s2579
        %v2581 = vmul.f32 %v2580, %v2493
        %v2582 = vmul.f32 %v2580, %v2494
        %v2583 = vadd.f32 %v2559, %v2581
        %v2584 = vadd.f32 %v2560, %v2582
        %s2585 = sld [smem:[#allocation11 + $0x8d]]
        %v2586 = vstv %s2585
        %v2587 = vmul.f32 %v2586, %v2493
        %v2588 = vmul.f32 %v2586, %v2494
        %v2589 = vadd.f32 %v2565, %v2587
        %v2590 = vadd.f32 %v2566, %v2588
        %2591 = vrot.lane.b32.xlu0 %v1699, 112
        %v2592 = vpop.permute.xlu0 %2591
        %2593 = vrot.lane.b32.xlu0 %v1705, 112
        %v2594 = vpop.permute.xlu0 %2593
        %2595 = vrot.lane.b32.xlu0 %v1711, 112
        %v2596 = vpop.permute.xlu0 %2595
        %2597 = vrot.lane.b32.xlu0 %v1717, 112
        %v2598 = vpop.permute.xlu0 %2597
        %2599 = vrot.lane.b32.xlu0 %v1700, 112
        %v2600 = vpop.permute.xlu0 %2599
        %2601 = vrot.lane.b32.xlu0 %v1706, 112
        %v2602 = vpop.permute.xlu0 %2601
        %2603 = vrot.lane.b32.xlu0 %v1712, 112
        %v2604 = vpop.permute.xlu0 %2603
        %2605 = vrot.lane.b32.xlu0 %v1718, 112
        %v2606 = vpop.permute.xlu0 %2605
        %v2607 = vsel %vm1451, %v2592, %v2600
        %v2608 = vsel %vm1451, %v2594, %v2602
        %v2609 = vsel %vm1451, %v2596, %v2604
        %v2610 = vsel %vm1451, %v2598, %v2606
        %v2611 = vsel %vm1451, %v2600, %v2592
        %v2612 = vsel %vm1451, %v2602, %v2594
        %v2613 = vsel %vm1451, %v2604, %v2596
        %v2614 = vsel %vm1451, %v2606, %v2598
        %v2615 = vmul.f32 %v2607, %v1466
        %v2616 = vmul.f32 %v2611, %v1470
        %v2617 = vmul.f32 %v2608, %v1466
        %v2618 = vmul.f32 %v2612, %v1470
        %v2619 = vmul.f32 %v2609, %v1466
        %v2620 = vmul.f32 %v2613, %v1470
        %v2621 = vmul.f32 %v2610, %v1466
        %v2622 = vmul.f32 %v2614, %v1470
        %s2623 = sld [smem:[#allocation11 + $0x7]]
        %v2624 = vstv %s2623
        %v2625 = vmul.f32 %v2624, %v2615
        %v2626 = vmul.f32 %v2624, %v2616
        %v2627 = vadd.f32 %v2571, %v2625
        %v2628 = vadd.f32 %v2572, %v2626
        %s2629 = sld [smem:[#allocation11 + $0x2b]]
        %v2630 = vstv %s2629
        %v2631 = vmul.f32 %v2630, %v2615
        %v2632 = vmul.f32 %v2630, %v2616
        %v2633 = vadd.f32 %v2577, %v2631
        %v2634 = vadd.f32 %v2578, %v2632
        %s2635 = sld [smem:[#allocation11 + $0x4f]]
        %v2636 = vstv %s2635
        %v2637 = vmul.f32 %v2636, %v2615
        %v2638 = vmul.f32 %v2636, %v2616
        %v2639 = vadd.f32 %v2583, %v2637
        %v2640 = vadd.f32 %v2584, %v2638
        %s2641 = sld [smem:[#allocation11 + $0x73]]
        %v2642 = vstv %s2641
        %v2643 = vmul.f32 %v2642, %v2615
        %v2644 = vmul.f32 %v2642, %v2616
        %v2645 = vadd.f32 %v2589, %v2643
        %v2646 = vadd.f32 %v2590, %v2644
        %s2647 = sld [smem:[#allocation11 + $0x10]]
        %v2648 = vstv %s2647
        %v2649 = vmul.f32 %v2648, %v2617
        %v2650 = vmul.f32 %v2648, %v2618
        %v2651 = vadd.f32 %v2627, %v2649
        %v2652 = vadd.f32 %v2628, %v2650
        %s2653 = sld [smem:[#allocation11 + $0x34]]
        %v2654 = vstv %s2653
        %v2655 = vmul.f32 %v2654, %v2617
        %v2656 = vmul.f32 %v2654, %v2618
        %v2657 = vadd.f32 %v2633, %v2655
        %v2658 = vadd.f32 %v2634, %v2656
        %s2659 = sld [smem:[#allocation11 + $0x58]]
        %v2660 = vstv %s2659
        %v2661 = vmul.f32 %v2660, %v2617
        %v2662 = vmul.f32 %v2660, %v2618
        %v2663 = vadd.f32 %v2639, %v2661
        %v2664 = vadd.f32 %v2640, %v2662
        %s2665 = sld [smem:[#allocation11 + $0x7c]]
        %v2666 = vstv %s2665
        %v2667 = vmul.f32 %v2666, %v2617
        %v2668 = vmul.f32 %v2666, %v2618
        %v2669 = vadd.f32 %v2645, %v2667
        %v2670 = vadd.f32 %v2646, %v2668
        %s2671 = sld [smem:[#allocation11 + $0x19]]
        %v2672 = vstv %s2671
        %v2673 = vmul.f32 %v2672, %v2619
        %v2674 = vmul.f32 %v2672, %v2620
        %v2675 = vadd.f32 %v2651, %v2673
        %v2676 = vadd.f32 %v2652, %v2674
        %s2677 = sld [smem:[#allocation11 + $0x3d]]
        %v2678 = vstv %s2677
        %v2679 = vmul.f32 %v2678, %v2619
        %v2680 = vmul.f32 %v2678, %v2620
        %v2681 = vadd.f32 %v2657, %v2679
        %v2682 = vadd.f32 %v2658, %v2680
        %s2683 = sld [smem:[#allocation11 + $0x61]]
        %v2684 = vstv %s2683
        %v2685 = vmul.f32 %v2684, %v2619
        %v2686 = vmul.f32 %v2684, %v2620
        %v2687 = vadd.f32 %v2663, %v2685
        %v2688 = vadd.f32 %v2664, %v2686
        %s2689 = sld [smem:[#allocation11 + $0x85]]
        %v2690 = vstv %s2689
        %v2691 = vmul.f32 %v2690, %v2619
        %v2692 = vmul.f32 %v2690, %v2620
        %v2693 = vadd.f32 %v2669, %v2691
        %v2694 = vadd.f32 %v2670, %v2692
        %s2695 = sld [smem:[#allocation11 + $0x22]]
        %v2696 = vstv %s2695
        %v2697 = vmul.f32 %v2696, %v2621
        %v2698 = vmul.f32 %v2696, %v2622
        %v2699 = vadd.f32 %v2675, %v2697
        %v2700 = vadd.f32 %v2676, %v2698
        %s2701 = sld [smem:[#allocation11 + $0x46]]
        %v2702 = vstv %s2701
        %v2703 = vmul.f32 %v2702, %v2621
        %v2704 = vmul.f32 %v2702, %v2622
        %v2705 = vadd.f32 %v2681, %v2703
        %v2706 = vadd.f32 %v2682, %v2704
        %s2707 = sld [smem:[#allocation11 + $0x6a]]
        %v2708 = vstv %s2707
        %v2709 = vmul.f32 %v2708, %v2621
        %v2710 = vmul.f32 %v2708, %v2622
        %v2711 = vadd.f32 %v2687, %v2709
        %v2712 = vadd.f32 %v2688, %v2710
        %s2713 = sld [smem:[#allocation11 + $0x8e]]
        %v2714 = vstv %s2713
        %v2715 = vmul.f32 %v2714, %v2621
        %v2716 = vmul.f32 %v2714, %v2622
        %v2717 = vadd.f32 %v2693, %v2715
        %v2718 = vadd.f32 %v2694, %v2716
        %2719 = vrot.lane.b32.xlu0 %v1699, 111
        %v2720 = vpop.permute.xlu0 %2719
        %2721 = vrot.lane.b32.xlu0 %v1705, 111
        %v2722 = vpop.permute.xlu0 %2721
        %2723 = vrot.lane.b32.xlu0 %v1711, 111
        %v2724 = vpop.permute.xlu0 %2723
        %2725 = vrot.lane.b32.xlu0 %v1717, 111
        %v2726 = vpop.permute.xlu0 %2725
        %2727 = vrot.lane.b32.xlu0 %v1700, 111
        %v2728 = vpop.permute.xlu0 %2727
        %2729 = vrot.lane.b32.xlu0 %v1706, 111
        %v2730 = vpop.permute.xlu0 %2729
        %2731 = vrot.lane.b32.xlu0 %v1712, 111
        %v2732 = vpop.permute.xlu0 %2731
        %2733 = vrot.lane.b32.xlu0 %v1718, 111
        %v2734 = vpop.permute.xlu0 %2733
        %v2735 = vsel %vm1593, %v2720, %v2728
        %v2736 = vsel %vm1593, %v2722, %v2730
        %v2737 = vsel %vm1593, %v2724, %v2732
        %v2738 = vsel %vm1593, %v2726, %v2734
        %v2739 = vsel %vm1593, %v2728, %v2720
        %v2740 = vsel %vm1593, %v2730, %v2722
        %v2741 = vsel %vm1593, %v2732, %v2724
        %v2742 = vsel %vm1593, %v2734, %v2726
        %v2743 = vmul.f32 %v2735, %v1608
        %v2744 = vmul.f32 %v2739, %v1612
        %v2745 = vmul.f32 %v2736, %v1608
        %v2746 = vmul.f32 %v2740, %v1612
        %v2747 = vmul.f32 %v2737, %v1608
        %v2748 = vmul.f32 %v2741, %v1612
        %v2749 = vmul.f32 %v2738, %v1608
        %v2750 = vmul.f32 %v2742, %v1612
        %s2751 = sld [smem:[#allocation11 + $0x8]]
        %v2752 = vstv %s2751
        %v2753 = vmul.f32 %v2752, %v2743
        %v2754 = vmul.f32 %v2752, %v2744
        %v2755 = vadd.f32 %v2699, %v2753
        %v2756 = vadd.f32 %v2700, %v2754
        %s2757 = sld [smem:[#allocation11 + $0x2c]]
        %v2758 = vstv %s2757
        %v2759 = vmul.f32 %v2758, %v2743
        %v2760 = vmul.f32 %v2758, %v2744
        %v2761 = vadd.f32 %v2705, %v2759
        %v2762 = vadd.f32 %v2706, %v2760
        %s2763 = sld [smem:[#allocation11 + $0x50]]
        %v2764 = vstv %s2763
        %v2765 = vmul.f32 %v2764, %v2743
        %v2766 = vmul.f32 %v2764, %v2744
        %v2767 = vadd.f32 %v2711, %v2765
        %v2768 = vadd.f32 %v2712, %v2766
        %s2769 = sld [smem:[#allocation11 + $0x74]]
        %v2770 = vstv %s2769
        %v2771 = vmul.f32 %v2770, %v2743
        %v2772 = vmul.f32 %v2770, %v2744
        %v2773 = vadd.f32 %v2717, %v2771
        %v2774 = vadd.f32 %v2718, %v2772
        %s2775 = sld [smem:[#allocation11 + $0x11]]
        %v2776 = vstv %s2775
        %v2777 = vmul.f32 %v2776, %v2745
        %v2778 = vmul.f32 %v2776, %v2746
        %v2779 = vadd.f32 %v2755, %v2777
        %v2780 = vadd.f32 %v2756, %v2778
        %s2781 = sld [smem:[#allocation11 + $0x35]]
        %v2782 = vstv %s2781
        %v2783 = vmul.f32 %v2782, %v2745
        %v2784 = vmul.f32 %v2782, %v2746
        %v2785 = vadd.f32 %v2761, %v2783
        %v2786 = vadd.f32 %v2762, %v2784
        %s2787 = sld [smem:[#allocation11 + $0x59]]
        %v2788 = vstv %s2787
        %v2789 = vmul.f32 %v2788, %v2745
        %v2790 = vmul.f32 %v2788, %v2746
        %v2791 = vadd.f32 %v2767, %v2789
        %v2792 = vadd.f32 %v2768, %v2790
        %s2793 = sld [smem:[#allocation11 + $0x7d]]
        %v2794 = vstv %s2793
        %v2795 = vmul.f32 %v2794, %v2745
        %v2796 = vmul.f32 %v2794, %v2746
        %v2797 = vadd.f32 %v2773, %v2795
        %v2798 = vadd.f32 %v2774, %v2796
        %s2799 = sld [smem:[#allocation11 + $0x1a]]
        %v2800 = vstv %s2799
        %v2801 = vmul.f32 %v2800, %v2747
        %v2802 = vmul.f32 %v2800, %v2748
        %v2803 = vadd.f32 %v2779, %v2801
        %v2804 = vadd.f32 %v2780, %v2802
        %s2805 = sld [smem:[#allocation11 + $0x3e]]
        %v2806 = vstv %s2805
        %v2807 = vmul.f32 %v2806, %v2747
        %v2808 = vmul.f32 %v2806, %v2748
        %v2809 = vadd.f32 %v2785, %v2807
        %v2810 = vadd.f32 %v2786, %v2808
        %s2811 = sld [smem:[#allocation11 + $0x62]]
        %v2812 = vstv %s2811
        %v2813 = vmul.f32 %v2812, %v2747
        %v2814 = vmul.f32 %v2812, %v2748
        %v2815 = vadd.f32 %v2791, %v2813
        %v2816 = vadd.f32 %v2792, %v2814
        %s2817 = sld [smem:[#allocation11 + $0x86]]
        %v2818 = vstv %s2817
        %v2819 = vmul.f32 %v2818, %v2747
        %v2820 = vmul.f32 %v2818, %v2748
        %v2821 = vadd.f32 %v2797, %v2819
        %v2822 = vadd.f32 %v2798, %v2820
        %s2823 = sld [smem:[#allocation11 + $0x23]]
        %v2824 = vstv %s2823
        %v2825 = vmul.f32 %v2824, %v2749
        %v2826 = vmul.f32 %v2824, %v2750
        %v2827 = vadd.f32 %v2803, %v2825
        %v2828 = vadd.f32 %v2804, %v2826
        %s2829 = sld [smem:[#allocation11 + $0x47]]
        %v2830 = vstv %s2829
        %v2831 = vmul.f32 %v2830, %v2749
        %v2832 = vmul.f32 %v2830, %v2750
        %v2833 = vadd.f32 %v2809, %v2831
        %v2834 = vadd.f32 %v2810, %v2832
        %s2835 = sld [smem:[#allocation11 + $0x6b]]
        %v2836 = vstv %s2835
        %v2837 = vmul.f32 %v2836, %v2749
        %v2838 = vmul.f32 %v2836, %v2750
        %v2839 = vadd.f32 %v2815, %v2837
        %v2840 = vadd.f32 %v2816, %v2838
        %s2841 = sld [smem:[#allocation11 + $0x8f]]
        %v2842 = vstv %s2841
        %v2843 = vmul.f32 %v2842, %v2749
        %v2844 = vmul.f32 %v2842, %v2750
        %v2845 = vadd.f32 %v2821, %v2843
        %v2846 = vadd.f32 %v2822, %v2844
        %s2847 = sld [smem:[#allocation16]]
        %v2848 = vstv %s2847
        %s2849 = sld [smem:[#allocation16 + $0x1]]
        %v2850 = vstv %s2849
        %s2851 = sld [smem:[#allocation16 + $0x2]]
        %v2852 = vstv %s2851
        %s2853 = sld [smem:[#allocation16 + $0x3]]
        %v2854 = vstv %s2853
        %2855 = vrot.lane.b32.xlu0 %v2827, 17
        %v2856 = vpop.permute.xlu0 %2855
        %2857 = vrot.lane.b32.xlu0 %v2833, 17
        %v2858 = vpop.permute.xlu0 %2857
        %2859 = vrot.lane.b32.xlu0 %v2839, 17
        %v2860 = vpop.permute.xlu0 %2859
        %2861 = vrot.lane.b32.xlu0 %v2845, 17
        %v2862 = vpop.permute.xlu0 %2861
        %2863 = vrot.lane.b32.xlu0 %v2828, 17
        %v2864 = vpop.permute.xlu0 %2863
        %2865 = vrot.lane.b32.xlu0 %v2834, 17
        %v2866 = vpop.permute.xlu0 %2865
        %2867 = vrot.lane.b32.xlu0 %v2840, 17
        %v2868 = vpop.permute.xlu0 %2867
        %2869 = vrot.lane.b32.xlu0 %v2846, 17
        %v2870 = vpop.permute.xlu0 %2869
        %v2871 = vsel %vm504, %v2856, %v2864
        %v2872 = vsel %vm504, %v2858, %v2866
        %v2873 = vsel %vm504, %v2860, %v2868
        %v2874 = vsel %vm504, %v2862, %v2870
        %v2875 = vsel %vm504, %v2864, %v2856
        %v2876 = vsel %vm504, %v2866, %v2858
        %v2877 = vsel %vm504, %v2868, %v2860
        %v2878 = vsel %vm504, %v2870, %v2862
        %v2879 = vmul.f32 %v2875, %v518
        %v2880 = vmul.f32 %v2871, %v522
        %v2881 = vmul.f32 %v2876, %v518
        %v2882 = vmul.f32 %v2872, %v522
        %v2883 = vmul.f32 %v2877, %v518
        %v2884 = vmul.f32 %v2873, %v522
        %v2885 = vmul.f32 %v2878, %v518
        %v2886 = vmul.f32 %v2874, %v522
        %s2887 = sld [smem:[#allocation15]]
        %v2888 = vstv %s2887
        %v2889 = vmul.f32 %v2888, %v2879
        %v2890 = vmul.f32 %v2888, %v2880
        %v2891 = vadd.f32 %v2848, %v2889
        %v2892 = vadd.f32 %v2848, %v2890
        %s2893 = sld [smem:[#allocation15 + $0x24]]
        %v2894 = vstv %s2893
        %v2895 = vmul.f32 %v2894, %v2879
        %v2896 = vmul.f32 %v2894, %v2880
        %v2897 = vadd.f32 %v2850, %v2895
        %v2898 = vadd.f32 %v2850, %v2896
        %s2899 = sld [smem:[#allocation15 + $0x48]]
        %v2900 = vstv %s2899
        %v2901 = vmul.f32 %v2900, %v2879
        %v2902 = vmul.f32 %v2900, %v2880
        %v2903 = vadd.f32 %v2852, %v2901
        %v2904 = vadd.f32 %v2852, %v2902
        %s2905 = sld [smem:[#allocation15 + $0x6c]]
        %v2906 = vstv %s2905
        %v2907 = vmul.f32 %v2906, %v2879
        %v2908 = vmul.f32 %v2906, %v2880
        %v2909 = vadd.f32 %v2854, %v2907
        %v2910 = vadd.f32 %v2854, %v2908
        %s2911 = sld [smem:[#allocation15 + $0x9]]
        %v2912 = vstv %s2911
        %v2913 = vmul.f32 %v2912, %v2881
        %v2914 = vmul.f32 %v2912, %v2882
        %v2915 = vadd.f32 %v2891, %v2913
        %v2916 = vadd.f32 %v2892, %v2914
        %s2917 = sld [smem:[#allocation15 + $0x2d]]
        %v2918 = vstv %s2917
        %v2919 = vmul.f32 %v2918, %v2881
        %v2920 = vmul.f32 %v2918, %v2882
        %v2921 = vadd.f32 %v2897, %v2919
        %v2922 = vadd.f32 %v2898, %v2920
        %s2923 = sld [smem:[#allocation15 + $0x51]]
        %v2924 = vstv %s2923
        %v2925 = vmul.f32 %v2924, %v2881
        %v2926 = vmul.f32 %v2924, %v2882
        %v2927 = vadd.f32 %v2903, %v2925
        %v2928 = vadd.f32 %v2904, %v2926
        %s2929 = sld [smem:[#allocation15 + $0x75]]
        %v2930 = vstv %s2929
        %v2931 = vmul.f32 %v2930, %v2881
        %v2932 = vmul.f32 %v2930, %v2882
        %v2933 = vadd.f32 %v2909, %v2931
        %v2934 = vadd.f32 %v2910, %v2932
        %s2935 = sld [smem:[#allocation15 + $0x12]]
        %v2936 = vstv %s2935
        %v2937 = vmul.f32 %v2936, %v2883
        %v2938 = vmul.f32 %v2936, %v2884
        %v2939 = vadd.f32 %v2915, %v2937
        %v2940 = vadd.f32 %v2916, %v2938
        %s2941 = sld [smem:[#allocation15 + $0x36]]
        %v2942 = vstv %s2941
        %v2943 = vmul.f32 %v2942, %v2883
        %v2944 = vmul.f32 %v2942, %v2884
        %v2945 = vadd.f32 %v2921, %v2943
        %v2946 = vadd.f32 %v2922, %v2944
        %s2947 = sld [smem:[#allocation15 + $0x5a]]
        %v2948 = vstv %s2947
        %v2949 = vmul.f32 %v2948, %v2883
        %v2950 = vmul.f32 %v2948, %v2884
        %v2951 = vadd.f32 %v2927, %v2949
        %v2952 = vadd.f32 %v2928, %v2950
        %s2953 = sld [smem:[#allocation15 + $0x7e]]
        %v2954 = vstv %s2953
        %v2955 = vmul.f32 %v2954, %v2883
        %v2956 = vmul.f32 %v2954, %v2884
        %v2957 = vadd.f32 %v2933, %v2955
        %v2958 = vadd.f32 %v2934, %v2956
        %s2959 = sld [smem:[#allocation15 + $0x1b]]
        %v2960 = vstv %s2959
        %v2961 = vmul.f32 %v2960, %v2885
        %v2962 = vmul.f32 %v2960, %v2886
        %v2963 = vadd.f32 %v2939, %v2961
        %v2964 = vadd.f32 %v2940, %v2962
        %s2965 = sld [smem:[#allocation15 + $0x3f]]
        %v2966 = vstv %s2965
        %v2967 = vmul.f32 %v2966, %v2885
        %v2968 = vmul.f32 %v2966, %v2886
        %v2969 = vadd.f32 %v2945, %v2967
        %v2970 = vadd.f32 %v2946, %v2968
        %s2971 = sld [smem:[#allocation15 + $0x63]]
        %v2972 = vstv %s2971
        %v2973 = vmul.f32 %v2972, %v2885
        %v2974 = vmul.f32 %v2972, %v2886
        %v2975 = vadd.f32 %v2951, %v2973
        %v2976 = vadd.f32 %v2952, %v2974
        %s2977 = sld [smem:[#allocation15 + $0x87]]
        %v2978 = vstv %s2977
        %v2979 = vmul.f32 %v2978, %v2885
        %v2980 = vmul.f32 %v2978, %v2886
        %v2981 = vadd.f32 %v2957, %v2979
        %v2982 = vadd.f32 %v2958, %v2980
        %2983 = vrot.lane.b32.xlu0 %v2827, 16
        %v2984 = vpop.permute.xlu0 %2983
        %2985 = vrot.lane.b32.xlu0 %v2833, 16
        %v2986 = vpop.permute.xlu0 %2985
        %2987 = vrot.lane.b32.xlu0 %v2839, 16
        %v2988 = vpop.permute.xlu0 %2987
        %2989 = vrot.lane.b32.xlu0 %v2845, 16
        %v2990 = vpop.permute.xlu0 %2989
        %2991 = vrot.lane.b32.xlu0 %v2828, 16
        %v2992 = vpop.permute.xlu0 %2991
        %2993 = vrot.lane.b32.xlu0 %v2834, 16
        %v2994 = vpop.permute.xlu0 %2993
        %2995 = vrot.lane.b32.xlu0 %v2840, 16
        %v2996 = vpop.permute.xlu0 %2995
        %2997 = vrot.lane.b32.xlu0 %v2846, 16
        %v2998 = vpop.permute.xlu0 %2997
        %v2999 = vsel %vm645, %v2984, %v2992
        %v3000 = vsel %vm645, %v2986, %v2994
        %v3001 = vsel %vm645, %v2988, %v2996
        %v3002 = vsel %vm645, %v2990, %v2998
        %v3003 = vsel %vm645, %v2992, %v2984
        %v3004 = vsel %vm645, %v2994, %v2986
        %v3005 = vsel %vm645, %v2996, %v2988
        %v3006 = vsel %vm645, %v2998, %v2990
        %v3007 = vmul.f32 %v3003, %v660
        %v3008 = vmul.f32 %v2999, %v664
        %v3009 = vmul.f32 %v3004, %v660
        %v3010 = vmul.f32 %v3000, %v664
        %v3011 = vmul.f32 %v3005, %v660
        %v3012 = vmul.f32 %v3001, %v664
        %v3013 = vmul.f32 %v3006, %v660
        %v3014 = vmul.f32 %v3002, %v664
        %s3015 = sld [smem:[#allocation15 + $0x1]]
        %v3016 = vstv %s3015
        %v3017 = vmul.f32 %v3016, %v3007
        %v3018 = vmul.f32 %v3016, %v3008
        %v3019 = vadd.f32 %v2963, %v3017
        %v3020 = vadd.f32 %v2964, %v3018
        %s3021 = sld [smem:[#allocation15 + $0x25]]
        %v3022 = vstv %s3021
        %v3023 = vmul.f32 %v3022, %v3007
        %v3024 = vmul.f32 %v3022, %v3008
        %v3025 = vadd.f32 %v2969, %v3023
        %v3026 = vadd.f32 %v2970, %v3024
        %s3027 = sld [smem:[#allocation15 + $0x49]]
        %v3028 = vstv %s3027
        %v3029 = vmul.f32 %v3028, %v3007
        %v3030 = vmul.f32 %v3028, %v3008
        %v3031 = vadd.f32 %v2975, %v3029
        %v3032 = vadd.f32 %v2976, %v3030
        %s3033 = sld [smem:[#allocation15 + $0x6d]]
        %v3034 = vstv %s3033
        %v3035 = vmul.f32 %v3034, %v3007
        %v3036 = vmul.f32 %v3034, %v3008
        %v3037 = vadd.f32 %v2981, %v3035
        %v3038 = vadd.f32 %v2982, %v3036
        %s3039 = sld [smem:[#allocation15 + $0xa]]
        %v3040 = vstv %s3039
        %v3041 = vmul.f32 %v3040, %v3009
        %v3042 = vmul.f32 %v3040, %v3010
        %v3043 = vadd.f32 %v3019, %v3041
        %v3044 = vadd.f32 %v3020, %v3042
        %s3045 = sld [smem:[#allocation15 + $0x2e]]
        %v3046 = vstv %s3045
        %v3047 = vmul.f32 %v3046, %v3009
        %v3048 = vmul.f32 %v3046, %v3010
        %v3049 = vadd.f32 %v3025, %v3047
        %v3050 = vadd.f32 %v3026, %v3048
        %s3051 = sld [smem:[#allocation15 + $0x52]]
        %v3052 = vstv %s3051
        %v3053 = vmul.f32 %v3052, %v3009
        %v3054 = vmul.f32 %v3052, %v3010
        %v3055 = vadd.f32 %v3031, %v3053
        %v3056 = vadd.f32 %v3032, %v3054
        %s3057 = sld [smem:[#allocation15 + $0x76]]
        %v3058 = vstv %s3057
        %v3059 = vmul.f32 %v3058, %v3009
        %v3060 = vmul.f32 %v3058, %v3010
        %v3061 = vadd.f32 %v3037, %v3059
        %v3062 = vadd.f32 %v3038, %v3060
        %s3063 = sld [smem:[#allocation15 + $0x13]]
        %v3064 = vstv %s3063
        %v3065 = vmul.f32 %v3064, %v3011
        %v3066 = vmul.f32 %v3064, %v3012
        %v3067 = vadd.f32 %v3043, %v3065
        %v3068 = vadd.f32 %v3044, %v3066
        %s3069 = sld [smem:[#allocation15 + $0x37]]
        %v3070 = vstv %s3069
        %v3071 = vmul.f32 %v3070, %v3011
        %v3072 = vmul.f32 %v3070, %v3012
        %v3073 = vadd.f32 %v3049, %v3071
        %v3074 = vadd.f32 %v3050, %v3072
        %s3075 = sld [smem:[#allocation15 + $0x5b]]
        %v3076 = vstv %s3075
        %v3077 = vmul.f32 %v3076, %v3011
        %v3078 = vmul.f32 %v3076, %v3012
        %v3079 = vadd.f32 %v3055, %v3077
        %v3080 = vadd.f32 %v3056, %v3078
        %s3081 = sld [smem:[#allocation15 + $0x7f]]
        %v3082 = vstv %s3081
        %v3083 = vmul.f32 %v3082, %v3011
        %v3084 = vmul.f32 %v3082, %v3012
        %v3085 = vadd.f32 %v3061, %v3083
        %v3086 = vadd.f32 %v3062, %v3084
        %s3087 = sld [smem:[#allocation15 + $0x1c]]
        %v3088 = vstv %s3087
        %v3089 = vmul.f32 %v3088, %v3013
        %v3090 = vmul.f32 %v3088, %v3014
        %v3091 = vadd.f32 %v3067, %v3089
        %v3092 = vadd.f32 %v3068, %v3090
        %s3093 = sld [smem:[#allocation15 + $0x40]]
        %v3094 = vstv %s3093
        %v3095 = vmul.f32 %v3094, %v3013
        %v3096 = vmul.f32 %v3094, %v3014
        %v3097 = vadd.f32 %v3073, %v3095
        %v3098 = vadd.f32 %v3074, %v3096
        %s3099 = sld [smem:[#allocation15 + $0x64]]
        %v3100 = vstv %s3099
        %v3101 = vmul.f32 %v3100, %v3013
        %v3102 = vmul.f32 %v3100, %v3014
        %v3103 = vadd.f32 %v3079, %v3101
        %v3104 = vadd.f32 %v3080, %v3102
        %s3105 = sld [smem:[#allocation15 + $0x88]]
        %v3106 = vstv %s3105
        %v3107 = vmul.f32 %v3106, %v3013
        %v3108 = vmul.f32 %v3106, %v3014
        %v3109 = vadd.f32 %v3085, %v3107
        %v3110 = vadd.f32 %v3086, %v3108
        %3111 = vrot.lane.b32.xlu0 %v2827, 15
        %v3112 = vpop.permute.xlu0 %3111
        %3113 = vrot.lane.b32.xlu0 %v2833, 15
        %v3114 = vpop.permute.xlu0 %3113
        %3115 = vrot.lane.b32.xlu0 %v2839, 15
        %v3116 = vpop.permute.xlu0 %3115
        %3117 = vrot.lane.b32.xlu0 %v2845, 15
        %v3118 = vpop.permute.xlu0 %3117
        %3119 = vrot.lane.b32.xlu0 %v2828, 15
        %v3120 = vpop.permute.xlu0 %3119
        %3121 = vrot.lane.b32.xlu0 %v2834, 15
        %v3122 = vpop.permute.xlu0 %3121
        %3123 = vrot.lane.b32.xlu0 %v2840, 15
        %v3124 = vpop.permute.xlu0 %3123
        %3125 = vrot.lane.b32.xlu0 %v2846, 15
        %v3126 = vpop.permute.xlu0 %3125
        %v3127 = vsel %vm787, %v3112, %v3120
        %v3128 = vsel %vm787, %v3114, %v3122
        %v3129 = vsel %vm787, %v3116, %v3124
        %v3130 = vsel %vm787, %v3118, %v3126
        %v3131 = vsel %vm787, %v3120, %v3112
        %v3132 = vsel %vm787, %v3122, %v3114
        %v3133 = vsel %vm787, %v3124, %v3116
        %v3134 = vsel %vm787, %v3126, %v3118
        %v3135 = vmul.f32 %v3131, %v802
        %v3136 = vmul.f32 %v3127, %v806
        %v3137 = vmul.f32 %v3132, %v802
        %v3138 = vmul.f32 %v3128, %v806
        %v3139 = vmul.f32 %v3133, %v802
        %v3140 = vmul.f32 %v3129, %v806
        %v3141 = vmul.f32 %v3134, %v802
        %v3142 = vmul.f32 %v3130, %v806
        %s3143 = sld [smem:[#allocation15 + $0x2]]
        %v3144 = vstv %s3143
        %v3145 = vmul.f32 %v3144, %v3135
        %v3146 = vmul.f32 %v3144, %v3136
        %v3147 = vadd.f32 %v3091, %v3145
        %v3148 = vadd.f32 %v3092, %v3146
        %s3149 = sld [smem:[#allocation15 + $0x26]]
        %v3150 = vstv %s3149
        %v3151 = vmul.f32 %v3150, %v3135
        %v3152 = vmul.f32 %v3150, %v3136
        %v3153 = vadd.f32 %v3097, %v3151
        %v3154 = vadd.f32 %v3098, %v3152
        %s3155 = sld [smem:[#allocation15 + $0x4a]]
        %v3156 = vstv %s3155
        %v3157 = vmul.f32 %v3156, %v3135
        %v3158 = vmul.f32 %v3156, %v3136
        %v3159 = vadd.f32 %v3103, %v3157
        %v3160 = vadd.f32 %v3104, %v3158
        %s3161 = sld [smem:[#allocation15 + $0x6e]]
        %v3162 = vstv %s3161
        %v3163 = vmul.f32 %v3162, %v3135
        %v3164 = vmul.f32 %v3162, %v3136
        %v3165 = vadd.f32 %v3109, %v3163
        %v3166 = vadd.f32 %v3110, %v3164
        %s3167 = sld [smem:[#allocation15 + $0xb]]
        %v3168 = vstv %s3167
        %v3169 = vmul.f32 %v3168, %v3137
        %v3170 = vmul.f32 %v3168, %v3138
        %v3171 = vadd.f32 %v3147, %v3169
        %v3172 = vadd.f32 %v3148, %v3170
        %s3173 = sld [smem:[#allocation15 + $0x2f]]
        %v3174 = vstv %s3173
        %v3175 = vmul.f32 %v3174, %v3137
        %v3176 = vmul.f32 %v3174, %v3138
        %v3177 = vadd.f32 %v3153, %v3175
        %v3178 = vadd.f32 %v3154, %v3176
        %s3179 = sld [smem:[#allocation15 + $0x53]]
        %v3180 = vstv %s3179
        %v3181 = vmul.f32 %v3180, %v3137
        %v3182 = vmul.f32 %v3180, %v3138
        %v3183 = vadd.f32 %v3159, %v3181
        %v3184 = vadd.f32 %v3160, %v3182
        %s3185 = sld [smem:[#allocation15 + $0x77]]
        %v3186 = vstv %s3185
        %v3187 = vmul.f32 %v3186, %v3137
        %v3188 = vmul.f32 %v3186, %v3138
        %v3189 = vadd.f32 %v3165, %v3187
        %v3190 = vadd.f32 %v3166, %v3188
        %s3191 = sld [smem:[#allocation15 + $0x14]]
        %v3192 = vstv %s3191
        %v3193 = vmul.f32 %v3192, %v3139
        %v3194 = vmul.f32 %v3192, %v3140
        %v3195 = vadd.f32 %v3171, %v3193
        %v3196 = vadd.f32 %v3172, %v3194
        %s3197 = sld [smem:[#allocation15 + $0x38]]
        %v3198 = vstv %s3197
        %v3199 = vmul.f32 %v3198, %v3139
        %v3200 = vmul.f32 %v3198, %v3140
        %v3201 = vadd.f32 %v3177, %v3199
        %v3202 = vadd.f32 %v3178, %v3200
        %s3203 = sld [smem:[#allocation15 + $0x5c]]
        %v3204 = vstv %s3203
        %v3205 = vmul.f32 %v3204, %v3139
        %v3206 = vmul.f32 %v3204, %v3140
        %v3207 = vadd.f32 %v3183, %v3205
        %v3208 = vadd.f32 %v3184, %v3206
        %s3209 = sld [smem:[#allocation15 + $0x80]]
        %v3210 = vstv %s3209
        %v3211 = vmul.f32 %v3210, %v3139
        %v3212 = vmul.f32 %v3210, %v3140
        %v3213 = vadd.f32 %v3189, %v3211
        %v3214 = vadd.f32 %v3190, %v3212
        %s3215 = sld [smem:[#allocation15 + $0x1d]]
        %v3216 = vstv %s3215
        %v3217 = vmul.f32 %v3216, %v3141
        %v3218 = vmul.f32 %v3216, %v3142
        %v3219 = vadd.f32 %v3195, %v3217
        %v3220 = vadd.f32 %v3196, %v3218
        %s3221 = sld [smem:[#allocation15 + $0x41]]
        %v3222 = vstv %s3221
        %v3223 = vmul.f32 %v3222, %v3141
        %v3224 = vmul.f32 %v3222, %v3142
        %v3225 = vadd.f32 %v3201, %v3223
        %v3226 = vadd.f32 %v3202, %v3224
        %s3227 = sld [smem:[#allocation15 + $0x65]]
        %v3228 = vstv %s3227
        %v3229 = vmul.f32 %v3228, %v3141
        %v3230 = vmul.f32 %v3228, %v3142
        %v3231 = vadd.f32 %v3207, %v3229
        %v3232 = vadd.f32 %v3208, %v3230
        %s3233 = sld [smem:[#allocation15 + $0x89]]
        %v3234 = vstv %s3233
        %v3235 = vmul.f32 %v3234, %v3141
        %v3236 = vmul.f32 %v3234, %v3142
        %v3237 = vadd.f32 %v3213, %v3235
        %v3238 = vadd.f32 %v3214, %v3236
        %3239 = vrot.lane.b32.xlu0 %v2827, 1
        %v3240 = vpop.permute.xlu0 %3239
        %3241 = vrot.lane.b32.xlu0 %v2833, 1
        %v3242 = vpop.permute.xlu0 %3241
        %3243 = vrot.lane.b32.xlu0 %v2839, 1
        %v3244 = vpop.permute.xlu0 %3243
        %3245 = vrot.lane.b32.xlu0 %v2845, 1
        %v3246 = vpop.permute.xlu0 %3245
        %3247 = vrot.lane.b32.xlu0 %v2828, 1
        %v3248 = vpop.permute.xlu0 %3247
        %3249 = vrot.lane.b32.xlu0 %v2834, 1
        %v3250 = vpop.permute.xlu0 %3249
        %3251 = vrot.lane.b32.xlu0 %v2840, 1
        %v3252 = vpop.permute.xlu0 %3251
        %3253 = vrot.lane.b32.xlu0 %v2846, 1
        %v3254 = vpop.permute.xlu0 %3253
        %v3255 = vsel %vm929, %v3240, %v3248
        %v3256 = vsel %vm929, %v3242, %v3250
        %v3257 = vsel %vm929, %v3244, %v3252
        %v3258 = vsel %vm929, %v3246, %v3254
        %v3259 = vsel %vm929, %v3248, %v3240
        %v3260 = vsel %vm929, %v3250, %v3242
        %v3261 = vsel %vm929, %v3252, %v3244
        %v3262 = vsel %vm929, %v3254, %v3246
        %v3263 = vmul.f32 %v3259, %v944
        %v3264 = vmul.f32 %v3255, %v948
        %v3265 = vmul.f32 %v3260, %v944
        %v3266 = vmul.f32 %v3256, %v948
        %v3267 = vmul.f32 %v3261, %v944
        %v3268 = vmul.f32 %v3257, %v948
        %v3269 = vmul.f32 %v3262, %v944
        %v3270 = vmul.f32 %v3258, %v948
        %s3271 = sld [smem:[#allocation15 + $0x3]]
        %v3272 = vstv %s3271
        %v3273 = vmul.f32 %v3272, %v3263
        %v3274 = vmul.f32 %v3272, %v3264
        %v3275 = vadd.f32 %v3219, %v3273
        %v3276 = vadd.f32 %v3220, %v3274
        %s3277 = sld [smem:[#allocation15 + $0x27]]
        %v3278 = vstv %s3277
        %v3279 = vmul.f32 %v3278, %v3263
        %v3280 = vmul.f32 %v3278, %v3264
        %v3281 = vadd.f32 %v3225, %v3279
        %v3282 = vadd.f32 %v3226, %v3280
        %s3283 = sld [smem:[#allocation15 + $0x4b]]
        %v3284 = vstv %s3283
        %v3285 = vmul.f32 %v3284, %v3263
        %v3286 = vmul.f32 %v3284, %v3264
        %v3287 = vadd.f32 %v3231, %v3285
        %v3288 = vadd.f32 %v3232, %v3286
        %s3289 = sld [smem:[#allocation15 + $0x6f]]
        %v3290 = vstv %s3289
        %v3291 = vmul.f32 %v3290, %v3263
        %v3292 = vmul.f32 %v3290, %v3264
        %v3293 = vadd.f32 %v3237, %v3291
        %v3294 = vadd.f32 %v3238, %v3292
        %s3295 = sld [smem:[#allocation15 + $0xc]]
        %v3296 = vstv %s3295
        %v3297 = vmul.f32 %v3296, %v3265
        %v3298 = vmul.f32 %v3296, %v3266
        %v3299 = vadd.f32 %v3275, %v3297
        %v3300 = vadd.f32 %v3276, %v3298
        %s3301 = sld [smem:[#allocation15 + $0x30]]
        %v3302 = vstv %s3301
        %v3303 = vmul.f32 %v3302, %v3265
        %v3304 = vmul.f32 %v3302, %v3266
        %v3305 = vadd.f32 %v3281, %v3303
        %v3306 = vadd.f32 %v3282, %v3304
        %s3307 = sld [smem:[#allocation15 + $0x54]]
        %v3308 = vstv %s3307
        %v3309 = vmul.f32 %v3308, %v3265
        %v3310 = vmul.f32 %v3308, %v3266
        %v3311 = vadd.f32 %v3287, %v3309
        %v3312 = vadd.f32 %v3288, %v3310
        %s3313 = sld [smem:[#allocation15 + $0x78]]
        %v3314 = vstv %s3313
        %v3315 = vmul.f32 %v3314, %v3265
        %v3316 = vmul.f32 %v3314, %v3266
        %v3317 = vadd.f32 %v3293, %v3315
        %v3318 = vadd.f32 %v3294, %v3316
        %s3319 = sld [smem:[#allocation15 + $0x15]]
        %v3320 = vstv %s3319
        %v3321 = vmul.f32 %v3320, %v3267
        %v3322 = vmul.f32 %v3320, %v3268
        %v3323 = vadd.f32 %v3299, %v3321
        %v3324 = vadd.f32 %v3300, %v3322
        %s3325 = sld [smem:[#allocation15 + $0x39]]
        %v3326 = vstv %s3325
        %v3327 = vmul.f32 %v3326, %v3267
        %v3328 = vmul.f32 %v3326, %v3268
        %v3329 = vadd.f32 %v3305, %v3327
        %v3330 = vadd.f32 %v3306, %v3328
        %s3331 = sld [smem:[#allocation15 + $0x5d]]
        %v3332 = vstv %s3331
        %v3333 = vmul.f32 %v3332, %v3267
        %v3334 = vmul.f32 %v3332, %v3268
        %v3335 = vadd.f32 %v3311, %v3333
        %v3336 = vadd.f32 %v3312, %v3334
        %s3337 = sld [smem:[#allocation15 + $0x81]]
        %v3338 = vstv %s3337
        %v3339 = vmul.f32 %v3338, %v3267
        %v3340 = vmul.f32 %v3338, %v3268
        %v3341 = vadd.f32 %v3317, %v3339
        %v3342 = vadd.f32 %v3318, %v3340
        %s3343 = sld [smem:[#allocation15 + $0x1e]]
        %v3344 = vstv %s3343
        %v3345 = vmul.f32 %v3344, %v3269
        %v3346 = vmul.f32 %v3344, %v3270
        %v3347 = vadd.f32 %v3323, %v3345
        %v3348 = vadd.f32 %v3324, %v3346
        %s3349 = sld [smem:[#allocation15 + $0x42]]
        %v3350 = vstv %s3349
        %v3351 = vmul.f32 %v3350, %v3269
        %v3352 = vmul.f32 %v3350, %v3270
        %v3353 = vadd.f32 %v3329, %v3351
        %v3354 = vadd.f32 %v3330, %v3352
        %s3355 = sld [smem:[#allocation15 + $0x66]]
        %v3356 = vstv %s3355
        %v3357 = vmul.f32 %v3356, %v3269
        %v3358 = vmul.f32 %v3356, %v3270
        %v3359 = vadd.f32 %v3335, %v3357
        %v3360 = vadd.f32 %v3336, %v3358
        %s3361 = sld [smem:[#allocation15 + $0x8a]]
        %v3362 = vstv %s3361
        %v3363 = vmul.f32 %v3362, %v3269
        %v3364 = vmul.f32 %v3362, %v3270
        %v3365 = vadd.f32 %v3341, %v3363
        %v3366 = vadd.f32 %v3342, %v3364
        %s3367 = sld [smem:[#allocation15 + $0x4]]
        %v3368 = vstv %s3367
        %v3369 = vmul.f32 %v3368, %v2827
        %v3370 = vmul.f32 %v3368, %v2828
        %v3371 = vadd.f32 %v3347, %v3369
        %v3372 = vadd.f32 %v3348, %v3370
        %s3373 = sld [smem:[#allocation15 + $0x28]]
        %v3374 = vstv %s3373
        %v3375 = vmul.f32 %v3374, %v2827
        %v3376 = vmul.f32 %v3374, %v2828
        %v3377 = vadd.f32 %v3353, %v3375
        %v3378 = vadd.f32 %v3354, %v3376
        %s3379 = sld [smem:[#allocation15 + $0x4c]]
        %v3380 = vstv %s3379
        %v3381 = vmul.f32 %v3380, %v2827
        %v3382 = vmul.f32 %v3380, %v2828
        %v3383 = vadd.f32 %v3359, %v3381
        %v3384 = vadd.f32 %v3360, %v3382
        %s3385 = sld [smem:[#allocation15 + $0x70]]
        %v3386 = vstv %s3385
        %v3387 = vmul.f32 %v3386, %v2827
        %v3388 = vmul.f32 %v3386, %v2828
        %v3389 = vadd.f32 %v3365, %v3387
        %v3390 = vadd.f32 %v3366, %v3388
        %s3391 = sld [smem:[#allocation15 + $0xd]]
        %v3392 = vstv %s3391
        %v3393 = vmul.f32 %v3392, %v2833
        %v3394 = vmul.f32 %v3392, %v2834
        %v3395 = vadd.f32 %v3371, %v3393
        %v3396 = vadd.f32 %v3372, %v3394
        %s3397 = sld [smem:[#allocation15 + $0x31]]
        %v3398 = vstv %s3397
        %v3399 = vmul.f32 %v3398, %v2833
        %v3400 = vmul.f32 %v3398, %v2834
        %v3401 = vadd.f32 %v3377, %v3399
        %v3402 = vadd.f32 %v3378, %v3400
        %s3403 = sld [smem:[#allocation15 + $0x55]]
        %v3404 = vstv %s3403
        %v3405 = vmul.f32 %v3404, %v2833
        %v3406 = vmul.f32 %v3404, %v2834
        %v3407 = vadd.f32 %v3383, %v3405
        %v3408 = vadd.f32 %v3384, %v3406
        %s3409 = sld [smem:[#allocation15 + $0x79]]
        %v3410 = vstv %s3409
        %v3411 = vmul.f32 %v3410, %v2833
        %v3412 = vmul.f32 %v3410, %v2834
        %v3413 = vadd.f32 %v3389, %v3411
        %v3414 = vadd.f32 %v3390, %v3412
        %s3415 = sld [smem:[#allocation15 + $0x16]]
        %v3416 = vstv %s3415
        %v3417 = vmul.f32 %v3416, %v2839
        %v3418 = vmul.f32 %v3416, %v2840
        %v3419 = vadd.f32 %v3395, %v3417
        %v3420 = vadd.f32 %v3396, %v3418
        %s3421 = sld [smem:[#allocation15 + $0x3a]]
        %v3422 = vstv %s3421
        %v3423 = vmul.f32 %v3422, %v2839
        %v3424 = vmul.f32 %v3422, %v2840
        %v3425 = vadd.f32 %v3401, %v3423
        %v3426 = vadd.f32 %v3402, %v3424
        %s3427 = sld [smem:[#allocation15 + $0x5e]]
        %v3428 = vstv %s3427
        %v3429 = vmul.f32 %v3428, %v2839
        %v3430 = vmul.f32 %v3428, %v2840
        %v3431 = vadd.f32 %v3407, %v3429
        %v3432 = vadd.f32 %v3408, %v3430
        %s3433 = sld [smem:[#allocation15 + $0x82]]
        %v3434 = vstv %s3433
        %v3435 = vmul.f32 %v3434, %v2839
        %v3436 = vmul.f32 %v3434, %v2840
        %v3437 = vadd.f32 %v3413, %v3435
        %v3438 = vadd.f32 %v3414, %v3436
        %s3439 = sld [smem:[#allocation15 + $0x1f]]
        %v3440 = vstv %s3439
        %v3441 = vmul.f32 %v3440, %v2845
        %v3442 = vmul.f32 %v3440, %v2846
        %v3443 = vadd.f32 %v3419, %v3441
        %v3444 = vadd.f32 %v3420, %v3442
        %s3445 = sld [smem:[#allocation15 + $0x43]]
        %v3446 = vstv %s3445
        %v3447 = vmul.f32 %v3446, %v2845
        %v3448 = vmul.f32 %v3446, %v2846
        %v3449 = vadd.f32 %v3425, %v3447
        %v3450 = vadd.f32 %v3426, %v3448
        %s3451 = sld [smem:[#allocation15 + $0x67]]
        %v3452 = vstv %s3451
        %v3453 = vmul.f32 %v3452, %v2845
        %v3454 = vmul.f32 %v3452, %v2846
        %v3455 = vadd.f32 %v3431, %v3453
        %v3456 = vadd.f32 %v3432, %v3454
        %s3457 = sld [smem:[#allocation15 + $0x8b]]
        %v3458 = vstv %s3457
        %v3459 = vmul.f32 %v3458, %v2845
        %v3460 = vmul.f32 %v3458, %v2846
        %v3461 = vadd.f32 %v3437, %v3459
        %v3462 = vadd.f32 %v3438, %v3460
        %3463 = vrot.lane.b32.xlu0 %v2827, 127
        %v3464 = vpop.permute.xlu0 %3463
        %3465 = vrot.lane.b32.xlu0 %v2833, 127
        %v3466 = vpop.permute.xlu0 %3465
        %3467 = vrot.lane.b32.xlu0 %v2839, 127
        %v3468 = vpop.permute.xlu0 %3467
        %3469 = vrot.lane.b32.xlu0 %v2845, 127
        %v3470 = vpop.permute.xlu0 %3469
        %3471 = vrot.lane.b32.xlu0 %v2828, 127
        %v3472 = vpop.permute.xlu0 %3471
        %3473 = vrot.lane.b32.xlu0 %v2834, 127
        %v3474 = vpop.permute.xlu0 %3473
        %3475 = vrot.lane.b32.xlu0 %v2840, 127
        %v3476 = vpop.permute.xlu0 %3475
        %3477 = vrot.lane.b32.xlu0 %v2846, 127
        %v3478 = vpop.permute.xlu0 %3477
        %v3479 = vsel %vm1167, %v3464, %v3472
        %v3480 = vsel %vm1167, %v3466, %v3474
        %v3481 = vsel %vm1167, %v3468, %v3476
        %v3482 = vsel %vm1167, %v3470, %v3478
        %v3483 = vsel %vm1167, %v3472, %v3464
        %v3484 = vsel %vm1167, %v3474, %v3466
        %v3485 = vsel %vm1167, %v3476, %v3468
        %v3486 = vsel %vm1167, %v3478, %v3470
        %v3487 = vmul.f32 %v3479, %v1182
        %v3488 = vmul.f32 %v3483, %v1186
        %v3489 = vmul.f32 %v3480, %v1182
        %v3490 = vmul.f32 %v3484, %v1186
        %v3491 = vmul.f32 %v3481, %v1182
        %v3492 = vmul.f32 %v3485, %v1186
        %v3493 = vmul.f32 %v3482, %v1182
        %v3494 = vmul.f32 %v3486, %v1186
        %s3495 = sld [smem:[#allocation15 + $0x5]]
        %v3496 = vstv %s3495
        %v3497 = vmul.f32 %v3496, %v3487
        %v3498 = vmul.f32 %v3496, %v3488
        %v3499 = vadd.f32 %v3443, %v3497
        %v3500 = vadd.f32 %v3444, %v3498
        %s3501 = sld [smem:[#allocation15 + $0x29]]
        %v3502 = vstv %s3501
        %v3503 = vmul.f32 %v3502, %v3487
        %v3504 = vmul.f32 %v3502, %v3488
        %v3505 = vadd.f32 %v3449, %v3503
        %v3506 = vadd.f32 %v3450, %v3504
        %s3507 = sld [smem:[#allocation15 + $0x4d]]
        %v3508 = vstv %s3507
        %v3509 = vmul.f32 %v3508, %v3487
        %v3510 = vmul.f32 %v3508, %v3488
        %v3511 = vadd.f32 %v3455, %v3509
        %v3512 = vadd.f32 %v3456, %v3510
        %s3513 = sld [smem:[#allocation15 + $0x71]]
        %v3514 = vstv %s3513
        %v3515 = vmul.f32 %v3514, %v3487
        %v3516 = vmul.f32 %v3514, %v3488
        %v3517 = vadd.f32 %v3461, %v3515
        %v3518 = vadd.f32 %v3462, %v3516
        %s3519 = sld [smem:[#allocation15 + $0xe]]
        %v3520 = vstv %s3519
        %v3521 = vmul.f32 %v3520, %v3489
        %v3522 = vmul.f32 %v3520, %v3490
        %v3523 = vadd.f32 %v3499, %v3521
        %v3524 = vadd.f32 %v3500, %v3522
        %s3525 = sld [smem:[#allocation15 + $0x32]]
        %v3526 = vstv %s3525
        %v3527 = vmul.f32 %v3526, %v3489
        %v3528 = vmul.f32 %v3526, %v3490
        %v3529 = vadd.f32 %v3505, %v3527
        %v3530 = vadd.f32 %v3506, %v3528
        %s3531 = sld [smem:[#allocation15 + $0x56]]
        %v3532 = vstv %s3531
        %v3533 = vmul.f32 %v3532, %v3489
        %v3534 = vmul.f32 %v3532, %v3490
        %v3535 = vadd.f32 %v3511, %v3533
        %v3536 = vadd.f32 %v3512, %v3534
        %s3537 = sld [smem:[#allocation15 + $0x7a]]
        %v3538 = vstv %s3537
        %v3539 = vmul.f32 %v3538, %v3489
        %v3540 = vmul.f32 %v3538, %v3490
        %v3541 = vadd.f32 %v3517, %v3539
        %v3542 = vadd.f32 %v3518, %v3540
        %s3543 = sld [smem:[#allocation15 + $0x17]]
        %v3544 = vstv %s3543
        %v3545 = vmul.f32 %v3544, %v3491
        %v3546 = vmul.f32 %v3544, %v3492
        %v3547 = vadd.f32 %v3523, %v3545
        %v3548 = vadd.f32 %v3524, %v3546
        %s3549 = sld [smem:[#allocation15 + $0x3b]]
        %v3550 = vstv %s3549
        %v3551 = vmul.f32 %v3550, %v3491
        %v3552 = vmul.f32 %v3550, %v3492
        %v3553 = vadd.f32 %v3529, %v3551
        %v3554 = vadd.f32 %v3530, %v3552
        %s3555 = sld [smem:[#allocation15 + $0x5f]]
        %v3556 = vstv %s3555
        %v3557 = vmul.f32 %v3556, %v3491
        %v3558 = vmul.f32 %v3556, %v3492
        %v3559 = vadd.f32 %v3535, %v3557
        %v3560 = vadd.f32 %v3536, %v3558
        %s3561 = sld [smem:[#allocation15 + $0x83]]
        %v3562 = vstv %s3561
        %v3563 = vmul.f32 %v3562, %v3491
        %v3564 = vmul.f32 %v3562, %v3492
        %v3565 = vadd.f32 %v3541, %v3563
        %v3566 = vadd.f32 %v3542, %v3564
        %s3567 = sld [smem:[#allocation15 + $0x20]]
        %v3568 = vstv %s3567
        %v3569 = vmul.f32 %v3568, %v3493
        %v3570 = vmul.f32 %v3568, %v3494
        %v3571 = vadd.f32 %v3547, %v3569
        %v3572 = vadd.f32 %v3548, %v3570
        %s3573 = sld [smem:[#allocation15 + $0x44]]
        %v3574 = vstv %s3573
        %v3575 = vmul.f32 %v3574, %v3493
        %v3576 = vmul.f32 %v3574, %v3494
        %v3577 = vadd.f32 %v3553, %v3575
        %v3578 = vadd.f32 %v3554, %v3576
        %s3579 = sld [smem:[#allocation15 + $0x68]]
        %v3580 = vstv %s3579
        %v3581 = vmul.f32 %v3580, %v3493
        %v3582 = vmul.f32 %v3580, %v3494
        %v3583 = vadd.f32 %v3559, %v3581
        %v3584 = vadd.f32 %v3560, %v3582
        %s3585 = sld [smem:[#allocation15 + $0x8c]]
        %v3586 = vstv %s3585
        %v3587 = vmul.f32 %v3586, %v3493
        %v3588 = vmul.f32 %v3586, %v3494
        %v3589 = vadd.f32 %v3565, %v3587
        %v3590 = vadd.f32 %v3566, %v3588
        %3591 = vrot.lane.b32.xlu0 %v2827, 113
        %v3592 = vpop.permute.xlu0 %3591
        %3593 = vrot.lane.b32.xlu0 %v2833, 113
        %v3594 = vpop.permute.xlu0 %3593
        %3595 = vrot.lane.b32.xlu0 %v2839, 113
        %v3596 = vpop.permute.xlu0 %3595
        %3597 = vrot.lane.b32.xlu0 %v2845, 113
        %v3598 = vpop.permute.xlu0 %3597
        %3599 = vrot.lane.b32.xlu0 %v2828, 113
        %v3600 = vpop.permute.xlu0 %3599
        %3601 = vrot.lane.b32.xlu0 %v2834, 113
        %v3602 = vpop.permute.xlu0 %3601
        %3603 = vrot.lane.b32.xlu0 %v2840, 113
        %v3604 = vpop.permute.xlu0 %3603
        %3605 = vrot.lane.b32.xlu0 %v2846, 113
        %v3606 = vpop.permute.xlu0 %3605
        %v3607 = vsel %vm1309, %v3592, %v3600
        %v3608 = vsel %vm1309, %v3594, %v3602
        %v3609 = vsel %vm1309, %v3596, %v3604
        %v3610 = vsel %vm1309, %v3598, %v3606
        %v3611 = vsel %vm1309, %v3600, %v3592
        %v3612 = vsel %vm1309, %v3602, %v3594
        %v3613 = vsel %vm1309, %v3604, %v3596
        %v3614 = vsel %vm1309, %v3606, %v3598
        %v3615 = vmul.f32 %v3607, %v1324
        %v3616 = vmul.f32 %v3611, %v1328
        %v3617 = vmul.f32 %v3608, %v1324
        %v3618 = vmul.f32 %v3612, %v1328
        %v3619 = vmul.f32 %v3609, %v1324
        %v3620 = vmul.f32 %v3613, %v1328
        %v3621 = vmul.f32 %v3610, %v1324
        %v3622 = vmul.f32 %v3614, %v1328
        %s3623 = sld [smem:[#allocation15 + $0x6]]
        %v3624 = vstv %s3623
        %v3625 = vmul.f32 %v3624, %v3615
        %v3626 = vmul.f32 %v3624, %v3616
        %v3627 = vadd.f32 %v3571, %v3625
        %v3628 = vadd.f32 %v3572, %v3626
        %s3629 = sld [smem:[#allocation15 + $0x2a]]
        %v3630 = vstv %s3629
        %v3631 = vmul.f32 %v3630, %v3615
        %v3632 = vmul.f32 %v3630, %v3616
        %v3633 = vadd.f32 %v3577, %v3631
        %v3634 = vadd.f32 %v3578, %v3632
        %s3635 = sld [smem:[#allocation15 + $0x4e]]
        %v3636 = vstv %s3635
        %v3637 = vmul.f32 %v3636, %v3615
        %v3638 = vmul.f32 %v3636, %v3616
        %v3639 = vadd.f32 %v3583, %v3637
        %v3640 = vadd.f32 %v3584, %v3638
        %s3641 = sld [smem:[#allocation15 + $0x72]]
        %v3642 = vstv %s3641
        %v3643 = vmul.f32 %v3642, %v3615
        %v3644 = vmul.f32 %v3642, %v3616
        %v3645 = vadd.f32 %v3589, %v3643
        %v3646 = vadd.f32 %v3590, %v3644
        %s3647 = sld [smem:[#allocation15 + $0xf]]
        %v3648 = vstv %s3647
        %v3649 = vmul.f32 %v3648, %v3617
        %v3650 = vmul.f32 %v3648, %v3618
        %v3651 = vadd.f32 %v3627, %v3649
        %v3652 = vadd.f32 %v3628, %v3650
        %s3653 = sld [smem:[#allocation15 + $0x33]]
        %v3654 = vstv %s3653
        %v3655 = vmul.f32 %v3654, %v3617
        %v3656 = vmul.f32 %v3654, %v3618
        %v3657 = vadd.f32 %v3633, %v3655
        %v3658 = vadd.f32 %v3634, %v3656
        %s3659 = sld [smem:[#allocation15 + $0x57]]
        %v3660 = vstv %s3659
        %v3661 = vmul.f32 %v3660, %v3617
        %v3662 = vmul.f32 %v3660, %v3618
        %v3663 = vadd.f32 %v3639, %v3661
        %v3664 = vadd.f32 %v3640, %v3662
        %s3665 = sld [smem:[#allocation15 + $0x7b]]
        %v3666 = vstv %s3665
        %v3667 = vmul.f32 %v3666, %v3617
        %v3668 = vmul.f32 %v3666, %v3618
        %v3669 = vadd.f32 %v3645, %v3667
        %v3670 = vadd.f32 %v3646, %v3668
        %s3671 = sld [smem:[#allocation15 + $0x18]]
        %v3672 = vstv %s3671
        %v3673 = vmul.f32 %v3672, %v3619
        %v3674 = vmul.f32 %v3672, %v3620
        %v3675 = vadd.f32 %v3651, %v3673
        %v3676 = vadd.f32 %v3652, %v3674
        %s3677 = sld [smem:[#allocation15 + $0x3c]]
        %v3678 = vstv %s3677
        %v3679 = vmul.f32 %v3678, %v3619
        %v3680 = vmul.f32 %v3678, %v3620
        %v3681 = vadd.f32 %v3657, %v3679
        %v3682 = vadd.f32 %v3658, %v3680
        %s3683 = sld [smem:[#allocation15 + $0x60]]
        %v3684 = vstv %s3683
        %v3685 = vmul.f32 %v3684, %v3619
        %v3686 = vmul.f32 %v3684, %v3620
        %v3687 = vadd.f32 %v3663, %v3685
        %v3688 = vadd.f32 %v3664, %v3686
        %s3689 = sld [smem:[#allocation15 + $0x84]]
        %v3690 = vstv %s3689
        %v3691 = vmul.f32 %v3690, %v3619
        %v3692 = vmul.f32 %v3690, %v3620
        %v3693 = vadd.f32 %v3669, %v3691
        %v3694 = vadd.f32 %v3670, %v3692
        %s3695 = sld [smem:[#allocation15 + $0x21]]
        %v3696 = vstv %s3695
        %v3697 = vmul.f32 %v3696, %v3621
        %v3698 = vmul.f32 %v3696, %v3622
        %v3699 = vadd.f32 %v3675, %v3697
        %v3700 = vadd.f32 %v3676, %v3698
        %s3701 = sld [smem:[#allocation15 + $0x45]]
        %v3702 = vstv %s3701
        %v3703 = vmul.f32 %v3702, %v3621
        %v3704 = vmul.f32 %v3702, %v3622
        %v3705 = vadd.f32 %v3681, %v3703
        %v3706 = vadd.f32 %v3682, %v3704
        %s3707 = sld [smem:[#allocation15 + $0x69]]
        %v3708 = vstv %s3707
        %v3709 = vmul.f32 %v3708, %v3621
        %v3710 = vmul.f32 %v3708, %v3622
        %v3711 = vadd.f32 %v3687, %v3709
        %v3712 = vadd.f32 %v3688, %v3710
        %s3713 = sld [smem:[#allocation15 + $0x8d]]
        %v3714 = vstv %s3713
        %v3715 = vmul.f32 %v3714, %v3621
        %v3716 = vmul.f32 %v3714, %v3622
        %v3717 = vadd.f32 %v3693, %v3715
        %v3718 = vadd.f32 %v3694, %v3716
        %3719 = vrot.lane.b32.xlu0 %v2827, 112
        %v3720 = vpop.permute.xlu0 %3719
        %3721 = vrot.lane.b32.xlu0 %v2833, 112
        %v3722 = vpop.permute.xlu0 %3721
        %3723 = vrot.lane.b32.xlu0 %v2839, 112
        %v3724 = vpop.permute.xlu0 %3723
        %3725 = vrot.lane.b32.xlu0 %v2845, 112
        %v3726 = vpop.permute.xlu0 %3725
        %3727 = vrot.lane.b32.xlu0 %v2828, 112
        %v3728 = vpop.permute.xlu0 %3727
        %3729 = vrot.lane.b32.xlu0 %v2834, 112
        %v3730 = vpop.permute.xlu0 %3729
        %3731 = vrot.lane.b32.xlu0 %v2840, 112
        %v3732 = vpop.permute.xlu0 %3731
        %3733 = vrot.lane.b32.xlu0 %v2846, 112
        %v3734 = vpop.permute.xlu0 %3733
        %v3735 = vsel %vm1451, %v3720, %v3728
        %v3736 = vsel %vm1451, %v3722, %v3730
        %v3737 = vsel %vm1451, %v3724, %v3732
        %v3738 = vsel %vm1451, %v3726, %v3734
        %v3739 = vsel %vm1451, %v3728, %v3720
        %v3740 = vsel %vm1451, %v3730, %v3722
        %v3741 = vsel %vm1451, %v3732, %v3724
        %v3742 = vsel %vm1451, %v3734, %v3726
        %v3743 = vmul.f32 %v3735, %v1466
        %v3744 = vmul.f32 %v3739, %v1470
        %v3745 = vmul.f32 %v3736, %v1466
        %v3746 = vmul.f32 %v3740, %v1470
        %v3747 = vmul.f32 %v3737, %v1466
        %v3748 = vmul.f32 %v3741, %v1470
        %v3749 = vmul.f32 %v3738, %v1466
        %v3750 = vmul.f32 %v3742, %v1470
        %s3751 = sld [smem:[#allocation15 + $0x7]]
        %v3752 = vstv %s3751
        %v3753 = vmul.f32 %v3752, %v3743
        %v3754 = vmul.f32 %v3752, %v3744
        %v3755 = vadd.f32 %v3699, %v3753
        %v3756 = vadd.f32 %v3700, %v3754
        %s3757 = sld [smem:[#allocation15 + $0x2b]]
        %v3758 = vstv %s3757
        %v3759 = vmul.f32 %v3758, %v3743
        %v3760 = vmul.f32 %v3758, %v3744
        %v3761 = vadd.f32 %v3705, %v3759
        %v3762 = vadd.f32 %v3706, %v3760
        %s3763 = sld [smem:[#allocation15 + $0x4f]]
        %v3764 = vstv %s3763
        %v3765 = vmul.f32 %v3764, %v3743
        %v3766 = vmul.f32 %v3764, %v3744
        %v3767 = vadd.f32 %v3711, %v3765
        %v3768 = vadd.f32 %v3712, %v3766
        %s3769 = sld [smem:[#allocation15 + $0x73]]
        %v3770 = vstv %s3769
        %v3771 = vmul.f32 %v3770, %v3743
        %v3772 = vmul.f32 %v3770, %v3744
        %v3773 = vadd.f32 %v3717, %v3771
        %v3774 = vadd.f32 %v3718, %v3772
        %s3775 = sld [smem:[#allocation15 + $0x10]]
        %v3776 = vstv %s3775
        %v3777 = vmul.f32 %v3776, %v3745
        %v3778 = vmul.f32 %v3776, %v3746
        %v3779 = vadd.f32 %v3755, %v3777
        %v3780 = vadd.f32 %v3756, %v3778
        %s3781 = sld [smem:[#allocation15 + $0x34]]
        %v3782 = vstv %s3781
        %v3783 = vmul.f32 %v3782, %v3745
        %v3784 = vmul.f32 %v3782, %v3746
        %v3785 = vadd.f32 %v3761, %v3783
        %v3786 = vadd.f32 %v3762, %v3784
        %s3787 = sld [smem:[#allocation15 + $0x58]]
        %v3788 = vstv %s3787
        %v3789 = vmul.f32 %v3788, %v3745
        %v3790 = vmul.f32 %v3788, %v3746
        %v3791 = vadd.f32 %v3767, %v3789
        %v3792 = vadd.f32 %v3768, %v3790
        %s3793 = sld [smem:[#allocation15 + $0x7c]]
        %v3794 = vstv %s3793
        %v3795 = vmul.f32 %v3794, %v3745
        %v3796 = vmul.f32 %v3794, %v3746
        %v3797 = vadd.f32 %v3773, %v3795
        %v3798 = vadd.f32 %v3774, %v3796
        %s3799 = sld [smem:[#allocation15 + $0x19]]
        %v3800 = vstv %s3799
        %v3801 = vmul.f32 %v3800, %v3747
        %v3802 = vmul.f32 %v3800, %v3748
        %v3803 = vadd.f32 %v3779, %v3801
        %v3804 = vadd.f32 %v3780, %v3802
        %s3805 = sld [smem:[#allocation15 + $0x3d]]
        %v3806 = vstv %s3805
        %v3807 = vmul.f32 %v3806, %v3747
        %v3808 = vmul.f32 %v3806, %v3748
        %v3809 = vadd.f32 %v3785, %v3807
        %v3810 = vadd.f32 %v3786, %v3808
        %s3811 = sld [smem:[#allocation15 + $0x61]]
        %v3812 = vstv %s3811
        %v3813 = vmul.f32 %v3812, %v3747
        %v3814 = vmul.f32 %v3812, %v3748
        %v3815 = vadd.f32 %v3791, %v3813
        %v3816 = vadd.f32 %v3792, %v3814
        %s3817 = sld [smem:[#allocation15 + $0x85]]
        %v3818 = vstv %s3817
        %v3819 = vmul.f32 %v3818, %v3747
        %v3820 = vmul.f32 %v3818, %v3748
        %v3821 = vadd.f32 %v3797, %v3819
        %v3822 = vadd.f32 %v3798, %v3820
        %s3823 = sld [smem:[#allocation15 + $0x22]]
        %v3824 = vstv %s3823
        %v3825 = vmul.f32 %v3824, %v3749
        %v3826 = vmul.f32 %v3824, %v3750
        %v3827 = vadd.f32 %v3803, %v3825
        %v3828 = vadd.f32 %v3804, %v3826
        %s3829 = sld [smem:[#allocation15 + $0x46]]
        %v3830 = vstv %s3829
        %v3831 = vmul.f32 %v3830, %v3749
        %v3832 = vmul.f32 %v3830, %v3750
        %v3833 = vadd.f32 %v3809, %v3831
        %v3834 = vadd.f32 %v3810, %v3832
        %s3835 = sld [smem:[#allocation15 + $0x6a]]
        %v3836 = vstv %s3835
        %v3837 = vmul.f32 %v3836, %v3749
        %v3838 = vmul.f32 %v3836, %v3750
        %v3839 = vadd.f32 %v3815, %v3837
        %v3840 = vadd.f32 %v3816, %v3838
        %s3841 = sld [smem:[#allocation15 + $0x8e]]
        %v3842 = vstv %s3841
        %v3843 = vmul.f32 %v3842, %v3749
        %v3844 = vmul.f32 %v3842, %v3750
        %v3845 = vadd.f32 %v3821, %v3843
        %v3846 = vadd.f32 %v3822, %v3844
        %3847 = vrot.lane.b32.xlu0 %v2827, 111
        %v3848 = vpop.permute.xlu0 %3847
        %3849 = vrot.lane.b32.xlu0 %v2833, 111
        %v3850 = vpop.permute.xlu0 %3849
        %3851 = vrot.lane.b32.xlu0 %v2839, 111
        %v3852 = vpop.permute.xlu0 %3851
        %3853 = vrot.lane.b32.xlu0 %v2845, 111
        %v3854 = vpop.permute.xlu0 %3853
        %3855 = vrot.lane.b32.xlu0 %v2828, 111
        %v3856 = vpop.permute.xlu0 %3855
        %3857 = vrot.lane.b32.xlu0 %v2834, 111
        %v3858 = vpop.permute.xlu0 %3857
        %3859 = vrot.lane.b32.xlu0 %v2840, 111
        %v3860 = vpop.permute.xlu0 %3859
        %3861 = vrot.lane.b32.xlu0 %v2846, 111
        %v3862 = vpop.permute.xlu0 %3861
        %v3863 = vsel %vm1593, %v3848, %v3856
        %v3864 = vsel %vm1593, %v3850, %v3858
        %v3865 = vsel %vm1593, %v3852, %v3860
        %v3866 = vsel %vm1593, %v3854, %v3862
        %v3867 = vsel %vm1593, %v3856, %v3848
        %v3868 = vsel %vm1593, %v3858, %v3850
        %v3869 = vsel %vm1593, %v3860, %v3852
        %v3870 = vsel %vm1593, %v3862, %v3854
        %v3871 = vmul.f32 %v3863, %v1608
        %v3872 = vmul.f32 %v3867, %v1612
        %v3873 = vmul.f32 %v3864, %v1608
        %v3874 = vmul.f32 %v3868, %v1612
        %v3875 = vmul.f32 %v3865, %v1608
        %v3876 = vmul.f32 %v3869, %v1612
        %v3877 = vmul.f32 %v3866, %v1608
        %v3878 = vmul.f32 %v3870, %v1612
        %s3879 = sld [smem:[#allocation15 + $0x8]]
        %v3880 = vstv %s3879
        %v3881 = vmul.f32 %v3880, %v3871
        %v3882 = vmul.f32 %v3880, %v3872
        %v3883 = vadd.f32 %v3827, %v3881
        %v3884 = vadd.f32 %v3828, %v3882
        %s3885 = sld [smem:[#allocation15 + $0x2c]]
        %v3886 = vstv %s3885
        %v3887 = vmul.f32 %v3886, %v3871
        %v3888 = vmul.f32 %v3886, %v3872
        %v3889 = vadd.f32 %v3833, %v3887
        %v3890 = vadd.f32 %v3834, %v3888
        %s3891 = sld [smem:[#allocation15 + $0x50]]
        %v3892 = vstv %s3891
        %v3893 = vmul.f32 %v3892, %v3871
        %v3894 = vmul.f32 %v3892, %v3872
        %v3895 = vadd.f32 %v3839, %v3893
        %v3896 = vadd.f32 %v3840, %v3894
        %s3897 = sld [smem:[#allocation15 + $0x74]]
        %v3898 = vstv %s3897
        %v3899 = vmul.f32 %v3898, %v3871
        %v3900 = vmul.f32 %v3898, %v3872
        %v3901 = vadd.f32 %v3845, %v3899
        %v3902 = vadd.f32 %v3846, %v3900
        %s3903 = sld [smem:[#allocation15 + $0x11]]
        %v3904 = vstv %s3903
        %v3905 = vmul.f32 %v3904, %v3873
        %v3906 = vmul.f32 %v3904, %v3874
        %v3907 = vadd.f32 %v3883, %v3905
        %v3908 = vadd.f32 %v3884, %v3906
        %s3909 = sld [smem:[#allocation15 + $0x35]]
        %v3910 = vstv %s3909
        %v3911 = vmul.f32 %v3910, %v3873
        %v3912 = vmul.f32 %v3910, %v3874
        %v3913 = vadd.f32 %v3889, %v3911
        %v3914 = vadd.f32 %v3890, %v3912
        %s3915 = sld [smem:[#allocation15 + $0x59]]
        %v3916 = vstv %s3915
        %v3917 = vmul.f32 %v3916, %v3873
        %v3918 = vmul.f32 %v3916, %v3874
        %v3919 = vadd.f32 %v3895, %v3917
        %v3920 = vadd.f32 %v3896, %v3918
        %s3921 = sld [smem:[#allocation15 + $0x7d]]
        %v3922 = vstv %s3921
        %v3923 = vmul.f32 %v3922, %v3873
        %v3924 = vmul.f32 %v3922, %v3874
        %v3925 = vadd.f32 %v3901, %v3923
        %v3926 = vadd.f32 %v3902, %v3924
        %s3927 = sld [smem:[#allocation15 + $0x1a]]
        %v3928 = vstv %s3927
        %v3929 = vmul.f32 %v3928, %v3875
        %v3930 = vmul.f32 %v3928, %v3876
        %v3931 = vadd.f32 %v3907, %v3929
        %v3932 = vadd.f32 %v3908, %v3930
        %s3933 = sld [smem:[#allocation15 + $0x3e]]
        %v3934 = vstv %s3933
        %v3935 = vmul.f32 %v3934, %v3875
        %v3936 = vmul.f32 %v3934, %v3876
        %v3937 = vadd.f32 %v3913, %v3935
        %v3938 = vadd.f32 %v3914, %v3936
        %s3939 = sld [smem:[#allocation15 + $0x62]]
        %v3940 = vstv %s3939
        %v3941 = vmul.f32 %v3940, %v3875
        %v3942 = vmul.f32 %v3940, %v3876
        %v3943 = vadd.f32 %v3919, %v3941
        %v3944 = vadd.f32 %v3920, %v3942
        %s3945 = sld [smem:[#allocation15 + $0x86]]
        %v3946 = vstv %s3945
        %v3947 = vmul.f32 %v3946, %v3875
        %v3948 = vmul.f32 %v3946, %v3876
        %v3949 = vadd.f32 %v3925, %v3947
        %v3950 = vadd.f32 %v3926, %v3948
        %s3951 = sld [smem:[#allocation15 + $0x23]]
        %v3952 = vstv %s3951
        %v3953 = vmul.f32 %v3952, %v3877
        %v3954 = vmul.f32 %v3952, %v3878
        %v3955 = vadd.f32 %v3931, %v3953
        %v3956 = vadd.f32 %v3932, %v3954
        %s3957 = sld [smem:[#allocation15 + $0x47]]
        %v3958 = vstv %s3957
        %v3959 = vmul.f32 %v3958, %v3877
        %v3960 = vmul.f32 %v3958, %v3878
        %v3961 = vadd.f32 %v3937, %v3959
        %v3962 = vadd.f32 %v3938, %v3960
        %s3963 = sld [smem:[#allocation15 + $0x6b]]
        %v3964 = vstv %s3963
        %v3965 = vmul.f32 %v3964, %v3877
        %v3966 = vmul.f32 %v3964, %v3878
        %v3967 = vadd.f32 %v3943, %v3965
        %v3968 = vadd.f32 %v3944, %v3966
        %s3969 = sld [smem:[#allocation15 + $0x8f]]
        %v3970 = vstv %s3969
        %v3971 = vmul.f32 %v3970, %v3877
        %v3972 = vmul.f32 %v3970, %v3878
        %v3973 = vadd.f32 %v3949, %v3971
        %v3974 = vadd.f32 %v3950, %v3972
        %s3975 = scalar_lea.vmem [#allocation7], 17
        %v3976 = vld [vmem:[%s3975] ss:$8 sm:$0x3]
        %v3977 = vmul.f32 %v3955, %v3955
        %v3978 = vmul.f32 %v3956, %v3956
        %v3979 = vmul.f32 %v3961, %v3961
        %v3980 = vmul.f32 %v3962, %v3962
        %v3981 = vmul.f32 %v3967, %v3967
        %v3982 = vmul.f32 %v3968, %v3968
        %v3983 = vmul.f32 %v3973, %v3973
        %v3984 = vmul.f32 %v3974, %v3974
        %3985 = vrot.lane.b32.xlu0 %v3955, 1
        %v3986 = vpop.permute.xlu0 %3985
        %3987 = vrot.lane.b32.xlu0 %v3961, 1
        %v3988 = vpop.permute.xlu0 %3987
        %3989 = vrot.lane.b32.xlu0 %v3967, 1
        %v3990 = vpop.permute.xlu0 %3989
        %3991 = vrot.lane.b32.xlu0 %v3973, 1
        %v3992 = vpop.permute.xlu0 %3991
        %3993 = vrot.lane.b32.xlu0 %v3977, 1
        %v3994 = vpop.permute.xlu0 %3993
        %3995 = vrot.lane.b32.xlu0 %v3979, 1
        %v3996 = vpop.permute.xlu0 %3995
        %3997 = vrot.lane.b32.xlu0 %v3981, 1
        %v3998 = vpop.permute.xlu0 %3997
        %3999 = vrot.lane.b32.xlu0 %v3983, 1
        %v4000 = vpop.permute.xlu0 %3999
        %4001 = vrot.lane.b32.xlu0 %v3956, 1
        %v4002 = vpop.permute.xlu0 %4001
        %4003 = vrot.lane.b32.xlu0 %v3962, 1
        %v4004 = vpop.permute.xlu0 %4003
        %4005 = vrot.lane.b32.xlu0 %v3968, 1
        %v4006 = vpop.permute.xlu0 %4005
        %4007 = vrot.lane.b32.xlu0 %v3974, 1
        %v4008 = vpop.permute.xlu0 %4007
        %4009 = vrot.lane.b32.xlu0 %v3978, 1
        %v4010 = vpop.permute.xlu0 %4009
        %4011 = vrot.lane.b32.xlu0 %v3980, 1
        %v4012 = vpop.permute.xlu0 %4011
        %4013 = vrot.lane.b32.xlu0 %v3982, 1
        %v4014 = vpop.permute.xlu0 %4013
        %4015 = vrot.lane.b32.xlu0 %v3984, 1
        %v4016 = vpop.permute.xlu0 %4015
        %v4017 = vsel %vm929, %v3986, %v4002
        %v4018 = vsel %vm929, %v3988, %v4004
        %v4019 = vsel %vm929, %v3990, %v4006
        %v4020 = vsel %vm929, %v3992, %v4008
        %v4021 = vsel %vm929, %v3994, %v4010
        %v4022 = vsel %vm929, %v3996, %v4012
        %v4023 = vsel %vm929, %v3998, %v4014
        %v4024 = vsel %vm929, %v4000, %v4016
        %v4025 = vsel %vm929, %v4002, %v3986
        %v4026 = vsel %vm929, %v4004, %v3988
        %v4027 = vsel %vm929, %v4006, %v3990
        %v4028 = vsel %vm929, %v4008, %v3992
        %v4029 = vsel %vm929, %v4010, %v3994
        %v4030 = vsel %vm929, %v4012, %v3996
        %v4031 = vsel %vm929, %v4014, %v3998
        %v4032 = vsel %vm929, %v4016, %v4000
        %v4033 = vadd.f32 %v3955, %v4025
        %v4034 = vadd.f32 %v3956, %v4017
        %v4035 = vadd.f32 %v3961, %v4026
        %v4036 = vadd.f32 %v3962, %v4018
        %v4037 = vadd.f32 %v3967, %v4027
        %v4038 = vadd.f32 %v3968, %v4019
        %v4039 = vadd.f32 %v3973, %v4028
        %v4040 = vadd.f32 %v3974, %v4020
        %v4041 = vadd.f32 %v3977, %v4029
        %v4042 = vadd.f32 %v3978, %v4021
        %v4043 = vadd.f32 %v3979, %v4030
        %v4044 = vadd.f32 %v3980, %v4022
        %v4045 = vadd.f32 %v3981, %v4031
        %v4046 = vadd.f32 %v3982, %v4023
        %v4047 = vadd.f32 %v3983, %v4032
        %v4048 = vadd.f32 %v3984, %v4024
        %4049 = vrot.lane.b32.xlu0 %v4033, 2
        %v4050 = vpop.permute.xlu0 %4049
        %4051 = vrot.lane.b32.xlu0 %v4035, 2
        %v4052 = vpop.permute.xlu0 %4051
        %4053 = vrot.lane.b32.xlu0 %v4037, 2
        %v4054 = vpop.permute.xlu0 %4053
        %4055 = vrot.lane.b32.xlu0 %v4039, 2
        %v4056 = vpop.permute.xlu0 %4055
        %4057 = vrot.lane.b32.xlu0 %v4041, 2
        %v4058 = vpop.permute.xlu0 %4057
        %4059 = vrot.lane.b32.xlu0 %v4043, 2
        %v4060 = vpop.permute.xlu0 %4059
        %4061 = vrot.lane.b32.xlu0 %v4045, 2
        %v4062 = vpop.permute.xlu0 %4061
        %4063 = vrot.lane.b32.xlu0 %v4047, 2
        %v4064 = vpop.permute.xlu0 %4063
        %4065 = vrot.lane.b32.xlu0 %v4034, 2
        %v4066 = vpop.permute.xlu0 %4065
        %4067 = vrot.lane.b32.xlu0 %v4036, 2
        %v4068 = vpop.permute.xlu0 %4067
        %4069 = vrot.lane.b32.xlu0 %v4038, 2
        %v4070 = vpop.permute.xlu0 %4069
        %4071 = vrot.lane.b32.xlu0 %v4040, 2
        %v4072 = vpop.permute.xlu0 %4071
        %4073 = vrot.lane.b32.xlu0 %v4042, 2
        %v4074 = vpop.permute.xlu0 %4073
        %4075 = vrot.lane.b32.xlu0 %v4044, 2
        %v4076 = vpop.permute.xlu0 %4075
        %4077 = vrot.lane.b32.xlu0 %v4046, 2
        %v4078 = vpop.permute.xlu0 %4077
        %4079 = vrot.lane.b32.xlu0 %v4048, 2
        %v4080 = vpop.permute.xlu0 %4079
        %vm4081 = vcmp.lt.s32.totalorder %v503, 2
        %v4082 = vsel %vm4081, %v4050, %v4066
        %v4083 = vsel %vm4081, %v4052, %v4068
        %v4084 = vsel %vm4081, %v4054, %v4070
        %v4085 = vsel %vm4081, %v4056, %v4072
        %v4086 = vsel %vm4081, %v4058, %v4074
        %v4087 = vsel %vm4081, %v4060, %v4076
        %v4088 = vsel %vm4081, %v4062, %v4078
        %v4089 = vsel %vm4081, %v4064, %v4080
        %v4090 = vsel %vm4081, %v4066, %v4050
        %v4091 = vsel %vm4081, %v4068, %v4052
        %v4092 = vsel %vm4081, %v4070, %v4054
        %v4093 = vsel %vm4081, %v4072, %v4056
        %v4094 = vsel %vm4081, %v4074, %v4058
        %v4095 = vsel %vm4081, %v4076, %v4060
        %v4096 = vsel %vm4081, %v4078, %v4062
        %v4097 = vsel %vm4081, %v4080, %v4064
        %v4098 = vadd.f32 %v4033, %v4090
        %v4099 = vadd.f32 %v4034, %v4082
        %v4100 = vadd.f32 %v4035, %v4091
        %v4101 = vadd.f32 %v4036, %v4083
        %v4102 = vadd.f32 %v4037, %v4092
        %v4103 = vadd.f32 %v4038, %v4084
        %v4104 = vadd.f32 %v4039, %v4093
        %v4105 = vadd.f32 %v4040, %v4085
        %v4106 = vadd.f32 %v4041, %v4094
        %v4107 = vadd.f32 %v4042, %v4086
        %v4108 = vadd.f32 %v4043, %v4095
        %v4109 = vadd.f32 %v4044, %v4087
        %v4110 = vadd.f32 %v4045, %v4096
        %v4111 = vadd.f32 %v4046, %v4088
        %v4112 = vadd.f32 %v4047, %v4097
        %v4113 = vadd.f32 %v4048, %v4089
        %4114 = vrot.lane.b32.xlu0 %v4098, 4
        %v4115 = vpop.permute.xlu0 %4114
        %4116 = vrot.lane.b32.xlu0 %v4100, 4
        %v4117 = vpop.permute.xlu0 %4116
        %4118 = vrot.lane.b32.xlu0 %v4102, 4
        %v4119 = vpop.permute.xlu0 %4118
        %4120 = vrot.lane.b32.xlu0 %v4104, 4
        %v4121 = vpop.permute.xlu0 %4120
        %4122 = vrot.lane.b32.xlu0 %v4106, 4
        %v4123 = vpop.permute.xlu0 %4122
        %4124 = vrot.lane.b32.xlu0 %v4108, 4
        %v4125 = vpop.permute.xlu0 %4124
        %4126 = vrot.lane.b32.xlu0 %v4110, 4
        %v4127 = vpop.permute.xlu0 %4126
        %4128 = vrot.lane.b32.xlu0 %v4112, 4
        %v4129 = vpop.permute.xlu0 %4128
        %4130 = vrot.lane.b32.xlu0 %v4099, 4
        %v4131 = vpop.permute.xlu0 %4130
        %4132 = vrot.lane.b32.xlu0 %v4101, 4
        %v4133 = vpop.permute.xlu0 %4132
        %4134 = vrot.lane.b32.xlu0 %v4103, 4
        %v4135 = vpop.permute.xlu0 %4134
        %4136 = vrot.lane.b32.xlu0 %v4105, 4
        %v4137 = vpop.permute.xlu0 %4136
        %4138 = vrot.lane.b32.xlu0 %v4107, 4
        %v4139 = vpop.permute.xlu0 %4138
        %4140 = vrot.lane.b32.xlu0 %v4109, 4
        %v4141 = vpop.permute.xlu0 %4140
        %4142 = vrot.lane.b32.xlu0 %v4111, 4
        %v4143 = vpop.permute.xlu0 %4142
        %4144 = vrot.lane.b32.xlu0 %v4113, 4
        %v4145 = vpop.permute.xlu0 %4144
        %vm4146 = vcmp.lt.s32.totalorder %v503, 4
        %v4147 = vsel %vm4146, %v4115, %v4131
        %v4148 = vsel %vm4146, %v4117, %v4133
        %v4149 = vsel %vm4146, %v4119, %v4135
        %v4150 = vsel %vm4146, %v4121, %v4137
        %v4151 = vsel %vm4146, %v4123, %v4139
        %v4152 = vsel %vm4146, %v4125, %v4141
        %v4153 = vsel %vm4146, %v4127, %v4143
        %v4154 = vsel %vm4146, %v4129, %v4145
        %v4155 = vsel %vm4146, %v4131, %v4115
        %v4156 = vsel %vm4146, %v4133, %v4117
        %v4157 = vsel %vm4146, %v4135, %v4119
        %v4158 = vsel %vm4146, %v4137, %v4121
        %v4159 = vsel %vm4146, %v4139, %v4123
        %v4160 = vsel %vm4146, %v4141, %v4125
        %v4161 = vsel %vm4146, %v4143, %v4127
        %v4162 = vsel %vm4146, %v4145, %v4129
        %v4163 = vadd.f32 %v4098, %v4155
        %v4164 = vadd.f32 %v4099, %v4147
        %v4165 = vadd.f32 %v4100, %v4156
        %v4166 = vadd.f32 %v4101, %v4148
        %v4167 = vadd.f32 %v4102, %v4157
        %v4168 = vadd.f32 %v4103, %v4149
        %v4169 = vadd.f32 %v4104, %v4158
        %v4170 = vadd.f32 %v4105, %v4150
        %v4171 = vadd.f32 %v4106, %v4159
        %v4172 = vadd.f32 %v4107, %v4151
        %v4173 = vadd.f32 %v4108, %v4160
        %v4174 = vadd.f32 %v4109, %v4152
        %v4175 = vadd.f32 %v4110, %v4161
        %v4176 = vadd.f32 %v4111, %v4153
        %v4177 = vadd.f32 %v4112, %v4162
        %v4178 = vadd.f32 %v4113, %v4154
        %4179 = vrot.lane.b32.xlu0 %v4163, 8
        %v4180 = vpop.permute.xlu0 %4179
        %4181 = vrot.lane.b32.xlu0 %v4165, 8
        %v4182 = vpop.permute.xlu0 %4181
        %4183 = vrot.lane.b32.xlu0 %v4167, 8
        %v4184 = vpop.permute.xlu0 %4183
        %4185 = vrot.lane.b32.xlu0 %v4169, 8
        %v4186 = vpop.permute.xlu0 %4185
        %4187 = vrot.lane.b32.xlu0 %v4171, 8
        %v4188 = vpop.permute.xlu0 %4187
        %4189 = vrot.lane.b32.xlu0 %v4173, 8
        %v4190 = vpop.permute.xlu0 %4189
        %4191 = vrot.lane.b32.xlu0 %v4175, 8
        %v4192 = vpop.permute.xlu0 %4191
        %4193 = vrot.lane.b32.xlu0 %v4177, 8
        %v4194 = vpop.permute.xlu0 %4193
        %4195 = vrot.lane.b32.xlu0 %v4164, 8
        %v4196 = vpop.permute.xlu0 %4195
        %4197 = vrot.lane.b32.xlu0 %v4166, 8
        %v4198 = vpop.permute.xlu0 %4197
        %4199 = vrot.lane.b32.xlu0 %v4168, 8
        %v4200 = vpop.permute.xlu0 %4199
        %4201 = vrot.lane.b32.xlu0 %v4170, 8
        %v4202 = vpop.permute.xlu0 %4201
        %4203 = vrot.lane.b32.xlu0 %v4172, 8
        %v4204 = vpop.permute.xlu0 %4203
        %4205 = vrot.lane.b32.xlu0 %v4174, 8
        %v4206 = vpop.permute.xlu0 %4205
        %4207 = vrot.lane.b32.xlu0 %v4176, 8
        %v4208 = vpop.permute.xlu0 %4207
        %4209 = vrot.lane.b32.xlu0 %v4178, 8
        %v4210 = vpop.permute.xlu0 %4209
        %vm4211 = vcmp.lt.s32.totalorder %v503, 8
        %v4212 = vsel %vm4211, %v4180, %v4196
        %v4213 = vsel %vm4211, %v4182, %v4198
        %v4214 = vsel %vm4211, %v4184, %v4200
        %v4215 = vsel %vm4211, %v4186, %v4202
        %v4216 = vsel %vm4211, %v4188, %v4204
        %v4217 = vsel %vm4211, %v4190, %v4206
        %v4218 = vsel %vm4211, %v4192, %v4208
        %v4219 = vsel %vm4211, %v4194, %v4210
        %v4220 = vsel %vm4211, %v4196, %v4180
        %v4221 = vsel %vm4211, %v4198, %v4182
        %v4222 = vsel %vm4211, %v4200, %v4184
        %v4223 = vsel %vm4211, %v4202, %v4186
        %v4224 = vsel %vm4211, %v4204, %v4188
        %v4225 = vsel %vm4211, %v4206, %v4190
        %v4226 = vsel %vm4211, %v4208, %v4192
        %v4227 = vsel %vm4211, %v4210, %v4194
        %v4228 = vadd.f32 %v4163, %v4220
        %v4229 = vadd.f32 %v4164, %v4212
        %v4230 = vadd.f32 %v4165, %v4221
        %v4231 = vadd.f32 %v4166, %v4213
        %v4232 = vadd.f32 %v4167, %v4222
        %v4233 = vadd.f32 %v4168, %v4214
        %v4234 = vadd.f32 %v4169, %v4223
        %v4235 = vadd.f32 %v4170, %v4215
        %v4236 = vadd.f32 %v4171, %v4224
        %v4237 = vadd.f32 %v4172, %v4216
        %v4238 = vadd.f32 %v4173, %v4225
        %v4239 = vadd.f32 %v4174, %v4217
        %v4240 = vadd.f32 %v4175, %v4226
        %v4241 = vadd.f32 %v4176, %v4218
        %v4242 = vadd.f32 %v4177, %v4227
        %v4243 = vadd.f32 %v4178, %v4219
        %v4245 = vlaneseq
        %v4246 = vshrl.u32 %v4245, 7
        %v4247 = vsub.s32 0, %v4246
        %v4248 = vrot.slane %v3976, %v4247
        %v4249 = vlaneseq
        %v4250 = vshrl.u32 %v4249, 7
        %v4251 = vsub.s32 1, %v4250
        %v4252 = vrot.slane %v3976, %v4251
        %v4255 = vmul.f32 %v4228, %v4248
        %v4256 = vmul.f32 %v4229, %v4252
        %v4257 = vmul.f32 %v4230, %v4248
        %v4258 = vmul.f32 %v4231, %v4252
        %v4259 = vmul.f32 %v4232, %v4248
        %v4260 = vmul.f32 %v4233, %v4252
        %v4261 = vmul.f32 %v4234, %v4248
        %v4262 = vmul.f32 %v4235, %v4252
        %v4263 = vmul.f32 %v4236, %v4248
        %v4264 = vmul.f32 %v4237, %v4252
        %v4265 = vmul.f32 %v4238, %v4248
        %v4266 = vmul.f32 %v4239, %v4252
        %v4267 = vmul.f32 %v4240, %v4248
        %v4268 = vmul.f32 %v4241, %v4252
        %v4269 = vmul.f32 %v4242, %v4248
        %v4270 = vmul.f32 %v4243, %v4252
        %4271 = vrot.lane.b32.xlu0 %v4255, 127
        %v4272 = vpop.permute.xlu0 %4271
        %4273 = vrot.lane.b32.xlu0 %v4257, 127
        %v4274 = vpop.permute.xlu0 %4273
        %4275 = vrot.lane.b32.xlu0 %v4259, 127
        %v4276 = vpop.permute.xlu0 %4275
        %4277 = vrot.lane.b32.xlu0 %v4261, 127
        %v4278 = vpop.permute.xlu0 %4277
        %4279 = vrot.lane.b32.xlu0 %v4263, 127
        %v4280 = vpop.permute.xlu0 %4279
        %4281 = vrot.lane.b32.xlu0 %v4265, 127
        %v4282 = vpop.permute.xlu0 %4281
        %4283 = vrot.lane.b32.xlu0 %v4267, 127
        %v4284 = vpop.permute.xlu0 %4283
        %4285 = vrot.lane.b32.xlu0 %v4269, 127
        %v4286 = vpop.permute.xlu0 %4285
        %4287 = vrot.lane.b32.xlu0 %v4256, 127
        %v4288 = vpop.permute.xlu0 %4287
        %4289 = vrot.lane.b32.xlu0 %v4258, 127
        %v4290 = vpop.permute.xlu0 %4289
        %4291 = vrot.lane.b32.xlu0 %v4260, 127
        %v4292 = vpop.permute.xlu0 %4291
        %4293 = vrot.lane.b32.xlu0 %v4262, 127
        %v4294 = vpop.permute.xlu0 %4293
        %4295 = vrot.lane.b32.xlu0 %v4264, 127
        %v4296 = vpop.permute.xlu0 %4295
        %4297 = vrot.lane.b32.xlu0 %v4266, 127
        %v4298 = vpop.permute.xlu0 %4297
        %4299 = vrot.lane.b32.xlu0 %v4268, 127
        %v4300 = vpop.permute.xlu0 %4299
        %4301 = vrot.lane.b32.xlu0 %v4270, 127
        %v4302 = vpop.permute.xlu0 %4301
        %v4303 = vsel %vm1167, %v4272, %v4288
        %v4304 = vsel %vm1167, %v4274, %v4290
        %v4305 = vsel %vm1167, %v4276, %v4292
        %v4306 = vsel %vm1167, %v4278, %v4294
        %v4307 = vsel %vm1167, %v4280, %v4296
        %v4308 = vsel %vm1167, %v4282, %v4298
        %v4309 = vsel %vm1167, %v4284, %v4300
        %v4310 = vsel %vm1167, %v4286, %v4302
        %v4311 = vsel %vm1167, %v4288, %v4272
        %v4312 = vsel %vm1167, %v4290, %v4274
        %v4313 = vsel %vm1167, %v4292, %v4276
        %v4314 = vsel %vm1167, %v4294, %v4278
        %v4315 = vsel %vm1167, %v4296, %v4280
        %v4316 = vsel %vm1167, %v4298, %v4282
        %v4317 = vsel %vm1167, %v4300, %v4284
        %v4318 = vsel %vm1167, %v4302, %v4286
        %v4319 = vadd.f32 %v4255, %v4303
        %v4320 = vadd.f32 %v4256, %v4311
        %v4321 = vadd.f32 %v4257, %v4304
        %v4322 = vadd.f32 %v4258, %v4312
        %v4323 = vadd.f32 %v4259, %v4305
        %v4324 = vadd.f32 %v4260, %v4313
        %v4325 = vadd.f32 %v4261, %v4306
        %v4326 = vadd.f32 %v4262, %v4314
        %v4327 = vadd.f32 %v4263, %v4307
        %v4328 = vadd.f32 %v4264, %v4315
        %v4329 = vadd.f32 %v4265, %v4308
        %v4330 = vadd.f32 %v4266, %v4316
        %v4331 = vadd.f32 %v4267, %v4309
        %v4332 = vadd.f32 %v4268, %v4317
        %v4333 = vadd.f32 %v4269, %v4310
        %v4334 = vadd.f32 %v4270, %v4318
        %4335 = vrot.lane.b32.xlu0 %v4319, 126
        %v4336 = vpop.permute.xlu0 %4335
        %4337 = vrot.lane.b32.xlu0 %v4321, 126
        %v4338 = vpop.permute.xlu0 %4337
        %4339 = vrot.lane.b32.xlu0 %v4323, 126
        %v4340 = vpop.permute.xlu0 %4339
        %4341 = vrot.lane.b32.xlu0 %v4325, 126
        %v4342 = vpop.permute.xlu0 %4341
        %4343 = vrot.lane.b32.xlu0 %v4327, 126
        %v4344 = vpop.permute.xlu0 %4343
        %4345 = vrot.lane.b32.xlu0 %v4329, 126
        %v4346 = vpop.permute.xlu0 %4345
        %4347 = vrot.lane.b32.xlu0 %v4331, 126
        %v4348 = vpop.permute.xlu0 %4347
        %4349 = vrot.lane.b32.xlu0 %v4333, 126
        %v4350 = vpop.permute.xlu0 %4349
        %4351 = vrot.lane.b32.xlu0 %v4320, 126
        %v4352 = vpop.permute.xlu0 %4351
        %4353 = vrot.lane.b32.xlu0 %v4322, 126
        %v4354 = vpop.permute.xlu0 %4353
        %4355 = vrot.lane.b32.xlu0 %v4324, 126
        %v4356 = vpop.permute.xlu0 %4355
        %4357 = vrot.lane.b32.xlu0 %v4326, 126
        %v4358 = vpop.permute.xlu0 %4357
        %4359 = vrot.lane.b32.xlu0 %v4328, 126
        %v4360 = vpop.permute.xlu0 %4359
        %4361 = vrot.lane.b32.xlu0 %v4330, 126
        %v4362 = vpop.permute.xlu0 %4361
        %4363 = vrot.lane.b32.xlu0 %v4332, 126
        %v4364 = vpop.permute.xlu0 %4363
        %4365 = vrot.lane.b32.xlu0 %v4334, 126
        %v4366 = vpop.permute.xlu0 %4365
        %vm4367 = vcmp.lt.s32.totalorder %v503, 126
        %v4368 = vsel %vm4367, %v4336, %v4352
        %v4369 = vsel %vm4367, %v4338, %v4354
        %v4370 = vsel %vm4367, %v4340, %v4356
        %v4371 = vsel %vm4367, %v4342, %v4358
        %v4372 = vsel %vm4367, %v4344, %v4360
        %v4373 = vsel %vm4367, %v4346, %v4362
        %v4374 = vsel %vm4367, %v4348, %v4364
        %v4375 = vsel %vm4367, %v4350, %v4366
        %v4376 = vsel %vm4367, %v4352, %v4336
        %v4377 = vsel %vm4367, %v4354, %v4338
        %v4378 = vsel %vm4367, %v4356, %v4340
        %v4379 = vsel %vm4367, %v4358, %v4342
        %v4380 = vsel %vm4367, %v4360, %v4344
        %v4381 = vsel %vm4367, %v4362, %v4346
        %v4382 = vsel %vm4367, %v4364, %v4348
        %v4383 = vsel %vm4367, %v4366, %v4350
        %v4384 = vadd.f32 %v4319, %v4368
        %v4385 = vadd.f32 %v4320, %v4376
        %v4386 = vadd.f32 %v4321, %v4369
        %v4387 = vadd.f32 %v4322, %v4377
        %v4388 = vadd.f32 %v4323, %v4370
        %v4389 = vadd.f32 %v4324, %v4378
        %v4390 = vadd.f32 %v4325, %v4371
        %v4391 = vadd.f32 %v4326, %v4379
        %v4392 = vadd.f32 %v4327, %v4372
        %v4393 = vadd.f32 %v4328, %v4380
        %v4394 = vadd.f32 %v4329, %v4373
        %v4395 = vadd.f32 %v4330, %v4381
        %v4396 = vadd.f32 %v4331, %v4374
        %v4397 = vadd.f32 %v4332, %v4382
        %v4398 = vadd.f32 %v4333, %v4375
        %v4399 = vadd.f32 %v4334, %v4383
        %4400 = vrot.lane.b32.xlu0 %v4384, 124
        %v4401 = vpop.permute.xlu0 %4400
        %4402 = vrot.lane.b32.xlu0 %v4386, 124
        %v4403 = vpop.permute.xlu0 %4402
        %4404 = vrot.lane.b32.xlu0 %v4388, 124
        %v4405 = vpop.permute.xlu0 %4404
        %4406 = vrot.lane.b32.xlu0 %v4390, 124
        %v4407 = vpop.permute.xlu0 %4406
        %4408 = vrot.lane.b32.xlu0 %v4392, 124
        %v4409 = vpop.permute.xlu0 %4408
        %4410 = vrot.lane.b32.xlu0 %v4394, 124
        %v4411 = vpop.permute.xlu0 %4410
        %4412 = vrot.lane.b32.xlu0 %v4396, 124
        %v4413 = vpop.permute.xlu0 %4412
        %4414 = vrot.lane.b32.xlu0 %v4398, 124
        %v4415 = vpop.permute.xlu0 %4414
        %4416 = vrot.lane.b32.xlu0 %v4385, 124
        %v4417 = vpop.permute.xlu0 %4416
        %4418 = vrot.lane.b32.xlu0 %v4387, 124
        %v4419 = vpop.permute.xlu0 %4418
        %4420 = vrot.lane.b32.xlu0 %v4389, 124
        %v4421 = vpop.permute.xlu0 %4420
        %4422 = vrot.lane.b32.xlu0 %v4391, 124
        %v4423 = vpop.permute.xlu0 %4422
        %4424 = vrot.lane.b32.xlu0 %v4393, 124
        %v4425 = vpop.permute.xlu0 %4424
        %4426 = vrot.lane.b32.xlu0 %v4395, 124
        %v4427 = vpop.permute.xlu0 %4426
        %4428 = vrot.lane.b32.xlu0 %v4397, 124
        %v4429 = vpop.permute.xlu0 %4428
        %4430 = vrot.lane.b32.xlu0 %v4399, 124
        %v4431 = vpop.permute.xlu0 %4430
        %vm4432 = vcmp.lt.s32.totalorder %v503, 124
        %v4433 = vsel %vm4432, %v4401, %v4417
        %v4434 = vsel %vm4432, %v4403, %v4419
        %v4435 = vsel %vm4432, %v4405, %v4421
        %v4436 = vsel %vm4432, %v4407, %v4423
        %v4437 = vsel %vm4432, %v4409, %v4425
        %v4438 = vsel %vm4432, %v4411, %v4427
        %v4439 = vsel %vm4432, %v4413, %v4429
        %v4440 = vsel %vm4432, %v4415, %v4431
        %v4441 = vsel %vm4432, %v4417, %v4401
        %v4442 = vsel %vm4432, %v4419, %v4403
        %v4443 = vsel %vm4432, %v4421, %v4405
        %v4444 = vsel %vm4432, %v4423, %v4407
        %v4445 = vsel %vm4432, %v4425, %v4409
        %v4446 = vsel %vm4432, %v4427, %v4411
        %v4447 = vsel %vm4432, %v4429, %v4413
        %v4448 = vsel %vm4432, %v4431, %v4415
        %v4449 = vadd.f32 %v4384, %v4433
        %v4450 = vadd.f32 %v4385, %v4441
        %v4451 = vadd.f32 %v4386, %v4434
        %v4452 = vadd.f32 %v4387, %v4442
        %v4453 = vadd.f32 %v4388, %v4435
        %v4454 = vadd.f32 %v4389, %v4443
        %v4455 = vadd.f32 %v4390, %v4436
        %v4456 = vadd.f32 %v4391, %v4444
        %v4457 = vadd.f32 %v4392, %v4437
        %v4458 = vadd.f32 %v4393, %v4445
        %v4459 = vadd.f32 %v4394, %v4438
        %v4460 = vadd.f32 %v4395, %v4446
        %v4461 = vadd.f32 %v4396, %v4439
        %v4462 = vadd.f32 %v4397, %v4447
        %v4463 = vadd.f32 %v4398, %v4440
        %v4464 = vadd.f32 %v4399, %v4448
        %4465 = vrot.lane.b32.xlu0 %v4449, 120
        %v4466 = vpop.permute.xlu0 %4465
        %4467 = vrot.lane.b32.xlu0 %v4451, 120
        %v4468 = vpop.permute.xlu0 %4467
        %4469 = vrot.lane.b32.xlu0 %v4453, 120
        %v4470 = vpop.permute.xlu0 %4469
        %4471 = vrot.lane.b32.xlu0 %v4455, 120
        %v4472 = vpop.permute.xlu0 %4471
        %4473 = vrot.lane.b32.xlu0 %v4457, 120
        %v4474 = vpop.permute.xlu0 %4473
        %4475 = vrot.lane.b32.xlu0 %v4459, 120
        %v4476 = vpop.permute.xlu0 %4475
        %4477 = vrot.lane.b32.xlu0 %v4461, 120
        %v4478 = vpop.permute.xlu0 %4477
        %4479 = vrot.lane.b32.xlu0 %v4463, 120
        %v4480 = vpop.permute.xlu0 %4479
        %4481 = vrot.lane.b32.xlu0 %v4450, 120
        %v4482 = vpop.permute.xlu0 %4481
        %4483 = vrot.lane.b32.xlu0 %v4452, 120
        %v4484 = vpop.permute.xlu0 %4483
        %4485 = vrot.lane.b32.xlu0 %v4454, 120
        %v4486 = vpop.permute.xlu0 %4485
        %4487 = vrot.lane.b32.xlu0 %v4456, 120
        %v4488 = vpop.permute.xlu0 %4487
        %4489 = vrot.lane.b32.xlu0 %v4458, 120
        %v4490 = vpop.permute.xlu0 %4489
        %4491 = vrot.lane.b32.xlu0 %v4460, 120
        %v4492 = vpop.permute.xlu0 %4491
        %4493 = vrot.lane.b32.xlu0 %v4462, 120
        %v4494 = vpop.permute.xlu0 %4493
        %4495 = vrot.lane.b32.xlu0 %v4464, 120
        %v4496 = vpop.permute.xlu0 %4495
        %vm4497 = vcmp.lt.s32.totalorder %v503, 120
        %v4498 = vsel %vm4497, %v4466, %v4482
        %v4499 = vsel %vm4497, %v4468, %v4484
        %v4500 = vsel %vm4497, %v4470, %v4486
        %v4501 = vsel %vm4497, %v4472, %v4488
        %v4502 = vsel %vm4497, %v4474, %v4490
        %v4503 = vsel %vm4497, %v4476, %v4492
        %v4504 = vsel %vm4497, %v4478, %v4494
        %v4505 = vsel %vm4497, %v4480, %v4496
        %v4506 = vsel %vm4497, %v4482, %v4466
        %v4507 = vsel %vm4497, %v4484, %v4468
        %v4508 = vsel %vm4497, %v4486, %v4470
        %v4509 = vsel %vm4497, %v4488, %v4472
        %v4510 = vsel %vm4497, %v4490, %v4474
        %v4511 = vsel %vm4497, %v4492, %v4476
        %v4512 = vsel %vm4497, %v4494, %v4478
        %v4513 = vsel %vm4497, %v4496, %v4480
        %v4514 = vadd.f32 %v4449, %v4498
        %v4515 = vadd.f32 %v4450, %v4506
        %v4516 = vadd.f32 %v4451, %v4499
        %v4517 = vadd.f32 %v4452, %v4507
        %v4518 = vadd.f32 %v4453, %v4500
        %v4519 = vadd.f32 %v4454, %v4508
        %v4520 = vadd.f32 %v4455, %v4501
        %v4521 = vadd.f32 %v4456, %v4509
        %v4522 = vadd.f32 %v4457, %v4502
        %v4523 = vadd.f32 %v4458, %v4510
        %v4524 = vadd.f32 %v4459, %v4503
        %v4525 = vadd.f32 %v4460, %v4511
        %v4526 = vadd.f32 %v4461, %v4504
        %v4527 = vadd.f32 %v4462, %v4512
        %v4528 = vadd.f32 %v4463, %v4505
        %v4529 = vadd.f32 %v4464, %v4513
        %v4530 = vmul.f32 %v4514, 0.0625
        %v4531 = vmul.f32 %v4515, 0.0625
        %v4532 = vmul.f32 %v4516, 0.0625
        %v4533 = vmul.f32 %v4517, 0.0625
        %v4534 = vmul.f32 %v4518, 0.0625
        %v4535 = vmul.f32 %v4519, 0.0625
        %v4536 = vmul.f32 %v4520, 0.0625
        %v4537 = vmul.f32 %v4521, 0.0625
        %v4538 = vmul.f32 %v4522, 0.0625
        %v4539 = vmul.f32 %v4523, 0.0625
        %v4540 = vmul.f32 %v4524, 0.0625
        %v4541 = vmul.f32 %v4525, 0.0625
        %v4542 = vmul.f32 %v4526, 0.0625
        %v4543 = vmul.f32 %v4527, 0.0625
        %v4544 = vmul.f32 %v4528, 0.0625
        %v4545 = vmul.f32 %v4529, 0.0625
        %v4546 = vmul.f32 %v4530, %v4530
        %v4547 = vmul.f32 %v4531, %v4531
        %v4548 = vmul.f32 %v4532, %v4532
        %v4549 = vmul.f32 %v4533, %v4533
        %v4550 = vmul.f32 %v4534, %v4534
        %v4551 = vmul.f32 %v4535, %v4535
        %v4552 = vmul.f32 %v4536, %v4536
        %v4553 = vmul.f32 %v4537, %v4537
        %v4554 = vsub.f32 %v4538, %v4546
        %v4555 = vsub.f32 %v4539, %v4547
        %v4556 = vsub.f32 %v4540, %v4548
        %v4557 = vsub.f32 %v4541, %v4549
        %v4558 = vsub.f32 %v4542, %v4550
        %v4559 = vsub.f32 %v4543, %v4551
        %v4560 = vsub.f32 %v4544, %v4552
        %v4561 = vsub.f32 %v4545, %v4553
        %v4562 = vsub.f32 %v3955, %v4530
        %v4563 = vsub.f32 %v3956, %v4531
        %v4564 = vsub.f32 %v3961, %v4532
        %v4565 = vsub.f32 %v3962, %v4533
        %v4566 = vsub.f32 %v3967, %v4534
        %v4567 = vsub.f32 %v3968, %v4535
        %v4568 = vsub.f32 %v3973, %v4536
        %v4569 = vsub.f32 %v3974, %v4537
        %v4570 = vadd.f32 %v4554, 1e-05
        %v4571 = vadd.f32 %v4555, 1e-05
        %v4572 = vadd.f32 %v4556, 1e-05
        %v4573 = vadd.f32 %v4557, 1e-05
        %v4574 = vadd.f32 %v4558, 1e-05
        %v4575 = vadd.f32 %v4559, 1e-05
        %v4576 = vadd.f32 %v4560, 1e-05
        %v4577 = vadd.f32 %v4561, 1e-05
        %v4578 = vrsqrt.pop %v4570
        %v4579 = vrsqrt.pop %v4571
        %v4580 = vrsqrt.pop %v4572
        %v4581 = vrsqrt.pop %v4573
        %v4582 = vrsqrt.pop %v4574
        %v4583 = vrsqrt.pop %v4575
        %v4584 = vrsqrt.pop %v4576
        %v4585 = vrsqrt.pop %v4577
        %v4586 = vmul.f32 %v4562, %v4578
        %v4587 = vmul.f32 %v4563, %v4579
        %v4588 = vmul.f32 %v4564, %v4580
        %v4589 = vmul.f32 %v4565, %v4581
        %v4590 = vmul.f32 %v4566, %v4582
        %v4591 = vmul.f32 %v4567, %v4583
        %v4592 = vmul.f32 %v4568, %v4584
        %v4593 = vmul.f32 %v4569, %v4585
        %v4594 = vld [vmem:[%s8] sm:$0x3]
        %v4596 = vlaneseq
        %v4597 = vshrl.u32 %v4596, 7
        %v4598 = vsub.s32 0, %v4597
        %v4599 = vrot.slane %v4594, %v4598
        %v4600 = vlaneseq
        %v4601 = vshrl.u32 %v4600, 7
        %v4602 = vsub.s32 1, %v4601
        %v4603 = vrot.slane %v4594, %v4602
        %v4606 = vmul.f32 %v4586, %v4599
        %v4607 = vmul.f32 %v4587, %v4603
        %v4608 = vmul.f32 %v4588, %v4599
        %v4609 = vmul.f32 %v4589, %v4603
        %v4610 = vmul.f32 %v4590, %v4599
        %v4611 = vmul.f32 %v4591, %v4603
        %v4612 = vmul.f32 %v4592, %v4599
        %v4613 = vmul.f32 %v4593, %v4603
        %v4614 = vld [vmem:[%s9] sm:$0x3]
        %v4616 = vlaneseq
        %v4617 = vshrl.u32 %v4616, 7
        %v4618 = vsub.s32 0, %v4617
        %v4619 = vrot.slane %v4614, %v4618
        %v4620 = vlaneseq
        %v4621 = vshrl.u32 %v4620, 7
        %v4622 = vsub.s32 1, %v4621
        %v4623 = vrot.slane %v4614, %v4622
        %v4626 = vadd.f32 %v4606, %v4619
        %v4627 = vadd.f32 %v4607, %v4623
        %v4628 = vadd.f32 %v4608, %v4619
        %v4629 = vadd.f32 %v4609, %v4623
        %v4630 = vadd.f32 %v4610, %v4619
        %v4631 = vadd.f32 %v4611, %v4623
        %v4632 = vadd.f32 %v4612, %v4619
        %v4633 = vadd.f32 %v4613, %v4623
        %v4634 = vmax.f32 %v4626, 0.0
        %v4635 = vmax.f32 %v4627, 0.0
        %v4636 = vmax.f32 %v4628, 0.0
        %v4637 = vmax.f32 %v4629, 0.0
        %v4638 = vmax.f32 %v4630, 0.0
        %v4639 = vmax.f32 %v4631, 0.0
        %v4640 = vmax.f32 %v4632, 0.0
        %v4641 = vmax.f32 %v4633, 0.0
        %v4642 = vadd.f32 %v4634, %v467
        %v4643 = vadd.f32 %v4635, %v468
        %4644 = vst [vmem:[%s466] sm:$0xff] %v4642
        %4645 = vst [vmem:[%s466 + $0x8] sm:$0xff] %v4643
        %v4646 = vld [vmem:[%s469] sm:$0xff]
        %v4647 = vld [vmem:[%s469 + $0x8] sm:$0xff]
        %v4648 = vadd.f32 %v4636, %v4646
        %v4649 = vadd.f32 %v4637, %v4647
        %s4650 = scalar_lea.vmem %s466, 16 [#allocation18]
        %4651 = vst [vmem:[%s4650] sm:$0xff] %v4648
        %4652 = vst [vmem:[%s4650 + $0x8] sm:$0xff] %v4649
        %v4653 = vld [vmem:[%s472] sm:$0xff]
        %v4654 = vld [vmem:[%s472 + $0x8] sm:$0xff]
        %v4655 = vadd.f32 %v4638, %v4653
        %v4656 = vadd.f32 %v4639, %v4654
        %s4657 = scalar_lea.vmem %s466, 32 [#allocation18]
        %4658 = vst [vmem:[%s4657] sm:$0xff] %v4655
        %4659 = vst [vmem:[%s4657 + $0x8] sm:$0xff] %v4656
        %v4660 = vld [vmem:[%s475] sm:$0xff]
        %v4661 = vld [vmem:[%s475 + $0x8] sm:$0xff]
        %v4662 = vadd.f32 %v4640, %v4660
        %v4663 = vadd.f32 %v4641, %v4661
        %s4664 = scalar_lea.vmem %s466, 48 [#allocation18]
        %4665 = vst [vmem:[%s4664] sm:$0xff] %v4662
        %4666 = vst [vmem:[%s4664 + $0x8] sm:$0xff] %v4663
        %s4667 = sand.u32 %s256, 1
        %s4668 = scalar_lea.sflag [#allocation4], %s4667
        %s4669 = sand.u32 %s256, 1
        %s4670 = smul.addr %s4669, 64
        %s4671 = scalar_lea.vmem [#allocation18], %s4670
        // Predicated region
        $region93: #{tpu_custom_call.1} parent=59 // pred_check
          %p4672 = pneg %p266
        $region94: #{tpu_custom_call.1} parent=59 // pred_check_branch
          %4674 = sbr.rel (%p4672) target = $region96
        $region95: #{tpu_custom_call.1} parent=59 // pred_region
          %s4676 = ssub.s32 1024, 1024
          %4677 = vsyncadd %s4668, %s4676
          %s4678 = smul.addr %s33, 2
          %s4679 = smul.addr %s4678, 128
          %s4680 = scalar_lea.hbm %s10, %s4679
          %s4681 = sshll.u32 %s4671, 4
          %s4682 = int_to_ptr.vmem [resolvable:$true] %s4681
          %4687 = dma.vmem_to_hbm [thread:$0]  %s4682, 1024, %s4680, %s4668, 256, 512, 16
        $region96: #{tpu_custom_call.1} parent=59 // pred_fallthru
          _
      $region60: #{tpu_custom_call.1} parent=5 // pred_fallthru
        _
      %p4688 = scmp.le.s32.totalorder 2, %s28
      // Predicated region
      $region97: #{tpu_custom_call.1} parent=5 // pred_check
        %p4689 = pneg %p4688
      $region98: #{tpu_custom_call.1} parent=5 // pred_check_branch
        %4691 = sbr.rel (%p4689) target = $region100
      $region99: #{tpu_custom_call.1} parent=5 // pred_region
        %s4692 = ssub.s32 %s28, 2
        // Predicated region
        $region101: #{tpu_custom_call.1} parent=99 // pred_check
          %p4693 = pneg %p272
        $region102: #{tpu_custom_call.1} parent=99 // pred_check_branch
          %4695 = sbr.rel (%p4693) target = $region104
        $region103: #{tpu_custom_call.1} parent=99 // pred_region
          %s4696 = sand.u32 %s257, 1
          %s4697 = scalar_lea.sflag [#allocation4], %s4696
          %s4698 = sand.u32 %s257, 1
          %s4699 = smul.addr %s4698, 64
          %s4700 = scalar_lea.vmem [#allocation18], %s4699
          %4701 = dma.done %s4697, 1024
        $region104: #{tpu_custom_call.1} parent=99 // pred_fallthru
          _
      $region100: #{tpu_custom_call.1} parent=5 // pred_fallthru
        _
    $region6: #{tpu_custom_call.1} parent=1 // loop_footer
      %s32 = sadd.s32 1, %s28
    $region7: #{tpu_custom_call.1} parent=1 // loop_footer_branch
      %27 = sbr.rel target = $region3
    $region8: #{tpu_custom_call.1} parent=1 // loop_exit
      _
    %4702 = vsyncpa [#allocation3], 1
    %s4703 = scalar_lea.sflag [#allocation3], 1
    %4704 = vsyncpa %s4703, 1
    %4705 = vsyncpa [#allocation8], 1
    %4706 = vsyncpa [#allocation4], 1
    %s4707 = scalar_lea.sflag [#allocation4], 1
    %4708 = vsyncpa %s4707, 1
    %4709 = vsyncpa [#allocation5], 1
    %s4710 = scalar_lea.sflag [#allocation5], 1
    %4711 = vsyncpa %s4710, 1
    %4712 = vsyncpa [#allocation14], 1
    %4713 = vsyncpa [#allocation6], 1
    %s4714 = scalar_lea.sflag [#allocation6], 1
    %4715 = vsyncpa %s4714, 1
    %4716 = vsyncpa [#allocation12], 1
    %4717 = vsyncpa [#allocation17], 1

</llo_original>
